<compile_context>
chip_gen: v6e
topology: v6e:2x2x1
jax: 0.10.0
libtpu: 0.0.40
codegen_flags: <defaults>
</compile_context>

<pallas_src>
import functools

import jax
import jax.numpy as jnp
from jax.experimental import pallas as pl
from jax.experimental.pallas import tpu as pltpu

BN_EPS = 1e-5


def _round_up(x, m):
    return (x + m - 1) // m * m


@functools.lru_cache(maxsize=None)
def _vmem_capacity_bytes():
    try:
        cap = int(getattr(pltpu.get_tpu_info(), "vmem_capacity_bytes", 0))
        if cap > 0:
            return cap
    except Exception:
        pass
    return 64 * 1024 * 1024          # conservative (v7x per-core) fallback


@functools.lru_cache(maxsize=None)
def _num_tensorcores():
    # Best-effort query; attribute names differ across versions.
    try:
        info = pltpu.get_tpu_info()
        for name in ("num_tensorcores", "num_cores", "core_count",
                     "tensorcores_per_chip"):
            v = getattr(info, name, None)
            if isinstance(v, int) and v > 0:
                return v
    except Exception:
        pass
    return 2                          # assume megacore; harmless on 1-core chips


def _pick_tm(rows):
    """Row-tile size: on multi-TensorCore chips keep >=2 grid steps so the
    'parallel' axis can be sharded; on single-core chips take the largest tile
    (fewer per-step overheads)."""
    if _num_tensorcores() >= 2:
        if rows >= 1024:
            return 512
        return max(128, _round_up((rows + 1) // 2, 128))
    return min(1024, max(128, _round_up(rows, 128)))


# ----------------------------------------------------------------------------
# Pallas kernel: multi-tap conv as chained matmuls on a flat (rows, K) layout,
# fused with the folded-BatchNorm affine and the activation.
# ----------------------------------------------------------------------------
def _tap_conv_kernel(x_ref, w_ref, scale_ref, shift_ref, o_ref,
                     *, tap_offsets, act, approx_sigmoid):
    """
    x_ref:     (rows_in, K)        whole packed input (VMEM resident)
    w_ref:     (n_taps, K, Cout)   per-tap weight matrices
    scale_ref: (1, Cout) f32       folded BN scale (0 in pad lanes)
    shift_ref: (1, Cout) f32       folded BN shift (0 in pad lanes)
    o_ref:     (TM, Cout)          output row tile
    """
    tm = o_ref.shape[0]
    base = pl.multiple_of(pl.program_id(0) * tm, tm)

    # Chained dots: accumulate in registers / MXU result buffer; the output is
    # written exactly once (no per-tap VMEM read-modify-write).
    acc = None
    for t, off in enumerate(tap_offsets):
        if off == 0:
            start = base
        elif off % 8 == 0:
            start = pl.multiple_of(base + off, 8)   # sublane-aligned tap load
        else:
            start = base + off
        xt = x_ref[pl.ds(start, tm), :]
        d = jnp.dot(xt, w_ref[t], preferred_element_type=jnp.float32)
        acc = d if acc is None else acc + d

    y = acc * scale_ref[...] + shift_ref[...]
    if act == "relu":
        y = jnp.maximum(y, 0.0)
    elif act == "sigmoid":
        e = jnp.exp(-y)                                   # EUP
        if approx_sigmoid:
            y = pl.reciprocal(1.0 + e, approx=True)       # EUP, frees the VALU
        else:
            y = 1.0 / (1.0 + e)
    o_ref[...] = y.astype(o_ref.dtype)


def _tap_conv(x_packed, w_taps, scale, shift, *, tap_offsets, rows_out, tm,
              act, approx_sigmoid, out_dtype):
    rows_in, k_dim = x_packed.shape
    n_taps, _, cout_tot = w_taps.shape
    assert rows_out % tm == 0

    kernel = functools.partial(_tap_conv_kernel, tap_offsets=tuple(tap_offsets),
                               act=act, approx_sigmoid=approx_sigmoid)

    in_sz = jnp.dtype(x_packed.dtype).itemsize
    w_sz = jnp.dtype(w_taps.dtype).itemsize
    out_sz = jnp.dtype(out_dtype).itemsize

    flops = 2 * rows_out * k_dim * cout_tot * n_taps
    transcendentals = rows_out * cout_tot if act == "sigmoid" else 0
    bytes_accessed = (x_packed.size * in_sz + w_taps.size * w_sz
                      + (scale.size + shift.size) * 4
                      + rows_out * cout_tot * out_sz)

    # Generation-aware VMEM budget (blocks are double-buffered by the pipeline).
    need = (2 * (x_packed.size * in_sz + w_taps.size * w_sz
                 + (scale.size + shift.size) * 4 + tm * cout_tot * out_sz)
            + 4 * tm * cout_tot * 4 + (4 << 20))
    cap = _vmem_capacity_bytes()
    vmem_limit = max(need, 32 << 20)
    vmem_limit = int(min(vmem_limit, max(cap - (16 << 20), need)))

    return pl.pallas_call(
        kernel,
        out_shape=jax.ShapeDtypeStruct((rows_out, cout_tot), out_dtype),
        grid=(rows_out // tm,),
        in_specs=[
            # Whole packed input / weights / BN vectors as single constant-index
            # blocks: fetched once into VMEM, reused by every row tile.
            pl.BlockSpec((rows_in, k_dim), lambda i: (0, 0)),
            pl.BlockSpec((n_taps, k_dim, cout_tot), lambda i: (0, 0, 0)),
            pl.BlockSpec((1, cout_tot), lambda i: (0, 0)),
            pl.BlockSpec((1, cout_tot), lambda i: (0, 0)),
        ],
        out_specs=pl.BlockSpec((tm, cout_tot), lambda i: (i, 0)),
        compiler_params=pltpu.CompilerParams(
            dimension_semantics=("parallel",),
            vmem_limit_bytes=vmem_limit),
        cost_estimate=pl.CostEstimate(flops=flops,
                                      transcendentals=transcendentals,
                                      bytes_accessed=bytes_accessed),
    )(x_packed, w_taps, scale, shift)


# ----------------------------------------------------------------------------
# Layer wrappers (pure-JAX glue: padding, kw/phase lane packing, BN fold)
# ----------------------------------------------------------------------------
def _fold_bn(bias, gamma, beta, mean, var, cpad):
    scale = gamma / jnp.sqrt(var + BN_EPS)
    shift = (bias - mean) * scale + beta
    c = scale.shape[0]
    s = jnp.zeros((1, cpad), jnp.float32).at[0, :c].set(scale.astype(jnp.float32))
    sh = jnp.zeros((1, cpad), jnp.float32).at[0, :c].set(shift.astype(jnp.float32))
    return s, sh


def conv3x3_bn_act(x_nhwc, w_oihw, bias, gamma, beta, mean, var, *,
                   act, compute_dtype, out_dtype, approx_sigmoid):
    """Conv2d(3x3, s1, p1) + BatchNorm + activation.

    kw is folded along lanes in the wrapper: 3 dots with K = 3*C, tap offsets
    (0, Wp, 2*Wp) all sublane-aligned because Wp is padded to a multiple of 8.
    """
    B, H, W, Cs = x_nhwc.shape                   # Cs = stored channels
    Cout, Cin_real = w_oihw.shape[0], w_oihw.shape[1]
    cout_store = _round_up(Cout, 8)
    Hp = H + 2
    Wp = _round_up(W + 2, 8)                     # aligned flat row stride

    rows_valid = B * Hp * Wp
    tm = _pick_tm(rows_valid)
    rows_out = _round_up(rows_valid, tm)
    rows_in = rows_out + _round_up(2 * Wp, 8)    # max tap offset = 2*Wp

    xp = jnp.pad(x_nhwc, ((0, 0), (1, 1), (1, Wp - W - 1), (0, 0))).astype(compute_dtype)
    x_flat = jnp.pad(xp.reshape(rows_valid, Cs),
                     ((0, rows_in + 2 - rows_valid), (0, 0)))
    # kw-fold: packed row r holds [x_flat[r], x_flat[r+1], x_flat[r+2]] lanes.
    x_packed = jnp.concatenate([x_flat[kw:kw + rows_in] for kw in range(3)], axis=1)

    # Per-kh (3*Cs, cout_store) weight matrices; zero rows/lanes for padding.
    wt = jnp.transpose(w_oihw, (2, 3, 1, 0)).astype(compute_dtype)  # (kh,kw,Cin,Cout)
    w_taps = jnp.zeros((3, 3 * Cs, cout_store), compute_dtype)
    for kh in range(3):
        for kw in range(3):
            w_taps = w_taps.at[kh, kw * Cs:kw * Cs + Cin_real, :Cout].set(wt[kh, kw])

    scale, shift = _fold_bn(bias, gamma, beta, mean, var, cout_store)
    offsets = (0, Wp, 2 * Wp)

    out_flat = _tap_conv(x_packed, w_taps, scale, shift, tap_offsets=offsets,
                         rows_out=rows_out, tm=tm, act=act,
                         approx_sigmoid=approx_sigmoid, out_dtype=out_dtype)
    # Drop padded border rows; intermediates carry only cout_store channels
    # (NOT 128 zero-padded lanes).
    return out_flat[:rows_valid].reshape(B, Hp, Wp, cout_store)[:, :H, :W, :]


def deconv3x3_s2_bn_act(x_nhwc, w_iohw, bias, gamma, beta, mean, var, *,
                        act, compute_dtype, out_dtype, approx_sigmoid):
    """ConvTranspose2d(3x3, s2, p1, op1) + BatchNorm + activation via a 4-phase
    (sub-pixel) decomposition.  The v (column) tap is folded into lanes, so the
    kernel does 2 dots with K = 2*C at sublane-aligned offsets (0, Wf), writing
    the 4 output parities packed along lanes (4*cout columns)."""
    B, H, W, Cs = x_nhwc.shape
    Cin_real, Cout = w_iohw.shape[0], w_iohw.shape[1]
    cout_store = _round_up(Cout, 8)
    Hf = H + 1
    Wf = _round_up(W + 1, 8)                     # aligned flat row stride

    rows_valid = B * Hf * Wf
    tm = _pick_tm(rows_valid)
    rows_out = _round_up(rows_valid, tm)
    rows_in = rows_out + _round_up(Wf, 8)

    xp = jnp.pad(x_nhwc, ((0, 0), (0, 1), (0, Wf - W), (0, 0))).astype(compute_dtype)
    x_flat = jnp.pad(xp.reshape(rows_valid, Cs),
                     ((0, rows_in + 1 - rows_valid), (0, 0)))
    # v-fold: packed row r holds [x_flat[r], x_flat[r+1]] along lanes.
    x_packed = jnp.concatenate([x_flat[0:rows_in], x_flat[1:rows_in + 1]], axis=1)

    # Equivalent regular-conv weight: Wc[kh][kw][ci,co] = w_t[ci, co, 2-kh, 2-kw]
    wc = w_iohw[:, :, ::-1, ::-1].astype(compute_dtype)

    # Output parity phase p = 2*du + dv occupies lanes [p*cout_store, ...):
    #   out[2u,   2v  ] = x[u,v]Wc[1,1]
    #   out[2u,   2v+1] = x[u,v]Wc[1,0] + x[u,v+1]Wc[1,2]
    #   out[2u+1, 2v  ] = x[u,v]Wc[0,1] + x[u+1,v]Wc[2,1]
    #   out[2u+1, 2v+1] = x[u,v]Wc[0,0] + x[u,v+1]Wc[0,2]
    #                   + x[u+1,v]Wc[2,0] + x[u+1,v+1]Wc[2,2]
    # tap 0 = packed row (u, v)   -> lane blocks [x[u,v]   | x[u,v+1]  ]
    # tap 1 = packed row (u+1, v) -> lane blocks [x[u+1,v] | x[u+1,v+1]]
    placements = {
        (0, 0): [(0, (1, 1)), (1, (1, 0)), (2, (0, 1)), (3, (0, 0))],
        (0, 1): [(1, (1, 2)), (3, (0, 2))],
        (1, 0): [(2, (2, 1)), (3, (2, 0))],
        (1, 1): [(3, (2, 2))],
    }
    w_taps = jnp.zeros((2, 2 * Cs, 4 * cout_store), compute_dtype)
    for (t, vb), plist in placements.items():
        for p, (kh, kw) in plist:
            w_taps = w_taps.at[t, vb * Cs:vb * Cs + Cin_real,
                               p * cout_store:p * cout_store + Cout].set(wc[:, :, kh, kw])

    scale1, shift1 = _fold_bn(bias, gamma, beta, mean, var, cout_store)
    scale = jnp.tile(scale1, (1, 4))
    shift = jnp.tile(shift1, (1, 4))
    offsets = (0, Wf)

    out_flat = _tap_conv(x_packed, w_taps, scale, shift, tap_offsets=offsets,
                         rows_out=rows_out, tm=tm, act=act,
                         approx_sigmoid=approx_sigmoid, out_dtype=out_dtype)
    # (rows, 4*c) -> (B,H,W,du,dv,c) -> interleave -> (B,2H,2W,c)
    # TODO(synk): emit the interleaved (or next layer's packed) layout directly
    # from the kernel to drop this XLA de-interleave pass.
    ph = out_flat[:rows_valid].reshape(B, Hf, Wf, 4, cout_store)[:, :H, :W]
    ph = ph.reshape(B, H, W, 2, 2, cout_store)
    return ph.transpose(0, 1, 3, 2, 4, 5).reshape(B, 2 * H, 2 * W, cout_store)


def conv_normN_AE_forward(x_nchw, params, *, compute_dtype=jnp.bfloat16,
                          approx_sigmoid=None):
    if approx_sigmoid is None:
        approx_sigmoid = jnp.dtype(compute_dtype) != jnp.dtype(jnp.float32)
    x = jnp.transpose(x_nchw, (0, 2, 3, 1))  # NCHW -> NHWC
    x = conv3x3_bn_act(x, *params["conv1"], act="relu",
                       compute_dtype=compute_dtype, out_dtype=compute_dtype,
                       approx_sigmoid=approx_sigmoid)
    x = deconv3x3_s2_bn_act(x, *params["deconv1"], act="relu",
                            compute_dtype=compute_dtype, out_dtype=compute_dtype,
                            approx_sigmoid=approx_sigmoid)
    x = deconv3x3_s2_bn_act(x, *params["deconv2"], act="relu",
                            compute_dtype=compute_dtype, out_dtype=compute_dtype,
                            approx_sigmoid=approx_sigmoid)
    x = conv3x3_bn_act(x, *params["conv_out"], act="sigmoid",
                       compute_dtype=compute_dtype, out_dtype=jnp.float32,
                       approx_sigmoid=approx_sigmoid)
    out_nc = params["conv_out"][0].shape[0]
    x = x[..., :out_nc]                      # drop the (<8) pad lanes
    return jnp.transpose(x, (0, 3, 1, 2))    # NHWC -> NCHW


# ----------------------------------------------------------------------------
# Pure-JAX (lax.conv) reference for the correctness check
# ----------------------------------------------------------------------------
def _ref_bn_act(y, gamma, beta, mean, var, act):
    y = (y - mean.reshape(1, -1, 1, 1)) / jnp.sqrt(var.reshape(1, -1, 1, 1) + BN_EPS)
    y = y * gamma.reshape(1, -1, 1, 1) + beta.reshape(1, -1, 1, 1)
    if act == "relu":
        return jnp.maximum(y, 0.0)
    return 1.0 / (1.0 + jnp.exp(-y))


def _ref_conv(x, w, b, padding, lhs_dilation=(1, 1)):
    y = jax.lax.conv_general_dilated(
        x, w, window_strides=(1, 1), padding=padding,
        lhs_dilation=lhs_dilation, dimension_numbers=("NCHW", "OIHW", "NCHW"))
    return y + b.reshape(1, -1, 1, 1)


def reference_forward(x_nchw, params):
    w, b, g, be, m, v = params["conv1"]
    x = _ref_bn_act(_ref_conv(x_nchw, w, b, ((1, 1), (1, 1))), g, be, m, v, "relu")
    for name in ("deconv1", "deconv2"):
        w_t, b, g, be, m, v = params[name]
        w_conv = jnp.transpose(w_t[:, :, ::-1, ::-1], (1, 0, 2, 3))
        x = _ref_bn_act(_ref_conv(x, w_conv, b, ((1, 2), (1, 2)), (2, 2)),
                        g, be, m, v, "relu")
    w, b, g, be, m, v = params["conv_out"]
    x = _ref_bn_act(_ref_conv(x, w, b, ((1, 1), (1, 1))), g, be, m, v, "sigmoid")
    return x


# ----------------------------------------------------------------------------
# Deterministic parameter init (shapes follow the nn.Module __init__)
# ----------------------------------------------------------------------------
def _init_conv(key, cout, cin):
    k1, k2 = jax.random.split(key)
    w = 0.1 * jax.random.normal(k1, (cout, cin, 3, 3), jnp.float32)
    b = 0.05 * jax.random.normal(k2, (cout,), jnp.float32)
    return w, b


def _init_deconv(key, cin, cout):
    k1, k2 = jax.random.split(key)
    w = 0.1 * jax.random.normal(k1, (cin, cout, 3, 3), jnp.float32)  # (Cin, Cout, kH, kW)
    b = 0.05 * jax.random.normal(k2, (cout,), jnp.float32)
    return w, b


def _init_bn(key, c):
    k1, k2, k3, k4 = jax.random.split(key, 4)
    gamma = 1.0 + 0.1 * jax.random.normal(k1, (c,), jnp.float32)
    beta = 0.05 * jax.random.normal(k2, (c,), jnp.float32)
    mean = 0.05 * jax.random.normal(k3, (c,), jnp.float32)
    var = jax.random.uniform(k4, (c,), jnp.float32, minval=0.5, maxval=1.5)
    return gamma, beta, mean, var


def init_params(key, input_nc, internal_nc, output_nc):
    ks = jax.random.split(key, 8)
    params = {}
    params["conv1"] = _init_conv(ks[0], internal_nc, input_nc) + _init_bn(ks[1], internal_nc)
    params["deconv1"] = _init_deconv(ks[2], internal_nc, internal_nc) + _init_bn(ks[3], internal_nc)
    params["deconv2"] = _init_deconv(ks[4], internal_nc, internal_nc) + _init_bn(ks[5], internal_nc)
    params["conv_out"] = _init_conv(ks[6], output_nc, internal_nc) + _init_bn(ks[7], output_nc)
    return params


if __name__ == "__main__":
    # Small shapes consistent with the module: input_dim=8, output_dim=32
    # (upsampling_num = 2), N=0, scaled-down channel counts.
    B, input_nc, internal_nc, output_nc = 2, 16, 16, 3
    input_dim = 8

    key = jax.random.PRNGKey(0)
    k_x, k_p = jax.random.split(key)
    x = jax.random.normal(k_x, (B, input_nc, input_dim, input_dim), jnp.float32)
    params = init_params(k_p, input_nc, internal_nc, output_nc)

    ref = jax.block_until_ready(reference_forward(x, params))

    # 1) Exact f32 mode: tight check against the lax.conv reference.
    fwd_f32 = jax.jit(functools.partial(conv_normN_AE_forward,
                                        compute_dtype=jnp.float32,
                                        approx_sigmoid=False))
    out32 = jax.block_until_ready(fwd_f32(x, params))
    assert out32.shape == (B, output_nc, 32, 32), out32.shape
    err32 = float(jnp.max(jnp.abs(out32 - ref)))
    assert jnp.allclose(out32, ref, atol=2e-3, rtol=2e-3), err32

    # 2) f32 with approximate sigmoid: bounds the pl.reciprocal(approx=True)
    #    error independently of bf16 rounding.
    fwd_f32a = jax.jit(functools.partial(conv_normN_AE_forward,
                                         compute_dtype=jnp.float32,
                                         approx_sigmoid=True))
    out32a = jax.block_until_ready(fwd_f32a(x, params))
    err32a = float(jnp.max(jnp.abs(out32a - ref)))
    assert jnp.allclose(out32a, ref, atol=1.5e-2, rtol=1.5e-2), err32a

    # 3) Fast (bf16 operands, f32 accumulation) mode: looser tolerance for the
    #    bf16 rounding of weights/activations through the four layers.
    fwd_bf16 = jax.jit(functools.partial(conv_normN_AE_forward,
                                         compute_dtype=jnp.bfloat16))
    out16 = jax.block_until_ready(fwd_bf16(x, params))
    assert out16.shape == (B, output_nc, 32, 32), out16.shape
    err16 = float(jnp.max(jnp.abs(out16 - ref)))
    assert jnp.allclose(out16, ref, atol=2e-2, rtol=2e-2), err16

    print("KERNEL_OK")
</pallas_src>

<mosaic_0001>
module attributes {stable_mosaic.version = 11 : i64} {
  func.func @_tap_conv_kernel(%arg0: i32, %arg1: memref<544x48xf32, #tpu.memory_space<vmem>>, %arg2: memref<3x48x16xf32, #tpu.memory_space<vmem>>, %arg3: memref<1x16xf32, #tpu.memory_space<vmem>>, %arg4: memref<1x16xf32, #tpu.memory_space<vmem>>, %arg5: memref<256x16xf32, #tpu.memory_space<vmem>>) attributes {dimension_semantics = [#tpu.dimension_semantics<parallel>], iteration_bounds = array<i64: 2>, scalar_prefetch = 0 : i64, scratch_operands = 0 : i64, tpu.core_type = #tpu.core_type<tc>, window_params = [{pipeline_mode = #tpu.pipeline_mode<synchronous>, transform_indices = @transform_0, window_bounds = array<i64: 544, 48>}, {pipeline_mode = #tpu.pipeline_mode<synchronous>, transform_indices = @transform_1, window_bounds = array<i64: 3, 48, 16>}, {pipeline_mode = #tpu.pipeline_mode<synchronous>, transform_indices = @transform_2, window_bounds = array<i64: 1, 16>}, {pipeline_mode = #tpu.pipeline_mode<synchronous>, transform_indices = @transform_3, window_bounds = array<i64: 1, 16>}, {transform_indices = @transform_4, window_bounds = array<i64: 256, 16>}]} {
    %c256_i32 = arith.constant 256 : i32
    %0 = arith.muli %arg0, %c256_i32 : i32
    %1 = tpu.assume_multiple %0, 256 : i32
    %2 = arith.index_cast %1 : i32 to index
    %c0 = arith.constant 0 : index
    %3 = vector.load %arg1[%2, %c0] : memref<544x48xf32, #tpu.memory_space<vmem>>, vector<256x48xf32>
    %c0_0 = arith.constant 0 : index
    %c0_1 = arith.constant 0 : index
    %c0_2 = arith.constant 0 : index
    %4 = vector.load %arg2[%c0_0, %c0_1, %c0_2] : memref<3x48x16xf32, #tpu.memory_space<vmem>>, vector<1x48x16xf32>
    %5 = vector.shape_cast %4 : vector<1x48x16xf32> to vector<48x16xf32>
    %cst = arith.constant dense<0.000000e+00> : vector<256x16xf32>
    %6 = tpu.matmul %3, %5, %cst {dimension_numbers = #tpu.dot_dimension_numbers<[1], [0], [0], [1], [0, 0, 1, 1], [], []>} : vector<256x48xf32>, vector<48x16xf32>, vector<256x16xf32> -> vector<256x16xf32>
    %c16_i32 = arith.constant 16 : i32
    %7 = arith.addi %1, %c16_i32 : i32
    %8 = tpu.assume_multiple %7, 8 : i32
    %9 = arith.index_cast %8 : i32 to index
    %c0_3 = arith.constant 0 : index
    %10 = vector.load %arg1[%9, %c0_3] : memref<544x48xf32, #tpu.memory_space<vmem>>, vector<256x48xf32>
    %c1 = arith.constant 1 : index
    %c0_4 = arith.constant 0 : index
    %c0_5 = arith.constant 0 : index
    %11 = vector.load %arg2[%c1, %c0_4, %c0_5] : memref<3x48x16xf32, #tpu.memory_space<vmem>>, vector<1x48x16xf32>
    %12 = vector.shape_cast %11 : vector<1x48x16xf32> to vector<48x16xf32>
    %cst_6 = arith.constant dense<0.000000e+00> : vector<256x16xf32>
    %13 = tpu.matmul %10, %12, %cst_6 {dimension_numbers = #tpu.dot_dimension_numbers<[1], [0], [0], [1], [0, 0, 1, 1], [], []>} : vector<256x48xf32>, vector<48x16xf32>, vector<256x16xf32> -> vector<256x16xf32>
    %14 = arith.addf %6, %13 : vector<256x16xf32>
    %c32_i32 = arith.constant 32 : i32
    %15 = arith.addi %1, %c32_i32 : i32
    %16 = tpu.assume_multiple %15, 8 : i32
    %17 = arith.index_cast %16 : i32 to index
    %c0_7 = arith.constant 0 : index
    %18 = vector.load %arg1[%17, %c0_7] : memref<544x48xf32, #tpu.memory_space<vmem>>, vector<256x48xf32>
    %c2 = arith.constant 2 : index
    %c0_8 = arith.constant 0 : index
    %c0_9 = arith.constant 0 : index
    %19 = vector.load %arg2[%c2, %c0_8, %c0_9] : memref<3x48x16xf32, #tpu.memory_space<vmem>>, vector<1x48x16xf32>
    %20 = vector.shape_cast %19 : vector<1x48x16xf32> to vector<48x16xf32>
    %cst_10 = arith.constant dense<0.000000e+00> : vector<256x16xf32>
    %21 = tpu.matmul %18, %20, %cst_10 {dimension_numbers = #tpu.dot_dimension_numbers<[1], [0], [0], [1], [0, 0, 1, 1], [], []>} : vector<256x48xf32>, vector<48x16xf32>, vector<256x16xf32> -> vector<256x16xf32>
    %22 = arith.addf %14, %21 : vector<256x16xf32>
    %c0_11 = arith.constant 0 : index
    %c0_12 = arith.constant 0 : index
    %23 = vector.load %arg3[%c0_11, %c0_12] : memref<1x16xf32, #tpu.memory_space<vmem>>, vector<1x16xf32>
    %24 = vector.broadcast %23 : vector<1x16xf32> to vector<256x16xf32>
    %25 = arith.mulf %22, %24 : vector<256x16xf32>
    %c0_13 = arith.constant 0 : index
    %c0_14 = arith.constant 0 : index
    %26 = vector.load %arg4[%c0_13, %c0_14] : memref<1x16xf32, #tpu.memory_space<vmem>>, vector<1x16xf32>
    %27 = vector.broadcast %26 : vector<1x16xf32> to vector<256x16xf32>
    %28 = arith.addf %25, %27 : vector<256x16xf32>
    %cst_15 = arith.constant 0.000000e+00 : f32
    %29 = vector.broadcast %cst_15 : f32 to vector<256x16xf32>
    %30 = arith.maximumf %28, %29 : vector<256x16xf32>
    %c0_16 = arith.constant 0 : index
    %c0_17 = arith.constant 0 : index
    %31 = vector.load %arg5[%c0_16, %c0_17] : memref<256x16xf32, #tpu.memory_space<vmem>>, vector<256x16xf32>
    tpu.vector_store %arg5[%c0_16, %c0_17], %30 {strides = array<i32>} : memref<256x16xf32, #tpu.memory_space<vmem>>, vector<256x16xf32>,
    return
  }
  func.func @transform_0(%arg0: i32) -> (i32, i32) {
    %c0_i32 = arith.constant 0 : i32
    %c0_i32_0 = arith.constant 0 : i32
    %c0_i32_1 = arith.constant 0 : i32
    return %c0_i32, %c0_i32_0 : i32, i32
  }
  func.func @transform_1(%arg0: i32) -> (i32, i32, i32) {
    %c0_i32 = arith.constant 0 : i32
    %c0_i32_0 = arith.constant 0 : i32
    %c0_i32_1 = arith.constant 0 : i32
    %c0_i32_2 = arith.constant 0 : i32
    return %c0_i32, %c0_i32_0, %c0_i32_1 : i32, i32, i32
  }
  func.func @transform_2(%arg0: i32) -> (i32, i32) {
    %c0_i32 = arith.constant 0 : i32
    %c0_i32_0 = arith.constant 0 : i32
    %c0_i32_1 = arith.constant 0 : i32
    return %c0_i32, %c0_i32_0 : i32, i32
  }
  func.func @transform_3(%arg0: i32) -> (i32, i32) {
    %c0_i32 = arith.constant 0 : i32
    %c0_i32_0 = arith.constant 0 : i32
    %c0_i32_1 = arith.constant 0 : i32
    return %c0_i32, %c0_i32_0 : i32, i32
  }
  func.func @transform_4(%arg0: i32) -> (i32, i32) {
    %c0_i32 = arith.constant 0 : i32
    %c0_i32_0 = arith.constant 0 : i32
    return %arg0, %c0_i32 : i32, i32
  }
}

module attributes {stable_mosaic.version = 11 : i64} {
  func.func @_tap_conv_kernel(%arg0: i32, %arg1: memref<528x32xf32, #tpu.memory_space<vmem>>, %arg2: memref<2x32x64xf32, #tpu.memory_space<vmem>>, %arg3: memref<1x64xf32, #tpu.memory_space<vmem>>, %arg4: memref<1x64xf32, #tpu.memory_space<vmem>>, %arg5: memref<256x64xf32, #tpu.memory_space<vmem>>) attributes {dimension_semantics = [#tpu.dimension_semantics<parallel>], iteration_bounds = array<i64: 2>, scalar_prefetch = 0 : i64, scratch_operands = 0 : i64, tpu.core_type = #tpu.core_type<tc>, window_params = [{pipeline_mode = #tpu.pipeline_mode<synchronous>, transform_indices = @transform_0, window_bounds = array<i64: 528, 32>}, {pipeline_mode = #tpu.pipeline_mode<synchronous>, transform_indices = @transform_1, window_bounds = array<i64: 2, 32, 64>}, {pipeline_mode = #tpu.pipeline_mode<synchronous>, transform_indices = @transform_2, window_bounds = array<i64: 1, 64>}, {pipeline_mode = #tpu.pipeline_mode<synchronous>, transform_indices = @transform_3, window_bounds = array<i64: 1, 64>}, {transform_indices = @transform_4, window_bounds = array<i64: 256, 64>}]} {
    %c256_i32 = arith.constant 256 : i32
    %0 = arith.muli %arg0, %c256_i32 : i32
    %1 = tpu.assume_multiple %0, 256 : i32
    %2 = arith.index_cast %1 : i32 to index
    %c0 = arith.constant 0 : index
    %3 = vector.load %arg1[%2, %c0] : memref<528x32xf32, #tpu.memory_space<vmem>>, vector<256x32xf32>
    %c0_0 = arith.constant 0 : index
    %c0_1 = arith.constant 0 : index
    %c0_2 = arith.constant 0 : index
    %4 = vector.load %arg2[%c0_0, %c0_1, %c0_2] : memref<2x32x64xf32, #tpu.memory_space<vmem>>, vector<1x32x64xf32>
    %5 = vector.shape_cast %4 : vector<1x32x64xf32> to vector<32x64xf32>
    %cst = arith.constant dense<0.000000e+00> : vector<256x64xf32>
    %6 = tpu.matmul %3, %5, %cst {dimension_numbers = #tpu.dot_dimension_numbers<[1], [0], [0], [1], [0, 0, 1, 1], [], []>} : vector<256x32xf32>, vector<32x64xf32>, vector<256x64xf32> -> vector<256x64xf32>
    %c16_i32 = arith.constant 16 : i32
    %7 = arith.addi %1, %c16_i32 : i32
    %8 = tpu.assume_multiple %7, 8 : i32
    %9 = arith.index_cast %8 : i32 to index
    %c0_3 = arith.constant 0 : index
    %10 = vector.load %arg1[%9, %c0_3] : memref<528x32xf32, #tpu.memory_space<vmem>>, vector<256x32xf32>
    %c1 = arith.constant 1 : index
    %c0_4 = arith.constant 0 : index
    %c0_5 = arith.constant 0 : index
    %11 = vector.load %arg2[%c1, %c0_4, %c0_5] : memref<2x32x64xf32, #tpu.memory_space<vmem>>, vector<1x32x64xf32>
    %12 = vector.shape_cast %11 : vector<1x32x64xf32> to vector<32x64xf32>
    %cst_6 = arith.constant dense<0.000000e+00> : vector<256x64xf32>
    %13 = tpu.matmul %10, %12, %cst_6 {dimension_numbers = #tpu.dot_dimension_numbers<[1], [0], [0], [1], [0, 0, 1, 1], [], []>} : vector<256x32xf32>, vector<32x64xf32>, vector<256x64xf32> -> vector<256x64xf32>
    %14 = arith.addf %6, %13 : vector<256x64xf32>
    %c0_7 = arith.constant 0 : index
    %c0_8 = arith.constant 0 : index
    %15 = vector.load %arg3[%c0_7, %c0_8] : memref<1x64xf32, #tpu.memory_space<vmem>>, vector<1x64xf32>
    %16 = vector.broadcast %15 : vector<1x64xf32> to vector<256x64xf32>
    %17 = arith.mulf %14, %16 : vector<256x64xf32>
    %c0_9 = arith.constant 0 : index
    %c0_10 = arith.constant 0 : index
    %18 = vector.load %arg4[%c0_9, %c0_10] : memref<1x64xf32, #tpu.memory_space<vmem>>, vector<1x64xf32>
    %19 = vector.broadcast %18 : vector<1x64xf32> to vector<256x64xf32>
    %20 = arith.addf %17, %19 : vector<256x64xf32>
    %cst_11 = arith.constant 0.000000e+00 : f32
    %21 = vector.broadcast %cst_11 : f32 to vector<256x64xf32>
    %22 = arith.maximumf %20, %21 : vector<256x64xf32>
    %c0_12 = arith.constant 0 : index
    %c0_13 = arith.constant 0 : index
    %23 = vector.load %arg5[%c0_12, %c0_13] : memref<256x64xf32, #tpu.memory_space<vmem>>, vector<256x64xf32>
    tpu.vector_store %arg5[%c0_12, %c0_13], %22 {strides = array<i32>} : memref<256x64xf32, #tpu.memory_space<vmem>>, vector<256x64xf32>,
    return
  }
  func.func @transform_0(%arg0: i32) -> (i32, i32) {
    %c0_i32 = arith.constant 0 : i32
    %c0_i32_0 = arith.constant 0 : i32
    %c0_i32_1 = arith.constant 0 : i32
    return %c0_i32, %c0_i32_0 : i32, i32
  }
  func.func @transform_1(%arg0: i32) -> (i32, i32, i32) {
    %c0_i32 = arith.constant 0 : i32
    %c0_i32_0 = arith.constant 0 : i32
    %c0_i32_1 = arith.constant 0 : i32
    %c0_i32_2 = arith.constant 0 : i32
    return %c0_i32, %c0_i32_0, %c0_i32_1 : i32, i32, i32
  }
  func.func @transform_2(%arg0: i32) -> (i32, i32) {
    %c0_i32 = arith.constant 0 : i32
    %c0_i32_0 = arith.constant 0 : i32
    %c0_i32_1 = arith.constant 0 : i32
    return %c0_i32, %c0_i32_0 : i32, i32
  }
  func.func @transform_3(%arg0: i32) -> (i32, i32) {
    %c0_i32 = arith.constant 0 : i32
    %c0_i32_0 = arith.constant 0 : i32
    %c0_i32_1 = arith.constant 0 : i32
    return %c0_i32, %c0_i32_0 : i32, i32
  }
  func.func @transform_4(%arg0: i32) -> (i32, i32) {
    %c0_i32 = arith.constant 0 : i32
    %c0_i32_0 = arith.constant 0 : i32
    return %arg0, %c0_i32 : i32, i32
  }
}

module attributes {stable_mosaic.version = 11 : i64} {
  func.func @_tap_conv_kernel(%arg0: i32, %arg1: memref<1048x32xf32, #tpu.memory_space<vmem>>, %arg2: memref<2x32x64xf32, #tpu.memory_space<vmem>>, %arg3: memref<1x64xf32, #tpu.memory_space<vmem>>, %arg4: memref<1x64xf32, #tpu.memory_space<vmem>>, %arg5: memref<512x64xf32, #tpu.memory_space<vmem>>) attributes {dimension_semantics = [#tpu.dimension_semantics<parallel>], iteration_bounds = array<i64: 2>, scalar_prefetch = 0 : i64, scratch_operands = 0 : i64, tpu.core_type = #tpu.core_type<tc>, window_params = [{pipeline_mode = #tpu.pipeline_mode<synchronous>, transform_indices = @transform_0, window_bounds = array<i64: 1048, 32>}, {pipeline_mode = #tpu.pipeline_mode<synchronous>, transform_indices = @transform_1, window_bounds = array<i64: 2, 32, 64>}, {pipeline_mode = #tpu.pipeline_mode<synchronous>, transform_indices = @transform_2, window_bounds = array<i64: 1, 64>}, {pipeline_mode = #tpu.pipeline_mode<synchronous>, transform_indices = @transform_3, window_bounds = array<i64: 1, 64>}, {transform_indices = @transform_4, window_bounds = array<i64: 512, 64>}]} {
    %c512_i32 = arith.constant 512 : i32
    %0 = arith.muli %arg0, %c512_i32 : i32
    %1 = tpu.assume_multiple %0, 512 : i32
    %2 = arith.index_cast %1 : i32 to index
    %c0 = arith.constant 0 : index
    %3 = vector.load %arg1[%2, %c0] : memref<1048x32xf32, #tpu.memory_space<vmem>>, vector<512x32xf32>
    %c0_0 = arith.constant 0 : index
    %c0_1 = arith.constant 0 : index
    %c0_2 = arith.constant 0 : index
    %4 = vector.load %arg2[%c0_0, %c0_1, %c0_2] : memref<2x32x64xf32, #tpu.memory_space<vmem>>, vector<1x32x64xf32>
    %5 = vector.shape_cast %4 : vector<1x32x64xf32> to vector<32x64xf32>
    %cst = arith.constant dense<0.000000e+00> : vector<512x64xf32>
    %6 = tpu.matmul %3, %5, %cst {dimension_numbers = #tpu.dot_dimension_numbers<[1], [0], [0], [1], [0, 0, 1, 1], [], []>} : vector<512x32xf32>, vector<32x64xf32>, vector<512x64xf32> -> vector<512x64xf32>
    %c24_i32 = arith.constant 24 : i32
    %7 = arith.addi %1, %c24_i32 : i32
    %8 = tpu.assume_multiple %7, 8 : i32
    %9 = arith.index_cast %8 : i32 to index
    %c0_3 = arith.constant 0 : index
    %10 = vector.load %arg1[%9, %c0_3] : memref<1048x32xf32, #tpu.memory_space<vmem>>, vector<512x32xf32>
    %c1 = arith.constant 1 : index
    %c0_4 = arith.constant 0 : index
    %c0_5 = arith.constant 0 : index
    %11 = vector.load %arg2[%c1, %c0_4, %c0_5] : memref<2x32x64xf32, #tpu.memory_space<vmem>>, vector<1x32x64xf32>
    %12 = vector.shape_cast %11 : vector<1x32x64xf32> to vector<32x64xf32>
    %cst_6 = arith.constant dense<0.000000e+00> : vector<512x64xf32>
    %13 = tpu.matmul %10, %12, %cst_6 {dimension_numbers = #tpu.dot_dimension_numbers<[1], [0], [0], [1], [0, 0, 1, 1], [], []>} : vector<512x32xf32>, vector<32x64xf32>, vector<512x64xf32> -> vector<512x64xf32>
    %14 = arith.addf %6, %13 : vector<512x64xf32>
    %c0_7 = arith.constant 0 : index
    %c0_8 = arith.constant 0 : index
    %15 = vector.load %arg3[%c0_7, %c0_8] : memref<1x64xf32, #tpu.memory_space<vmem>>, vector<1x64xf32>
    %16 = vector.broadcast %15 : vector<1x64xf32> to vector<512x64xf32>
    %17 = arith.mulf %14, %16 : vector<512x64xf32>
    %c0_9 = arith.constant 0 : index
    %c0_10 = arith.constant 0 : index
    %18 = vector.load %arg4[%c0_9, %c0_10] : memref<1x64xf32, #tpu.memory_space<vmem>>, vector<1x64xf32>
    %19 = vector.broadcast %18 : vector<1x64xf32> to vector<512x64xf32>
    %20 = arith.addf %17, %19 : vector<512x64xf32>
    %cst_11 = arith.constant 0.000000e+00 : f32
    %21 = vector.broadcast %cst_11 : f32 to vector<512x64xf32>
    %22 = arith.maximumf %20, %21 : vector<512x64xf32>
    %c0_12 = arith.constant 0 : index
    %c0_13 = arith.constant 0 : index
    %23 = vector.load %arg5[%c0_12, %c0_13] : memref<512x64xf32, #tpu.memory_space<vmem>>, vector<512x64xf32>
    tpu.vector_store %arg5[%c0_12, %c0_13], %22 {strides = array<i32>} : memref<512x64xf32, #tpu.memory_space<vmem>>, vector<512x64xf32>,
    return
  }
  func.func @transform_0(%arg0: i32) -> (i32, i32) {
    %c0_i32 = arith.constant 0 : i32
    %c0_i32_0 = arith.constant 0 : i32
    %c0_i32_1 = arith.constant 0 : i32
    return %c0_i32, %c0_i32_0 : i32, i32
  }
  func.func @transform_1(%arg0: i32) -> (i32, i32, i32) {
    %c0_i32 = arith.constant 0 : i32
    %c0_i32_0 = arith.constant 0 : i32
    %c0_i32_1 = arith.constant 0 : i32
    %c0_i32_2 = arith.constant 0 : i32
    return %c0_i32, %c0_i32_0, %c0_i32_1 : i32, i32, i32
  }
  func.func @transform_2(%arg0: i32) -> (i32, i32) {
    %c0_i32 = arith.constant 0 : i32
    %c0_i32_0 = arith.constant 0 : i32
    %c0_i32_1 = arith.constant 0 : i32
    return %c0_i32, %c0_i32_0 : i32, i32
  }
  func.func @transform_3(%arg0: i32) -> (i32, i32) {
    %c0_i32 = arith.constant 0 : i32
    %c0_i32_0 = arith.constant 0 : i32
    %c0_i32_1 = arith.constant 0 : i32
    return %c0_i32, %c0_i32_0 : i32, i32
  }
  func.func @transform_4(%arg0: i32) -> (i32, i32) {
    %c0_i32 = arith.constant 0 : i32
    %c0_i32_0 = arith.constant 0 : i32
    return %arg0, %c0_i32 : i32, i32
  }
}

module attributes {stable_mosaic.version = 11 : i64} {
  func.func @_tap_conv_kernel(%arg0: i32, %arg1: memref<3152x48xf32, #tpu.memory_space<vmem>>, %arg2: memref<3x48x8xf32, #tpu.memory_space<vmem>>, %arg3: memref<1x8xf32, #tpu.memory_space<vmem>>, %arg4: memref<1x8xf32, #tpu.memory_space<vmem>>, %arg5: memref<512x8xf32, #tpu.memory_space<vmem>>) attributes {dimension_semantics = [#tpu.dimension_semantics<parallel>], iteration_bounds = array<i64: 6>, scalar_prefetch = 0 : i64, scratch_operands = 0 : i64, tpu.core_type = #tpu.core_type<tc>, window_params = [{pipeline_mode = #tpu.pipeline_mode<synchronous>, transform_indices = @transform_0, window_bounds = array<i64: 3152, 48>}, {pipeline_mode = #tpu.pipeline_mode<synchronous>, transform_indices = @transform_1, window_bounds = array<i64: 3, 48, 8>}, {pipeline_mode = #tpu.pipeline_mode<synchronous>, transform_indices = @transform_2, window_bounds = array<i64: 1, 8>}, {pipeline_mode = #tpu.pipeline_mode<synchronous>, transform_indices = @transform_3, window_bounds = array<i64: 1, 8>}, {transform_indices = @transform_4, window_bounds = array<i64: 512, 8>}]} {
    %c512_i32 = arith.constant 512 : i32
    %0 = arith.muli %arg0, %c512_i32 : i32
    %1 = tpu.assume_multiple %0, 512 : i32
    %2 = arith.index_cast %1 : i32 to index
    %c0 = arith.constant 0 : index
    %3 = vector.load %arg1[%2, %c0] : memref<3152x48xf32, #tpu.memory_space<vmem>>, vector<512x48xf32>
    %c0_0 = arith.constant 0 : index
    %c0_1 = arith.constant 0 : index
    %c0_2 = arith.constant 0 : index
    %4 = vector.load %arg2[%c0_0, %c0_1, %c0_2] : memref<3x48x8xf32, #tpu.memory_space<vmem>>, vector<1x48x8xf32>
    %5 = vector.shape_cast %4 : vector<1x48x8xf32> to vector<48x8xf32>
    %cst = arith.constant dense<0.000000e+00> : vector<512x8xf32>
    %6 = tpu.matmul %3, %5, %cst {dimension_numbers = #tpu.dot_dimension_numbers<[1], [0], [0], [1], [0, 0, 1, 1], [], []>} : vector<512x48xf32>, vector<48x8xf32>, vector<512x8xf32> -> vector<512x8xf32>
    %c40_i32 = arith.constant 40 : i32
    %7 = arith.addi %1, %c40_i32 : i32
    %8 = tpu.assume_multiple %7, 8 : i32
    %9 = arith.index_cast %8 : i32 to index
    %c0_3 = arith.constant 0 : index
    %10 = vector.load %arg1[%9, %c0_3] : memref<3152x48xf32, #tpu.memory_space<vmem>>, vector<512x48xf32>
    %c1 = arith.constant 1 : index
    %c0_4 = arith.constant 0 : index
    %c0_5 = arith.constant 0 : index
    %11 = vector.load %arg2[%c1, %c0_4, %c0_5] : memref<3x48x8xf32, #tpu.memory_space<vmem>>, vector<1x48x8xf32>
    %12 = vector.shape_cast %11 : vector<1x48x8xf32> to vector<48x8xf32>
    %cst_6 = arith.constant dense<0.000000e+00> : vector<512x8xf32>
    %13 = tpu.matmul %10, %12, %cst_6 {dimension_numbers = #tpu.dot_dimension_numbers<[1], [0], [0], [1], [0, 0, 1, 1], [], []>} : vector<512x48xf32>, vector<48x8xf32>, vector<512x8xf32> -> vector<512x8xf32>
    %14 = arith.addf %6, %13 : vector<512x8xf32>
    %c80_i32 = arith.constant 80 : i32
    %15 = arith.addi %1, %c80_i32 : i32
    %16 = tpu.assume_multiple %15, 8 : i32
    %17 = arith.index_cast %16 : i32 to index
    %c0_7 = arith.constant 0 : index
    %18 = vector.load %arg1[%17, %c0_7] : memref<3152x48xf32, #tpu.memory_space<vmem>>, vector<512x48xf32>
    %c2 = arith.constant 2 : index
    %c0_8 = arith.constant 0 : index
    %c0_9 = arith.constant 0 : index
    %19 = vector.load %arg2[%c2, %c0_8, %c0_9] : memref<3x48x8xf32, #tpu.memory_space<vmem>>, vector<1x48x8xf32>
    %20 = vector.shape_cast %19 : vector<1x48x8xf32> to vector<48x8xf32>
    %cst_10 = arith.constant dense<0.000000e+00> : vector<512x8xf32>
    %21 = tpu.matmul %18, %20, %cst_10 {dimension_numbers = #tpu.dot_dimension_numbers<[1], [0], [0], [1], [0, 0, 1, 1], [], []>} : vector<512x48xf32>, vector<48x8xf32>, vector<512x8xf32> -> vector<512x8xf32>
    %22 = arith.addf %14, %21 : vector<512x8xf32>
    %c0_11 = arith.constant 0 : index
    %c0_12 = arith.constant 0 : index
    %23 = vector.load %arg3[%c0_11, %c0_12] : memref<1x8xf32, #tpu.memory_space<vmem>>, vector<1x8xf32>
    %24 = vector.broadcast %23 : vector<1x8xf32> to vector<512x8xf32>
    %25 = arith.mulf %22, %24 : vector<512x8xf32>
    %c0_13 = arith.constant 0 : index
    %c0_14 = arith.constant 0 : index
    %26 = vector.load %arg4[%c0_13, %c0_14] : memref<1x8xf32, #tpu.memory_space<vmem>>, vector<1x8xf32>
    %27 = vector.broadcast %26 : vector<1x8xf32> to vector<512x8xf32>
    %28 = arith.addf %25, %27 : vector<512x8xf32>
    %cst_15 = arith.constant 0.000000e+00 : f32
    %29 = vector.broadcast %cst_15 : f32 to vector<512x8xf32>
    %30 = arith.subf %29, %28 : vector<512x8xf32>
    %31 = math.exp %30 : vector<512x8xf32>
    %cst_16 = arith.constant 1.000000e+00 : f32
    %32 = vector.broadcast %cst_16 : f32 to vector<512x8xf32>
    %33 = arith.addf %32, %31 : vector<512x8xf32>
    %cst_17 = arith.constant 1.000000e+00 : f32
    %34 = vector.broadcast %cst_17 : f32 to vector<512x8xf32>
    %35 = arith.divf %34, %33 : vector<512x8xf32>
    %c0_18 = arith.constant 0 : index
    %c0_19 = arith.constant 0 : index
    %36 = vector.load %arg5[%c0_18, %c0_19] : memref<512x8xf32, #tpu.memory_space<vmem>>, vector<512x8xf32>
    tpu.vector_store %arg5[%c0_18, %c0_19], %35 {strides = array<i32>} : memref<512x8xf32, #tpu.memory_space<vmem>>, vector<512x8xf32>,
    return
  }
  func.func @transform_0(%arg0: i32) -> (i32, i32) {
    %c0_i32 = arith.constant 0 : i32
    %c0_i32_0 = arith.constant 0 : i32
    %c0_i32_1 = arith.constant 0 : i32
    return %c0_i32, %c0_i32_0 : i32, i32
  }
  func.func @transform_1(%arg0: i32) -> (i32, i32, i32) {
    %c0_i32 = arith.constant 0 : i32
    %c0_i32_0 = arith.constant 0 : i32
    %c0_i32_1 = arith.constant 0 : i32
    %c0_i32_2 = arith.constant 0 : i32
    return %c0_i32, %c0_i32_0, %c0_i32_1 : i32, i32, i32
  }
  func.func @transform_2(%arg0: i32) -> (i32, i32) {
    %c0_i32 = arith.constant 0 : i32
    %c0_i32_0 = arith.constant 0 : i32
    %c0_i32_1 = arith.constant 0 : i32
    return %c0_i32, %c0_i32_0 : i32, i32
  }
  func.func @transform_3(%arg0: i32) -> (i32, i32) {
    %c0_i32 = arith.constant 0 : i32
    %c0_i32_0 = arith.constant 0 : i32
    %c0_i32_1 = arith.constant 0 : i32
    return %c0_i32, %c0_i32_0 : i32, i32
  }
  func.func @transform_4(%arg0: i32) -> (i32, i32) {
    %c0_i32 = arith.constant 0 : i32
    %c0_i32_0 = arith.constant 0 : i32
    return %arg0, %c0_i32 : i32, i32
  }
}

</mosaic_0001>

<llo_original>
// kernel: conv_normN_AE_forward.5
$region0: #{conv_normN_AE_forward.5}
  #allocation0 [shape = 'u32[]', space=smem, size = 0x4, offset = 0x4, fixed_abs, tag = 'smem constant byte address 0x4 - core index']
  #allocation1 [shape = 'u32[144,128]{1,0:T(1,128)}', space=vmem, size = 0x12000, scoped, tag = 'internal scratch']
  %s0 = inlined_call_operand.vmem [shape: f32[528,32], index: 0, kind: input, shape index: {}]
  %s1 = inlined_call_operand.vmem [shape: f32[2,32,64], index: 1, kind: input, shape index: {}]
  %s2 = inlined_call_operand.vmem [shape: f32[1,64], index: 2, kind: input, shape index: {}]
  %s3 = inlined_call_operand.vmem [shape: f32[1,64], index: 3, kind: input, shape index: {}]
  %s4 = inlined_call_operand.vmem [shape: f32[512,64], index: 4, kind: output, shape index: {}]
  %s5 = sld [smem:[#allocation0]]
  $region49: #{conv_normN_AE_forward.5} parent=0
    _
  %s7 = ssub.s32 1, %s5
  %s8 = scalar_select 0, %s7, %s5
  loop: start=0, step=1, limit=4
  $region2: #{conv_normN_AE_forward.5} parent=0 // loop_pre_header
    _
  $region3: #{conv_normN_AE_forward.5} parent=0 // loop_header
    %s10 = sphi 0, %s14
    %p11 = scmp.ge.s32.totalorder %s10, 4
    %s18 = sphi 0, %s18
    %s20 = sphi 0, %s18
    %s21 = sphi 0, %s20
    %s35 = sphi 0, %s21
    %s39 = sphi 0, %s39
    %s41 = sphi 0, %s39
    %s42 = sphi 0, %s41
    %s56 = sphi 0, %s42
    %s60 = sphi 0, %s60
    %s62 = sphi 0, %s60
    %s63 = sphi 0, %s62
    %s77 = sphi 0, %s63
    %s81 = sphi 0, %s81
    %s83 = sphi 0, %s81
    %s84 = sphi 0, %s83
    %s98 = sphi 0, %s84
    %s104 = sphi 0, %s106
    %s107 = sphi 0, %s104
    %s108 = sphi 0, %s107
    %s124 = sphi 0, %s108
  $region4: #{conv_normN_AE_forward.5} parent=0 // loop_header_branch
    %13 = sbr.rel (%p11) target = $region8
  $region5: #{conv_normN_AE_forward.5} parent=0 // loop_body
    %s15 = ssub.s32 %s10, 1
    %s16 = ssub.s32 %s10, 2
    %s17 = sadd.s32 %s10, 1
    %s19 = sadd.s32 %s18, 1
    %p22 = scmp.eq.s32.totalorder %s10, 1
    %p23 = scmp.ne.s32.totalorder %s18, %s20
    %p24 = scmp.eq.s32.totalorder %s10, 0
    %p25 = por %p23, %p24
    %p26 = scmp.ne.s32.totalorder %s18, %s20
    %p27 = scmp.eq.s32.totalorder %s15, 1
    %p28 = por %p26, %p27
    %p29 = scmp.ne.s32.totalorder %s20, %s21
    %p30 = scmp.eq.s32.totalorder %s15, 0
    %p31 = por %p29, %p30
    %p32 = scmp.ne.s32.totalorder %s20, %s21
    %p33 = scmp.eq.s32.totalorder %s16, 1
    %p34 = por %p32, %p33
    %p36 = scmp.ne.s32.totalorder %s21, %s35
    %p37 = scmp.eq.s32.totalorder %s16, 0
    %p38 = por %p36, %p37
    %s40 = sadd.s32 %s39, 1
    %p43 = scmp.eq.s32.totalorder %s10, 1
    %p44 = scmp.ne.s32.totalorder %s39, %s41
    %p45 = scmp.eq.s32.totalorder %s10, 0
    %p46 = por %p44, %p45
    %p47 = scmp.ne.s32.totalorder %s39, %s41
    %p48 = scmp.eq.s32.totalorder %s15, 1
    %p49 = por %p47, %p48
    %p50 = scmp.ne.s32.totalorder %s41, %s42
    %p51 = scmp.eq.s32.totalorder %s15, 0
    %p52 = por %p50, %p51
    %p53 = scmp.ne.s32.totalorder %s41, %s42
    %p54 = scmp.eq.s32.totalorder %s16, 1
    %p55 = por %p53, %p54
    %p57 = scmp.ne.s32.totalorder %s42, %s56
    %p58 = scmp.eq.s32.totalorder %s16, 0
    %p59 = por %p57, %p58
    %s61 = sadd.s32 %s60, 1
    %p64 = scmp.eq.s32.totalorder %s10, 1
    %p65 = scmp.ne.s32.totalorder %s60, %s62
    %p66 = scmp.eq.s32.totalorder %s10, 0
    %p67 = por %p65, %p66
    %p68 = scmp.ne.s32.totalorder %s60, %s62
    %p69 = scmp.eq.s32.totalorder %s15, 1
    %p70 = por %p68, %p69
    %p71 = scmp.ne.s32.totalorder %s62, %s63
    %p72 = scmp.eq.s32.totalorder %s15, 0
    %p73 = por %p71, %p72
    %p74 = scmp.ne.s32.totalorder %s62, %s63
    %p75 = scmp.eq.s32.totalorder %s16, 1
    %p76 = por %p74, %p75
    %p78 = scmp.ne.s32.totalorder %s63, %s77
    %p79 = scmp.eq.s32.totalorder %s16, 0
    %p80 = por %p78, %p79
    %s82 = sadd.s32 %s81, 1
    %p85 = scmp.eq.s32.totalorder %s10, 1
    %p86 = scmp.ne.s32.totalorder %s81, %s83
    %p87 = scmp.eq.s32.totalorder %s10, 0
    %p88 = por %p86, %p87
    %p89 = scmp.ne.s32.totalorder %s81, %s83
    %p90 = scmp.eq.s32.totalorder %s15, 1
    %p91 = por %p89, %p90
    %p92 = scmp.ne.s32.totalorder %s83, %s84
    %p93 = scmp.eq.s32.totalorder %s15, 0
    %p94 = por %p92, %p93
    %p95 = scmp.ne.s32.totalorder %s83, %s84
    %p96 = scmp.eq.s32.totalorder %s16, 1
    %p97 = por %p95, %p96
    %p99 = scmp.ne.s32.totalorder %s84, %s98
    %p100 = scmp.eq.s32.totalorder %s16, 0
    %p101 = por %p99, %p100
    %s102 = ssub.s32 %s10, %s17
    %p103 = scmp.eq.s32.totalorder %s102, 0
    %s105 = sadd.s32 %s104, 1
    %s106 = scalar_select %p103, %s104, %s105
    %p109 = pneg %p103
    %p110 = scmp.eq.s32.totalorder %s10, 1
    %p111 = por %p109, %p110
    %p112 = scmp.ne.s32.totalorder %s104, %s107
    %p113 = scmp.eq.s32.totalorder %s10, 0
    %p114 = por %p112, %p113
    %p115 = scmp.ne.s32.totalorder %s104, %s107
    %p116 = scmp.eq.s32.totalorder %s15, 1
    %p117 = por %p115, %p116
    %p118 = scmp.ne.s32.totalorder %s107, %s108
    %p119 = scmp.eq.s32.totalorder %s15, 0
    %p120 = por %p118, %p119
    %p121 = scmp.ne.s32.totalorder %s107, %s108
    %p122 = scmp.eq.s32.totalorder %s16, 1
    %p123 = por %p121, %p122
    %p125 = scmp.ne.s32.totalorder %s108, %s124
    %p126 = scmp.eq.s32.totalorder %s16, 0
    %p127 = por %p125, %p126
    %p128 = scmp.le.s32.totalorder 1, %s10
    %p129 = scmp.lt.s32.totalorder %s10, 3
    %p130 = pnand %p128, %p129
    %p131 = pneg %p130
    // Predicated region
    $region9: #{conv_normN_AE_forward.5} parent=5 // pred_check
      _
    $region10: #{conv_normN_AE_forward.5} parent=5 // pred_check_branch
      %133 = sbr.rel (%p130) target = $region12
    $region11: #{conv_normN_AE_forward.5} parent=5 // pred_region
      %s134 = ssub.s32 %s10, 1
      // Predicated region
      $region13: #{conv_normN_AE_forward.5} parent=11 // pred_check
        %p135 = pneg %p31
      $region14: #{conv_normN_AE_forward.5} parent=11 // pred_check_branch
        %137 = sbr.rel (%p135) target = $region16
      $region15: #{conv_normN_AE_forward.5} parent=11 // pred_region
        _
      $region16: #{conv_normN_AE_forward.5} parent=11 // pred_fallthru
        _
      // Predicated region
      $region17: #{conv_normN_AE_forward.5} parent=11 // pred_check
        %p138 = pneg %p52
      $region18: #{conv_normN_AE_forward.5} parent=11 // pred_check_branch
        %140 = sbr.rel (%p138) target = $region20
      $region19: #{conv_normN_AE_forward.5} parent=11 // pred_region
        _
      $region20: #{conv_normN_AE_forward.5} parent=11 // pred_fallthru
        _
      // Predicated region
      $region21: #{conv_normN_AE_forward.5} parent=11 // pred_check
        %p141 = pneg %p73
      $region22: #{conv_normN_AE_forward.5} parent=11 // pred_check_branch
        %143 = sbr.rel (%p141) target = $region24
      $region23: #{conv_normN_AE_forward.5} parent=11 // pred_region
        _
      $region24: #{conv_normN_AE_forward.5} parent=11 // pred_fallthru
        _
      // Predicated region
      $region25: #{conv_normN_AE_forward.5} parent=11 // pred_check
        %p144 = pneg %p94
      $region26: #{conv_normN_AE_forward.5} parent=11 // pred_check_branch
        %146 = sbr.rel (%p144) target = $region28
      $region27: #{conv_normN_AE_forward.5} parent=11 // pred_region
        _
      $region28: #{conv_normN_AE_forward.5} parent=11 // pred_fallthru
        _
    $region12: #{conv_normN_AE_forward.5} parent=5 // pred_fallthru
      _
    %p147 = scmp.lt.s32.totalorder %s10, 2
    // Predicated region
    $region29: #{conv_normN_AE_forward.5} parent=5 // pred_check
      %p148 = pneg %p147
    $region30: #{conv_normN_AE_forward.5} parent=5 // pred_check_branch
      %150 = sbr.rel (%p148) target = $region32
    $region31: #{conv_normN_AE_forward.5} parent=5 // pred_region
      _
    $region32: #{conv_normN_AE_forward.5} parent=5 // pred_fallthru
      _
    %p151 = scmp.le.s32.totalorder 1, %s10
    %p152 = scmp.lt.s32.totalorder %s10, 3
    %p153 = pnand %p151, %p152
    %p154 = pneg %p153
    // Predicated region
    $region33: #{conv_normN_AE_forward.5} parent=5 // pred_check
      _
    $region34: #{conv_normN_AE_forward.5} parent=5 // pred_check_branch
      %156 = sbr.rel (%p153) target = $region36
    $region35: #{conv_normN_AE_forward.5} parent=5 // pred_region
      %s157 = ssub.s32 %s10, 1
      %p158 = pneg %p31
      %p159 = pneg %p28
      %p160 = pneg %p52
      %p161 = pneg %p49
      %p162 = pneg %p73
      %p163 = pneg %p70
      %p164 = pneg %p94
      %p165 = pneg %p91
      %p166 = pneg %p120
      %p167 = pneg %p117
      %s168 = smul.u32 32, %s15
      %p169 = scmp.lt.s32.totalorder %s168, 63
      %s170 = scalar_select %p169, %s168, 63
      %s171 = smul.addr %s170, 8
      %s172 = scalar_lea.vmem %s4, %s171
      %s173 = smul.u32 32, %s15
      %p174 = scmp.lt.s32.totalorder %s173, 63
      %s175 = scalar_select %p174, %s173, 63
      %s176 = smul.addr %s175, 8
      %s177 = scalar_lea.vmem %s4, %s176
      %s178 = smul.u32 32, %s15
      %s179 = smul.u32 %s15, 256
      %s180 = scalar_lea.vmem %s0, %s179
      %v181 = vld [vmem:[%s180] sm:$0xff]
      %v182 = vld [vmem:[%s180 + $0x8] sm:$0xff]
      %v183 = vld [vmem:[%s180 + $0x10] sm:$0xff]
      %v184 = vld [vmem:[%s180 + $0x18] sm:$0xff]
      %v185 = vld [vmem:[%s180 + $0x20] sm:$0xff]
      %v186 = vld [vmem:[%s180 + $0x28] sm:$0xff]
      %v187 = vld [vmem:[%s180 + $0x30] sm:$0xff]
      %v188 = vld [vmem:[%s180 + $0x38] sm:$0xff]
      %v189 = vld [vmem:[%s180 + $0x40] sm:$0xff]
      %v190 = vld [vmem:[%s180 + $0x48] sm:$0xff]
      %v191 = vld [vmem:[%s180 + $0x50] sm:$0xff]
      %v192 = vld [vmem:[%s180 + $0x58] sm:$0xff]
      %v193 = vld [vmem:[%s180 + $0x60] sm:$0xff]
      %v194 = vld [vmem:[%s180 + $0x68] sm:$0xff]
      %v195 = vld [vmem:[%s180 + $0x70] sm:$0xff]
      %v196 = vld [vmem:[%s180 + $0x78] sm:$0xff]
      %v197 = vld [vmem:[%s180 + $0x80] sm:$0xff]
      %v198 = vld [vmem:[%s180 + $0x88] sm:$0xff]
      %v199 = vld [vmem:[%s180 + $0x90] sm:$0xff]
      %v200 = vld [vmem:[%s180 + $0x98] sm:$0xff]
      %v201 = vld [vmem:[%s180 + $0xa0] sm:$0xff]
      %v202 = vld [vmem:[%s180 + $0xa8] sm:$0xff]
      %v203 = vld [vmem:[%s180 + $0xb0] sm:$0xff]
      %v204 = vld [vmem:[%s180 + $0xb8] sm:$0xff]
      %v205 = vld [vmem:[%s180 + $0xc0] sm:$0xff]
      %v206 = vld [vmem:[%s180 + $0xc8] sm:$0xff]
      %v207 = vld [vmem:[%s180 + $0xd0] sm:$0xff]
      %v208 = vld [vmem:[%s180 + $0xd8] sm:$0xff]
      %v209 = vld [vmem:[%s180 + $0xe0] sm:$0xff]
      %v210 = vld [vmem:[%s180 + $0xe8] sm:$0xff]
      %v211 = vld [vmem:[%s180 + $0xf0] sm:$0xff]
      %v212 = vld [vmem:[%s180 + $0xf8] sm:$0xff]
      %v213 = vld [vmem:[%s1] sm:$0xff]
      %v214 = vld [vmem:[%s1 + $0x8] sm:$0xff]
      %v215 = vld [vmem:[%s1 + $0x10] sm:$0xff]
      %v216 = vld [vmem:[%s1 + $0x18] sm:$0xff]
      %s217 = sadd.s32 %s179, 16
      %s218 = scalar_lea.vmem %s0, %s217
      %v219 = vld [vmem:[%s218] sm:$0xff]
      %v220 = vld [vmem:[%s218 + $0x8] sm:$0xff]
      %v221 = vld [vmem:[%s218 + $0x10] sm:$0xff]
      %v222 = vld [vmem:[%s218 + $0x18] sm:$0xff]
      %v223 = vld [vmem:[%s218 + $0x20] sm:$0xff]
      %v224 = vld [vmem:[%s218 + $0x28] sm:$0xff]
      %v225 = vld [vmem:[%s218 + $0x30] sm:$0xff]
      %v226 = vld [vmem:[%s218 + $0x38] sm:$0xff]
      %v227 = vld [vmem:[%s218 + $0x40] sm:$0xff]
      %v228 = vld [vmem:[%s218 + $0x48] sm:$0xff]
      %v229 = vld [vmem:[%s218 + $0x50] sm:$0xff]
      %v230 = vld [vmem:[%s218 + $0x58] sm:$0xff]
      %v231 = vld [vmem:[%s218 + $0x60] sm:$0xff]
      %v232 = vld [vmem:[%s218 + $0x68] sm:$0xff]
      %v233 = vld [vmem:[%s218 + $0x70] sm:$0xff]
      %v234 = vld [vmem:[%s218 + $0x78] sm:$0xff]
      %v235 = vld [vmem:[%s218 + $0x80] sm:$0xff]
      %v236 = vld [vmem:[%s218 + $0x88] sm:$0xff]
      %v237 = vld [vmem:[%s218 + $0x90] sm:$0xff]
      %v238 = vld [vmem:[%s218 + $0x98] sm:$0xff]
      %v239 = vld [vmem:[%s218 + $0xa0] sm:$0xff]
      %v240 = vld [vmem:[%s218 + $0xa8] sm:$0xff]
      %v241 = vld [vmem:[%s218 + $0xb0] sm:$0xff]
      %v242 = vld [vmem:[%s218 + $0xb8] sm:$0xff]
      %v243 = vld [vmem:[%s218 + $0xc0] sm:$0xff]
      %v244 = vld [vmem:[%s218 + $0xc8] sm:$0xff]
      %v245 = vld [vmem:[%s218 + $0xd0] sm:$0xff]
      %v246 = vld [vmem:[%s218 + $0xd8] sm:$0xff]
      %v247 = vld [vmem:[%s218 + $0xe0] sm:$0xff]
      %v248 = vld [vmem:[%s218 + $0xe8] sm:$0xff]
      %v249 = vld [vmem:[%s218 + $0xf0] sm:$0xff]
      %v250 = vld [vmem:[%s218 + $0xf8] sm:$0xff]
      %s251 = scalar_lea.vmem %s1, 32
      %v252 = vld [vmem:[%s251] sm:$0xff]
      %v253 = vld [vmem:[%s251 + $0x8] sm:$0xff]
      %v254 = vld [vmem:[%s251 + $0x10] sm:$0xff]
      %v255 = vld [vmem:[%s251 + $0x18] sm:$0xff]
      %vm256 = vcmask 261120
      %v258 = vsel %vm256, %v219, 0
      %v261 = vsel %vm256, %v220, 0
      %v264 = vsel %vm256, %v221, 0
      %v267 = vsel %vm256, %v222, 0
      %v270 = vsel %vm256, %v223, 0
      %v273 = vsel %vm256, %v224, 0
      %v276 = vsel %vm256, %v225, 0
      %v279 = vsel %vm256, %v226, 0
      %v282 = vsel %vm256, %v227, 0
      %v285 = vsel %vm256, %v228, 0
      %v288 = vsel %vm256, %v229, 0
      %v291 = vsel %vm256, %v230, 0
      %v294 = vsel %vm256, %v231, 0
      %v297 = vsel %vm256, %v232, 0
      %v300 = vsel %vm256, %v233, 0
      %v303 = vsel %vm256, %v234, 0
      %v306 = vsel %vm256, %v235, 0
      %v309 = vsel %vm256, %v236, 0
      %v312 = vsel %vm256, %v237, 0
      %v315 = vsel %vm256, %v238, 0
      %v318 = vsel %vm256, %v239, 0
      %v321 = vsel %vm256, %v240, 0
      %v324 = vsel %vm256, %v241, 0
      %v327 = vsel %vm256, %v242, 0
      %v330 = vsel %vm256, %v243, 0
      %v333 = vsel %vm256, %v244, 0
      %v336 = vsel %vm256, %v245, 0
      %v339 = vsel %vm256, %v246, 0
      %v342 = vsel %vm256, %v247, 0
      %v345 = vsel %vm256, %v248, 0
      %v348 = vsel %vm256, %v249, 0
      %v351 = vsel %vm256, %v250, 0
      %353 = vmatprep.subr.mxu0 0.0
      %354 = vmatpush1.msra.mxu0 0.0
      %355 = vmatprep.subr.mxu0 0.0
      %356 = vmatpush1.msra.mxu0 0.0
      %357 = vmatprep.subr.mxu0 0.0
      %358 = vmatpush1.msra.mxu0 0.0
      %359 = vmatprep.subr.mxu0 0.0
      %360 = vmatpush1.msra.mxu0 0.0
      %361 = vmatprep.subr.mxu0 0.0
      %362 = vmatpush1.msra.mxu0 0.0
      %363 = vmatprep.subr.mxu0 0.0
      %364 = vmatpush1.msra.mxu0 0.0
      %365 = vmatprep.subr.mxu0 0.0
      %366 = vmatpush1.msra.mxu0 0.0
      %367 = vmatprep.subr.mxu0 0.0
      %368 = vmatpush1.msra.mxu0 0.0
      %369 = vmatprep.subr.mxu0 0.0
      %370 = vmatpush1.msra.mxu0 0.0
      %371 = vmatprep.subr.mxu0 0.0
      %372 = vmatpush1.msra.mxu0 0.0
      %373 = vmatprep.subr.mxu0 0.0
      %374 = vmatpush1.msra.mxu0 0.0
      %375 = vmatprep.subr.mxu0 0.0
      %376 = vmatpush1.msra.mxu0 0.0
      %377 = vmatprep.subr.mxu0 0.0
      %378 = vmatpush1.msra.mxu0 %v255
      %379 = vmatprep.subr.mxu0 0.0
      %380 = vmatpush1.msra.mxu0 %v254
      %381 = vmatprep.subr.mxu0 0.0
      %382 = vmatpush1.msra.mxu0 %v253
      %383 = vmatprep.subr.mxu0 0.0
      %384 = vmatpush1.msra.mxu0 %v252
      %385 = vmatprep.subr.mxu0 0.0
      %386 = vmatpush2.msra.mxu0 0.0
      %387 = vmatprep.subr.mxu0 0.0
      %388 = vmatpush2.msra.mxu0 0.0
      %389 = vmatprep.subr.mxu0 0.0
      %390 = vmatpush2.msra.mxu0 0.0
      %391 = vmatprep.subr.mxu0 0.0
      %392 = vmatpush2.msra.mxu0 0.0
      %393 = vmatprep.subr.mxu0 0.0
      %394 = vmatpush2.msra.mxu0 0.0
      %395 = vmatprep.subr.mxu0 0.0
      %396 = vmatpush2.msra.mxu0 0.0
      %397 = vmatprep.subr.mxu0 0.0
      %398 = vmatpush2.msra.mxu0 0.0
      %399 = vmatprep.subr.mxu0 0.0
      %400 = vmatpush2.msra.mxu0 0.0
      %401 = vmatprep.subr.mxu0 0.0
      %402 = vmatpush2.msra.mxu0 0.0
      %403 = vmatprep.subr.mxu0 0.0
      %404 = vmatpush2.msra.mxu0 0.0
      %405 = vmatprep.subr.mxu0 0.0
      %406 = vmatpush2.msra.mxu0 0.0
      %407 = vmatprep.subr.mxu0 0.0
      %408 = vmatpush2.msra.mxu0 0.0
      %409 = vmatprep.subr.mxu0 0.0
      %410 = vmatpush2.msra.mxu0 0.0
      %411 = vmatprep.subr.mxu0 0.0
      %412 = vmatpush2.msra.mxu0 0.0
      %413 = vmatprep.subr.mxu0 0.0
      %414 = vmatpush2.msra.mxu0 0.0
      %415 = vmatprep.subr.mxu0 0.0
      %416 = vmatpush2.msra.mxu0 0.0
      %417 = vmatprep.mubr.f32.mxu0 0.0
      %418 = vmatmul.mubr.f32.gmra.mxu0 %v258
      %v419 = vpop.f32.mrf.mxu0
      %v420 = vadd.f32 0.0, %v419
      %v421 = vpop.f32.mrf.mxu0
      %422 = vmatprep.mubr.f32.mxu0 0.0
      %423 = vmatmul.mubr.f32.gmra.mxu0 %v261
      %v424 = vpop.f32.mrf.mxu0
      %v425 = vadd.f32 0.0, %v424
      %v426 = vpop.f32.mrf.mxu0
      %427 = vmatprep.mubr.f32.mxu0 0.0
      %428 = vmatmul.mubr.f32.gmra.mxu0 %v264
      %v429 = vpop.f32.mrf.mxu0
      %v430 = vadd.f32 0.0, %v429
      %v431 = vpop.f32.mrf.mxu0
      %432 = vmatprep.mubr.f32.mxu0 0.0
      %433 = vmatmul.mubr.f32.gmra.mxu0 %v267
      %v434 = vpop.f32.mrf.mxu0
      %v435 = vadd.f32 0.0, %v434
      %v436 = vpop.f32.mrf.mxu0
      %437 = vmatprep.mubr.f32.mxu0 0.0
      %438 = vmatmul.mubr.f32.gmra.mxu0 %v270
      %v439 = vpop.f32.mrf.mxu0
      %v440 = vadd.f32 0.0, %v439
      %v441 = vpop.f32.mrf.mxu0
      %442 = vmatprep.mubr.f32.mxu0 0.0
      %443 = vmatmul.mubr.f32.gmra.mxu0 %v273
      %v444 = vpop.f32.mrf.mxu0
      %v445 = vadd.f32 0.0, %v444
      %v446 = vpop.f32.mrf.mxu0
      %447 = vmatprep.mubr.f32.mxu0 0.0
      %448 = vmatmul.mubr.f32.gmra.mxu0 %v276
      %v449 = vpop.f32.mrf.mxu0
      %v450 = vadd.f32 0.0, %v449
      %v451 = vpop.f32.mrf.mxu0
      %452 = vmatprep.mubr.f32.mxu0 0.0
      %453 = vmatmul.mubr.f32.gmra.mxu0 %v279
      %v454 = vpop.f32.mrf.mxu0
      %v455 = vadd.f32 0.0, %v454
      %v456 = vpop.f32.mrf.mxu0
      %457 = vmatprep.mubr.f32.mxu0 0.0
      %458 = vmatmul.mubr.f32.gmra.mxu0 %v282
      %v459 = vpop.f32.mrf.mxu0
      %v460 = vadd.f32 0.0, %v459
      %v461 = vpop.f32.mrf.mxu0
      %462 = vmatprep.mubr.f32.mxu0 0.0
      %463 = vmatmul.mubr.f32.gmra.mxu0 %v285
      %v464 = vpop.f32.mrf.mxu0
      %v465 = vadd.f32 0.0, %v464
      %v466 = vpop.f32.mrf.mxu0
      %467 = vmatprep.mubr.f32.mxu0 0.0
      %468 = vmatmul.mubr.f32.gmra.mxu0 %v288
      %v469 = vpop.f32.mrf.mxu0
      %v470 = vadd.f32 0.0, %v469
      %v471 = vpop.f32.mrf.mxu0
      %472 = vmatprep.mubr.f32.mxu0 0.0
      %473 = vmatmul.mubr.f32.gmra.mxu0 %v291
      %v474 = vpop.f32.mrf.mxu0
      %v475 = vadd.f32 0.0, %v474
      %v476 = vpop.f32.mrf.mxu0
      %477 = vmatprep.mubr.f32.mxu0 0.0
      %478 = vmatmul.mubr.f32.gmra.mxu0 %v294
      %v479 = vpop.f32.mrf.mxu0
      %v480 = vadd.f32 0.0, %v479
      %v481 = vpop.f32.mrf.mxu0
      %482 = vmatprep.mubr.f32.mxu0 0.0
      %483 = vmatmul.mubr.f32.gmra.mxu0 %v297
      %v484 = vpop.f32.mrf.mxu0
      %v485 = vadd.f32 0.0, %v484
      %v486 = vpop.f32.mrf.mxu0
      %487 = vmatprep.mubr.f32.mxu0 0.0
      %488 = vmatmul.mubr.f32.gmra.mxu0 %v300
      %v489 = vpop.f32.mrf.mxu0
      %v490 = vadd.f32 0.0, %v489
      %v491 = vpop.f32.mrf.mxu0
      %492 = vmatprep.mubr.f32.mxu0 0.0
      %493 = vmatmul.mubr.f32.gmra.mxu0 %v303
      %v494 = vpop.f32.mrf.mxu0
      %v495 = vadd.f32 0.0, %v494
      %v496 = vpop.f32.mrf.mxu0
      %497 = vmatprep.mubr.f32.mxu0 0.0
      %498 = vmatmul.mubr.f32.gmra.mxu0 %v306
      %v499 = vpop.f32.mrf.mxu0
      %v500 = vadd.f32 0.0, %v499
      %v501 = vpop.f32.mrf.mxu0
      %502 = vmatprep.mubr.f32.mxu0 0.0
      %503 = vmatmul.mubr.f32.gmra.mxu0 %v309
      %v504 = vpop.f32.mrf.mxu0
      %v505 = vadd.f32 0.0, %v504
      %v506 = vpop.f32.mrf.mxu0
      %507 = vmatprep.mubr.f32.mxu0 0.0
      %508 = vmatmul.mubr.f32.gmra.mxu0 %v312
      %v509 = vpop.f32.mrf.mxu0
      %v510 = vadd.f32 0.0, %v509
      %v511 = vpop.f32.mrf.mxu0
      %512 = vmatprep.mubr.f32.mxu0 0.0
      %513 = vmatmul.mubr.f32.gmra.mxu0 %v315
      %v514 = vpop.f32.mrf.mxu0
      %v515 = vadd.f32 0.0, %v514
      %v516 = vpop.f32.mrf.mxu0
      %517 = vmatprep.mubr.f32.mxu0 0.0
      %518 = vmatmul.mubr.f32.gmra.mxu0 %v318
      %v519 = vpop.f32.mrf.mxu0
      %v520 = vadd.f32 0.0, %v519
      %v521 = vpop.f32.mrf.mxu0
      %522 = vmatprep.mubr.f32.mxu0 0.0
      %523 = vmatmul.mubr.f32.gmra.mxu0 %v321
      %v524 = vpop.f32.mrf.mxu0
      %v525 = vadd.f32 0.0, %v524
      %v526 = vpop.f32.mrf.mxu0
      %527 = vmatprep.mubr.f32.mxu0 0.0
      %528 = vmatmul.mubr.f32.gmra.mxu0 %v324
      %v529 = vpop.f32.mrf.mxu0
      %v530 = vadd.f32 0.0, %v529
      %v531 = vpop.f32.mrf.mxu0
      %532 = vmatprep.mubr.f32.mxu0 0.0
      %533 = vmatmul.mubr.f32.gmra.mxu0 %v327
      %v534 = vpop.f32.mrf.mxu0
      %v535 = vadd.f32 0.0, %v534
      %v536 = vpop.f32.mrf.mxu0
      %537 = vmatprep.mubr.f32.mxu0 0.0
      %538 = vmatmul.mubr.f32.gmra.mxu0 %v330
      %v539 = vpop.f32.mrf.mxu0
      %v540 = vadd.f32 0.0, %v539
      %v541 = vpop.f32.mrf.mxu0
      %542 = vmatprep.mubr.f32.mxu0 0.0
      %543 = vmatmul.mubr.f32.gmra.mxu0 %v333
      %v544 = vpop.f32.mrf.mxu0
      %v545 = vadd.f32 0.0, %v544
      %v546 = vpop.f32.mrf.mxu0
      %547 = vmatprep.mubr.f32.mxu0 0.0
      %548 = vmatmul.mubr.f32.gmra.mxu0 %v336
      %v549 = vpop.f32.mrf.mxu0
      %v550 = vadd.f32 0.0, %v549
      %v551 = vpop.f32.mrf.mxu0
      %552 = vmatprep.mubr.f32.mxu0 0.0
      %553 = vmatmul.mubr.f32.gmra.mxu0 %v339
      %v554 = vpop.f32.mrf.mxu0
      %v555 = vadd.f32 0.0, %v554
      %v556 = vpop.f32.mrf.mxu0
      %557 = vmatprep.mubr.f32.mxu0 0.0
      %558 = vmatmul.mubr.f32.gmra.mxu0 %v342
      %v559 = vpop.f32.mrf.mxu0
      %v560 = vadd.f32 0.0, %v559
      %v561 = vpop.f32.mrf.mxu0
      %562 = vmatprep.mubr.f32.mxu0 0.0
      %563 = vmatmul.mubr.f32.gmra.mxu0 %v345
      %v564 = vpop.f32.mrf.mxu0
      %v565 = vadd.f32 0.0, %v564
      %v566 = vpop.f32.mrf.mxu0
      %567 = vmatprep.mubr.f32.mxu0 0.0
      %568 = vmatmul.mubr.f32.gmra.mxu0 %v348
      %v569 = vpop.f32.mrf.mxu0
      %v570 = vadd.f32 0.0, %v569
      %v571 = vpop.f32.mrf.mxu0
      %572 = vmatprep.mubr.f32.mxu0 0.0
      %573 = vmatmul.mubr.f32.gmra.mxu0 %v351
      %v574 = vpop.f32.mrf.mxu0
      %v575 = vadd.f32 0.0, %v574
      %v576 = vpop.f32.mrf.mxu0
      %577 = vdwg.mxu0
      %v579 = vsel %vm256, %v181, 0
      %v582 = vsel %vm256, %v182, 0
      %v585 = vsel %vm256, %v183, 0
      %v588 = vsel %vm256, %v184, 0
      %v591 = vsel %vm256, %v185, 0
      %v594 = vsel %vm256, %v186, 0
      %v597 = vsel %vm256, %v187, 0
      %v600 = vsel %vm256, %v188, 0
      %v603 = vsel %vm256, %v189, 0
      %v606 = vsel %vm256, %v190, 0
      %v609 = vsel %vm256, %v191, 0
      %v612 = vsel %vm256, %v192, 0
      %v615 = vsel %vm256, %v193, 0
      %v618 = vsel %vm256, %v194, 0
      %v621 = vsel %vm256, %v195, 0
      %v624 = vsel %vm256, %v196, 0
      %v627 = vsel %vm256, %v197, 0
      %v630 = vsel %vm256, %v198, 0
      %v633 = vsel %vm256, %v199, 0
      %v636 = vsel %vm256, %v200, 0
      %v639 = vsel %vm256, %v201, 0
      %v642 = vsel %vm256, %v202, 0
      %v645 = vsel %vm256, %v203, 0
      %v648 = vsel %vm256, %v204, 0
      %v651 = vsel %vm256, %v205, 0
      %v654 = vsel %vm256, %v206, 0
      %v657 = vsel %vm256, %v207, 0
      %v660 = vsel %vm256, %v208, 0
      %v663 = vsel %vm256, %v209, 0
      %v666 = vsel %vm256, %v210, 0
      %v669 = vsel %vm256, %v211, 0
      %v672 = vsel %vm256, %v212, 0
      %674 = vmatprep.subr.mxu0 0.0
      %675 = vmatpush1.msra.mxu0 0.0
      %676 = vmatprep.subr.mxu0 0.0
      %677 = vmatpush1.msra.mxu0 0.0
      %678 = vmatprep.subr.mxu0 0.0
      %679 = vmatpush1.msra.mxu0 0.0
      %680 = vmatprep.subr.mxu0 0.0
      %681 = vmatpush1.msra.mxu0 0.0
      %682 = vmatprep.subr.mxu0 0.0
      %683 = vmatpush1.msra.mxu0 0.0
      %684 = vmatprep.subr.mxu0 0.0
      %685 = vmatpush1.msra.mxu0 0.0
      %686 = vmatprep.subr.mxu0 0.0
      %687 = vmatpush1.msra.mxu0 0.0
      %688 = vmatprep.subr.mxu0 0.0
      %689 = vmatpush1.msra.mxu0 0.0
      %690 = vmatprep.subr.mxu0 0.0
      %691 = vmatpush1.msra.mxu0 0.0
      %692 = vmatprep.subr.mxu0 0.0
      %693 = vmatpush1.msra.mxu0 0.0
      %694 = vmatprep.subr.mxu0 0.0
      %695 = vmatpush1.msra.mxu0 0.0
      %696 = vmatprep.subr.mxu0 0.0
      %697 = vmatpush1.msra.mxu0 0.0
      %698 = vmatprep.subr.mxu0 0.0
      %699 = vmatpush1.msra.mxu0 %v216
      %700 = vmatprep.subr.mxu0 0.0
      %701 = vmatpush1.msra.mxu0 %v215
      %702 = vmatprep.subr.mxu0 0.0
      %703 = vmatpush1.msra.mxu0 %v214
      %704 = vmatprep.subr.mxu0 0.0
      %705 = vmatpush1.msra.mxu0 %v213
      %706 = vmatprep.subr.mxu0 0.0
      %707 = vmatpush2.msra.mxu0 0.0
      %708 = vmatprep.subr.mxu0 0.0
      %709 = vmatpush2.msra.mxu0 0.0
      %710 = vmatprep.subr.mxu0 0.0
      %711 = vmatpush2.msra.mxu0 0.0
      %712 = vmatprep.subr.mxu0 0.0
      %713 = vmatpush2.msra.mxu0 0.0
      %714 = vmatprep.subr.mxu0 0.0
      %715 = vmatpush2.msra.mxu0 0.0
      %716 = vmatprep.subr.mxu0 0.0
      %717 = vmatpush2.msra.mxu0 0.0
      %718 = vmatprep.subr.mxu0 0.0
      %719 = vmatpush2.msra.mxu0 0.0
      %720 = vmatprep.subr.mxu0 0.0
      %721 = vmatpush2.msra.mxu0 0.0
      %722 = vmatprep.subr.mxu0 0.0
      %723 = vmatpush2.msra.mxu0 0.0
      %724 = vmatprep.subr.mxu0 0.0
      %725 = vmatpush2.msra.mxu0 0.0
      %726 = vmatprep.subr.mxu0 0.0
      %727 = vmatpush2.msra.mxu0 0.0
      %728 = vmatprep.subr.mxu0 0.0
      %729 = vmatpush2.msra.mxu0 0.0
      %730 = vmatprep.subr.mxu0 0.0
      %731 = vmatpush2.msra.mxu0 0.0
      %732 = vmatprep.subr.mxu0 0.0
      %733 = vmatpush2.msra.mxu0 0.0
      %734 = vmatprep.subr.mxu0 0.0
      %735 = vmatpush2.msra.mxu0 0.0
      %736 = vmatprep.subr.mxu0 0.0
      %737 = vmatpush2.msra.mxu0 0.0
      %738 = vmatprep.mubr.f32.mxu0 0.0
      %739 = vmatmul.mubr.f32.gmra.mxu0 %v579
      %v740 = vpop.f32.mrf.mxu0
      %v741 = vadd.f32 %v420, %v740
      %v742 = vpop.f32.mrf.mxu0
      %743 = vmatprep.mubr.f32.mxu0 0.0
      %744 = vmatmul.mubr.f32.gmra.mxu0 %v582
      %v745 = vpop.f32.mrf.mxu0
      %v746 = vadd.f32 %v425, %v745
      %v747 = vpop.f32.mrf.mxu0
      %748 = vmatprep.mubr.f32.mxu0 0.0
      %749 = vmatmul.mubr.f32.gmra.mxu0 %v585
      %v750 = vpop.f32.mrf.mxu0
      %v751 = vadd.f32 %v430, %v750
      %v752 = vpop.f32.mrf.mxu0
      %753 = vmatprep.mubr.f32.mxu0 0.0
      %754 = vmatmul.mubr.f32.gmra.mxu0 %v588
      %v755 = vpop.f32.mrf.mxu0
      %v756 = vadd.f32 %v435, %v755
      %v757 = vpop.f32.mrf.mxu0
      %758 = vmatprep.mubr.f32.mxu0 0.0
      %759 = vmatmul.mubr.f32.gmra.mxu0 %v591
      %v760 = vpop.f32.mrf.mxu0
      %v761 = vadd.f32 %v440, %v760
      %v762 = vpop.f32.mrf.mxu0
      %763 = vmatprep.mubr.f32.mxu0 0.0
      %764 = vmatmul.mubr.f32.gmra.mxu0 %v594
      %v765 = vpop.f32.mrf.mxu0
      %v766 = vadd.f32 %v445, %v765
      %v767 = vpop.f32.mrf.mxu0
      %768 = vmatprep.mubr.f32.mxu0 0.0
      %769 = vmatmul.mubr.f32.gmra.mxu0 %v597
      %v770 = vpop.f32.mrf.mxu0
      %v771 = vadd.f32 %v450, %v770
      %v772 = vpop.f32.mrf.mxu0
      %773 = vmatprep.mubr.f32.mxu0 0.0
      %774 = vmatmul.mubr.f32.gmra.mxu0 %v600
      %v775 = vpop.f32.mrf.mxu0
      %v776 = vadd.f32 %v455, %v775
      %v777 = vpop.f32.mrf.mxu0
      %778 = vmatprep.mubr.f32.mxu0 0.0
      %779 = vmatmul.mubr.f32.gmra.mxu0 %v603
      %v780 = vpop.f32.mrf.mxu0
      %v781 = vadd.f32 %v460, %v780
      %v782 = vpop.f32.mrf.mxu0
      %783 = vmatprep.mubr.f32.mxu0 0.0
      %784 = vmatmul.mubr.f32.gmra.mxu0 %v606
      %v785 = vpop.f32.mrf.mxu0
      %v786 = vadd.f32 %v465, %v785
      %v787 = vpop.f32.mrf.mxu0
      %788 = vmatprep.mubr.f32.mxu0 0.0
      %789 = vmatmul.mubr.f32.gmra.mxu0 %v609
      %v790 = vpop.f32.mrf.mxu0
      %v791 = vadd.f32 %v470, %v790
      %v792 = vpop.f32.mrf.mxu0
      %793 = vmatprep.mubr.f32.mxu0 0.0
      %794 = vmatmul.mubr.f32.gmra.mxu0 %v612
      %v795 = vpop.f32.mrf.mxu0
      %v796 = vadd.f32 %v475, %v795
      %v797 = vpop.f32.mrf.mxu0
      %798 = vmatprep.mubr.f32.mxu0 0.0
      %799 = vmatmul.mubr.f32.gmra.mxu0 %v615
      %v800 = vpop.f32.mrf.mxu0
      %v801 = vadd.f32 %v480, %v800
      %v802 = vpop.f32.mrf.mxu0
      %803 = vmatprep.mubr.f32.mxu0 0.0
      %804 = vmatmul.mubr.f32.gmra.mxu0 %v618
      %v805 = vpop.f32.mrf.mxu0
      %v806 = vadd.f32 %v485, %v805
      %v807 = vpop.f32.mrf.mxu0
      %808 = vmatprep.mubr.f32.mxu0 0.0
      %809 = vmatmul.mubr.f32.gmra.mxu0 %v621
      %v810 = vpop.f32.mrf.mxu0
      %v811 = vadd.f32 %v490, %v810
      %v812 = vpop.f32.mrf.mxu0
      %813 = vmatprep.mubr.f32.mxu0 0.0
      %814 = vmatmul.mubr.f32.gmra.mxu0 %v624
      %v815 = vpop.f32.mrf.mxu0
      %v816 = vadd.f32 %v495, %v815
      %v817 = vpop.f32.mrf.mxu0
      %818 = vmatprep.mubr.f32.mxu0 0.0
      %819 = vmatmul.mubr.f32.gmra.mxu0 %v627
      %v820 = vpop.f32.mrf.mxu0
      %v821 = vadd.f32 %v500, %v820
      %v822 = vpop.f32.mrf.mxu0
      %823 = vmatprep.mubr.f32.mxu0 0.0
      %824 = vmatmul.mubr.f32.gmra.mxu0 %v630
      %v825 = vpop.f32.mrf.mxu0
      %v826 = vadd.f32 %v505, %v825
      %v827 = vpop.f32.mrf.mxu0
      %828 = vmatprep.mubr.f32.mxu0 0.0
      %829 = vmatmul.mubr.f32.gmra.mxu0 %v633
      %v830 = vpop.f32.mrf.mxu0
      %v831 = vadd.f32 %v510, %v830
      %v832 = vpop.f32.mrf.mxu0
      %833 = vmatprep.mubr.f32.mxu0 0.0
      %834 = vmatmul.mubr.f32.gmra.mxu0 %v636
      %v835 = vpop.f32.mrf.mxu0
      %v836 = vadd.f32 %v515, %v835
      %v837 = vpop.f32.mrf.mxu0
      %838 = vmatprep.mubr.f32.mxu0 0.0
      %839 = vmatmul.mubr.f32.gmra.mxu0 %v639
      %v840 = vpop.f32.mrf.mxu0
      %v841 = vadd.f32 %v520, %v840
      %v842 = vpop.f32.mrf.mxu0
      %843 = vmatprep.mubr.f32.mxu0 0.0
      %844 = vmatmul.mubr.f32.gmra.mxu0 %v642
      %v845 = vpop.f32.mrf.mxu0
      %v846 = vadd.f32 %v525, %v845
      %v847 = vpop.f32.mrf.mxu0
      %848 = vmatprep.mubr.f32.mxu0 0.0
      %849 = vmatmul.mubr.f32.gmra.mxu0 %v645
      %v850 = vpop.f32.mrf.mxu0
      %v851 = vadd.f32 %v530, %v850
      %v852 = vpop.f32.mrf.mxu0
      %853 = vmatprep.mubr.f32.mxu0 0.0
      %854 = vmatmul.mubr.f32.gmra.mxu0 %v648
      %v855 = vpop.f32.mrf.mxu0
      %v856 = vadd.f32 %v535, %v855
      %v857 = vpop.f32.mrf.mxu0
      %858 = vmatprep.mubr.f32.mxu0 0.0
      %859 = vmatmul.mubr.f32.gmra.mxu0 %v651
      %v860 = vpop.f32.mrf.mxu0
      %v861 = vadd.f32 %v540, %v860
      %v862 = vpop.f32.mrf.mxu0
      %863 = vmatprep.mubr.f32.mxu0 0.0
      %864 = vmatmul.mubr.f32.gmra.mxu0 %v654
      %v865 = vpop.f32.mrf.mxu0
      %v866 = vadd.f32 %v545, %v865
      %v867 = vpop.f32.mrf.mxu0
      %868 = vmatprep.mubr.f32.mxu0 0.0
      %869 = vmatmul.mubr.f32.gmra.mxu0 %v657
      %v870 = vpop.f32.mrf.mxu0
      %v871 = vadd.f32 %v550, %v870
      %v872 = vpop.f32.mrf.mxu0
      %873 = vmatprep.mubr.f32.mxu0 0.0
      %874 = vmatmul.mubr.f32.gmra.mxu0 %v660
      %v875 = vpop.f32.mrf.mxu0
      %v876 = vadd.f32 %v555, %v875
      %v877 = vpop.f32.mrf.mxu0
      %878 = vmatprep.mubr.f32.mxu0 0.0
      %879 = vmatmul.mubr.f32.gmra.mxu0 %v663
      %v880 = vpop.f32.mrf.mxu0
      %v881 = vadd.f32 %v560, %v880
      %v882 = vpop.f32.mrf.mxu0
      %883 = vmatprep.mubr.f32.mxu0 0.0
      %884 = vmatmul.mubr.f32.gmra.mxu0 %v666
      %v885 = vpop.f32.mrf.mxu0
      %v886 = vadd.f32 %v565, %v885
      %v887 = vpop.f32.mrf.mxu0
      %888 = vmatprep.mubr.f32.mxu0 0.0
      %889 = vmatmul.mubr.f32.gmra.mxu0 %v669
      %v890 = vpop.f32.mrf.mxu0
      %v891 = vadd.f32 %v570, %v890
      %v892 = vpop.f32.mrf.mxu0
      %893 = vmatprep.mubr.f32.mxu0 0.0
      %894 = vmatmul.mubr.f32.gmra.mxu0 %v672
      %v895 = vpop.f32.mrf.mxu0
      %v896 = vadd.f32 %v575, %v895
      %v897 = vpop.f32.mrf.mxu0
      %898 = vdwg.mxu0
      %v899 = vld [vmem:[%s2] sm:$0x1]
      %v901 = vlaneseq
      %v902 = vshrl.u32 %v901, 7
      %v903 = vsub.s32 0, %v902
      %v904 = vrot.slane %v899, %v903
      %v906 = vmul.f32 %v741, %v904
      %v907 = vmul.f32 %v746, %v904
      %v908 = vmul.f32 %v751, %v904
      %v909 = vmul.f32 %v756, %v904
      %v910 = vmul.f32 %v761, %v904
      %v911 = vmul.f32 %v766, %v904
      %v912 = vmul.f32 %v771, %v904
      %v913 = vmul.f32 %v776, %v904
      %v914 = vmul.f32 %v781, %v904
      %v915 = vmul.f32 %v786, %v904
      %v916 = vmul.f32 %v791, %v904
      %v917 = vmul.f32 %v796, %v904
      %v918 = vmul.f32 %v801, %v904
      %v919 = vmul.f32 %v806, %v904
      %v920 = vmul.f32 %v811, %v904
      %v921 = vmul.f32 %v816, %v904
      %v922 = vmul.f32 %v821, %v904
      %v923 = vmul.f32 %v826, %v904
      %v924 = vmul.f32 %v831, %v904
      %v925 = vmul.f32 %v836, %v904
      %v926 = vmul.f32 %v841, %v904
      %v927 = vmul.f32 %v846, %v904
      %v928 = vmul.f32 %v851, %v904
      %v929 = vmul.f32 %v856, %v904
      %v930 = vmul.f32 %v861, %v904
      %v931 = vmul.f32 %v866, %v904
      %v932 = vmul.f32 %v871, %v904
      %v933 = vmul.f32 %v876, %v904
      %v934 = vmul.f32 %v881, %v904
      %v935 = vmul.f32 %v886, %v904
      %v936 = vmul.f32 %v891, %v904
      %v937 = vmul.f32 %v896, %v904
      %v938 = vld [vmem:[%s3] sm:$0x1]
      %v940 = vlaneseq
      %v941 = vshrl.u32 %v940, 7
      %v942 = vsub.s32 0, %v941
      %v943 = vrot.slane %v938, %v942
      %v945 = vadd.f32 %v906, %v943
      %v946 = vadd.f32 %v907, %v943
      %v947 = vadd.f32 %v908, %v943
      %v948 = vadd.f32 %v909, %v943
      %v949 = vadd.f32 %v910, %v943
      %v950 = vadd.f32 %v911, %v943
      %v951 = vadd.f32 %v912, %v943
      %v952 = vadd.f32 %v913, %v943
      %v953 = vadd.f32 %v914, %v943
      %v954 = vadd.f32 %v915, %v943
      %v955 = vadd.f32 %v916, %v943
      %v956 = vadd.f32 %v917, %v943
      %v957 = vadd.f32 %v918, %v943
      %v958 = vadd.f32 %v919, %v943
      %v959 = vadd.f32 %v920, %v943
      %v960 = vadd.f32 %v921, %v943
      %v961 = vadd.f32 %v922, %v943
      %v962 = vadd.f32 %v923, %v943
      %v963 = vadd.f32 %v924, %v943
      %v964 = vadd.f32 %v925, %v943
      %v965 = vadd.f32 %v926, %v943
      %v966 = vadd.f32 %v927, %v943
      %v967 = vadd.f32 %v928, %v943
      %v968 = vadd.f32 %v929, %v943
      %v969 = vadd.f32 %v930, %v943
      %v970 = vadd.f32 %v931, %v943
      %v971 = vadd.f32 %v932, %v943
      %v972 = vadd.f32 %v933, %v943
      %v973 = vadd.f32 %v934, %v943
      %v974 = vadd.f32 %v935, %v943
      %v975 = vadd.f32 %v936, %v943
      %v976 = vadd.f32 %v937, %v943
      %v977 = vmax.f32 %v945, 0.0
      %v978 = vmax.f32 %v946, 0.0
      %v979 = vmax.f32 %v947, 0.0
      %v980 = vmax.f32 %v948, 0.0
      %v981 = vmax.f32 %v949, 0.0
      %v982 = vmax.f32 %v950, 0.0
      %v983 = vmax.f32 %v951, 0.0
      %v984 = vmax.f32 %v952, 0.0
      %v985 = vmax.f32 %v953, 0.0
      %v986 = vmax.f32 %v954, 0.0
      %v987 = vmax.f32 %v955, 0.0
      %v988 = vmax.f32 %v956, 0.0
      %v989 = vmax.f32 %v957, 0.0
      %v990 = vmax.f32 %v958, 0.0
      %v991 = vmax.f32 %v959, 0.0
      %v992 = vmax.f32 %v960, 0.0
      %v993 = vmax.f32 %v961, 0.0
      %v994 = vmax.f32 %v962, 0.0
      %v995 = vmax.f32 %v963, 0.0
      %v996 = vmax.f32 %v964, 0.0
      %v997 = vmax.f32 %v965, 0.0
      %v998 = vmax.f32 %v966, 0.0
      %v999 = vmax.f32 %v967, 0.0
      %v1000 = vmax.f32 %v968, 0.0
      %v1001 = vmax.f32 %v969, 0.0
      %v1002 = vmax.f32 %v970, 0.0
      %v1003 = vmax.f32 %v971, 0.0
      %v1004 = vmax.f32 %v972, 0.0
      %v1005 = vmax.f32 %v973, 0.0
      %v1006 = vmax.f32 %v974, 0.0
      %v1007 = vmax.f32 %v975, 0.0
      %v1008 = vmax.f32 %v976, 0.0
      %vm1009 = vcmask 523264
      %1010 = vst.msk [vmem:[%s177] sm:$0xff] %vm1009, %v977
      %1011 = vst.msk [vmem:[%s177 + $0x8] sm:$0xff] %vm1009, %v978
      %1012 = vst.msk [vmem:[%s177 + $0x10] sm:$0xff] %vm1009, %v979
      %1013 = vst.msk [vmem:[%s177 + $0x18] sm:$0xff] %vm1009, %v980
      %1014 = vst.msk [vmem:[%s177 + $0x20] sm:$0xff] %vm1009, %v981
      %1015 = vst.msk [vmem:[%s177 + $0x28] sm:$0xff] %vm1009, %v982
      %1016 = vst.msk [vmem:[%s177 + $0x30] sm:$0xff] %vm1009, %v983
      %1017 = vst.msk [vmem:[%s177 + $0x38] sm:$0xff] %vm1009, %v984
      %1018 = vst.msk [vmem:[%s177 + $0x40] sm:$0xff] %vm1009, %v985
      %1019 = vst.msk [vmem:[%s177 + $0x48] sm:$0xff] %vm1009, %v986
      %1020 = vst.msk [vmem:[%s177 + $0x50] sm:$0xff] %vm1009, %v987
      %1021 = vst.msk [vmem:[%s177 + $0x58] sm:$0xff] %vm1009, %v988
      %1022 = vst.msk [vmem:[%s177 + $0x60] sm:$0xff] %vm1009, %v989
      %1023 = vst.msk [vmem:[%s177 + $0x68] sm:$0xff] %vm1009, %v990
      %1024 = vst.msk [vmem:[%s177 + $0x70] sm:$0xff] %vm1009, %v991
      %1025 = vst.msk [vmem:[%s177 + $0x78] sm:$0xff] %vm1009, %v992
      %1026 = vst.msk [vmem:[%s177 + $0x80] sm:$0xff] %vm1009, %v993
      %1027 = vst.msk [vmem:[%s177 + $0x88] sm:$0xff] %vm1009, %v994
      %1028 = vst.msk [vmem:[%s177 + $0x90] sm:$0xff] %vm1009, %v995
      %1029 = vst.msk [vmem:[%s177 + $0x98] sm:$0xff] %vm1009, %v996
      %1030 = vst.msk [vmem:[%s177 + $0xa0] sm:$0xff] %vm1009, %v997
      %1031 = vst.msk [vmem:[%s177 + $0xa8] sm:$0xff] %vm1009, %v998
      %1032 = vst.msk [vmem:[%s177 + $0xb0] sm:$0xff] %vm1009, %v999
      %1033 = vst.msk [vmem:[%s177 + $0xb8] sm:$0xff] %vm1009, %v1000
      %1034 = vst.msk [vmem:[%s177 + $0xc0] sm:$0xff] %vm1009, %v1001
      %1035 = vst.msk [vmem:[%s177 + $0xc8] sm:$0xff] %vm1009, %v1002
      %1036 = vst.msk [vmem:[%s177 + $0xd0] sm:$0xff] %vm1009, %v1003
      %1037 = vst.msk [vmem:[%s177 + $0xd8] sm:$0xff] %vm1009, %v1004
      %1038 = vst.msk [vmem:[%s177 + $0xe0] sm:$0xff] %vm1009, %v1005
      %1039 = vst.msk [vmem:[%s177 + $0xe8] sm:$0xff] %vm1009, %v1006
      %1040 = vst.msk [vmem:[%s177 + $0xf0] sm:$0xff] %vm1009, %v1007
      %1041 = vst.msk [vmem:[%s177 + $0xf8] sm:$0xff] %vm1009, %v1008
      %s1042 = smul.u32 32, %s15
      %p1043 = scmp.lt.s32.totalorder %s1042, 63
      %s1044 = scalar_select %p1043, %s1042, 63
      %s1045 = smul.addr %s1044, 8
      %s1046 = scalar_lea.vmem %s4, %s1045
      // Predicated region
      $region37: #{conv_normN_AE_forward.5} parent=35 // pred_check
        %p1047 = pneg %p117
      $region38: #{conv_normN_AE_forward.5} parent=35 // pred_check_branch
        %1049 = sbr.rel (%p1047) target = $region40
      $region39: #{conv_normN_AE_forward.5} parent=35 // pred_region
        %s1050 = smul.u32 32, %s15
      $region40: #{conv_normN_AE_forward.5} parent=35 // pred_fallthru
        _
    $region36: #{conv_normN_AE_forward.5} parent=5 // pred_fallthru
      _
    %p1051 = scmp.le.s32.totalorder 2, %s10
    // Predicated region
    $region41: #{conv_normN_AE_forward.5} parent=5 // pred_check
      %p1052 = pneg %p1051
    $region42: #{conv_normN_AE_forward.5} parent=5 // pred_check_branch
      %1054 = sbr.rel (%p1052) target = $region44
    $region43: #{conv_normN_AE_forward.5} parent=5 // pred_region
      %s1055 = ssub.s32 %s10, 2
      // Predicated region
      $region45: #{conv_normN_AE_forward.5} parent=43 // pred_check
        %p1056 = pneg %p123
      $region46: #{conv_normN_AE_forward.5} parent=43 // pred_check_branch
        %1058 = sbr.rel (%p1056) target = $region48
      $region47: #{conv_normN_AE_forward.5} parent=43 // pred_region
        %s1059 = smul.u32 32, %s16
        %p1060 = scmp.lt.s32.totalorder %s1059, 63
        %s1061 = scalar_select %p1060, %s1059, 63
        %s1062 = smul.addr %s1061, 8
        %s1063 = scalar_lea.vmem %s4, %s1062
      $region48: #{conv_normN_AE_forward.5} parent=43 // pred_fallthru
        _
    $region44: #{conv_normN_AE_forward.5} parent=5 // pred_fallthru
      _
  $region6: #{conv_normN_AE_forward.5} parent=0 // loop_footer
    %s14 = sadd.s32 1, %s10
  $region7: #{conv_normN_AE_forward.5} parent=0 // loop_footer_branch
    %9 = sbr.rel target = $region3
  $region8: #{conv_normN_AE_forward.5} parent=0 // loop_exit
    _

// kernel: conv_normN_AE_forward.4
$region0: #{conv_normN_AE_forward.4}
  #allocation0 [shape = 'u32[]', space=smem, size = 0x4, offset = 0x4, fixed_abs, tag = 'smem constant byte address 0x4 - core index']
  #allocation1 [shape = 'u32[144,128]{1,0:T(1,128)}', space=vmem, size = 0x12000, scoped, tag = 'internal scratch']
  %s0 = inlined_call_operand.vmem [shape: f32[544,48], index: 0, kind: input, shape index: {}]
  %s1 = inlined_call_operand.vmem [shape: f32[3,48,16], index: 1, kind: input, shape index: {}]
  %s2 = inlined_call_operand.vmem [shape: f32[1,16], index: 2, kind: input, shape index: {}]
  %s3 = inlined_call_operand.vmem [shape: f32[1,16], index: 3, kind: input, shape index: {}]
  %s4 = inlined_call_operand.vmem [shape: f32[512,16], index: 4, kind: output, shape index: {}]
  %s5 = sld [smem:[#allocation0]]
  $region49: #{conv_normN_AE_forward.4} parent=0
    _
  %s7 = ssub.s32 1, %s5
  %s8 = scalar_select 0, %s7, %s5
  loop: start=0, step=1, limit=4
  $region2: #{conv_normN_AE_forward.4} parent=0 // loop_pre_header
    _
  $region3: #{conv_normN_AE_forward.4} parent=0 // loop_header
    %s10 = sphi 0, %s14
    %p11 = scmp.ge.s32.totalorder %s10, 4
    %s18 = sphi 0, %s18
    %s20 = sphi 0, %s18
    %s21 = sphi 0, %s20
    %s35 = sphi 0, %s21
    %s39 = sphi 0, %s39
    %s41 = sphi 0, %s39
    %s42 = sphi 0, %s41
    %s56 = sphi 0, %s42
    %s60 = sphi 0, %s60
    %s62 = sphi 0, %s60
    %s63 = sphi 0, %s62
    %s77 = sphi 0, %s63
    %s81 = sphi 0, %s81
    %s83 = sphi 0, %s81
    %s84 = sphi 0, %s83
    %s98 = sphi 0, %s84
    %s104 = sphi 0, %s106
    %s107 = sphi 0, %s104
    %s108 = sphi 0, %s107
    %s124 = sphi 0, %s108
  $region4: #{conv_normN_AE_forward.4} parent=0 // loop_header_branch
    %13 = sbr.rel (%p11) target = $region8
  $region5: #{conv_normN_AE_forward.4} parent=0 // loop_body
    %s15 = ssub.s32 %s10, 1
    %s16 = ssub.s32 %s10, 2
    %s17 = sadd.s32 %s10, 1
    %s19 = sadd.s32 %s18, 1
    %p22 = scmp.eq.s32.totalorder %s10, 1
    %p23 = scmp.ne.s32.totalorder %s18, %s20
    %p24 = scmp.eq.s32.totalorder %s10, 0
    %p25 = por %p23, %p24
    %p26 = scmp.ne.s32.totalorder %s18, %s20
    %p27 = scmp.eq.s32.totalorder %s15, 1
    %p28 = por %p26, %p27
    %p29 = scmp.ne.s32.totalorder %s20, %s21
    %p30 = scmp.eq.s32.totalorder %s15, 0
    %p31 = por %p29, %p30
    %p32 = scmp.ne.s32.totalorder %s20, %s21
    %p33 = scmp.eq.s32.totalorder %s16, 1
    %p34 = por %p32, %p33
    %p36 = scmp.ne.s32.totalorder %s21, %s35
    %p37 = scmp.eq.s32.totalorder %s16, 0
    %p38 = por %p36, %p37
    %s40 = sadd.s32 %s39, 1
    %p43 = scmp.eq.s32.totalorder %s10, 1
    %p44 = scmp.ne.s32.totalorder %s39, %s41
    %p45 = scmp.eq.s32.totalorder %s10, 0
    %p46 = por %p44, %p45
    %p47 = scmp.ne.s32.totalorder %s39, %s41
    %p48 = scmp.eq.s32.totalorder %s15, 1
    %p49 = por %p47, %p48
    %p50 = scmp.ne.s32.totalorder %s41, %s42
    %p51 = scmp.eq.s32.totalorder %s15, 0
    %p52 = por %p50, %p51
    %p53 = scmp.ne.s32.totalorder %s41, %s42
    %p54 = scmp.eq.s32.totalorder %s16, 1
    %p55 = por %p53, %p54
    %p57 = scmp.ne.s32.totalorder %s42, %s56
    %p58 = scmp.eq.s32.totalorder %s16, 0
    %p59 = por %p57, %p58
    %s61 = sadd.s32 %s60, 1
    %p64 = scmp.eq.s32.totalorder %s10, 1
    %p65 = scmp.ne.s32.totalorder %s60, %s62
    %p66 = scmp.eq.s32.totalorder %s10, 0
    %p67 = por %p65, %p66
    %p68 = scmp.ne.s32.totalorder %s60, %s62
    %p69 = scmp.eq.s32.totalorder %s15, 1
    %p70 = por %p68, %p69
    %p71 = scmp.ne.s32.totalorder %s62, %s63
    %p72 = scmp.eq.s32.totalorder %s15, 0
    %p73 = por %p71, %p72
    %p74 = scmp.ne.s32.totalorder %s62, %s63
    %p75 = scmp.eq.s32.totalorder %s16, 1
    %p76 = por %p74, %p75
    %p78 = scmp.ne.s32.totalorder %s63, %s77
    %p79 = scmp.eq.s32.totalorder %s16, 0
    %p80 = por %p78, %p79
    %s82 = sadd.s32 %s81, 1
    %p85 = scmp.eq.s32.totalorder %s10, 1
    %p86 = scmp.ne.s32.totalorder %s81, %s83
    %p87 = scmp.eq.s32.totalorder %s10, 0
    %p88 = por %p86, %p87
    %p89 = scmp.ne.s32.totalorder %s81, %s83
    %p90 = scmp.eq.s32.totalorder %s15, 1
    %p91 = por %p89, %p90
    %p92 = scmp.ne.s32.totalorder %s83, %s84
    %p93 = scmp.eq.s32.totalorder %s15, 0
    %p94 = por %p92, %p93
    %p95 = scmp.ne.s32.totalorder %s83, %s84
    %p96 = scmp.eq.s32.totalorder %s16, 1
    %p97 = por %p95, %p96
    %p99 = scmp.ne.s32.totalorder %s84, %s98
    %p100 = scmp.eq.s32.totalorder %s16, 0
    %p101 = por %p99, %p100
    %s102 = ssub.s32 %s10, %s17
    %p103 = scmp.eq.s32.totalorder %s102, 0
    %s105 = sadd.s32 %s104, 1
    %s106 = scalar_select %p103, %s104, %s105
    %p109 = pneg %p103
    %p110 = scmp.eq.s32.totalorder %s10, 1
    %p111 = por %p109, %p110
    %p112 = scmp.ne.s32.totalorder %s104, %s107
    %p113 = scmp.eq.s32.totalorder %s10, 0
    %p114 = por %p112, %p113
    %p115 = scmp.ne.s32.totalorder %s104, %s107
    %p116 = scmp.eq.s32.totalorder %s15, 1
    %p117 = por %p115, %p116
    %p118 = scmp.ne.s32.totalorder %s107, %s108
    %p119 = scmp.eq.s32.totalorder %s15, 0
    %p120 = por %p118, %p119
    %p121 = scmp.ne.s32.totalorder %s107, %s108
    %p122 = scmp.eq.s32.totalorder %s16, 1
    %p123 = por %p121, %p122
    %p125 = scmp.ne.s32.totalorder %s108, %s124
    %p126 = scmp.eq.s32.totalorder %s16, 0
    %p127 = por %p125, %p126
    %p128 = scmp.le.s32.totalorder 1, %s10
    %p129 = scmp.lt.s32.totalorder %s10, 3
    %p130 = pnand %p128, %p129
    %p131 = pneg %p130
    // Predicated region
    $region9: #{conv_normN_AE_forward.4} parent=5 // pred_check
      _
    $region10: #{conv_normN_AE_forward.4} parent=5 // pred_check_branch
      %133 = sbr.rel (%p130) target = $region12
    $region11: #{conv_normN_AE_forward.4} parent=5 // pred_region
      %s134 = ssub.s32 %s10, 1
      // Predicated region
      $region13: #{conv_normN_AE_forward.4} parent=11 // pred_check
        %p135 = pneg %p31
      $region14: #{conv_normN_AE_forward.4} parent=11 // pred_check_branch
        %137 = sbr.rel (%p135) target = $region16
      $region15: #{conv_normN_AE_forward.4} parent=11 // pred_region
        _
      $region16: #{conv_normN_AE_forward.4} parent=11 // pred_fallthru
        _
      // Predicated region
      $region17: #{conv_normN_AE_forward.4} parent=11 // pred_check
        %p138 = pneg %p52
      $region18: #{conv_normN_AE_forward.4} parent=11 // pred_check_branch
        %140 = sbr.rel (%p138) target = $region20
      $region19: #{conv_normN_AE_forward.4} parent=11 // pred_region
        _
      $region20: #{conv_normN_AE_forward.4} parent=11 // pred_fallthru
        _
      // Predicated region
      $region21: #{conv_normN_AE_forward.4} parent=11 // pred_check
        %p141 = pneg %p73
      $region22: #{conv_normN_AE_forward.4} parent=11 // pred_check_branch
        %143 = sbr.rel (%p141) target = $region24
      $region23: #{conv_normN_AE_forward.4} parent=11 // pred_region
        _
      $region24: #{conv_normN_AE_forward.4} parent=11 // pred_fallthru
        _
      // Predicated region
      $region25: #{conv_normN_AE_forward.4} parent=11 // pred_check
        %p144 = pneg %p94
      $region26: #{conv_normN_AE_forward.4} parent=11 // pred_check_branch
        %146 = sbr.rel (%p144) target = $region28
      $region27: #{conv_normN_AE_forward.4} parent=11 // pred_region
        _
      $region28: #{conv_normN_AE_forward.4} parent=11 // pred_fallthru
        _
    $region12: #{conv_normN_AE_forward.4} parent=5 // pred_fallthru
      _
    %p147 = scmp.lt.s32.totalorder %s10, 2
    // Predicated region
    $region29: #{conv_normN_AE_forward.4} parent=5 // pred_check
      %p148 = pneg %p147
    $region30: #{conv_normN_AE_forward.4} parent=5 // pred_check_branch
      %150 = sbr.rel (%p148) target = $region32
    $region31: #{conv_normN_AE_forward.4} parent=5 // pred_region
      _
    $region32: #{conv_normN_AE_forward.4} parent=5 // pred_fallthru
      _
    %p151 = scmp.le.s32.totalorder 1, %s10
    %p152 = scmp.lt.s32.totalorder %s10, 3
    %p153 = pnand %p151, %p152
    %p154 = pneg %p153
    // Predicated region
    $region33: #{conv_normN_AE_forward.4} parent=5 // pred_check
      _
    $region34: #{conv_normN_AE_forward.4} parent=5 // pred_check_branch
      %156 = sbr.rel (%p153) target = $region36
    $region35: #{conv_normN_AE_forward.4} parent=5 // pred_region
      %s157 = ssub.s32 %s10, 1
      %p158 = pneg %p31
      %p159 = pneg %p28
      %p160 = pneg %p52
      %p161 = pneg %p49
      %p162 = pneg %p73
      %p163 = pneg %p70
      %p164 = pneg %p94
      %p165 = pneg %p91
      %p166 = pneg %p120
      %p167 = pneg %p117
      %s168 = smul.u32 32, %s15
      %p169 = scmp.lt.s32.totalorder %s168, 63
      %s170 = scalar_select %p169, %s168, 63
      %s171 = smul.addr %s170, 8
      %s172 = scalar_lea.vmem %s4, %s171
      %s173 = smul.u32 32, %s15
      %p174 = scmp.lt.s32.totalorder %s173, 63
      %s175 = scalar_select %p174, %s173, 63
      %s176 = smul.addr %s175, 8
      %s177 = scalar_lea.vmem %s4, %s176
      %s178 = smul.u32 32, %s15
      %s179 = smul.u32 %s15, 256
      %s180 = scalar_lea.vmem %s0, %s179
      %v181 = vld [vmem:[%s180] sm:$0xff]
      %v182 = vld [vmem:[%s180 + $0x8] sm:$0xff]
      %v183 = vld [vmem:[%s180 + $0x10] sm:$0xff]
      %v184 = vld [vmem:[%s180 + $0x18] sm:$0xff]
      %v185 = vld [vmem:[%s180 + $0x20] sm:$0xff]
      %v186 = vld [vmem:[%s180 + $0x28] sm:$0xff]
      %v187 = vld [vmem:[%s180 + $0x30] sm:$0xff]
      %v188 = vld [vmem:[%s180 + $0x38] sm:$0xff]
      %v189 = vld [vmem:[%s180 + $0x40] sm:$0xff]
      %v190 = vld [vmem:[%s180 + $0x48] sm:$0xff]
      %v191 = vld [vmem:[%s180 + $0x50] sm:$0xff]
      %v192 = vld [vmem:[%s180 + $0x58] sm:$0xff]
      %v193 = vld [vmem:[%s180 + $0x60] sm:$0xff]
      %v194 = vld [vmem:[%s180 + $0x68] sm:$0xff]
      %v195 = vld [vmem:[%s180 + $0x70] sm:$0xff]
      %v196 = vld [vmem:[%s180 + $0x78] sm:$0xff]
      %v197 = vld [vmem:[%s180 + $0x80] sm:$0xff]
      %v198 = vld [vmem:[%s180 + $0x88] sm:$0xff]
      %v199 = vld [vmem:[%s180 + $0x90] sm:$0xff]
      %v200 = vld [vmem:[%s180 + $0x98] sm:$0xff]
      %v201 = vld [vmem:[%s180 + $0xa0] sm:$0xff]
      %v202 = vld [vmem:[%s180 + $0xa8] sm:$0xff]
      %v203 = vld [vmem:[%s180 + $0xb0] sm:$0xff]
      %v204 = vld [vmem:[%s180 + $0xb8] sm:$0xff]
      %v205 = vld [vmem:[%s180 + $0xc0] sm:$0xff]
      %v206 = vld [vmem:[%s180 + $0xc8] sm:$0xff]
      %v207 = vld [vmem:[%s180 + $0xd0] sm:$0xff]
      %v208 = vld [vmem:[%s180 + $0xd8] sm:$0xff]
      %v209 = vld [vmem:[%s180 + $0xe0] sm:$0xff]
      %v210 = vld [vmem:[%s180 + $0xe8] sm:$0xff]
      %v211 = vld [vmem:[%s180 + $0xf0] sm:$0xff]
      %v212 = vld [vmem:[%s180 + $0xf8] sm:$0xff]
      %v213 = vld [vmem:[%s1] sm:$0xff]
      %v214 = vld [vmem:[%s1 + $0x8] sm:$0xff]
      %v215 = vld [vmem:[%s1 + $0x10] sm:$0xff]
      %v216 = vld [vmem:[%s1 + $0x18] sm:$0xff]
      %v217 = vld [vmem:[%s1 + $0x20] sm:$0xff]
      %v218 = vld [vmem:[%s1 + $0x28] sm:$0xff]
      %s219 = sadd.s32 %s179, 16
      %s220 = scalar_lea.vmem %s0, %s219
      %v221 = vld [vmem:[%s220] sm:$0xff]
      %v222 = vld [vmem:[%s220 + $0x8] sm:$0xff]
      %v223 = vld [vmem:[%s220 + $0x10] sm:$0xff]
      %v224 = vld [vmem:[%s220 + $0x18] sm:$0xff]
      %v225 = vld [vmem:[%s220 + $0x20] sm:$0xff]
      %v226 = vld [vmem:[%s220 + $0x28] sm:$0xff]
      %v227 = vld [vmem:[%s220 + $0x30] sm:$0xff]
      %v228 = vld [vmem:[%s220 + $0x38] sm:$0xff]
      %v229 = vld [vmem:[%s220 + $0x40] sm:$0xff]
      %v230 = vld [vmem:[%s220 + $0x48] sm:$0xff]
      %v231 = vld [vmem:[%s220 + $0x50] sm:$0xff]
      %v232 = vld [vmem:[%s220 + $0x58] sm:$0xff]
      %v233 = vld [vmem:[%s220 + $0x60] sm:$0xff]
      %v234 = vld [vmem:[%s220 + $0x68] sm:$0xff]
      %v235 = vld [vmem:[%s220 + $0x70] sm:$0xff]
      %v236 = vld [vmem:[%s220 + $0x78] sm:$0xff]
      %v237 = vld [vmem:[%s220 + $0x80] sm:$0xff]
      %v238 = vld [vmem:[%s220 + $0x88] sm:$0xff]
      %v239 = vld [vmem:[%s220 + $0x90] sm:$0xff]
      %v240 = vld [vmem:[%s220 + $0x98] sm:$0xff]
      %v241 = vld [vmem:[%s220 + $0xa0] sm:$0xff]
      %v242 = vld [vmem:[%s220 + $0xa8] sm:$0xff]
      %v243 = vld [vmem:[%s220 + $0xb0] sm:$0xff]
      %v244 = vld [vmem:[%s220 + $0xb8] sm:$0xff]
      %v245 = vld [vmem:[%s220 + $0xc0] sm:$0xff]
      %v246 = vld [vmem:[%s220 + $0xc8] sm:$0xff]
      %v247 = vld [vmem:[%s220 + $0xd0] sm:$0xff]
      %v248 = vld [vmem:[%s220 + $0xd8] sm:$0xff]
      %v249 = vld [vmem:[%s220 + $0xe0] sm:$0xff]
      %v250 = vld [vmem:[%s220 + $0xe8] sm:$0xff]
      %v251 = vld [vmem:[%s220 + $0xf0] sm:$0xff]
      %v252 = vld [vmem:[%s220 + $0xf8] sm:$0xff]
      %s253 = scalar_lea.vmem %s1, 48
      %v254 = vld [vmem:[%s253] sm:$0xff]
      %v255 = vld [vmem:[%s253 + $0x8] sm:$0xff]
      %v256 = vld [vmem:[%s253 + $0x10] sm:$0xff]
      %v257 = vld [vmem:[%s253 + $0x18] sm:$0xff]
      %v258 = vld [vmem:[%s253 + $0x20] sm:$0xff]
      %v259 = vld [vmem:[%s253 + $0x28] sm:$0xff]
      %vm260 = vcmask 392192
      %v262 = vsel %vm260, %v221, 0
      %v265 = vsel %vm260, %v222, 0
      %v268 = vsel %vm260, %v223, 0
      %v271 = vsel %vm260, %v224, 0
      %v274 = vsel %vm260, %v225, 0
      %v277 = vsel %vm260, %v226, 0
      %v280 = vsel %vm260, %v227, 0
      %v283 = vsel %vm260, %v228, 0
      %v286 = vsel %vm260, %v229, 0
      %v289 = vsel %vm260, %v230, 0
      %v292 = vsel %vm260, %v231, 0
      %v295 = vsel %vm260, %v232, 0
      %v298 = vsel %vm260, %v233, 0
      %v301 = vsel %vm260, %v234, 0
      %v304 = vsel %vm260, %v235, 0
      %v307 = vsel %vm260, %v236, 0
      %v310 = vsel %vm260, %v237, 0
      %v313 = vsel %vm260, %v238, 0
      %v316 = vsel %vm260, %v239, 0
      %v319 = vsel %vm260, %v240, 0
      %v322 = vsel %vm260, %v241, 0
      %v325 = vsel %vm260, %v242, 0
      %v328 = vsel %vm260, %v243, 0
      %v331 = vsel %vm260, %v244, 0
      %v334 = vsel %vm260, %v245, 0
      %v337 = vsel %vm260, %v246, 0
      %v340 = vsel %vm260, %v247, 0
      %v343 = vsel %vm260, %v248, 0
      %v346 = vsel %vm260, %v249, 0
      %v349 = vsel %vm260, %v250, 0
      %v352 = vsel %vm260, %v251, 0
      %v355 = vsel %vm260, %v252, 0
      %357 = vmatprep.subr.mxu0 0.0
      %358 = vmatpush1.msra.mxu0 0.0
      %359 = vmatprep.subr.mxu0 0.0
      %360 = vmatpush1.msra.mxu0 0.0
      %361 = vmatprep.subr.mxu0 0.0
      %362 = vmatpush1.msra.mxu0 0.0
      %363 = vmatprep.subr.mxu0 0.0
      %364 = vmatpush1.msra.mxu0 0.0
      %365 = vmatprep.subr.mxu0 0.0
      %366 = vmatpush1.msra.mxu0 0.0
      %367 = vmatprep.subr.mxu0 0.0
      %368 = vmatpush1.msra.mxu0 0.0
      %369 = vmatprep.subr.mxu0 0.0
      %370 = vmatpush1.msra.mxu0 0.0
      %371 = vmatprep.subr.mxu0 0.0
      %372 = vmatpush1.msra.mxu0 0.0
      %373 = vmatprep.subr.mxu0 0.0
      %374 = vmatpush1.msra.mxu0 0.0
      %375 = vmatprep.subr.mxu0 0.0
      %376 = vmatpush1.msra.mxu0 0.0
      %377 = vmatprep.subr.mxu0 0.0
      %378 = vmatpush1.msra.mxu0 %v259
      %379 = vmatprep.subr.mxu0 0.0
      %380 = vmatpush1.msra.mxu0 %v258
      %381 = vmatprep.subr.mxu0 0.0
      %382 = vmatpush1.msra.mxu0 %v257
      %383 = vmatprep.subr.mxu0 0.0
      %384 = vmatpush1.msra.mxu0 %v256
      %385 = vmatprep.subr.mxu0 0.0
      %386 = vmatpush1.msra.mxu0 %v255
      %387 = vmatprep.subr.mxu0 0.0
      %388 = vmatpush1.msra.mxu0 %v254
      %389 = vmatprep.subr.mxu0 0.0
      %390 = vmatpush2.msra.mxu0 0.0
      %391 = vmatprep.subr.mxu0 0.0
      %392 = vmatpush2.msra.mxu0 0.0
      %393 = vmatprep.subr.mxu0 0.0
      %394 = vmatpush2.msra.mxu0 0.0
      %395 = vmatprep.subr.mxu0 0.0
      %396 = vmatpush2.msra.mxu0 0.0
      %397 = vmatprep.subr.mxu0 0.0
      %398 = vmatpush2.msra.mxu0 0.0
      %399 = vmatprep.subr.mxu0 0.0
      %400 = vmatpush2.msra.mxu0 0.0
      %401 = vmatprep.subr.mxu0 0.0
      %402 = vmatpush2.msra.mxu0 0.0
      %403 = vmatprep.subr.mxu0 0.0
      %404 = vmatpush2.msra.mxu0 0.0
      %405 = vmatprep.subr.mxu0 0.0
      %406 = vmatpush2.msra.mxu0 0.0
      %407 = vmatprep.subr.mxu0 0.0
      %408 = vmatpush2.msra.mxu0 0.0
      %409 = vmatprep.subr.mxu0 0.0
      %410 = vmatpush2.msra.mxu0 0.0
      %411 = vmatprep.subr.mxu0 0.0
      %412 = vmatpush2.msra.mxu0 0.0
      %413 = vmatprep.subr.mxu0 0.0
      %414 = vmatpush2.msra.mxu0 0.0
      %415 = vmatprep.subr.mxu0 0.0
      %416 = vmatpush2.msra.mxu0 0.0
      %417 = vmatprep.subr.mxu0 0.0
      %418 = vmatpush2.msra.mxu0 0.0
      %419 = vmatprep.subr.mxu0 0.0
      %420 = vmatpush2.msra.mxu0 0.0
      %421 = vmatprep.mubr.f32.mxu0 0.0
      %422 = vmatmul.mubr.f32.gmra.mxu0 %v262
      %v423 = vpop.f32.mrf.mxu0
      %v424 = vadd.f32 0.0, %v423
      %v425 = vpop.f32.mrf.mxu0
      %426 = vmatprep.mubr.f32.mxu0 0.0
      %427 = vmatmul.mubr.f32.gmra.mxu0 %v265
      %v428 = vpop.f32.mrf.mxu0
      %v429 = vadd.f32 0.0, %v428
      %v430 = vpop.f32.mrf.mxu0
      %431 = vmatprep.mubr.f32.mxu0 0.0
      %432 = vmatmul.mubr.f32.gmra.mxu0 %v268
      %v433 = vpop.f32.mrf.mxu0
      %v434 = vadd.f32 0.0, %v433
      %v435 = vpop.f32.mrf.mxu0
      %436 = vmatprep.mubr.f32.mxu0 0.0
      %437 = vmatmul.mubr.f32.gmra.mxu0 %v271
      %v438 = vpop.f32.mrf.mxu0
      %v439 = vadd.f32 0.0, %v438
      %v440 = vpop.f32.mrf.mxu0
      %441 = vmatprep.mubr.f32.mxu0 0.0
      %442 = vmatmul.mubr.f32.gmra.mxu0 %v274
      %v443 = vpop.f32.mrf.mxu0
      %v444 = vadd.f32 0.0, %v443
      %v445 = vpop.f32.mrf.mxu0
      %446 = vmatprep.mubr.f32.mxu0 0.0
      %447 = vmatmul.mubr.f32.gmra.mxu0 %v277
      %v448 = vpop.f32.mrf.mxu0
      %v449 = vadd.f32 0.0, %v448
      %v450 = vpop.f32.mrf.mxu0
      %451 = vmatprep.mubr.f32.mxu0 0.0
      %452 = vmatmul.mubr.f32.gmra.mxu0 %v280
      %v453 = vpop.f32.mrf.mxu0
      %v454 = vadd.f32 0.0, %v453
      %v455 = vpop.f32.mrf.mxu0
      %456 = vmatprep.mubr.f32.mxu0 0.0
      %457 = vmatmul.mubr.f32.gmra.mxu0 %v283
      %v458 = vpop.f32.mrf.mxu0
      %v459 = vadd.f32 0.0, %v458
      %v460 = vpop.f32.mrf.mxu0
      %461 = vmatprep.mubr.f32.mxu0 0.0
      %462 = vmatmul.mubr.f32.gmra.mxu0 %v286
      %v463 = vpop.f32.mrf.mxu0
      %v464 = vadd.f32 0.0, %v463
      %v465 = vpop.f32.mrf.mxu0
      %466 = vmatprep.mubr.f32.mxu0 0.0
      %467 = vmatmul.mubr.f32.gmra.mxu0 %v289
      %v468 = vpop.f32.mrf.mxu0
      %v469 = vadd.f32 0.0, %v468
      %v470 = vpop.f32.mrf.mxu0
      %471 = vmatprep.mubr.f32.mxu0 0.0
      %472 = vmatmul.mubr.f32.gmra.mxu0 %v292
      %v473 = vpop.f32.mrf.mxu0
      %v474 = vadd.f32 0.0, %v473
      %v475 = vpop.f32.mrf.mxu0
      %476 = vmatprep.mubr.f32.mxu0 0.0
      %477 = vmatmul.mubr.f32.gmra.mxu0 %v295
      %v478 = vpop.f32.mrf.mxu0
      %v479 = vadd.f32 0.0, %v478
      %v480 = vpop.f32.mrf.mxu0
      %481 = vmatprep.mubr.f32.mxu0 0.0
      %482 = vmatmul.mubr.f32.gmra.mxu0 %v298
      %v483 = vpop.f32.mrf.mxu0
      %v484 = vadd.f32 0.0, %v483
      %v485 = vpop.f32.mrf.mxu0
      %486 = vmatprep.mubr.f32.mxu0 0.0
      %487 = vmatmul.mubr.f32.gmra.mxu0 %v301
      %v488 = vpop.f32.mrf.mxu0
      %v489 = vadd.f32 0.0, %v488
      %v490 = vpop.f32.mrf.mxu0
      %491 = vmatprep.mubr.f32.mxu0 0.0
      %492 = vmatmul.mubr.f32.gmra.mxu0 %v304
      %v493 = vpop.f32.mrf.mxu0
      %v494 = vadd.f32 0.0, %v493
      %v495 = vpop.f32.mrf.mxu0
      %496 = vmatprep.mubr.f32.mxu0 0.0
      %497 = vmatmul.mubr.f32.gmra.mxu0 %v307
      %v498 = vpop.f32.mrf.mxu0
      %v499 = vadd.f32 0.0, %v498
      %v500 = vpop.f32.mrf.mxu0
      %501 = vmatprep.mubr.f32.mxu0 0.0
      %502 = vmatmul.mubr.f32.gmra.mxu0 %v310
      %v503 = vpop.f32.mrf.mxu0
      %v504 = vadd.f32 0.0, %v503
      %v505 = vpop.f32.mrf.mxu0
      %506 = vmatprep.mubr.f32.mxu0 0.0
      %507 = vmatmul.mubr.f32.gmra.mxu0 %v313
      %v508 = vpop.f32.mrf.mxu0
      %v509 = vadd.f32 0.0, %v508
      %v510 = vpop.f32.mrf.mxu0
      %511 = vmatprep.mubr.f32.mxu0 0.0
      %512 = vmatmul.mubr.f32.gmra.mxu0 %v316
      %v513 = vpop.f32.mrf.mxu0
      %v514 = vadd.f32 0.0, %v513
      %v515 = vpop.f32.mrf.mxu0
      %516 = vmatprep.mubr.f32.mxu0 0.0
      %517 = vmatmul.mubr.f32.gmra.mxu0 %v319
      %v518 = vpop.f32.mrf.mxu0
      %v519 = vadd.f32 0.0, %v518
      %v520 = vpop.f32.mrf.mxu0
      %521 = vmatprep.mubr.f32.mxu0 0.0
      %522 = vmatmul.mubr.f32.gmra.mxu0 %v322
      %v523 = vpop.f32.mrf.mxu0
      %v524 = vadd.f32 0.0, %v523
      %v525 = vpop.f32.mrf.mxu0
      %526 = vmatprep.mubr.f32.mxu0 0.0
      %527 = vmatmul.mubr.f32.gmra.mxu0 %v325
      %v528 = vpop.f32.mrf.mxu0
      %v529 = vadd.f32 0.0, %v528
      %v530 = vpop.f32.mrf.mxu0
      %531 = vmatprep.mubr.f32.mxu0 0.0
      %532 = vmatmul.mubr.f32.gmra.mxu0 %v328
      %v533 = vpop.f32.mrf.mxu0
      %v534 = vadd.f32 0.0, %v533
      %v535 = vpop.f32.mrf.mxu0
      %536 = vmatprep.mubr.f32.mxu0 0.0
      %537 = vmatmul.mubr.f32.gmra.mxu0 %v331
      %v538 = vpop.f32.mrf.mxu0
      %v539 = vadd.f32 0.0, %v538
      %v540 = vpop.f32.mrf.mxu0
      %541 = vmatprep.mubr.f32.mxu0 0.0
      %542 = vmatmul.mubr.f32.gmra.mxu0 %v334
      %v543 = vpop.f32.mrf.mxu0
      %v544 = vadd.f32 0.0, %v543
      %v545 = vpop.f32.mrf.mxu0
      %546 = vmatprep.mubr.f32.mxu0 0.0
      %547 = vmatmul.mubr.f32.gmra.mxu0 %v337
      %v548 = vpop.f32.mrf.mxu0
      %v549 = vadd.f32 0.0, %v548
      %v550 = vpop.f32.mrf.mxu0
      %551 = vmatprep.mubr.f32.mxu0 0.0
      %552 = vmatmul.mubr.f32.gmra.mxu0 %v340
      %v553 = vpop.f32.mrf.mxu0
      %v554 = vadd.f32 0.0, %v553
      %v555 = vpop.f32.mrf.mxu0
      %556 = vmatprep.mubr.f32.mxu0 0.0
      %557 = vmatmul.mubr.f32.gmra.mxu0 %v343
      %v558 = vpop.f32.mrf.mxu0
      %v559 = vadd.f32 0.0, %v558
      %v560 = vpop.f32.mrf.mxu0
      %561 = vmatprep.mubr.f32.mxu0 0.0
      %562 = vmatmul.mubr.f32.gmra.mxu0 %v346
      %v563 = vpop.f32.mrf.mxu0
      %v564 = vadd.f32 0.0, %v563
      %v565 = vpop.f32.mrf.mxu0
      %566 = vmatprep.mubr.f32.mxu0 0.0
      %567 = vmatmul.mubr.f32.gmra.mxu0 %v349
      %v568 = vpop.f32.mrf.mxu0
      %v569 = vadd.f32 0.0, %v568
      %v570 = vpop.f32.mrf.mxu0
      %571 = vmatprep.mubr.f32.mxu0 0.0
      %572 = vmatmul.mubr.f32.gmra.mxu0 %v352
      %v573 = vpop.f32.mrf.mxu0
      %v574 = vadd.f32 0.0, %v573
      %v575 = vpop.f32.mrf.mxu0
      %576 = vmatprep.mubr.f32.mxu0 0.0
      %577 = vmatmul.mubr.f32.gmra.mxu0 %v355
      %v578 = vpop.f32.mrf.mxu0
      %v579 = vadd.f32 0.0, %v578
      %v580 = vpop.f32.mrf.mxu0
      %581 = vdwg.mxu0
      %v583 = vsel %vm260, %v181, 0
      %v586 = vsel %vm260, %v182, 0
      %v589 = vsel %vm260, %v183, 0
      %v592 = vsel %vm260, %v184, 0
      %v595 = vsel %vm260, %v185, 0
      %v598 = vsel %vm260, %v186, 0
      %v601 = vsel %vm260, %v187, 0
      %v604 = vsel %vm260, %v188, 0
      %v607 = vsel %vm260, %v189, 0
      %v610 = vsel %vm260, %v190, 0
      %v613 = vsel %vm260, %v191, 0
      %v616 = vsel %vm260, %v192, 0
      %v619 = vsel %vm260, %v193, 0
      %v622 = vsel %vm260, %v194, 0
      %v625 = vsel %vm260, %v195, 0
      %v628 = vsel %vm260, %v196, 0
      %v631 = vsel %vm260, %v197, 0
      %v634 = vsel %vm260, %v198, 0
      %v637 = vsel %vm260, %v199, 0
      %v640 = vsel %vm260, %v200, 0
      %v643 = vsel %vm260, %v201, 0
      %v646 = vsel %vm260, %v202, 0
      %v649 = vsel %vm260, %v203, 0
      %v652 = vsel %vm260, %v204, 0
      %v655 = vsel %vm260, %v205, 0
      %v658 = vsel %vm260, %v206, 0
      %v661 = vsel %vm260, %v207, 0
      %v664 = vsel %vm260, %v208, 0
      %v667 = vsel %vm260, %v209, 0
      %v670 = vsel %vm260, %v210, 0
      %v673 = vsel %vm260, %v211, 0
      %v676 = vsel %vm260, %v212, 0
      %678 = vmatprep.subr.mxu0 0.0
      %679 = vmatpush1.msra.mxu0 0.0
      %680 = vmatprep.subr.mxu0 0.0
      %681 = vmatpush1.msra.mxu0 0.0
      %682 = vmatprep.subr.mxu0 0.0
      %683 = vmatpush1.msra.mxu0 0.0
      %684 = vmatprep.subr.mxu0 0.0
      %685 = vmatpush1.msra.mxu0 0.0
      %686 = vmatprep.subr.mxu0 0.0
      %687 = vmatpush1.msra.mxu0 0.0
      %688 = vmatprep.subr.mxu0 0.0
      %689 = vmatpush1.msra.mxu0 0.0
      %690 = vmatprep.subr.mxu0 0.0
      %691 = vmatpush1.msra.mxu0 0.0
      %692 = vmatprep.subr.mxu0 0.0
      %693 = vmatpush1.msra.mxu0 0.0
      %694 = vmatprep.subr.mxu0 0.0
      %695 = vmatpush1.msra.mxu0 0.0
      %696 = vmatprep.subr.mxu0 0.0
      %697 = vmatpush1.msra.mxu0 0.0
      %698 = vmatprep.subr.mxu0 0.0
      %699 = vmatpush1.msra.mxu0 %v218
      %700 = vmatprep.subr.mxu0 0.0
      %701 = vmatpush1.msra.mxu0 %v217
      %702 = vmatprep.subr.mxu0 0.0
      %703 = vmatpush1.msra.mxu0 %v216
      %704 = vmatprep.subr.mxu0 0.0
      %705 = vmatpush1.msra.mxu0 %v215
      %706 = vmatprep.subr.mxu0 0.0
      %707 = vmatpush1.msra.mxu0 %v214
      %708 = vmatprep.subr.mxu0 0.0
      %709 = vmatpush1.msra.mxu0 %v213
      %710 = vmatprep.subr.mxu0 0.0
      %711 = vmatpush2.msra.mxu0 0.0
      %712 = vmatprep.subr.mxu0 0.0
      %713 = vmatpush2.msra.mxu0 0.0
      %714 = vmatprep.subr.mxu0 0.0
      %715 = vmatpush2.msra.mxu0 0.0
      %716 = vmatprep.subr.mxu0 0.0
      %717 = vmatpush2.msra.mxu0 0.0
      %718 = vmatprep.subr.mxu0 0.0
      %719 = vmatpush2.msra.mxu0 0.0
      %720 = vmatprep.subr.mxu0 0.0
      %721 = vmatpush2.msra.mxu0 0.0
      %722 = vmatprep.subr.mxu0 0.0
      %723 = vmatpush2.msra.mxu0 0.0
      %724 = vmatprep.subr.mxu0 0.0
      %725 = vmatpush2.msra.mxu0 0.0
      %726 = vmatprep.subr.mxu0 0.0
      %727 = vmatpush2.msra.mxu0 0.0
      %728 = vmatprep.subr.mxu0 0.0
      %729 = vmatpush2.msra.mxu0 0.0
      %730 = vmatprep.subr.mxu0 0.0
      %731 = vmatpush2.msra.mxu0 0.0
      %732 = vmatprep.subr.mxu0 0.0
      %733 = vmatpush2.msra.mxu0 0.0
      %734 = vmatprep.subr.mxu0 0.0
      %735 = vmatpush2.msra.mxu0 0.0
      %736 = vmatprep.subr.mxu0 0.0
      %737 = vmatpush2.msra.mxu0 0.0
      %738 = vmatprep.subr.mxu0 0.0
      %739 = vmatpush2.msra.mxu0 0.0
      %740 = vmatprep.subr.mxu0 0.0
      %741 = vmatpush2.msra.mxu0 0.0
      %742 = vmatprep.mubr.f32.mxu0 0.0
      %743 = vmatmul.mubr.f32.gmra.mxu0 %v583
      %v744 = vpop.f32.mrf.mxu0
      %v745 = vadd.f32 %v424, %v744
      %v746 = vpop.f32.mrf.mxu0
      %747 = vmatprep.mubr.f32.mxu0 0.0
      %748 = vmatmul.mubr.f32.gmra.mxu0 %v586
      %v749 = vpop.f32.mrf.mxu0
      %v750 = vadd.f32 %v429, %v749
      %v751 = vpop.f32.mrf.mxu0
      %752 = vmatprep.mubr.f32.mxu0 0.0
      %753 = vmatmul.mubr.f32.gmra.mxu0 %v589
      %v754 = vpop.f32.mrf.mxu0
      %v755 = vadd.f32 %v434, %v754
      %v756 = vpop.f32.mrf.mxu0
      %757 = vmatprep.mubr.f32.mxu0 0.0
      %758 = vmatmul.mubr.f32.gmra.mxu0 %v592
      %v759 = vpop.f32.mrf.mxu0
      %v760 = vadd.f32 %v439, %v759
      %v761 = vpop.f32.mrf.mxu0
      %762 = vmatprep.mubr.f32.mxu0 0.0
      %763 = vmatmul.mubr.f32.gmra.mxu0 %v595
      %v764 = vpop.f32.mrf.mxu0
      %v765 = vadd.f32 %v444, %v764
      %v766 = vpop.f32.mrf.mxu0
      %767 = vmatprep.mubr.f32.mxu0 0.0
      %768 = vmatmul.mubr.f32.gmra.mxu0 %v598
      %v769 = vpop.f32.mrf.mxu0
      %v770 = vadd.f32 %v449, %v769
      %v771 = vpop.f32.mrf.mxu0
      %772 = vmatprep.mubr.f32.mxu0 0.0
      %773 = vmatmul.mubr.f32.gmra.mxu0 %v601
      %v774 = vpop.f32.mrf.mxu0
      %v775 = vadd.f32 %v454, %v774
      %v776 = vpop.f32.mrf.mxu0
      %777 = vmatprep.mubr.f32.mxu0 0.0
      %778 = vmatmul.mubr.f32.gmra.mxu0 %v604
      %v779 = vpop.f32.mrf.mxu0
      %v780 = vadd.f32 %v459, %v779
      %v781 = vpop.f32.mrf.mxu0
      %782 = vmatprep.mubr.f32.mxu0 0.0
      %783 = vmatmul.mubr.f32.gmra.mxu0 %v607
      %v784 = vpop.f32.mrf.mxu0
      %v785 = vadd.f32 %v464, %v784
      %v786 = vpop.f32.mrf.mxu0
      %787 = vmatprep.mubr.f32.mxu0 0.0
      %788 = vmatmul.mubr.f32.gmra.mxu0 %v610
      %v789 = vpop.f32.mrf.mxu0
      %v790 = vadd.f32 %v469, %v789
      %v791 = vpop.f32.mrf.mxu0
      %792 = vmatprep.mubr.f32.mxu0 0.0
      %793 = vmatmul.mubr.f32.gmra.mxu0 %v613
      %v794 = vpop.f32.mrf.mxu0
      %v795 = vadd.f32 %v474, %v794
      %v796 = vpop.f32.mrf.mxu0
      %797 = vmatprep.mubr.f32.mxu0 0.0
      %798 = vmatmul.mubr.f32.gmra.mxu0 %v616
      %v799 = vpop.f32.mrf.mxu0
      %v800 = vadd.f32 %v479, %v799
      %v801 = vpop.f32.mrf.mxu0
      %802 = vmatprep.mubr.f32.mxu0 0.0
      %803 = vmatmul.mubr.f32.gmra.mxu0 %v619
      %v804 = vpop.f32.mrf.mxu0
      %v805 = vadd.f32 %v484, %v804
      %v806 = vpop.f32.mrf.mxu0
      %807 = vmatprep.mubr.f32.mxu0 0.0
      %808 = vmatmul.mubr.f32.gmra.mxu0 %v622
      %v809 = vpop.f32.mrf.mxu0
      %v810 = vadd.f32 %v489, %v809
      %v811 = vpop.f32.mrf.mxu0
      %812 = vmatprep.mubr.f32.mxu0 0.0
      %813 = vmatmul.mubr.f32.gmra.mxu0 %v625
      %v814 = vpop.f32.mrf.mxu0
      %v815 = vadd.f32 %v494, %v814
      %v816 = vpop.f32.mrf.mxu0
      %817 = vmatprep.mubr.f32.mxu0 0.0
      %818 = vmatmul.mubr.f32.gmra.mxu0 %v628
      %v819 = vpop.f32.mrf.mxu0
      %v820 = vadd.f32 %v499, %v819
      %v821 = vpop.f32.mrf.mxu0
      %822 = vmatprep.mubr.f32.mxu0 0.0
      %823 = vmatmul.mubr.f32.gmra.mxu0 %v631
      %v824 = vpop.f32.mrf.mxu0
      %v825 = vadd.f32 %v504, %v824
      %v826 = vpop.f32.mrf.mxu0
      %827 = vmatprep.mubr.f32.mxu0 0.0
      %828 = vmatmul.mubr.f32.gmra.mxu0 %v634
      %v829 = vpop.f32.mrf.mxu0
      %v830 = vadd.f32 %v509, %v829
      %v831 = vpop.f32.mrf.mxu0
      %832 = vmatprep.mubr.f32.mxu0 0.0
      %833 = vmatmul.mubr.f32.gmra.mxu0 %v637
      %v834 = vpop.f32.mrf.mxu0
      %v835 = vadd.f32 %v514, %v834
      %v836 = vpop.f32.mrf.mxu0
      %837 = vmatprep.mubr.f32.mxu0 0.0
      %838 = vmatmul.mubr.f32.gmra.mxu0 %v640
      %v839 = vpop.f32.mrf.mxu0
      %v840 = vadd.f32 %v519, %v839
      %v841 = vpop.f32.mrf.mxu0
      %842 = vmatprep.mubr.f32.mxu0 0.0
      %843 = vmatmul.mubr.f32.gmra.mxu0 %v643
      %v844 = vpop.f32.mrf.mxu0
      %v845 = vadd.f32 %v524, %v844
      %v846 = vpop.f32.mrf.mxu0
      %847 = vmatprep.mubr.f32.mxu0 0.0
      %848 = vmatmul.mubr.f32.gmra.mxu0 %v646
      %v849 = vpop.f32.mrf.mxu0
      %v850 = vadd.f32 %v529, %v849
      %v851 = vpop.f32.mrf.mxu0
      %852 = vmatprep.mubr.f32.mxu0 0.0
      %853 = vmatmul.mubr.f32.gmra.mxu0 %v649
      %v854 = vpop.f32.mrf.mxu0
      %v855 = vadd.f32 %v534, %v854
      %v856 = vpop.f32.mrf.mxu0
      %857 = vmatprep.mubr.f32.mxu0 0.0
      %858 = vmatmul.mubr.f32.gmra.mxu0 %v652
      %v859 = vpop.f32.mrf.mxu0
      %v860 = vadd.f32 %v539, %v859
      %v861 = vpop.f32.mrf.mxu0
      %862 = vmatprep.mubr.f32.mxu0 0.0
      %863 = vmatmul.mubr.f32.gmra.mxu0 %v655
      %v864 = vpop.f32.mrf.mxu0
      %v865 = vadd.f32 %v544, %v864
      %v866 = vpop.f32.mrf.mxu0
      %867 = vmatprep.mubr.f32.mxu0 0.0
      %868 = vmatmul.mubr.f32.gmra.mxu0 %v658
      %v869 = vpop.f32.mrf.mxu0
      %v870 = vadd.f32 %v549, %v869
      %v871 = vpop.f32.mrf.mxu0
      %872 = vmatprep.mubr.f32.mxu0 0.0
      %873 = vmatmul.mubr.f32.gmra.mxu0 %v661
      %v874 = vpop.f32.mrf.mxu0
      %v875 = vadd.f32 %v554, %v874
      %v876 = vpop.f32.mrf.mxu0
      %877 = vmatprep.mubr.f32.mxu0 0.0
      %878 = vmatmul.mubr.f32.gmra.mxu0 %v664
      %v879 = vpop.f32.mrf.mxu0
      %v880 = vadd.f32 %v559, %v879
      %v881 = vpop.f32.mrf.mxu0
      %882 = vmatprep.mubr.f32.mxu0 0.0
      %883 = vmatmul.mubr.f32.gmra.mxu0 %v667
      %v884 = vpop.f32.mrf.mxu0
      %v885 = vadd.f32 %v564, %v884
      %v886 = vpop.f32.mrf.mxu0
      %887 = vmatprep.mubr.f32.mxu0 0.0
      %888 = vmatmul.mubr.f32.gmra.mxu0 %v670
      %v889 = vpop.f32.mrf.mxu0
      %v890 = vadd.f32 %v569, %v889
      %v891 = vpop.f32.mrf.mxu0
      %892 = vmatprep.mubr.f32.mxu0 0.0
      %893 = vmatmul.mubr.f32.gmra.mxu0 %v673
      %v894 = vpop.f32.mrf.mxu0
      %v895 = vadd.f32 %v574, %v894
      %v896 = vpop.f32.mrf.mxu0
      %897 = vmatprep.mubr.f32.mxu0 0.0
      %898 = vmatmul.mubr.f32.gmra.mxu0 %v676
      %v899 = vpop.f32.mrf.mxu0
      %v900 = vadd.f32 %v579, %v899
      %v901 = vpop.f32.mrf.mxu0
      %902 = vdwg.mxu0
      %s903 = sadd.s32 %s179, 32
      %s904 = scalar_lea.vmem %s0, %s903
      %v905 = vld [vmem:[%s904] sm:$0xff]
      %v906 = vld [vmem:[%s904 + $0x8] sm:$0xff]
      %v907 = vld [vmem:[%s904 + $0x10] sm:$0xff]
      %v908 = vld [vmem:[%s904 + $0x18] sm:$0xff]
      %v909 = vld [vmem:[%s904 + $0x20] sm:$0xff]
      %v910 = vld [vmem:[%s904 + $0x28] sm:$0xff]
      %v911 = vld [vmem:[%s904 + $0x30] sm:$0xff]
      %v912 = vld [vmem:[%s904 + $0x38] sm:$0xff]
      %v913 = vld [vmem:[%s904 + $0x40] sm:$0xff]
      %v914 = vld [vmem:[%s904 + $0x48] sm:$0xff]
      %v915 = vld [vmem:[%s904 + $0x50] sm:$0xff]
      %v916 = vld [vmem:[%s904 + $0x58] sm:$0xff]
      %v917 = vld [vmem:[%s904 + $0x60] sm:$0xff]
      %v918 = vld [vmem:[%s904 + $0x68] sm:$0xff]
      %v919 = vld [vmem:[%s904 + $0x70] sm:$0xff]
      %v920 = vld [vmem:[%s904 + $0x78] sm:$0xff]
      %v921 = vld [vmem:[%s904 + $0x80] sm:$0xff]
      %v922 = vld [vmem:[%s904 + $0x88] sm:$0xff]
      %v923 = vld [vmem:[%s904 + $0x90] sm:$0xff]
      %v924 = vld [vmem:[%s904 + $0x98] sm:$0xff]
      %v925 = vld [vmem:[%s904 + $0xa0] sm:$0xff]
      %v926 = vld [vmem:[%s904 + $0xa8] sm:$0xff]
      %v927 = vld [vmem:[%s904 + $0xb0] sm:$0xff]
      %v928 = vld [vmem:[%s904 + $0xb8] sm:$0xff]
      %v929 = vld [vmem:[%s904 + $0xc0] sm:$0xff]
      %v930 = vld [vmem:[%s904 + $0xc8] sm:$0xff]
      %v931 = vld [vmem:[%s904 + $0xd0] sm:$0xff]
      %v932 = vld [vmem:[%s904 + $0xd8] sm:$0xff]
      %v933 = vld [vmem:[%s904 + $0xe0] sm:$0xff]
      %v934 = vld [vmem:[%s904 + $0xe8] sm:$0xff]
      %v935 = vld [vmem:[%s904 + $0xf0] sm:$0xff]
      %v936 = vld [vmem:[%s904 + $0xf8] sm:$0xff]
      %s937 = scalar_lea.vmem %s1, 96
      %v938 = vld [vmem:[%s937] sm:$0xff]
      %v939 = vld [vmem:[%s937 + $0x8] sm:$0xff]
      %v940 = vld [vmem:[%s937 + $0x10] sm:$0xff]
      %v941 = vld [vmem:[%s937 + $0x18] sm:$0xff]
      %v942 = vld [vmem:[%s937 + $0x20] sm:$0xff]
      %v943 = vld [vmem:[%s937 + $0x28] sm:$0xff]
      %v945 = vsel %vm260, %v905, 0
      %v948 = vsel %vm260, %v906, 0
      %v951 = vsel %vm260, %v907, 0
      %v954 = vsel %vm260, %v908, 0
      %v957 = vsel %vm260, %v909, 0
      %v960 = vsel %vm260, %v910, 0
      %v963 = vsel %vm260, %v911, 0
      %v966 = vsel %vm260, %v912, 0
      %v969 = vsel %vm260, %v913, 0
      %v972 = vsel %vm260, %v914, 0
      %v975 = vsel %vm260, %v915, 0
      %v978 = vsel %vm260, %v916, 0
      %v981 = vsel %vm260, %v917, 0
      %v984 = vsel %vm260, %v918, 0
      %v987 = vsel %vm260, %v919, 0
      %v990 = vsel %vm260, %v920, 0
      %v993 = vsel %vm260, %v921, 0
      %v996 = vsel %vm260, %v922, 0
      %v999 = vsel %vm260, %v923, 0
      %v1002 = vsel %vm260, %v924, 0
      %v1005 = vsel %vm260, %v925, 0
      %v1008 = vsel %vm260, %v926, 0
      %v1011 = vsel %vm260, %v927, 0
      %v1014 = vsel %vm260, %v928, 0
      %v1017 = vsel %vm260, %v929, 0
      %v1020 = vsel %vm260, %v930, 0
      %v1023 = vsel %vm260, %v931, 0
      %v1026 = vsel %vm260, %v932, 0
      %v1029 = vsel %vm260, %v933, 0
      %v1032 = vsel %vm260, %v934, 0
      %v1035 = vsel %vm260, %v935, 0
      %v1038 = vsel %vm260, %v936, 0
      %1040 = vmatprep.subr.mxu0 0.0
      %1041 = vmatpush1.msra.mxu0 0.0
      %1042 = vmatprep.subr.mxu0 0.0
      %1043 = vmatpush1.msra.mxu0 0.0
      %1044 = vmatprep.subr.mxu0 0.0
      %1045 = vmatpush1.msra.mxu0 0.0
      %1046 = vmatprep.subr.mxu0 0.0
      %1047 = vmatpush1.msra.mxu0 0.0
      %1048 = vmatprep.subr.mxu0 0.0
      %1049 = vmatpush1.msra.mxu0 0.0
      %1050 = vmatprep.subr.mxu0 0.0
      %1051 = vmatpush1.msra.mxu0 0.0
      %1052 = vmatprep.subr.mxu0 0.0
      %1053 = vmatpush1.msra.mxu0 0.0
      %1054 = vmatprep.subr.mxu0 0.0
      %1055 = vmatpush1.msra.mxu0 0.0
      %1056 = vmatprep.subr.mxu0 0.0
      %1057 = vmatpush1.msra.mxu0 0.0
      %1058 = vmatprep.subr.mxu0 0.0
      %1059 = vmatpush1.msra.mxu0 0.0
      %1060 = vmatprep.subr.mxu0 0.0
      %1061 = vmatpush1.msra.mxu0 %v943
      %1062 = vmatprep.subr.mxu0 0.0
      %1063 = vmatpush1.msra.mxu0 %v942
      %1064 = vmatprep.subr.mxu0 0.0
      %1065 = vmatpush1.msra.mxu0 %v941
      %1066 = vmatprep.subr.mxu0 0.0
      %1067 = vmatpush1.msra.mxu0 %v940
      %1068 = vmatprep.subr.mxu0 0.0
      %1069 = vmatpush1.msra.mxu0 %v939
      %1070 = vmatprep.subr.mxu0 0.0
      %1071 = vmatpush1.msra.mxu0 %v938
      %1072 = vmatprep.subr.mxu0 0.0
      %1073 = vmatpush2.msra.mxu0 0.0
      %1074 = vmatprep.subr.mxu0 0.0
      %1075 = vmatpush2.msra.mxu0 0.0
      %1076 = vmatprep.subr.mxu0 0.0
      %1077 = vmatpush2.msra.mxu0 0.0
      %1078 = vmatprep.subr.mxu0 0.0
      %1079 = vmatpush2.msra.mxu0 0.0
      %1080 = vmatprep.subr.mxu0 0.0
      %1081 = vmatpush2.msra.mxu0 0.0
      %1082 = vmatprep.subr.mxu0 0.0
      %1083 = vmatpush2.msra.mxu0 0.0
      %1084 = vmatprep.subr.mxu0 0.0
      %1085 = vmatpush2.msra.mxu0 0.0
      %1086 = vmatprep.subr.mxu0 0.0
      %1087 = vmatpush2.msra.mxu0 0.0
      %1088 = vmatprep.subr.mxu0 0.0
      %1089 = vmatpush2.msra.mxu0 0.0
      %1090 = vmatprep.subr.mxu0 0.0
      %1091 = vmatpush2.msra.mxu0 0.0
      %1092 = vmatprep.subr.mxu0 0.0
      %1093 = vmatpush2.msra.mxu0 0.0
      %1094 = vmatprep.subr.mxu0 0.0
      %1095 = vmatpush2.msra.mxu0 0.0
      %1096 = vmatprep.subr.mxu0 0.0
      %1097 = vmatpush2.msra.mxu0 0.0
      %1098 = vmatprep.subr.mxu0 0.0
      %1099 = vmatpush2.msra.mxu0 0.0
      %1100 = vmatprep.subr.mxu0 0.0
      %1101 = vmatpush2.msra.mxu0 0.0
      %1102 = vmatprep.subr.mxu0 0.0
      %1103 = vmatpush2.msra.mxu0 0.0
      %1104 = vmatprep.mubr.f32.mxu0 0.0
      %1105 = vmatmul.mubr.f32.gmra.mxu0 %v945
      %v1106 = vpop.f32.mrf.mxu0
      %v1107 = vadd.f32 0.0, %v1106
      %v1108 = vpop.f32.mrf.mxu0
      %1109 = vmatprep.mubr.f32.mxu0 0.0
      %1110 = vmatmul.mubr.f32.gmra.mxu0 %v948
      %v1111 = vpop.f32.mrf.mxu0
      %v1112 = vadd.f32 0.0, %v1111
      %v1113 = vpop.f32.mrf.mxu0
      %1114 = vmatprep.mubr.f32.mxu0 0.0
      %1115 = vmatmul.mubr.f32.gmra.mxu0 %v951
      %v1116 = vpop.f32.mrf.mxu0
      %v1117 = vadd.f32 0.0, %v1116
      %v1118 = vpop.f32.mrf.mxu0
      %1119 = vmatprep.mubr.f32.mxu0 0.0
      %1120 = vmatmul.mubr.f32.gmra.mxu0 %v954
      %v1121 = vpop.f32.mrf.mxu0
      %v1122 = vadd.f32 0.0, %v1121
      %v1123 = vpop.f32.mrf.mxu0
      %1124 = vmatprep.mubr.f32.mxu0 0.0
      %1125 = vmatmul.mubr.f32.gmra.mxu0 %v957
      %v1126 = vpop.f32.mrf.mxu0
      %v1127 = vadd.f32 0.0, %v1126
      %v1128 = vpop.f32.mrf.mxu0
      %1129 = vmatprep.mubr.f32.mxu0 0.0
      %1130 = vmatmul.mubr.f32.gmra.mxu0 %v960
      %v1131 = vpop.f32.mrf.mxu0
      %v1132 = vadd.f32 0.0, %v1131
      %v1133 = vpop.f32.mrf.mxu0
      %1134 = vmatprep.mubr.f32.mxu0 0.0
      %1135 = vmatmul.mubr.f32.gmra.mxu0 %v963
      %v1136 = vpop.f32.mrf.mxu0
      %v1137 = vadd.f32 0.0, %v1136
      %v1138 = vpop.f32.mrf.mxu0
      %1139 = vmatprep.mubr.f32.mxu0 0.0
      %1140 = vmatmul.mubr.f32.gmra.mxu0 %v966
      %v1141 = vpop.f32.mrf.mxu0
      %v1142 = vadd.f32 0.0, %v1141
      %v1143 = vpop.f32.mrf.mxu0
      %1144 = vmatprep.mubr.f32.mxu0 0.0
      %1145 = vmatmul.mubr.f32.gmra.mxu0 %v969
      %v1146 = vpop.f32.mrf.mxu0
      %v1147 = vadd.f32 0.0, %v1146
      %v1148 = vpop.f32.mrf.mxu0
      %1149 = vmatprep.mubr.f32.mxu0 0.0
      %1150 = vmatmul.mubr.f32.gmra.mxu0 %v972
      %v1151 = vpop.f32.mrf.mxu0
      %v1152 = vadd.f32 0.0, %v1151
      %v1153 = vpop.f32.mrf.mxu0
      %1154 = vmatprep.mubr.f32.mxu0 0.0
      %1155 = vmatmul.mubr.f32.gmra.mxu0 %v975
      %v1156 = vpop.f32.mrf.mxu0
      %v1157 = vadd.f32 0.0, %v1156
      %v1158 = vpop.f32.mrf.mxu0
      %1159 = vmatprep.mubr.f32.mxu0 0.0
      %1160 = vmatmul.mubr.f32.gmra.mxu0 %v978
      %v1161 = vpop.f32.mrf.mxu0
      %v1162 = vadd.f32 0.0, %v1161
      %v1163 = vpop.f32.mrf.mxu0
      %1164 = vmatprep.mubr.f32.mxu0 0.0
      %1165 = vmatmul.mubr.f32.gmra.mxu0 %v981
      %v1166 = vpop.f32.mrf.mxu0
      %v1167 = vadd.f32 0.0, %v1166
      %v1168 = vpop.f32.mrf.mxu0
      %1169 = vmatprep.mubr.f32.mxu0 0.0
      %1170 = vmatmul.mubr.f32.gmra.mxu0 %v984
      %v1171 = vpop.f32.mrf.mxu0
      %v1172 = vadd.f32 0.0, %v1171
      %v1173 = vpop.f32.mrf.mxu0
      %1174 = vmatprep.mubr.f32.mxu0 0.0
      %1175 = vmatmul.mubr.f32.gmra.mxu0 %v987
      %v1176 = vpop.f32.mrf.mxu0
      %v1177 = vadd.f32 0.0, %v1176
      %v1178 = vpop.f32.mrf.mxu0
      %1179 = vmatprep.mubr.f32.mxu0 0.0
      %1180 = vmatmul.mubr.f32.gmra.mxu0 %v990
      %v1181 = vpop.f32.mrf.mxu0
      %v1182 = vadd.f32 0.0, %v1181
      %v1183 = vpop.f32.mrf.mxu0
      %1184 = vmatprep.mubr.f32.mxu0 0.0
      %1185 = vmatmul.mubr.f32.gmra.mxu0 %v993
      %v1186 = vpop.f32.mrf.mxu0
      %v1187 = vadd.f32 0.0, %v1186
      %v1188 = vpop.f32.mrf.mxu0
      %1189 = vmatprep.mubr.f32.mxu0 0.0
      %1190 = vmatmul.mubr.f32.gmra.mxu0 %v996
      %v1191 = vpop.f32.mrf.mxu0
      %v1192 = vadd.f32 0.0, %v1191
      %v1193 = vpop.f32.mrf.mxu0
      %1194 = vmatprep.mubr.f32.mxu0 0.0
      %1195 = vmatmul.mubr.f32.gmra.mxu0 %v999
      %v1196 = vpop.f32.mrf.mxu0
      %v1197 = vadd.f32 0.0, %v1196
      %v1198 = vpop.f32.mrf.mxu0
      %1199 = vmatprep.mubr.f32.mxu0 0.0
      %1200 = vmatmul.mubr.f32.gmra.mxu0 %v1002
      %v1201 = vpop.f32.mrf.mxu0
      %v1202 = vadd.f32 0.0, %v1201
      %v1203 = vpop.f32.mrf.mxu0
      %1204 = vmatprep.mubr.f32.mxu0 0.0
      %1205 = vmatmul.mubr.f32.gmra.mxu0 %v1005
      %v1206 = vpop.f32.mrf.mxu0
      %v1207 = vadd.f32 0.0, %v1206
      %v1208 = vpop.f32.mrf.mxu0
      %1209 = vmatprep.mubr.f32.mxu0 0.0
      %1210 = vmatmul.mubr.f32.gmra.mxu0 %v1008
      %v1211 = vpop.f32.mrf.mxu0
      %v1212 = vadd.f32 0.0, %v1211
      %v1213 = vpop.f32.mrf.mxu0
      %1214 = vmatprep.mubr.f32.mxu0 0.0
      %1215 = vmatmul.mubr.f32.gmra.mxu0 %v1011
      %v1216 = vpop.f32.mrf.mxu0
      %v1217 = vadd.f32 0.0, %v1216
      %v1218 = vpop.f32.mrf.mxu0
      %1219 = vmatprep.mubr.f32.mxu0 0.0
      %1220 = vmatmul.mubr.f32.gmra.mxu0 %v1014
      %v1221 = vpop.f32.mrf.mxu0
      %v1222 = vadd.f32 0.0, %v1221
      %v1223 = vpop.f32.mrf.mxu0
      %1224 = vmatprep.mubr.f32.mxu0 0.0
      %1225 = vmatmul.mubr.f32.gmra.mxu0 %v1017
      %v1226 = vpop.f32.mrf.mxu0
      %v1227 = vadd.f32 0.0, %v1226
      %v1228 = vpop.f32.mrf.mxu0
      %1229 = vmatprep.mubr.f32.mxu0 0.0
      %1230 = vmatmul.mubr.f32.gmra.mxu0 %v1020
      %v1231 = vpop.f32.mrf.mxu0
      %v1232 = vadd.f32 0.0, %v1231
      %v1233 = vpop.f32.mrf.mxu0
      %1234 = vmatprep.mubr.f32.mxu0 0.0
      %1235 = vmatmul.mubr.f32.gmra.mxu0 %v1023
      %v1236 = vpop.f32.mrf.mxu0
      %v1237 = vadd.f32 0.0, %v1236
      %v1238 = vpop.f32.mrf.mxu0
      %1239 = vmatprep.mubr.f32.mxu0 0.0
      %1240 = vmatmul.mubr.f32.gmra.mxu0 %v1026
      %v1241 = vpop.f32.mrf.mxu0
      %v1242 = vadd.f32 0.0, %v1241
      %v1243 = vpop.f32.mrf.mxu0
      %1244 = vmatprep.mubr.f32.mxu0 0.0
      %1245 = vmatmul.mubr.f32.gmra.mxu0 %v1029
      %v1246 = vpop.f32.mrf.mxu0
      %v1247 = vadd.f32 0.0, %v1246
      %v1248 = vpop.f32.mrf.mxu0
      %1249 = vmatprep.mubr.f32.mxu0 0.0
      %1250 = vmatmul.mubr.f32.gmra.mxu0 %v1032
      %v1251 = vpop.f32.mrf.mxu0
      %v1252 = vadd.f32 0.0, %v1251
      %v1253 = vpop.f32.mrf.mxu0
      %1254 = vmatprep.mubr.f32.mxu0 0.0
      %1255 = vmatmul.mubr.f32.gmra.mxu0 %v1035
      %v1256 = vpop.f32.mrf.mxu0
      %v1257 = vadd.f32 0.0, %v1256
      %v1258 = vpop.f32.mrf.mxu0
      %1259 = vmatprep.mubr.f32.mxu0 0.0
      %1260 = vmatmul.mubr.f32.gmra.mxu0 %v1038
      %v1261 = vpop.f32.mrf.mxu0
      %v1262 = vadd.f32 0.0, %v1261
      %v1263 = vpop.f32.mrf.mxu0
      %1264 = vdwg.mxu0
      %v1265 = vadd.f32 %v745, %v1107
      %v1266 = vadd.f32 %v750, %v1112
      %v1267 = vadd.f32 %v755, %v1117
      %v1268 = vadd.f32 %v760, %v1122
      %v1269 = vadd.f32 %v765, %v1127
      %v1270 = vadd.f32 %v770, %v1132
      %v1271 = vadd.f32 %v775, %v1137
      %v1272 = vadd.f32 %v780, %v1142
      %v1273 = vadd.f32 %v785, %v1147
      %v1274 = vadd.f32 %v790, %v1152
      %v1275 = vadd.f32 %v795, %v1157
      %v1276 = vadd.f32 %v800, %v1162
      %v1277 = vadd.f32 %v805, %v1167
      %v1278 = vadd.f32 %v810, %v1172
      %v1279 = vadd.f32 %v815, %v1177
      %v1280 = vadd.f32 %v820, %v1182
      %v1281 = vadd.f32 %v825, %v1187
      %v1282 = vadd.f32 %v830, %v1192
      %v1283 = vadd.f32 %v835, %v1197
      %v1284 = vadd.f32 %v840, %v1202
      %v1285 = vadd.f32 %v845, %v1207
      %v1286 = vadd.f32 %v850, %v1212
      %v1287 = vadd.f32 %v855, %v1217
      %v1288 = vadd.f32 %v860, %v1222
      %v1289 = vadd.f32 %v865, %v1227
      %v1290 = vadd.f32 %v870, %v1232
      %v1291 = vadd.f32 %v875, %v1237
      %v1292 = vadd.f32 %v880, %v1242
      %v1293 = vadd.f32 %v885, %v1247
      %v1294 = vadd.f32 %v890, %v1252
      %v1295 = vadd.f32 %v895, %v1257
      %v1296 = vadd.f32 %v900, %v1262
      %v1297 = vld [vmem:[%s2] sm:$0x1]
      %v1299 = vlaneseq
      %v1300 = vshrl.u32 %v1299, 7
      %v1301 = vsub.s32 0, %v1300
      %v1302 = vrot.slane %v1297, %v1301
      %v1304 = vmul.f32 %v1265, %v1302
      %v1305 = vmul.f32 %v1266, %v1302
      %v1306 = vmul.f32 %v1267, %v1302
      %v1307 = vmul.f32 %v1268, %v1302
      %v1308 = vmul.f32 %v1269, %v1302
      %v1309 = vmul.f32 %v1270, %v1302
      %v1310 = vmul.f32 %v1271, %v1302
      %v1311 = vmul.f32 %v1272, %v1302
      %v1312 = vmul.f32 %v1273, %v1302
      %v1313 = vmul.f32 %v1274, %v1302
      %v1314 = vmul.f32 %v1275, %v1302
      %v1315 = vmul.f32 %v1276, %v1302
      %v1316 = vmul.f32 %v1277, %v1302
      %v1317 = vmul.f32 %v1278, %v1302
      %v1318 = vmul.f32 %v1279, %v1302
      %v1319 = vmul.f32 %v1280, %v1302
      %v1320 = vmul.f32 %v1281, %v1302
      %v1321 = vmul.f32 %v1282, %v1302
      %v1322 = vmul.f32 %v1283, %v1302
      %v1323 = vmul.f32 %v1284, %v1302
      %v1324 = vmul.f32 %v1285, %v1302
      %v1325 = vmul.f32 %v1286, %v1302
      %v1326 = vmul.f32 %v1287, %v1302
      %v1327 = vmul.f32 %v1288, %v1302
      %v1328 = vmul.f32 %v1289, %v1302
      %v1329 = vmul.f32 %v1290, %v1302
      %v1330 = vmul.f32 %v1291, %v1302
      %v1331 = vmul.f32 %v1292, %v1302
      %v1332 = vmul.f32 %v1293, %v1302
      %v1333 = vmul.f32 %v1294, %v1302
      %v1334 = vmul.f32 %v1295, %v1302
      %v1335 = vmul.f32 %v1296, %v1302
      %v1336 = vld [vmem:[%s3] sm:$0x1]
      %v1338 = vlaneseq
      %v1339 = vshrl.u32 %v1338, 7
      %v1340 = vsub.s32 0, %v1339
      %v1341 = vrot.slane %v1336, %v1340
      %v1343 = vadd.f32 %v1304, %v1341
      %v1344 = vadd.f32 %v1305, %v1341
      %v1345 = vadd.f32 %v1306, %v1341
      %v1346 = vadd.f32 %v1307, %v1341
      %v1347 = vadd.f32 %v1308, %v1341
      %v1348 = vadd.f32 %v1309, %v1341
      %v1349 = vadd.f32 %v1310, %v1341
      %v1350 = vadd.f32 %v1311, %v1341
      %v1351 = vadd.f32 %v1312, %v1341
      %v1352 = vadd.f32 %v1313, %v1341
      %v1353 = vadd.f32 %v1314, %v1341
      %v1354 = vadd.f32 %v1315, %v1341
      %v1355 = vadd.f32 %v1316, %v1341
      %v1356 = vadd.f32 %v1317, %v1341
      %v1357 = vadd.f32 %v1318, %v1341
      %v1358 = vadd.f32 %v1319, %v1341
      %v1359 = vadd.f32 %v1320, %v1341
      %v1360 = vadd.f32 %v1321, %v1341
      %v1361 = vadd.f32 %v1322, %v1341
      %v1362 = vadd.f32 %v1323, %v1341
      %v1363 = vadd.f32 %v1324, %v1341
      %v1364 = vadd.f32 %v1325, %v1341
      %v1365 = vadd.f32 %v1326, %v1341
      %v1366 = vadd.f32 %v1327, %v1341
      %v1367 = vadd.f32 %v1328, %v1341
      %v1368 = vadd.f32 %v1329, %v1341
      %v1369 = vadd.f32 %v1330, %v1341
      %v1370 = vadd.f32 %v1331, %v1341
      %v1371 = vadd.f32 %v1332, %v1341
      %v1372 = vadd.f32 %v1333, %v1341
      %v1373 = vadd.f32 %v1334, %v1341
      %v1374 = vadd.f32 %v1335, %v1341
      %v1375 = vmax.f32 %v1343, 0.0
      %v1376 = vmax.f32 %v1344, 0.0
      %v1377 = vmax.f32 %v1345, 0.0
      %v1378 = vmax.f32 %v1346, 0.0
      %v1379 = vmax.f32 %v1347, 0.0
      %v1380 = vmax.f32 %v1348, 0.0
      %v1381 = vmax.f32 %v1349, 0.0
      %v1382 = vmax.f32 %v1350, 0.0
      %v1383 = vmax.f32 %v1351, 0.0
      %v1384 = vmax.f32 %v1352, 0.0
      %v1385 = vmax.f32 %v1353, 0.0
      %v1386 = vmax.f32 %v1354, 0.0
      %v1387 = vmax.f32 %v1355, 0.0
      %v1388 = vmax.f32 %v1356, 0.0
      %v1389 = vmax.f32 %v1357, 0.0
      %v1390 = vmax.f32 %v1358, 0.0
      %v1391 = vmax.f32 %v1359, 0.0
      %v1392 = vmax.f32 %v1360, 0.0
      %v1393 = vmax.f32 %v1361, 0.0
      %v1394 = vmax.f32 %v1362, 0.0
      %v1395 = vmax.f32 %v1363, 0.0
      %v1396 = vmax.f32 %v1364, 0.0
      %v1397 = vmax.f32 %v1365, 0.0
      %v1398 = vmax.f32 %v1366, 0.0
      %v1399 = vmax.f32 %v1367, 0.0
      %v1400 = vmax.f32 %v1368, 0.0
      %v1401 = vmax.f32 %v1369, 0.0
      %v1402 = vmax.f32 %v1370, 0.0
      %v1403 = vmax.f32 %v1371, 0.0
      %v1404 = vmax.f32 %v1372, 0.0
      %v1405 = vmax.f32 %v1373, 0.0
      %v1406 = vmax.f32 %v1374, 0.0
      %vm1407 = vcmask 130048
      %1408 = vst.msk [vmem:[%s177] sm:$0xff] %vm1407, %v1375
      %1409 = vst.msk [vmem:[%s177 + $0x8] sm:$0xff] %vm1407, %v1376
      %1410 = vst.msk [vmem:[%s177 + $0x10] sm:$0xff] %vm1407, %v1377
      %1411 = vst.msk [vmem:[%s177 + $0x18] sm:$0xff] %vm1407, %v1378
      %1412 = vst.msk [vmem:[%s177 + $0x20] sm:$0xff] %vm1407, %v1379
      %1413 = vst.msk [vmem:[%s177 + $0x28] sm:$0xff] %vm1407, %v1380
      %1414 = vst.msk [vmem:[%s177 + $0x30] sm:$0xff] %vm1407, %v1381
      %1415 = vst.msk [vmem:[%s177 + $0x38] sm:$0xff] %vm1407, %v1382
      %1416 = vst.msk [vmem:[%s177 + $0x40] sm:$0xff] %vm1407, %v1383
      %1417 = vst.msk [vmem:[%s177 + $0x48] sm:$0xff] %vm1407, %v1384
      %1418 = vst.msk [vmem:[%s177 + $0x50] sm:$0xff] %vm1407, %v1385
      %1419 = vst.msk [vmem:[%s177 + $0x58] sm:$0xff] %vm1407, %v1386
      %1420 = vst.msk [vmem:[%s177 + $0x60] sm:$0xff] %vm1407, %v1387
      %1421 = vst.msk [vmem:[%s177 + $0x68] sm:$0xff] %vm1407, %v1388
      %1422 = vst.msk [vmem:[%s177 + $0x70] sm:$0xff] %vm1407, %v1389
      %1423 = vst.msk [vmem:[%s177 + $0x78] sm:$0xff] %vm1407, %v1390
      %1424 = vst.msk [vmem:[%s177 + $0x80] sm:$0xff] %vm1407, %v1391
      %1425 = vst.msk [vmem:[%s177 + $0x88] sm:$0xff] %vm1407, %v1392
      %1426 = vst.msk [vmem:[%s177 + $0x90] sm:$0xff] %vm1407, %v1393
      %1427 = vst.msk [vmem:[%s177 + $0x98] sm:$0xff] %vm1407, %v1394
      %1428 = vst.msk [vmem:[%s177 + $0xa0] sm:$0xff] %vm1407, %v1395
      %1429 = vst.msk [vmem:[%s177 + $0xa8] sm:$0xff] %vm1407, %v1396
      %1430 = vst.msk [vmem:[%s177 + $0xb0] sm:$0xff] %vm1407, %v1397
      %1431 = vst.msk [vmem:[%s177 + $0xb8] sm:$0xff] %vm1407, %v1398
      %1432 = vst.msk [vmem:[%s177 + $0xc0] sm:$0xff] %vm1407, %v1399
      %1433 = vst.msk [vmem:[%s177 + $0xc8] sm:$0xff] %vm1407, %v1400
      %1434 = vst.msk [vmem:[%s177 + $0xd0] sm:$0xff] %vm1407, %v1401
      %1435 = vst.msk [vmem:[%s177 + $0xd8] sm:$0xff] %vm1407, %v1402
      %1436 = vst.msk [vmem:[%s177 + $0xe0] sm:$0xff] %vm1407, %v1403
      %1437 = vst.msk [vmem:[%s177 + $0xe8] sm:$0xff] %vm1407, %v1404
      %1438 = vst.msk [vmem:[%s177 + $0xf0] sm:$0xff] %vm1407, %v1405
      %1439 = vst.msk [vmem:[%s177 + $0xf8] sm:$0xff] %vm1407, %v1406
      %s1440 = smul.u32 32, %s15
      %p1441 = scmp.lt.s32.totalorder %s1440, 63
      %s1442 = scalar_select %p1441, %s1440, 63
      %s1443 = smul.addr %s1442, 8
      %s1444 = scalar_lea.vmem %s4, %s1443
      // Predicated region
      $region37: #{conv_normN_AE_forward.4} parent=35 // pred_check
        %p1445 = pneg %p117
      $region38: #{conv_normN_AE_forward.4} parent=35 // pred_check_branch
        %1447 = sbr.rel (%p1445) target = $region40
      $region39: #{conv_normN_AE_forward.4} parent=35 // pred_region
        %s1448 = smul.u32 32, %s15
      $region40: #{conv_normN_AE_forward.4} parent=35 // pred_fallthru
        _
    $region36: #{conv_normN_AE_forward.4} parent=5 // pred_fallthru
      _
    %p1449 = scmp.le.s32.totalorder 2, %s10
    // Predicated region
    $region41: #{conv_normN_AE_forward.4} parent=5 // pred_check
      %p1450 = pneg %p1449
    $region42: #{conv_normN_AE_forward.4} parent=5 // pred_check_branch
      %1452 = sbr.rel (%p1450) target = $region44
    $region43: #{conv_normN_AE_forward.4} parent=5 // pred_region
      %s1453 = ssub.s32 %s10, 2
      // Predicated region
      $region45: #{conv_normN_AE_forward.4} parent=43 // pred_check
        %p1454 = pneg %p123
      $region46: #{conv_normN_AE_forward.4} parent=43 // pred_check_branch
        %1456 = sbr.rel (%p1454) target = $region48
      $region47: #{conv_normN_AE_forward.4} parent=43 // pred_region
        %s1457 = smul.u32 32, %s16
        %p1458 = scmp.lt.s32.totalorder %s1457, 63
        %s1459 = scalar_select %p1458, %s1457, 63
        %s1460 = smul.addr %s1459, 8
        %s1461 = scalar_lea.vmem %s4, %s1460
      $region48: #{conv_normN_AE_forward.4} parent=43 // pred_fallthru
        _
    $region44: #{conv_normN_AE_forward.4} parent=5 // pred_fallthru
      _
  $region6: #{conv_normN_AE_forward.4} parent=0 // loop_footer
    %s14 = sadd.s32 1, %s10
  $region7: #{conv_normN_AE_forward.4} parent=0 // loop_footer_branch
    %9 = sbr.rel target = $region3
  $region8: #{conv_normN_AE_forward.4} parent=0 // loop_exit
    _

// kernel: conv_normN_AE_forward.6
$region0: #{conv_normN_AE_forward.6}
  #allocation0 [shape = 'u32[]', space=smem, size = 0x4, offset = 0x4, fixed_abs, tag = 'smem constant byte address 0x4 - core index']
  #allocation1 [shape = 'u32[144,128]{1,0:T(1,128)}', space=vmem, size = 0x12000, scoped, tag = 'internal scratch']
  %s0 = inlined_call_operand.vmem [shape: f32[1048,32], index: 0, kind: input, shape index: {}]
  %s1 = inlined_call_operand.vmem [shape: f32[2,32,64], index: 1, kind: input, shape index: {}]
  %s2 = inlined_call_operand.vmem [shape: f32[1,64], index: 2, kind: input, shape index: {}]
  %s3 = inlined_call_operand.vmem [shape: f32[1,64], index: 3, kind: input, shape index: {}]
  %s4 = inlined_call_operand.vmem [shape: f32[1024,64], index: 4, kind: output, shape index: {}]
  %s5 = sld [smem:[#allocation0]]
  $region49: #{conv_normN_AE_forward.6} parent=0
    _
  %s7 = ssub.s32 1, %s5
  %s8 = scalar_select 0, %s7, %s5
  loop: start=0, step=1, limit=4
  $region2: #{conv_normN_AE_forward.6} parent=0 // loop_pre_header
    _
  $region3: #{conv_normN_AE_forward.6} parent=0 // loop_header
    %s10 = sphi 0, %s14
    %p11 = scmp.ge.s32.totalorder %s10, 4
    %s18 = sphi 0, %s18
    %s20 = sphi 0, %s18
    %s21 = sphi 0, %s20
    %s35 = sphi 0, %s21
    %s39 = sphi 0, %s39
    %s41 = sphi 0, %s39
    %s42 = sphi 0, %s41
    %s56 = sphi 0, %s42
    %s60 = sphi 0, %s60
    %s62 = sphi 0, %s60
    %s63 = sphi 0, %s62
    %s77 = sphi 0, %s63
    %s81 = sphi 0, %s81
    %s83 = sphi 0, %s81
    %s84 = sphi 0, %s83
    %s98 = sphi 0, %s84
    %s104 = sphi 0, %s106
    %s107 = sphi 0, %s104
    %s108 = sphi 0, %s107
    %s124 = sphi 0, %s108
  $region4: #{conv_normN_AE_forward.6} parent=0 // loop_header_branch
    %13 = sbr.rel (%p11) target = $region8
  $region5: #{conv_normN_AE_forward.6} parent=0 // loop_body
    %s15 = ssub.s32 %s10, 1
    %s16 = ssub.s32 %s10, 2
    %s17 = sadd.s32 %s10, 1
    %s19 = sadd.s32 %s18, 1
    %p22 = scmp.eq.s32.totalorder %s10, 1
    %p23 = scmp.ne.s32.totalorder %s18, %s20
    %p24 = scmp.eq.s32.totalorder %s10, 0
    %p25 = por %p23, %p24
    %p26 = scmp.ne.s32.totalorder %s18, %s20
    %p27 = scmp.eq.s32.totalorder %s15, 1
    %p28 = por %p26, %p27
    %p29 = scmp.ne.s32.totalorder %s20, %s21
    %p30 = scmp.eq.s32.totalorder %s15, 0
    %p31 = por %p29, %p30
    %p32 = scmp.ne.s32.totalorder %s20, %s21
    %p33 = scmp.eq.s32.totalorder %s16, 1
    %p34 = por %p32, %p33
    %p36 = scmp.ne.s32.totalorder %s21, %s35
    %p37 = scmp.eq.s32.totalorder %s16, 0
    %p38 = por %p36, %p37
    %s40 = sadd.s32 %s39, 1
    %p43 = scmp.eq.s32.totalorder %s10, 1
    %p44 = scmp.ne.s32.totalorder %s39, %s41
    %p45 = scmp.eq.s32.totalorder %s10, 0
    %p46 = por %p44, %p45
    %p47 = scmp.ne.s32.totalorder %s39, %s41
    %p48 = scmp.eq.s32.totalorder %s15, 1
    %p49 = por %p47, %p48
    %p50 = scmp.ne.s32.totalorder %s41, %s42
    %p51 = scmp.eq.s32.totalorder %s15, 0
    %p52 = por %p50, %p51
    %p53 = scmp.ne.s32.totalorder %s41, %s42
    %p54 = scmp.eq.s32.totalorder %s16, 1
    %p55 = por %p53, %p54
    %p57 = scmp.ne.s32.totalorder %s42, %s56
    %p58 = scmp.eq.s32.totalorder %s16, 0
    %p59 = por %p57, %p58
    %s61 = sadd.s32 %s60, 1
    %p64 = scmp.eq.s32.totalorder %s10, 1
    %p65 = scmp.ne.s32.totalorder %s60, %s62
    %p66 = scmp.eq.s32.totalorder %s10, 0
    %p67 = por %p65, %p66
    %p68 = scmp.ne.s32.totalorder %s60, %s62
    %p69 = scmp.eq.s32.totalorder %s15, 1
    %p70 = por %p68, %p69
    %p71 = scmp.ne.s32.totalorder %s62, %s63
    %p72 = scmp.eq.s32.totalorder %s15, 0
    %p73 = por %p71, %p72
    %p74 = scmp.ne.s32.totalorder %s62, %s63
    %p75 = scmp.eq.s32.totalorder %s16, 1
    %p76 = por %p74, %p75
    %p78 = scmp.ne.s32.totalorder %s63, %s77
    %p79 = scmp.eq.s32.totalorder %s16, 0
    %p80 = por %p78, %p79
    %s82 = sadd.s32 %s81, 1
    %p85 = scmp.eq.s32.totalorder %s10, 1
    %p86 = scmp.ne.s32.totalorder %s81, %s83
    %p87 = scmp.eq.s32.totalorder %s10, 0
    %p88 = por %p86, %p87
    %p89 = scmp.ne.s32.totalorder %s81, %s83
    %p90 = scmp.eq.s32.totalorder %s15, 1
    %p91 = por %p89, %p90
    %p92 = scmp.ne.s32.totalorder %s83, %s84
    %p93 = scmp.eq.s32.totalorder %s15, 0
    %p94 = por %p92, %p93
    %p95 = scmp.ne.s32.totalorder %s83, %s84
    %p96 = scmp.eq.s32.totalorder %s16, 1
    %p97 = por %p95, %p96
    %p99 = scmp.ne.s32.totalorder %s84, %s98
    %p100 = scmp.eq.s32.totalorder %s16, 0
    %p101 = por %p99, %p100
    %s102 = ssub.s32 %s10, %s17
    %p103 = scmp.eq.s32.totalorder %s102, 0
    %s105 = sadd.s32 %s104, 1
    %s106 = scalar_select %p103, %s104, %s105
    %p109 = pneg %p103
    %p110 = scmp.eq.s32.totalorder %s10, 1
    %p111 = por %p109, %p110
    %p112 = scmp.ne.s32.totalorder %s104, %s107
    %p113 = scmp.eq.s32.totalorder %s10, 0
    %p114 = por %p112, %p113
    %p115 = scmp.ne.s32.totalorder %s104, %s107
    %p116 = scmp.eq.s32.totalorder %s15, 1
    %p117 = por %p115, %p116
    %p118 = scmp.ne.s32.totalorder %s107, %s108
    %p119 = scmp.eq.s32.totalorder %s15, 0
    %p120 = por %p118, %p119
    %p121 = scmp.ne.s32.totalorder %s107, %s108
    %p122 = scmp.eq.s32.totalorder %s16, 1
    %p123 = por %p121, %p122
    %p125 = scmp.ne.s32.totalorder %s108, %s124
    %p126 = scmp.eq.s32.totalorder %s16, 0
    %p127 = por %p125, %p126
    %p128 = scmp.le.s32.totalorder 1, %s10
    %p129 = scmp.lt.s32.totalorder %s10, 3
    %p130 = pnand %p128, %p129
    %p131 = pneg %p130
    // Predicated region
    $region9: #{conv_normN_AE_forward.6} parent=5 // pred_check
      _
    $region10: #{conv_normN_AE_forward.6} parent=5 // pred_check_branch
      %133 = sbr.rel (%p130) target = $region12
    $region11: #{conv_normN_AE_forward.6} parent=5 // pred_region
      %s134 = ssub.s32 %s10, 1
      // Predicated region
      $region13: #{conv_normN_AE_forward.6} parent=11 // pred_check
        %p135 = pneg %p31
      $region14: #{conv_normN_AE_forward.6} parent=11 // pred_check_branch
        %137 = sbr.rel (%p135) target = $region16
      $region15: #{conv_normN_AE_forward.6} parent=11 // pred_region
        _
      $region16: #{conv_normN_AE_forward.6} parent=11 // pred_fallthru
        _
      // Predicated region
      $region17: #{conv_normN_AE_forward.6} parent=11 // pred_check
        %p138 = pneg %p52
      $region18: #{conv_normN_AE_forward.6} parent=11 // pred_check_branch
        %140 = sbr.rel (%p138) target = $region20
      $region19: #{conv_normN_AE_forward.6} parent=11 // pred_region
        _
      $region20: #{conv_normN_AE_forward.6} parent=11 // pred_fallthru
        _
      // Predicated region
      $region21: #{conv_normN_AE_forward.6} parent=11 // pred_check
        %p141 = pneg %p73
      $region22: #{conv_normN_AE_forward.6} parent=11 // pred_check_branch
        %143 = sbr.rel (%p141) target = $region24
      $region23: #{conv_normN_AE_forward.6} parent=11 // pred_region
        _
      $region24: #{conv_normN_AE_forward.6} parent=11 // pred_fallthru
        _
      // Predicated region
      $region25: #{conv_normN_AE_forward.6} parent=11 // pred_check
        %p144 = pneg %p94
      $region26: #{conv_normN_AE_forward.6} parent=11 // pred_check_branch
        %146 = sbr.rel (%p144) target = $region28
      $region27: #{conv_normN_AE_forward.6} parent=11 // pred_region
        _
      $region28: #{conv_normN_AE_forward.6} parent=11 // pred_fallthru
        _
    $region12: #{conv_normN_AE_forward.6} parent=5 // pred_fallthru
      _
    %p147 = scmp.lt.s32.totalorder %s10, 2
    // Predicated region
    $region29: #{conv_normN_AE_forward.6} parent=5 // pred_check
      %p148 = pneg %p147
    $region30: #{conv_normN_AE_forward.6} parent=5 // pred_check_branch
      %150 = sbr.rel (%p148) target = $region32
    $region31: #{conv_normN_AE_forward.6} parent=5 // pred_region
      _
    $region32: #{conv_normN_AE_forward.6} parent=5 // pred_fallthru
      _
    %p151 = scmp.le.s32.totalorder 1, %s10
    %p152 = scmp.lt.s32.totalorder %s10, 3
    %p153 = pnand %p151, %p152
    %p154 = pneg %p153
    // Predicated region
    $region33: #{conv_normN_AE_forward.6} parent=5 // pred_check
      _
    $region34: #{conv_normN_AE_forward.6} parent=5 // pred_check_branch
      %156 = sbr.rel (%p153) target = $region36
    $region35: #{conv_normN_AE_forward.6} parent=5 // pred_region
      %s157 = ssub.s32 %s10, 1
      %p158 = pneg %p31
      %p159 = pneg %p28
      %p160 = pneg %p52
      %p161 = pneg %p49
      %p162 = pneg %p73
      %p163 = pneg %p70
      %p164 = pneg %p94
      %p165 = pneg %p91
      %p166 = pneg %p120
      %p167 = pneg %p117
      %s168 = smul.u32 64, %s15
      %p169 = scmp.lt.s32.totalorder %s168, 127
      %s170 = scalar_select %p169, %s168, 127
      %s171 = smul.addr %s170, 8
      %s172 = scalar_lea.vmem %s4, %s171
      %s173 = smul.u32 64, %s15
      %p174 = scmp.lt.s32.totalorder %s173, 127
      %s175 = scalar_select %p174, %s173, 127
      %s176 = smul.addr %s175, 8
      %s177 = scalar_lea.vmem %s4, %s176
      %s178 = smul.u32 64, %s15
      %s179 = smul.u32 %s15, 512
      %s180 = scalar_lea.vmem %s0, %s179
      %v181 = vld [vmem:[%s180] sm:$0xff]
      %v182 = vld [vmem:[%s180 + $0x8] sm:$0xff]
      %v183 = vld [vmem:[%s180 + $0x10] sm:$0xff]
      %v184 = vld [vmem:[%s180 + $0x18] sm:$0xff]
      %v185 = vld [vmem:[%s180 + $0x20] sm:$0xff]
      %v186 = vld [vmem:[%s180 + $0x28] sm:$0xff]
      %v187 = vld [vmem:[%s180 + $0x30] sm:$0xff]
      %v188 = vld [vmem:[%s180 + $0x38] sm:$0xff]
      %v189 = vld [vmem:[%s180 + $0x40] sm:$0xff]
      %v190 = vld [vmem:[%s180 + $0x48] sm:$0xff]
      %v191 = vld [vmem:[%s180 + $0x50] sm:$0xff]
      %v192 = vld [vmem:[%s180 + $0x58] sm:$0xff]
      %v193 = vld [vmem:[%s180 + $0x60] sm:$0xff]
      %v194 = vld [vmem:[%s180 + $0x68] sm:$0xff]
      %v195 = vld [vmem:[%s180 + $0x70] sm:$0xff]
      %v196 = vld [vmem:[%s180 + $0x78] sm:$0xff]
      %v197 = vld [vmem:[%s180 + $0x80] sm:$0xff]
      %v198 = vld [vmem:[%s180 + $0x88] sm:$0xff]
      %v199 = vld [vmem:[%s180 + $0x90] sm:$0xff]
      %v200 = vld [vmem:[%s180 + $0x98] sm:$0xff]
      %v201 = vld [vmem:[%s180 + $0xa0] sm:$0xff]
      %v202 = vld [vmem:[%s180 + $0xa8] sm:$0xff]
      %v203 = vld [vmem:[%s180 + $0xb0] sm:$0xff]
      %v204 = vld [vmem:[%s180 + $0xb8] sm:$0xff]
      %v205 = vld [vmem:[%s180 + $0xc0] sm:$0xff]
      %v206 = vld [vmem:[%s180 + $0xc8] sm:$0xff]
      %v207 = vld [vmem:[%s180 + $0xd0] sm:$0xff]
      %v208 = vld [vmem:[%s180 + $0xd8] sm:$0xff]
      %v209 = vld [vmem:[%s180 + $0xe0] sm:$0xff]
      %v210 = vld [vmem:[%s180 + $0xe8] sm:$0xff]
      %v211 = vld [vmem:[%s180 + $0xf0] sm:$0xff]
      %v212 = vld [vmem:[%s180 + $0xf8] sm:$0xff]
      %v213 = vld [vmem:[%s180 + $0x100] sm:$0xff]
      %v214 = vld [vmem:[%s180 + $0x108] sm:$0xff]
      %v215 = vld [vmem:[%s180 + $0x110] sm:$0xff]
      %v216 = vld [vmem:[%s180 + $0x118] sm:$0xff]
      %v217 = vld [vmem:[%s180 + $0x120] sm:$0xff]
      %v218 = vld [vmem:[%s180 + $0x128] sm:$0xff]
      %v219 = vld [vmem:[%s180 + $0x130] sm:$0xff]
      %v220 = vld [vmem:[%s180 + $0x138] sm:$0xff]
      %v221 = vld [vmem:[%s180 + $0x140] sm:$0xff]
      %v222 = vld [vmem:[%s180 + $0x148] sm:$0xff]
      %v223 = vld [vmem:[%s180 + $0x150] sm:$0xff]
      %v224 = vld [vmem:[%s180 + $0x158] sm:$0xff]
      %v225 = vld [vmem:[%s180 + $0x160] sm:$0xff]
      %v226 = vld [vmem:[%s180 + $0x168] sm:$0xff]
      %v227 = vld [vmem:[%s180 + $0x170] sm:$0xff]
      %v228 = vld [vmem:[%s180 + $0x178] sm:$0xff]
      %v229 = vld [vmem:[%s180 + $0x180] sm:$0xff]
      %v230 = vld [vmem:[%s180 + $0x188] sm:$0xff]
      %v231 = vld [vmem:[%s180 + $0x190] sm:$0xff]
      %v232 = vld [vmem:[%s180 + $0x198] sm:$0xff]
      %v233 = vld [vmem:[%s180 + $0x1a0] sm:$0xff]
      %v234 = vld [vmem:[%s180 + $0x1a8] sm:$0xff]
      %v235 = vld [vmem:[%s180 + $0x1b0] sm:$0xff]
      %v236 = vld [vmem:[%s180 + $0x1b8] sm:$0xff]
      %v237 = vld [vmem:[%s180 + $0x1c0] sm:$0xff]
      %v238 = vld [vmem:[%s180 + $0x1c8] sm:$0xff]
      %v239 = vld [vmem:[%s180 + $0x1d0] sm:$0xff]
      %v240 = vld [vmem:[%s180 + $0x1d8] sm:$0xff]
      %v241 = vld [vmem:[%s180 + $0x1e0] sm:$0xff]
      %v242 = vld [vmem:[%s180 + $0x1e8] sm:$0xff]
      %v243 = vld [vmem:[%s180 + $0x1f0] sm:$0xff]
      %v244 = vld [vmem:[%s180 + $0x1f8] sm:$0xff]
      %v245 = vld [vmem:[%s1] sm:$0xff]
      %v246 = vld [vmem:[%s1 + $0x8] sm:$0xff]
      %v247 = vld [vmem:[%s1 + $0x10] sm:$0xff]
      %v248 = vld [vmem:[%s1 + $0x18] sm:$0xff]
      %s249 = sadd.s32 %s179, 24
      %s250 = scalar_lea.vmem %s0, %s249
      %v251 = vld [vmem:[%s250] sm:$0xff]
      %v252 = vld [vmem:[%s250 + $0x8] sm:$0xff]
      %v253 = vld [vmem:[%s250 + $0x10] sm:$0xff]
      %v254 = vld [vmem:[%s250 + $0x18] sm:$0xff]
      %v255 = vld [vmem:[%s250 + $0x20] sm:$0xff]
      %v256 = vld [vmem:[%s250 + $0x28] sm:$0xff]
      %v257 = vld [vmem:[%s250 + $0x30] sm:$0xff]
      %v258 = vld [vmem:[%s250 + $0x38] sm:$0xff]
      %v259 = vld [vmem:[%s250 + $0x40] sm:$0xff]
      %v260 = vld [vmem:[%s250 + $0x48] sm:$0xff]
      %v261 = vld [vmem:[%s250 + $0x50] sm:$0xff]
      %v262 = vld [vmem:[%s250 + $0x58] sm:$0xff]
      %v263 = vld [vmem:[%s250 + $0x60] sm:$0xff]
      %v264 = vld [vmem:[%s250 + $0x68] sm:$0xff]
      %v265 = vld [vmem:[%s250 + $0x70] sm:$0xff]
      %v266 = vld [vmem:[%s250 + $0x78] sm:$0xff]
      %v267 = vld [vmem:[%s250 + $0x80] sm:$0xff]
      %v268 = vld [vmem:[%s250 + $0x88] sm:$0xff]
      %v269 = vld [vmem:[%s250 + $0x90] sm:$0xff]
      %v270 = vld [vmem:[%s250 + $0x98] sm:$0xff]
      %v271 = vld [vmem:[%s250 + $0xa0] sm:$0xff]
      %v272 = vld [vmem:[%s250 + $0xa8] sm:$0xff]
      %v273 = vld [vmem:[%s250 + $0xb0] sm:$0xff]
      %v274 = vld [vmem:[%s250 + $0xb8] sm:$0xff]
      %v275 = vld [vmem:[%s250 + $0xc0] sm:$0xff]
      %v276 = vld [vmem:[%s250 + $0xc8] sm:$0xff]
      %v277 = vld [vmem:[%s250 + $0xd0] sm:$0xff]
      %v278 = vld [vmem:[%s250 + $0xd8] sm:$0xff]
      %v279 = vld [vmem:[%s250 + $0xe0] sm:$0xff]
      %v280 = vld [vmem:[%s250 + $0xe8] sm:$0xff]
      %v281 = vld [vmem:[%s250 + $0xf0] sm:$0xff]
      %v282 = vld [vmem:[%s250 + $0xf8] sm:$0xff]
      %v283 = vld [vmem:[%s250 + $0x100] sm:$0xff]
      %v284 = vld [vmem:[%s250 + $0x108] sm:$0xff]
      %v285 = vld [vmem:[%s250 + $0x110] sm:$0xff]
      %v286 = vld [vmem:[%s250 + $0x118] sm:$0xff]
      %v287 = vld [vmem:[%s250 + $0x120] sm:$0xff]
      %v288 = vld [vmem:[%s250 + $0x128] sm:$0xff]
      %v289 = vld [vmem:[%s250 + $0x130] sm:$0xff]
      %v290 = vld [vmem:[%s250 + $0x138] sm:$0xff]
      %v291 = vld [vmem:[%s250 + $0x140] sm:$0xff]
      %v292 = vld [vmem:[%s250 + $0x148] sm:$0xff]
      %v293 = vld [vmem:[%s250 + $0x150] sm:$0xff]
      %v294 = vld [vmem:[%s250 + $0x158] sm:$0xff]
      %v295 = vld [vmem:[%s250 + $0x160] sm:$0xff]
      %v296 = vld [vmem:[%s250 + $0x168] sm:$0xff]
      %v297 = vld [vmem:[%s250 + $0x170] sm:$0xff]
      %v298 = vld [vmem:[%s250 + $0x178] sm:$0xff]
      %v299 = vld [vmem:[%s250 + $0x180] sm:$0xff]
      %v300 = vld [vmem:[%s250 + $0x188] sm:$0xff]
      %v301 = vld [vmem:[%s250 + $0x190] sm:$0xff]
      %v302 = vld [vmem:[%s250 + $0x198] sm:$0xff]
      %v303 = vld [vmem:[%s250 + $0x1a0] sm:$0xff]
      %v304 = vld [vmem:[%s250 + $0x1a8] sm:$0xff]
      %v305 = vld [vmem:[%s250 + $0x1b0] sm:$0xff]
      %v306 = vld [vmem:[%s250 + $0x1b8] sm:$0xff]
      %v307 = vld [vmem:[%s250 + $0x1c0] sm:$0xff]
      %v308 = vld [vmem:[%s250 + $0x1c8] sm:$0xff]
      %v309 = vld [vmem:[%s250 + $0x1d0] sm:$0xff]
      %v310 = vld [vmem:[%s250 + $0x1d8] sm:$0xff]
      %v311 = vld [vmem:[%s250 + $0x1e0] sm:$0xff]
      %v312 = vld [vmem:[%s250 + $0x1e8] sm:$0xff]
      %v313 = vld [vmem:[%s250 + $0x1f0] sm:$0xff]
      %v314 = vld [vmem:[%s250 + $0x1f8] sm:$0xff]
      %s315 = scalar_lea.vmem %s1, 32
      %v316 = vld [vmem:[%s315] sm:$0xff]
      %v317 = vld [vmem:[%s315 + $0x8] sm:$0xff]
      %v318 = vld [vmem:[%s315 + $0x10] sm:$0xff]
      %v319 = vld [vmem:[%s315 + $0x18] sm:$0xff]
      %vm320 = vcmask 261120
      %v322 = vsel %vm320, %v251, 0
      %v325 = vsel %vm320, %v252, 0
      %v328 = vsel %vm320, %v253, 0
      %v331 = vsel %vm320, %v254, 0
      %v334 = vsel %vm320, %v255, 0
      %v337 = vsel %vm320, %v256, 0
      %v340 = vsel %vm320, %v257, 0
      %v343 = vsel %vm320, %v258, 0
      %v346 = vsel %vm320, %v259, 0
      %v349 = vsel %vm320, %v260, 0
      %v352 = vsel %vm320, %v261, 0
      %v355 = vsel %vm320, %v262, 0
      %v358 = vsel %vm320, %v263, 0
      %v361 = vsel %vm320, %v264, 0
      %v364 = vsel %vm320, %v265, 0
      %v367 = vsel %vm320, %v266, 0
      %v370 = vsel %vm320, %v267, 0
      %v373 = vsel %vm320, %v268, 0
      %v376 = vsel %vm320, %v269, 0
      %v379 = vsel %vm320, %v270, 0
      %v382 = vsel %vm320, %v271, 0
      %v385 = vsel %vm320, %v272, 0
      %v388 = vsel %vm320, %v273, 0
      %v391 = vsel %vm320, %v274, 0
      %v394 = vsel %vm320, %v275, 0
      %v397 = vsel %vm320, %v276, 0
      %v400 = vsel %vm320, %v277, 0
      %v403 = vsel %vm320, %v278, 0
      %v406 = vsel %vm320, %v279, 0
      %v409 = vsel %vm320, %v280, 0
      %v412 = vsel %vm320, %v281, 0
      %v415 = vsel %vm320, %v282, 0
      %v418 = vsel %vm320, %v283, 0
      %v421 = vsel %vm320, %v284, 0
      %v424 = vsel %vm320, %v285, 0
      %v427 = vsel %vm320, %v286, 0
      %v430 = vsel %vm320, %v287, 0
      %v433 = vsel %vm320, %v288, 0
      %v436 = vsel %vm320, %v289, 0
      %v439 = vsel %vm320, %v290, 0
      %v442 = vsel %vm320, %v291, 0
      %v445 = vsel %vm320, %v292, 0
      %v448 = vsel %vm320, %v293, 0
      %v451 = vsel %vm320, %v294, 0
      %v454 = vsel %vm320, %v295, 0
      %v457 = vsel %vm320, %v296, 0
      %v460 = vsel %vm320, %v297, 0
      %v463 = vsel %vm320, %v298, 0
      %v466 = vsel %vm320, %v299, 0
      %v469 = vsel %vm320, %v300, 0
      %v472 = vsel %vm320, %v301, 0
      %v475 = vsel %vm320, %v302, 0
      %v478 = vsel %vm320, %v303, 0
      %v481 = vsel %vm320, %v304, 0
      %v484 = vsel %vm320, %v305, 0
      %v487 = vsel %vm320, %v306, 0
      %v490 = vsel %vm320, %v307, 0
      %v493 = vsel %vm320, %v308, 0
      %v496 = vsel %vm320, %v309, 0
      %v499 = vsel %vm320, %v310, 0
      %v502 = vsel %vm320, %v311, 0
      %v505 = vsel %vm320, %v312, 0
      %v508 = vsel %vm320, %v313, 0
      %v511 = vsel %vm320, %v314, 0
      %513 = vmatprep.subr.mxu0 0.0
      %514 = vmatpush1.msra.mxu0 0.0
      %515 = vmatprep.subr.mxu0 0.0
      %516 = vmatpush1.msra.mxu0 0.0
      %517 = vmatprep.subr.mxu0 0.0
      %518 = vmatpush1.msra.mxu0 0.0
      %519 = vmatprep.subr.mxu0 0.0
      %520 = vmatpush1.msra.mxu0 0.0
      %521 = vmatprep.subr.mxu0 0.0
      %522 = vmatpush1.msra.mxu0 0.0
      %523 = vmatprep.subr.mxu0 0.0
      %524 = vmatpush1.msra.mxu0 0.0
      %525 = vmatprep.subr.mxu0 0.0
      %526 = vmatpush1.msra.mxu0 0.0
      %527 = vmatprep.subr.mxu0 0.0
      %528 = vmatpush1.msra.mxu0 0.0
      %529 = vmatprep.subr.mxu0 0.0
      %530 = vmatpush1.msra.mxu0 0.0
      %531 = vmatprep.subr.mxu0 0.0
      %532 = vmatpush1.msra.mxu0 0.0
      %533 = vmatprep.subr.mxu0 0.0
      %534 = vmatpush1.msra.mxu0 0.0
      %535 = vmatprep.subr.mxu0 0.0
      %536 = vmatpush1.msra.mxu0 0.0
      %537 = vmatprep.subr.mxu0 0.0
      %538 = vmatpush1.msra.mxu0 %v319
      %539 = vmatprep.subr.mxu0 0.0
      %540 = vmatpush1.msra.mxu0 %v318
      %541 = vmatprep.subr.mxu0 0.0
      %542 = vmatpush1.msra.mxu0 %v317
      %543 = vmatprep.subr.mxu0 0.0
      %544 = vmatpush1.msra.mxu0 %v316
      %545 = vmatprep.subr.mxu0 0.0
      %546 = vmatpush2.msra.mxu0 0.0
      %547 = vmatprep.subr.mxu0 0.0
      %548 = vmatpush2.msra.mxu0 0.0
      %549 = vmatprep.subr.mxu0 0.0
      %550 = vmatpush2.msra.mxu0 0.0
      %551 = vmatprep.subr.mxu0 0.0
      %552 = vmatpush2.msra.mxu0 0.0
      %553 = vmatprep.subr.mxu0 0.0
      %554 = vmatpush2.msra.mxu0 0.0
      %555 = vmatprep.subr.mxu0 0.0
      %556 = vmatpush2.msra.mxu0 0.0
      %557 = vmatprep.subr.mxu0 0.0
      %558 = vmatpush2.msra.mxu0 0.0
      %559 = vmatprep.subr.mxu0 0.0
      %560 = vmatpush2.msra.mxu0 0.0
      %561 = vmatprep.subr.mxu0 0.0
      %562 = vmatpush2.msra.mxu0 0.0
      %563 = vmatprep.subr.mxu0 0.0
      %564 = vmatpush2.msra.mxu0 0.0
      %565 = vmatprep.subr.mxu0 0.0
      %566 = vmatpush2.msra.mxu0 0.0
      %567 = vmatprep.subr.mxu0 0.0
      %568 = vmatpush2.msra.mxu0 0.0
      %569 = vmatprep.subr.mxu0 0.0
      %570 = vmatpush2.msra.mxu0 0.0
      %571 = vmatprep.subr.mxu0 0.0
      %572 = vmatpush2.msra.mxu0 0.0
      %573 = vmatprep.subr.mxu0 0.0
      %574 = vmatpush2.msra.mxu0 0.0
      %575 = vmatprep.subr.mxu0 0.0
      %576 = vmatpush2.msra.mxu0 0.0
      %577 = vmatprep.mubr.f32.mxu0 0.0
      %578 = vmatmul.mubr.f32.gmra.mxu0 %v322
      %v579 = vpop.f32.mrf.mxu0
      %v580 = vadd.f32 0.0, %v579
      %v581 = vpop.f32.mrf.mxu0
      %582 = vmatprep.mubr.f32.mxu0 0.0
      %583 = vmatmul.mubr.f32.gmra.mxu0 %v325
      %v584 = vpop.f32.mrf.mxu0
      %v585 = vadd.f32 0.0, %v584
      %v586 = vpop.f32.mrf.mxu0
      %587 = vmatprep.mubr.f32.mxu0 0.0
      %588 = vmatmul.mubr.f32.gmra.mxu0 %v328
      %v589 = vpop.f32.mrf.mxu0
      %v590 = vadd.f32 0.0, %v589
      %v591 = vpop.f32.mrf.mxu0
      %592 = vmatprep.mubr.f32.mxu0 0.0
      %593 = vmatmul.mubr.f32.gmra.mxu0 %v331
      %v594 = vpop.f32.mrf.mxu0
      %v595 = vadd.f32 0.0, %v594
      %v596 = vpop.f32.mrf.mxu0
      %597 = vmatprep.mubr.f32.mxu0 0.0
      %598 = vmatmul.mubr.f32.gmra.mxu0 %v334
      %v599 = vpop.f32.mrf.mxu0
      %v600 = vadd.f32 0.0, %v599
      %v601 = vpop.f32.mrf.mxu0
      %602 = vmatprep.mubr.f32.mxu0 0.0
      %603 = vmatmul.mubr.f32.gmra.mxu0 %v337
      %v604 = vpop.f32.mrf.mxu0
      %v605 = vadd.f32 0.0, %v604
      %v606 = vpop.f32.mrf.mxu0
      %607 = vmatprep.mubr.f32.mxu0 0.0
      %608 = vmatmul.mubr.f32.gmra.mxu0 %v340
      %v609 = vpop.f32.mrf.mxu0
      %v610 = vadd.f32 0.0, %v609
      %v611 = vpop.f32.mrf.mxu0
      %612 = vmatprep.mubr.f32.mxu0 0.0
      %613 = vmatmul.mubr.f32.gmra.mxu0 %v343
      %v614 = vpop.f32.mrf.mxu0
      %v615 = vadd.f32 0.0, %v614
      %v616 = vpop.f32.mrf.mxu0
      %617 = vmatprep.mubr.f32.mxu0 0.0
      %618 = vmatmul.mubr.f32.gmra.mxu0 %v346
      %v619 = vpop.f32.mrf.mxu0
      %v620 = vadd.f32 0.0, %v619
      %v621 = vpop.f32.mrf.mxu0
      %622 = vmatprep.mubr.f32.mxu0 0.0
      %623 = vmatmul.mubr.f32.gmra.mxu0 %v349
      %v624 = vpop.f32.mrf.mxu0
      %v625 = vadd.f32 0.0, %v624
      %v626 = vpop.f32.mrf.mxu0
      %627 = vmatprep.mubr.f32.mxu0 0.0
      %628 = vmatmul.mubr.f32.gmra.mxu0 %v352
      %v629 = vpop.f32.mrf.mxu0
      %v630 = vadd.f32 0.0, %v629
      %v631 = vpop.f32.mrf.mxu0
      %632 = vmatprep.mubr.f32.mxu0 0.0
      %633 = vmatmul.mubr.f32.gmra.mxu0 %v355
      %v634 = vpop.f32.mrf.mxu0
      %v635 = vadd.f32 0.0, %v634
      %v636 = vpop.f32.mrf.mxu0
      %637 = vmatprep.mubr.f32.mxu0 0.0
      %638 = vmatmul.mubr.f32.gmra.mxu0 %v358
      %v639 = vpop.f32.mrf.mxu0
      %v640 = vadd.f32 0.0, %v639
      %v641 = vpop.f32.mrf.mxu0
      %642 = vmatprep.mubr.f32.mxu0 0.0
      %643 = vmatmul.mubr.f32.gmra.mxu0 %v361
      %v644 = vpop.f32.mrf.mxu0
      %v645 = vadd.f32 0.0, %v644
      %v646 = vpop.f32.mrf.mxu0
      %647 = vmatprep.mubr.f32.mxu0 0.0
      %648 = vmatmul.mubr.f32.gmra.mxu0 %v364
      %v649 = vpop.f32.mrf.mxu0
      %v650 = vadd.f32 0.0, %v649
      %v651 = vpop.f32.mrf.mxu0
      %652 = vmatprep.mubr.f32.mxu0 0.0
      %653 = vmatmul.mubr.f32.gmra.mxu0 %v367
      %v654 = vpop.f32.mrf.mxu0
      %v655 = vadd.f32 0.0, %v654
      %v656 = vpop.f32.mrf.mxu0
      %657 = vmatprep.mubr.f32.mxu0 0.0
      %658 = vmatmul.mubr.f32.gmra.mxu0 %v370
      %v659 = vpop.f32.mrf.mxu0
      %v660 = vadd.f32 0.0, %v659
      %v661 = vpop.f32.mrf.mxu0
      %662 = vmatprep.mubr.f32.mxu0 0.0
      %663 = vmatmul.mubr.f32.gmra.mxu0 %v373
      %v664 = vpop.f32.mrf.mxu0
      %v665 = vadd.f32 0.0, %v664
      %v666 = vpop.f32.mrf.mxu0
      %667 = vmatprep.mubr.f32.mxu0 0.0
      %668 = vmatmul.mubr.f32.gmra.mxu0 %v376
      %v669 = vpop.f32.mrf.mxu0
      %v670 = vadd.f32 0.0, %v669
      %v671 = vpop.f32.mrf.mxu0
      %672 = vmatprep.mubr.f32.mxu0 0.0
      %673 = vmatmul.mubr.f32.gmra.mxu0 %v379
      %v674 = vpop.f32.mrf.mxu0
      %v675 = vadd.f32 0.0, %v674
      %v676 = vpop.f32.mrf.mxu0
      %677 = vmatprep.mubr.f32.mxu0 0.0
      %678 = vmatmul.mubr.f32.gmra.mxu0 %v382
      %v679 = vpop.f32.mrf.mxu0
      %v680 = vadd.f32 0.0, %v679
      %v681 = vpop.f32.mrf.mxu0
      %682 = vmatprep.mubr.f32.mxu0 0.0
      %683 = vmatmul.mubr.f32.gmra.mxu0 %v385
      %v684 = vpop.f32.mrf.mxu0
      %v685 = vadd.f32 0.0, %v684
      %v686 = vpop.f32.mrf.mxu0
      %687 = vmatprep.mubr.f32.mxu0 0.0
      %688 = vmatmul.mubr.f32.gmra.mxu0 %v388
      %v689 = vpop.f32.mrf.mxu0
      %v690 = vadd.f32 0.0, %v689
      %v691 = vpop.f32.mrf.mxu0
      %692 = vmatprep.mubr.f32.mxu0 0.0
      %693 = vmatmul.mubr.f32.gmra.mxu0 %v391
      %v694 = vpop.f32.mrf.mxu0
      %v695 = vadd.f32 0.0, %v694
      %v696 = vpop.f32.mrf.mxu0
      %697 = vmatprep.mubr.f32.mxu0 0.0
      %698 = vmatmul.mubr.f32.gmra.mxu0 %v394
      %v699 = vpop.f32.mrf.mxu0
      %v700 = vadd.f32 0.0, %v699
      %v701 = vpop.f32.mrf.mxu0
      %702 = vmatprep.mubr.f32.mxu0 0.0
      %703 = vmatmul.mubr.f32.gmra.mxu0 %v397
      %v704 = vpop.f32.mrf.mxu0
      %v705 = vadd.f32 0.0, %v704
      %v706 = vpop.f32.mrf.mxu0
      %707 = vmatprep.mubr.f32.mxu0 0.0
      %708 = vmatmul.mubr.f32.gmra.mxu0 %v400
      %v709 = vpop.f32.mrf.mxu0
      %v710 = vadd.f32 0.0, %v709
      %v711 = vpop.f32.mrf.mxu0
      %712 = vmatprep.mubr.f32.mxu0 0.0
      %713 = vmatmul.mubr.f32.gmra.mxu0 %v403
      %v714 = vpop.f32.mrf.mxu0
      %v715 = vadd.f32 0.0, %v714
      %v716 = vpop.f32.mrf.mxu0
      %717 = vmatprep.mubr.f32.mxu0 0.0
      %718 = vmatmul.mubr.f32.gmra.mxu0 %v406
      %v719 = vpop.f32.mrf.mxu0
      %v720 = vadd.f32 0.0, %v719
      %v721 = vpop.f32.mrf.mxu0
      %722 = vmatprep.mubr.f32.mxu0 0.0
      %723 = vmatmul.mubr.f32.gmra.mxu0 %v409
      %v724 = vpop.f32.mrf.mxu0
      %v725 = vadd.f32 0.0, %v724
      %v726 = vpop.f32.mrf.mxu0
      %727 = vmatprep.mubr.f32.mxu0 0.0
      %728 = vmatmul.mubr.f32.gmra.mxu0 %v412
      %v729 = vpop.f32.mrf.mxu0
      %v730 = vadd.f32 0.0, %v729
      %v731 = vpop.f32.mrf.mxu0
      %732 = vmatprep.mubr.f32.mxu0 0.0
      %733 = vmatmul.mubr.f32.gmra.mxu0 %v415
      %v734 = vpop.f32.mrf.mxu0
      %v735 = vadd.f32 0.0, %v734
      %v736 = vpop.f32.mrf.mxu0
      %737 = vmatprep.mubr.f32.mxu0 0.0
      %738 = vmatmul.mubr.f32.gmra.mxu0 %v418
      %v739 = vpop.f32.mrf.mxu0
      %v740 = vadd.f32 0.0, %v739
      %v741 = vpop.f32.mrf.mxu0
      %742 = vmatprep.mubr.f32.mxu0 0.0
      %743 = vmatmul.mubr.f32.gmra.mxu0 %v421
      %v744 = vpop.f32.mrf.mxu0
      %v745 = vadd.f32 0.0, %v744
      %v746 = vpop.f32.mrf.mxu0
      %747 = vmatprep.mubr.f32.mxu0 0.0
      %748 = vmatmul.mubr.f32.gmra.mxu0 %v424
      %v749 = vpop.f32.mrf.mxu0
      %v750 = vadd.f32 0.0, %v749
      %v751 = vpop.f32.mrf.mxu0
      %752 = vmatprep.mubr.f32.mxu0 0.0
      %753 = vmatmul.mubr.f32.gmra.mxu0 %v427
      %v754 = vpop.f32.mrf.mxu0
      %v755 = vadd.f32 0.0, %v754
      %v756 = vpop.f32.mrf.mxu0
      %757 = vmatprep.mubr.f32.mxu0 0.0
      %758 = vmatmul.mubr.f32.gmra.mxu0 %v430
      %v759 = vpop.f32.mrf.mxu0
      %v760 = vadd.f32 0.0, %v759
      %v761 = vpop.f32.mrf.mxu0
      %762 = vmatprep.mubr.f32.mxu0 0.0
      %763 = vmatmul.mubr.f32.gmra.mxu0 %v433
      %v764 = vpop.f32.mrf.mxu0
      %v765 = vadd.f32 0.0, %v764
      %v766 = vpop.f32.mrf.mxu0
      %767 = vmatprep.mubr.f32.mxu0 0.0
      %768 = vmatmul.mubr.f32.gmra.mxu0 %v436
      %v769 = vpop.f32.mrf.mxu0
      %v770 = vadd.f32 0.0, %v769
      %v771 = vpop.f32.mrf.mxu0
      %772 = vmatprep.mubr.f32.mxu0 0.0
      %773 = vmatmul.mubr.f32.gmra.mxu0 %v439
      %v774 = vpop.f32.mrf.mxu0
      %v775 = vadd.f32 0.0, %v774
      %v776 = vpop.f32.mrf.mxu0
      %777 = vmatprep.mubr.f32.mxu0 0.0
      %778 = vmatmul.mubr.f32.gmra.mxu0 %v442
      %v779 = vpop.f32.mrf.mxu0
      %v780 = vadd.f32 0.0, %v779
      %v781 = vpop.f32.mrf.mxu0
      %782 = vmatprep.mubr.f32.mxu0 0.0
      %783 = vmatmul.mubr.f32.gmra.mxu0 %v445
      %v784 = vpop.f32.mrf.mxu0
      %v785 = vadd.f32 0.0, %v784
      %v786 = vpop.f32.mrf.mxu0
      %787 = vmatprep.mubr.f32.mxu0 0.0
      %788 = vmatmul.mubr.f32.gmra.mxu0 %v448
      %v789 = vpop.f32.mrf.mxu0
      %v790 = vadd.f32 0.0, %v789
      %v791 = vpop.f32.mrf.mxu0
      %792 = vmatprep.mubr.f32.mxu0 0.0
      %793 = vmatmul.mubr.f32.gmra.mxu0 %v451
      %v794 = vpop.f32.mrf.mxu0
      %v795 = vadd.f32 0.0, %v794
      %v796 = vpop.f32.mrf.mxu0
      %797 = vmatprep.mubr.f32.mxu0 0.0
      %798 = vmatmul.mubr.f32.gmra.mxu0 %v454
      %v799 = vpop.f32.mrf.mxu0
      %v800 = vadd.f32 0.0, %v799
      %v801 = vpop.f32.mrf.mxu0
      %802 = vmatprep.mubr.f32.mxu0 0.0
      %803 = vmatmul.mubr.f32.gmra.mxu0 %v457
      %v804 = vpop.f32.mrf.mxu0
      %v805 = vadd.f32 0.0, %v804
      %v806 = vpop.f32.mrf.mxu0
      %807 = vmatprep.mubr.f32.mxu0 0.0
      %808 = vmatmul.mubr.f32.gmra.mxu0 %v460
      %v809 = vpop.f32.mrf.mxu0
      %v810 = vadd.f32 0.0, %v809
      %v811 = vpop.f32.mrf.mxu0
      %812 = vmatprep.mubr.f32.mxu0 0.0
      %813 = vmatmul.mubr.f32.gmra.mxu0 %v463
      %v814 = vpop.f32.mrf.mxu0
      %v815 = vadd.f32 0.0, %v814
      %v816 = vpop.f32.mrf.mxu0
      %817 = vmatprep.mubr.f32.mxu0 0.0
      %818 = vmatmul.mubr.f32.gmra.mxu0 %v466
      %v819 = vpop.f32.mrf.mxu0
      %v820 = vadd.f32 0.0, %v819
      %v821 = vpop.f32.mrf.mxu0
      %822 = vmatprep.mubr.f32.mxu0 0.0
      %823 = vmatmul.mubr.f32.gmra.mxu0 %v469
      %v824 = vpop.f32.mrf.mxu0
      %v825 = vadd.f32 0.0, %v824
      %v826 = vpop.f32.mrf.mxu0
      %827 = vmatprep.mubr.f32.mxu0 0.0
      %828 = vmatmul.mubr.f32.gmra.mxu0 %v472
      %v829 = vpop.f32.mrf.mxu0
      %v830 = vadd.f32 0.0, %v829
      %v831 = vpop.f32.mrf.mxu0
      %832 = vmatprep.mubr.f32.mxu0 0.0
      %833 = vmatmul.mubr.f32.gmra.mxu0 %v475
      %v834 = vpop.f32.mrf.mxu0
      %v835 = vadd.f32 0.0, %v834
      %v836 = vpop.f32.mrf.mxu0
      %837 = vmatprep.mubr.f32.mxu0 0.0
      %838 = vmatmul.mubr.f32.gmra.mxu0 %v478
      %v839 = vpop.f32.mrf.mxu0
      %v840 = vadd.f32 0.0, %v839
      %v841 = vpop.f32.mrf.mxu0
      %842 = vmatprep.mubr.f32.mxu0 0.0
      %843 = vmatmul.mubr.f32.gmra.mxu0 %v481
      %v844 = vpop.f32.mrf.mxu0
      %v845 = vadd.f32 0.0, %v844
      %v846 = vpop.f32.mrf.mxu0
      %847 = vmatprep.mubr.f32.mxu0 0.0
      %848 = vmatmul.mubr.f32.gmra.mxu0 %v484
      %v849 = vpop.f32.mrf.mxu0
      %v850 = vadd.f32 0.0, %v849
      %v851 = vpop.f32.mrf.mxu0
      %852 = vmatprep.mubr.f32.mxu0 0.0
      %853 = vmatmul.mubr.f32.gmra.mxu0 %v487
      %v854 = vpop.f32.mrf.mxu0
      %v855 = vadd.f32 0.0, %v854
      %v856 = vpop.f32.mrf.mxu0
      %857 = vmatprep.mubr.f32.mxu0 0.0
      %858 = vmatmul.mubr.f32.gmra.mxu0 %v490
      %v859 = vpop.f32.mrf.mxu0
      %v860 = vadd.f32 0.0, %v859
      %v861 = vpop.f32.mrf.mxu0
      %862 = vmatprep.mubr.f32.mxu0 0.0
      %863 = vmatmul.mubr.f32.gmra.mxu0 %v493
      %v864 = vpop.f32.mrf.mxu0
      %v865 = vadd.f32 0.0, %v864
      %v866 = vpop.f32.mrf.mxu0
      %867 = vmatprep.mubr.f32.mxu0 0.0
      %868 = vmatmul.mubr.f32.gmra.mxu0 %v496
      %v869 = vpop.f32.mrf.mxu0
      %v870 = vadd.f32 0.0, %v869
      %v871 = vpop.f32.mrf.mxu0
      %872 = vmatprep.mubr.f32.mxu0 0.0
      %873 = vmatmul.mubr.f32.gmra.mxu0 %v499
      %v874 = vpop.f32.mrf.mxu0
      %v875 = vadd.f32 0.0, %v874
      %v876 = vpop.f32.mrf.mxu0
      %877 = vmatprep.mubr.f32.mxu0 0.0
      %878 = vmatmul.mubr.f32.gmra.mxu0 %v502
      %v879 = vpop.f32.mrf.mxu0
      %v880 = vadd.f32 0.0, %v879
      %v881 = vpop.f32.mrf.mxu0
      %882 = vmatprep.mubr.f32.mxu0 0.0
      %883 = vmatmul.mubr.f32.gmra.mxu0 %v505
      %v884 = vpop.f32.mrf.mxu0
      %v885 = vadd.f32 0.0, %v884
      %v886 = vpop.f32.mrf.mxu0
      %887 = vmatprep.mubr.f32.mxu0 0.0
      %888 = vmatmul.mubr.f32.gmra.mxu0 %v508
      %v889 = vpop.f32.mrf.mxu0
      %v890 = vadd.f32 0.0, %v889
      %v891 = vpop.f32.mrf.mxu0
      %892 = vmatprep.mubr.f32.mxu0 0.0
      %893 = vmatmul.mubr.f32.gmra.mxu0 %v511
      %v894 = vpop.f32.mrf.mxu0
      %v895 = vadd.f32 0.0, %v894
      %v896 = vpop.f32.mrf.mxu0
      %897 = vdwg.mxu0
      %v899 = vsel %vm320, %v181, 0
      %v902 = vsel %vm320, %v182, 0
      %v905 = vsel %vm320, %v183, 0
      %v908 = vsel %vm320, %v184, 0
      %v911 = vsel %vm320, %v185, 0
      %v914 = vsel %vm320, %v186, 0
      %v917 = vsel %vm320, %v187, 0
      %v920 = vsel %vm320, %v188, 0
      %v923 = vsel %vm320, %v189, 0
      %v926 = vsel %vm320, %v190, 0
      %v929 = vsel %vm320, %v191, 0
      %v932 = vsel %vm320, %v192, 0
      %v935 = vsel %vm320, %v193, 0
      %v938 = vsel %vm320, %v194, 0
      %v941 = vsel %vm320, %v195, 0
      %v944 = vsel %vm320, %v196, 0
      %v947 = vsel %vm320, %v197, 0
      %v950 = vsel %vm320, %v198, 0
      %v953 = vsel %vm320, %v199, 0
      %v956 = vsel %vm320, %v200, 0
      %v959 = vsel %vm320, %v201, 0
      %v962 = vsel %vm320, %v202, 0
      %v965 = vsel %vm320, %v203, 0
      %v968 = vsel %vm320, %v204, 0
      %v971 = vsel %vm320, %v205, 0
      %v974 = vsel %vm320, %v206, 0
      %v977 = vsel %vm320, %v207, 0
      %v980 = vsel %vm320, %v208, 0
      %v983 = vsel %vm320, %v209, 0
      %v986 = vsel %vm320, %v210, 0
      %v989 = vsel %vm320, %v211, 0
      %v992 = vsel %vm320, %v212, 0
      %v995 = vsel %vm320, %v213, 0
      %v998 = vsel %vm320, %v214, 0
      %v1001 = vsel %vm320, %v215, 0
      %v1004 = vsel %vm320, %v216, 0
      %v1007 = vsel %vm320, %v217, 0
      %v1010 = vsel %vm320, %v218, 0
      %v1013 = vsel %vm320, %v219, 0
      %v1016 = vsel %vm320, %v220, 0
      %v1019 = vsel %vm320, %v221, 0
      %v1022 = vsel %vm320, %v222, 0
      %v1025 = vsel %vm320, %v223, 0
      %v1028 = vsel %vm320, %v224, 0
      %v1031 = vsel %vm320, %v225, 0
      %v1034 = vsel %vm320, %v226, 0
      %v1037 = vsel %vm320, %v227, 0
      %v1040 = vsel %vm320, %v228, 0
      %v1043 = vsel %vm320, %v229, 0
      %v1046 = vsel %vm320, %v230, 0
      %v1049 = vsel %vm320, %v231, 0
      %v1052 = vsel %vm320, %v232, 0
      %v1055 = vsel %vm320, %v233, 0
      %v1058 = vsel %vm320, %v234, 0
      %v1061 = vsel %vm320, %v235, 0
      %v1064 = vsel %vm320, %v236, 0
      %v1067 = vsel %vm320, %v237, 0
      %v1070 = vsel %vm320, %v238, 0
      %v1073 = vsel %vm320, %v239, 0
      %v1076 = vsel %vm320, %v240, 0
      %v1079 = vsel %vm320, %v241, 0
      %v1082 = vsel %vm320, %v242, 0
      %v1085 = vsel %vm320, %v243, 0
      %v1088 = vsel %vm320, %v244, 0
      %1090 = vmatprep.subr.mxu0 0.0
      %1091 = vmatpush1.msra.mxu0 0.0
      %1092 = vmatprep.subr.mxu0 0.0
      %1093 = vmatpush1.msra.mxu0 0.0
      %1094 = vmatprep.subr.mxu0 0.0
      %1095 = vmatpush1.msra.mxu0 0.0
      %1096 = vmatprep.subr.mxu0 0.0
      %1097 = vmatpush1.msra.mxu0 0.0
      %1098 = vmatprep.subr.mxu0 0.0
      %1099 = vmatpush1.msra.mxu0 0.0
      %1100 = vmatprep.subr.mxu0 0.0
      %1101 = vmatpush1.msra.mxu0 0.0
      %1102 = vmatprep.subr.mxu0 0.0
      %1103 = vmatpush1.msra.mxu0 0.0
      %1104 = vmatprep.subr.mxu0 0.0
      %1105 = vmatpush1.msra.mxu0 0.0
      %1106 = vmatprep.subr.mxu0 0.0
      %1107 = vmatpush1.msra.mxu0 0.0
      %1108 = vmatprep.subr.mxu0 0.0
      %1109 = vmatpush1.msra.mxu0 0.0
      %1110 = vmatprep.subr.mxu0 0.0
      %1111 = vmatpush1.msra.mxu0 0.0
      %1112 = vmatprep.subr.mxu0 0.0
      %1113 = vmatpush1.msra.mxu0 0.0
      %1114 = vmatprep.subr.mxu0 0.0
      %1115 = vmatpush1.msra.mxu0 %v248
      %1116 = vmatprep.subr.mxu0 0.0
      %1117 = vmatpush1.msra.mxu0 %v247
      %1118 = vmatprep.subr.mxu0 0.0
      %1119 = vmatpush1.msra.mxu0 %v246
      %1120 = vmatprep.subr.mxu0 0.0
      %1121 = vmatpush1.msra.mxu0 %v245
      %1122 = vmatprep.subr.mxu0 0.0
      %1123 = vmatpush2.msra.mxu0 0.0
      %1124 = vmatprep.subr.mxu0 0.0
      %1125 = vmatpush2.msra.mxu0 0.0
      %1126 = vmatprep.subr.mxu0 0.0
      %1127 = vmatpush2.msra.mxu0 0.0
      %1128 = vmatprep.subr.mxu0 0.0
      %1129 = vmatpush2.msra.mxu0 0.0
      %1130 = vmatprep.subr.mxu0 0.0
      %1131 = vmatpush2.msra.mxu0 0.0
      %1132 = vmatprep.subr.mxu0 0.0
      %1133 = vmatpush2.msra.mxu0 0.0
      %1134 = vmatprep.subr.mxu0 0.0
      %1135 = vmatpush2.msra.mxu0 0.0
      %1136 = vmatprep.subr.mxu0 0.0
      %1137 = vmatpush2.msra.mxu0 0.0
      %1138 = vmatprep.subr.mxu0 0.0
      %1139 = vmatpush2.msra.mxu0 0.0
      %1140 = vmatprep.subr.mxu0 0.0
      %1141 = vmatpush2.msra.mxu0 0.0
      %1142 = vmatprep.subr.mxu0 0.0
      %1143 = vmatpush2.msra.mxu0 0.0
      %1144 = vmatprep.subr.mxu0 0.0
      %1145 = vmatpush2.msra.mxu0 0.0
      %1146 = vmatprep.subr.mxu0 0.0
      %1147 = vmatpush2.msra.mxu0 0.0
      %1148 = vmatprep.subr.mxu0 0.0
      %1149 = vmatpush2.msra.mxu0 0.0
      %1150 = vmatprep.subr.mxu0 0.0
      %1151 = vmatpush2.msra.mxu0 0.0
      %1152 = vmatprep.subr.mxu0 0.0
      %1153 = vmatpush2.msra.mxu0 0.0
      %1154 = vmatprep.mubr.f32.mxu0 0.0
      %1155 = vmatmul.mubr.f32.gmra.mxu0 %v899
      %v1156 = vpop.f32.mrf.mxu0
      %v1157 = vadd.f32 %v580, %v1156
      %v1158 = vpop.f32.mrf.mxu0
      %1159 = vmatprep.mubr.f32.mxu0 0.0
      %1160 = vmatmul.mubr.f32.gmra.mxu0 %v902
      %v1161 = vpop.f32.mrf.mxu0
      %v1162 = vadd.f32 %v585, %v1161
      %v1163 = vpop.f32.mrf.mxu0
      %1164 = vmatprep.mubr.f32.mxu0 0.0
      %1165 = vmatmul.mubr.f32.gmra.mxu0 %v905
      %v1166 = vpop.f32.mrf.mxu0
      %v1167 = vadd.f32 %v590, %v1166
      %v1168 = vpop.f32.mrf.mxu0
      %1169 = vmatprep.mubr.f32.mxu0 0.0
      %1170 = vmatmul.mubr.f32.gmra.mxu0 %v908
      %v1171 = vpop.f32.mrf.mxu0
      %v1172 = vadd.f32 %v595, %v1171
      %v1173 = vpop.f32.mrf.mxu0
      %1174 = vmatprep.mubr.f32.mxu0 0.0
      %1175 = vmatmul.mubr.f32.gmra.mxu0 %v911
      %v1176 = vpop.f32.mrf.mxu0
      %v1177 = vadd.f32 %v600, %v1176
      %v1178 = vpop.f32.mrf.mxu0
      %1179 = vmatprep.mubr.f32.mxu0 0.0
      %1180 = vmatmul.mubr.f32.gmra.mxu0 %v914
      %v1181 = vpop.f32.mrf.mxu0
      %v1182 = vadd.f32 %v605, %v1181
      %v1183 = vpop.f32.mrf.mxu0
      %1184 = vmatprep.mubr.f32.mxu0 0.0
      %1185 = vmatmul.mubr.f32.gmra.mxu0 %v917
      %v1186 = vpop.f32.mrf.mxu0
      %v1187 = vadd.f32 %v610, %v1186
      %v1188 = vpop.f32.mrf.mxu0
      %1189 = vmatprep.mubr.f32.mxu0 0.0
      %1190 = vmatmul.mubr.f32.gmra.mxu0 %v920
      %v1191 = vpop.f32.mrf.mxu0
      %v1192 = vadd.f32 %v615, %v1191
      %v1193 = vpop.f32.mrf.mxu0
      %1194 = vmatprep.mubr.f32.mxu0 0.0
      %1195 = vmatmul.mubr.f32.gmra.mxu0 %v923
      %v1196 = vpop.f32.mrf.mxu0
      %v1197 = vadd.f32 %v620, %v1196
      %v1198 = vpop.f32.mrf.mxu0
      %1199 = vmatprep.mubr.f32.mxu0 0.0
      %1200 = vmatmul.mubr.f32.gmra.mxu0 %v926
      %v1201 = vpop.f32.mrf.mxu0
      %v1202 = vadd.f32 %v625, %v1201
      %v1203 = vpop.f32.mrf.mxu0
      %1204 = vmatprep.mubr.f32.mxu0 0.0
      %1205 = vmatmul.mubr.f32.gmra.mxu0 %v929
      %v1206 = vpop.f32.mrf.mxu0
      %v1207 = vadd.f32 %v630, %v1206
      %v1208 = vpop.f32.mrf.mxu0
      %1209 = vmatprep.mubr.f32.mxu0 0.0
      %1210 = vmatmul.mubr.f32.gmra.mxu0 %v932
      %v1211 = vpop.f32.mrf.mxu0
      %v1212 = vadd.f32 %v635, %v1211
      %v1213 = vpop.f32.mrf.mxu0
      %1214 = vmatprep.mubr.f32.mxu0 0.0
      %1215 = vmatmul.mubr.f32.gmra.mxu0 %v935
      %v1216 = vpop.f32.mrf.mxu0
      %v1217 = vadd.f32 %v640, %v1216
      %v1218 = vpop.f32.mrf.mxu0
      %1219 = vmatprep.mubr.f32.mxu0 0.0
      %1220 = vmatmul.mubr.f32.gmra.mxu0 %v938
      %v1221 = vpop.f32.mrf.mxu0
      %v1222 = vadd.f32 %v645, %v1221
      %v1223 = vpop.f32.mrf.mxu0
      %1224 = vmatprep.mubr.f32.mxu0 0.0
      %1225 = vmatmul.mubr.f32.gmra.mxu0 %v941
      %v1226 = vpop.f32.mrf.mxu0
      %v1227 = vadd.f32 %v650, %v1226
      %v1228 = vpop.f32.mrf.mxu0
      %1229 = vmatprep.mubr.f32.mxu0 0.0
      %1230 = vmatmul.mubr.f32.gmra.mxu0 %v944
      %v1231 = vpop.f32.mrf.mxu0
      %v1232 = vadd.f32 %v655, %v1231
      %v1233 = vpop.f32.mrf.mxu0
      %1234 = vmatprep.mubr.f32.mxu0 0.0
      %1235 = vmatmul.mubr.f32.gmra.mxu0 %v947
      %v1236 = vpop.f32.mrf.mxu0
      %v1237 = vadd.f32 %v660, %v1236
      %v1238 = vpop.f32.mrf.mxu0
      %1239 = vmatprep.mubr.f32.mxu0 0.0
      %1240 = vmatmul.mubr.f32.gmra.mxu0 %v950
      %v1241 = vpop.f32.mrf.mxu0
      %v1242 = vadd.f32 %v665, %v1241
      %v1243 = vpop.f32.mrf.mxu0
      %1244 = vmatprep.mubr.f32.mxu0 0.0
      %1245 = vmatmul.mubr.f32.gmra.mxu0 %v953
      %v1246 = vpop.f32.mrf.mxu0
      %v1247 = vadd.f32 %v670, %v1246
      %v1248 = vpop.f32.mrf.mxu0
      %1249 = vmatprep.mubr.f32.mxu0 0.0
      %1250 = vmatmul.mubr.f32.gmra.mxu0 %v956
      %v1251 = vpop.f32.mrf.mxu0
      %v1252 = vadd.f32 %v675, %v1251
      %v1253 = vpop.f32.mrf.mxu0
      %1254 = vmatprep.mubr.f32.mxu0 0.0
      %1255 = vmatmul.mubr.f32.gmra.mxu0 %v959
      %v1256 = vpop.f32.mrf.mxu0
      %v1257 = vadd.f32 %v680, %v1256
      %v1258 = vpop.f32.mrf.mxu0
      %1259 = vmatprep.mubr.f32.mxu0 0.0
      %1260 = vmatmul.mubr.f32.gmra.mxu0 %v962
      %v1261 = vpop.f32.mrf.mxu0
      %v1262 = vadd.f32 %v685, %v1261
      %v1263 = vpop.f32.mrf.mxu0
      %1264 = vmatprep.mubr.f32.mxu0 0.0
      %1265 = vmatmul.mubr.f32.gmra.mxu0 %v965
      %v1266 = vpop.f32.mrf.mxu0
      %v1267 = vadd.f32 %v690, %v1266
      %v1268 = vpop.f32.mrf.mxu0
      %1269 = vmatprep.mubr.f32.mxu0 0.0
      %1270 = vmatmul.mubr.f32.gmra.mxu0 %v968
      %v1271 = vpop.f32.mrf.mxu0
      %v1272 = vadd.f32 %v695, %v1271
      %v1273 = vpop.f32.mrf.mxu0
      %1274 = vmatprep.mubr.f32.mxu0 0.0
      %1275 = vmatmul.mubr.f32.gmra.mxu0 %v971
      %v1276 = vpop.f32.mrf.mxu0
      %v1277 = vadd.f32 %v700, %v1276
      %v1278 = vpop.f32.mrf.mxu0
      %1279 = vmatprep.mubr.f32.mxu0 0.0
      %1280 = vmatmul.mubr.f32.gmra.mxu0 %v974
      %v1281 = vpop.f32.mrf.mxu0
      %v1282 = vadd.f32 %v705, %v1281
      %v1283 = vpop.f32.mrf.mxu0
      %1284 = vmatprep.mubr.f32.mxu0 0.0
      %1285 = vmatmul.mubr.f32.gmra.mxu0 %v977
      %v1286 = vpop.f32.mrf.mxu0
      %v1287 = vadd.f32 %v710, %v1286
      %v1288 = vpop.f32.mrf.mxu0
      %1289 = vmatprep.mubr.f32.mxu0 0.0
      %1290 = vmatmul.mubr.f32.gmra.mxu0 %v980
      %v1291 = vpop.f32.mrf.mxu0
      %v1292 = vadd.f32 %v715, %v1291
      %v1293 = vpop.f32.mrf.mxu0
      %1294 = vmatprep.mubr.f32.mxu0 0.0
      %1295 = vmatmul.mubr.f32.gmra.mxu0 %v983
      %v1296 = vpop.f32.mrf.mxu0
      %v1297 = vadd.f32 %v720, %v1296
      %v1298 = vpop.f32.mrf.mxu0
      %1299 = vmatprep.mubr.f32.mxu0 0.0
      %1300 = vmatmul.mubr.f32.gmra.mxu0 %v986
      %v1301 = vpop.f32.mrf.mxu0
      %v1302 = vadd.f32 %v725, %v1301
      %v1303 = vpop.f32.mrf.mxu0
      %1304 = vmatprep.mubr.f32.mxu0 0.0
      %1305 = vmatmul.mubr.f32.gmra.mxu0 %v989
      %v1306 = vpop.f32.mrf.mxu0
      %v1307 = vadd.f32 %v730, %v1306
      %v1308 = vpop.f32.mrf.mxu0
      %1309 = vmatprep.mubr.f32.mxu0 0.0
      %1310 = vmatmul.mubr.f32.gmra.mxu0 %v992
      %v1311 = vpop.f32.mrf.mxu0
      %v1312 = vadd.f32 %v735, %v1311
      %v1313 = vpop.f32.mrf.mxu0
      %1314 = vmatprep.mubr.f32.mxu0 0.0
      %1315 = vmatmul.mubr.f32.gmra.mxu0 %v995
      %v1316 = vpop.f32.mrf.mxu0
      %v1317 = vadd.f32 %v740, %v1316
      %v1318 = vpop.f32.mrf.mxu0
      %1319 = vmatprep.mubr.f32.mxu0 0.0
      %1320 = vmatmul.mubr.f32.gmra.mxu0 %v998
      %v1321 = vpop.f32.mrf.mxu0
      %v1322 = vadd.f32 %v745, %v1321
      %v1323 = vpop.f32.mrf.mxu0
      %1324 = vmatprep.mubr.f32.mxu0 0.0
      %1325 = vmatmul.mubr.f32.gmra.mxu0 %v1001
      %v1326 = vpop.f32.mrf.mxu0
      %v1327 = vadd.f32 %v750, %v1326
      %v1328 = vpop.f32.mrf.mxu0
      %1329 = vmatprep.mubr.f32.mxu0 0.0
      %1330 = vmatmul.mubr.f32.gmra.mxu0 %v1004
      %v1331 = vpop.f32.mrf.mxu0
      %v1332 = vadd.f32 %v755, %v1331
      %v1333 = vpop.f32.mrf.mxu0
      %1334 = vmatprep.mubr.f32.mxu0 0.0
      %1335 = vmatmul.mubr.f32.gmra.mxu0 %v1007
      %v1336 = vpop.f32.mrf.mxu0
      %v1337 = vadd.f32 %v760, %v1336
      %v1338 = vpop.f32.mrf.mxu0
      %1339 = vmatprep.mubr.f32.mxu0 0.0
      %1340 = vmatmul.mubr.f32.gmra.mxu0 %v1010
      %v1341 = vpop.f32.mrf.mxu0
      %v1342 = vadd.f32 %v765, %v1341
      %v1343 = vpop.f32.mrf.mxu0
      %1344 = vmatprep.mubr.f32.mxu0 0.0
      %1345 = vmatmul.mubr.f32.gmra.mxu0 %v1013
      %v1346 = vpop.f32.mrf.mxu0
      %v1347 = vadd.f32 %v770, %v1346
      %v1348 = vpop.f32.mrf.mxu0
      %1349 = vmatprep.mubr.f32.mxu0 0.0
      %1350 = vmatmul.mubr.f32.gmra.mxu0 %v1016
      %v1351 = vpop.f32.mrf.mxu0
      %v1352 = vadd.f32 %v775, %v1351
      %v1353 = vpop.f32.mrf.mxu0
      %1354 = vmatprep.mubr.f32.mxu0 0.0
      %1355 = vmatmul.mubr.f32.gmra.mxu0 %v1019
      %v1356 = vpop.f32.mrf.mxu0
      %v1357 = vadd.f32 %v780, %v1356
      %v1358 = vpop.f32.mrf.mxu0
      %1359 = vmatprep.mubr.f32.mxu0 0.0
      %1360 = vmatmul.mubr.f32.gmra.mxu0 %v1022
      %v1361 = vpop.f32.mrf.mxu0
      %v1362 = vadd.f32 %v785, %v1361
      %v1363 = vpop.f32.mrf.mxu0
      %1364 = vmatprep.mubr.f32.mxu0 0.0
      %1365 = vmatmul.mubr.f32.gmra.mxu0 %v1025
      %v1366 = vpop.f32.mrf.mxu0
      %v1367 = vadd.f32 %v790, %v1366
      %v1368 = vpop.f32.mrf.mxu0
      %1369 = vmatprep.mubr.f32.mxu0 0.0
      %1370 = vmatmul.mubr.f32.gmra.mxu0 %v1028
      %v1371 = vpop.f32.mrf.mxu0
      %v1372 = vadd.f32 %v795, %v1371
      %v1373 = vpop.f32.mrf.mxu0
      %1374 = vmatprep.mubr.f32.mxu0 0.0
      %1375 = vmatmul.mubr.f32.gmra.mxu0 %v1031
      %v1376 = vpop.f32.mrf.mxu0
      %v1377 = vadd.f32 %v800, %v1376
      %v1378 = vpop.f32.mrf.mxu0
      %1379 = vmatprep.mubr.f32.mxu0 0.0
      %1380 = vmatmul.mubr.f32.gmra.mxu0 %v1034
      %v1381 = vpop.f32.mrf.mxu0
      %v1382 = vadd.f32 %v805, %v1381
      %v1383 = vpop.f32.mrf.mxu0
      %1384 = vmatprep.mubr.f32.mxu0 0.0
      %1385 = vmatmul.mubr.f32.gmra.mxu0 %v1037
      %v1386 = vpop.f32.mrf.mxu0
      %v1387 = vadd.f32 %v810, %v1386
      %v1388 = vpop.f32.mrf.mxu0
      %1389 = vmatprep.mubr.f32.mxu0 0.0
      %1390 = vmatmul.mubr.f32.gmra.mxu0 %v1040
      %v1391 = vpop.f32.mrf.mxu0
      %v1392 = vadd.f32 %v815, %v1391
      %v1393 = vpop.f32.mrf.mxu0
      %1394 = vmatprep.mubr.f32.mxu0 0.0
      %1395 = vmatmul.mubr.f32.gmra.mxu0 %v1043
      %v1396 = vpop.f32.mrf.mxu0
      %v1397 = vadd.f32 %v820, %v1396
      %v1398 = vpop.f32.mrf.mxu0
      %1399 = vmatprep.mubr.f32.mxu0 0.0
      %1400 = vmatmul.mubr.f32.gmra.mxu0 %v1046
      %v1401 = vpop.f32.mrf.mxu0
      %v1402 = vadd.f32 %v825, %v1401
      %v1403 = vpop.f32.mrf.mxu0
      %1404 = vmatprep.mubr.f32.mxu0 0.0
      %1405 = vmatmul.mubr.f32.gmra.mxu0 %v1049
      %v1406 = vpop.f32.mrf.mxu0
      %v1407 = vadd.f32 %v830, %v1406
      %v1408 = vpop.f32.mrf.mxu0
      %1409 = vmatprep.mubr.f32.mxu0 0.0
      %1410 = vmatmul.mubr.f32.gmra.mxu0 %v1052
      %v1411 = vpop.f32.mrf.mxu0
      %v1412 = vadd.f32 %v835, %v1411
      %v1413 = vpop.f32.mrf.mxu0
      %1414 = vmatprep.mubr.f32.mxu0 0.0
      %1415 = vmatmul.mubr.f32.gmra.mxu0 %v1055
      %v1416 = vpop.f32.mrf.mxu0
      %v1417 = vadd.f32 %v840, %v1416
      %v1418 = vpop.f32.mrf.mxu0
      %1419 = vmatprep.mubr.f32.mxu0 0.0
      %1420 = vmatmul.mubr.f32.gmra.mxu0 %v1058
      %v1421 = vpop.f32.mrf.mxu0
      %v1422 = vadd.f32 %v845, %v1421
      %v1423 = vpop.f32.mrf.mxu0
      %1424 = vmatprep.mubr.f32.mxu0 0.0
      %1425 = vmatmul.mubr.f32.gmra.mxu0 %v1061
      %v1426 = vpop.f32.mrf.mxu0
      %v1427 = vadd.f32 %v850, %v1426
      %v1428 = vpop.f32.mrf.mxu0
      %1429 = vmatprep.mubr.f32.mxu0 0.0
      %1430 = vmatmul.mubr.f32.gmra.mxu0 %v1064
      %v1431 = vpop.f32.mrf.mxu0
      %v1432 = vadd.f32 %v855, %v1431
      %v1433 = vpop.f32.mrf.mxu0
      %1434 = vmatprep.mubr.f32.mxu0 0.0
      %1435 = vmatmul.mubr.f32.gmra.mxu0 %v1067
      %v1436 = vpop.f32.mrf.mxu0
      %v1437 = vadd.f32 %v860, %v1436
      %v1438 = vpop.f32.mrf.mxu0
      %1439 = vmatprep.mubr.f32.mxu0 0.0
      %1440 = vmatmul.mubr.f32.gmra.mxu0 %v1070
      %v1441 = vpop.f32.mrf.mxu0
      %v1442 = vadd.f32 %v865, %v1441
      %v1443 = vpop.f32.mrf.mxu0
      %1444 = vmatprep.mubr.f32.mxu0 0.0
      %1445 = vmatmul.mubr.f32.gmra.mxu0 %v1073
      %v1446 = vpop.f32.mrf.mxu0
      %v1447 = vadd.f32 %v870, %v1446
      %v1448 = vpop.f32.mrf.mxu0
      %1449 = vmatprep.mubr.f32.mxu0 0.0
      %1450 = vmatmul.mubr.f32.gmra.mxu0 %v1076
      %v1451 = vpop.f32.mrf.mxu0
      %v1452 = vadd.f32 %v875, %v1451
      %v1453 = vpop.f32.mrf.mxu0
      %1454 = vmatprep.mubr.f32.mxu0 0.0
      %1455 = vmatmul.mubr.f32.gmra.mxu0 %v1079
      %v1456 = vpop.f32.mrf.mxu0
      %v1457 = vadd.f32 %v880, %v1456
      %v1458 = vpop.f32.mrf.mxu0
      %1459 = vmatprep.mubr.f32.mxu0 0.0
      %1460 = vmatmul.mubr.f32.gmra.mxu0 %v1082
      %v1461 = vpop.f32.mrf.mxu0
      %v1462 = vadd.f32 %v885, %v1461
      %v1463 = vpop.f32.mrf.mxu0
      %1464 = vmatprep.mubr.f32.mxu0 0.0
      %1465 = vmatmul.mubr.f32.gmra.mxu0 %v1085
      %v1466 = vpop.f32.mrf.mxu0
      %v1467 = vadd.f32 %v890, %v1466
      %v1468 = vpop.f32.mrf.mxu0
      %1469 = vmatprep.mubr.f32.mxu0 0.0
      %1470 = vmatmul.mubr.f32.gmra.mxu0 %v1088
      %v1471 = vpop.f32.mrf.mxu0
      %v1472 = vadd.f32 %v895, %v1471
      %v1473 = vpop.f32.mrf.mxu0
      %1474 = vdwg.mxu0
      %v1475 = vld [vmem:[%s2] sm:$0x1]
      %v1477 = vlaneseq
      %v1478 = vshrl.u32 %v1477, 7
      %v1479 = vsub.s32 0, %v1478
      %v1480 = vrot.slane %v1475, %v1479
      %v1482 = vmul.f32 %v1157, %v1480
      %v1483 = vmul.f32 %v1162, %v1480
      %v1484 = vmul.f32 %v1167, %v1480
      %v1485 = vmul.f32 %v1172, %v1480
      %v1486 = vmul.f32 %v1177, %v1480
      %v1487 = vmul.f32 %v1182, %v1480
      %v1488 = vmul.f32 %v1187, %v1480
      %v1489 = vmul.f32 %v1192, %v1480
      %v1490 = vmul.f32 %v1197, %v1480
      %v1491 = vmul.f32 %v1202, %v1480
      %v1492 = vmul.f32 %v1207, %v1480
      %v1493 = vmul.f32 %v1212, %v1480
      %v1494 = vmul.f32 %v1217, %v1480
      %v1495 = vmul.f32 %v1222, %v1480
      %v1496 = vmul.f32 %v1227, %v1480
      %v1497 = vmul.f32 %v1232, %v1480
      %v1498 = vmul.f32 %v1237, %v1480
      %v1499 = vmul.f32 %v1242, %v1480
      %v1500 = vmul.f32 %v1247, %v1480
      %v1501 = vmul.f32 %v1252, %v1480
      %v1502 = vmul.f32 %v1257, %v1480
      %v1503 = vmul.f32 %v1262, %v1480
      %v1504 = vmul.f32 %v1267, %v1480
      %v1505 = vmul.f32 %v1272, %v1480
      %v1506 = vmul.f32 %v1277, %v1480
      %v1507 = vmul.f32 %v1282, %v1480
      %v1508 = vmul.f32 %v1287, %v1480
      %v1509 = vmul.f32 %v1292, %v1480
      %v1510 = vmul.f32 %v1297, %v1480
      %v1511 = vmul.f32 %v1302, %v1480
      %v1512 = vmul.f32 %v1307, %v1480
      %v1513 = vmul.f32 %v1312, %v1480
      %v1514 = vmul.f32 %v1317, %v1480
      %v1515 = vmul.f32 %v1322, %v1480
      %v1516 = vmul.f32 %v1327, %v1480
      %v1517 = vmul.f32 %v1332, %v1480
      %v1518 = vmul.f32 %v1337, %v1480
      %v1519 = vmul.f32 %v1342, %v1480
      %v1520 = vmul.f32 %v1347, %v1480
      %v1521 = vmul.f32 %v1352, %v1480
      %v1522 = vmul.f32 %v1357, %v1480
      %v1523 = vmul.f32 %v1362, %v1480
      %v1524 = vmul.f32 %v1367, %v1480
      %v1525 = vmul.f32 %v1372, %v1480
      %v1526 = vmul.f32 %v1377, %v1480
      %v1527 = vmul.f32 %v1382, %v1480
      %v1528 = vmul.f32 %v1387, %v1480
      %v1529 = vmul.f32 %v1392, %v1480
      %v1530 = vmul.f32 %v1397, %v1480
      %v1531 = vmul.f32 %v1402, %v1480
      %v1532 = vmul.f32 %v1407, %v1480
      %v1533 = vmul.f32 %v1412, %v1480
      %v1534 = vmul.f32 %v1417, %v1480
      %v1535 = vmul.f32 %v1422, %v1480
      %v1536 = vmul.f32 %v1427, %v1480
      %v1537 = vmul.f32 %v1432, %v1480
      %v1538 = vmul.f32 %v1437, %v1480
      %v1539 = vmul.f32 %v1442, %v1480
      %v1540 = vmul.f32 %v1447, %v1480
      %v1541 = vmul.f32 %v1452, %v1480
      %v1542 = vmul.f32 %v1457, %v1480
      %v1543 = vmul.f32 %v1462, %v1480
      %v1544 = vmul.f32 %v1467, %v1480
      %v1545 = vmul.f32 %v1472, %v1480
      %v1546 = vld [vmem:[%s3] sm:$0x1]
      %v1548 = vlaneseq
      %v1549 = vshrl.u32 %v1548, 7
      %v1550 = vsub.s32 0, %v1549
      %v1551 = vrot.slane %v1546, %v1550
      %v1553 = vadd.f32 %v1482, %v1551
      %v1554 = vadd.f32 %v1483, %v1551
      %v1555 = vadd.f32 %v1484, %v1551
      %v1556 = vadd.f32 %v1485, %v1551
      %v1557 = vadd.f32 %v1486, %v1551
      %v1558 = vadd.f32 %v1487, %v1551
      %v1559 = vadd.f32 %v1488, %v1551
      %v1560 = vadd.f32 %v1489, %v1551
      %v1561 = vadd.f32 %v1490, %v1551
      %v1562 = vadd.f32 %v1491, %v1551
      %v1563 = vadd.f32 %v1492, %v1551
      %v1564 = vadd.f32 %v1493, %v1551
      %v1565 = vadd.f32 %v1494, %v1551
      %v1566 = vadd.f32 %v1495, %v1551
      %v1567 = vadd.f32 %v1496, %v1551
      %v1568 = vadd.f32 %v1497, %v1551
      %v1569 = vadd.f32 %v1498, %v1551
      %v1570 = vadd.f32 %v1499, %v1551
      %v1571 = vadd.f32 %v1500, %v1551
      %v1572 = vadd.f32 %v1501, %v1551
      %v1573 = vadd.f32 %v1502, %v1551
      %v1574 = vadd.f32 %v1503, %v1551
      %v1575 = vadd.f32 %v1504, %v1551
      %v1576 = vadd.f32 %v1505, %v1551
      %v1577 = vadd.f32 %v1506, %v1551
      %v1578 = vadd.f32 %v1507, %v1551
      %v1579 = vadd.f32 %v1508, %v1551
      %v1580 = vadd.f32 %v1509, %v1551
      %v1581 = vadd.f32 %v1510, %v1551
      %v1582 = vadd.f32 %v1511, %v1551
      %v1583 = vadd.f32 %v1512, %v1551
      %v1584 = vadd.f32 %v1513, %v1551
      %v1585 = vadd.f32 %v1514, %v1551
      %v1586 = vadd.f32 %v1515, %v1551
      %v1587 = vadd.f32 %v1516, %v1551
      %v1588 = vadd.f32 %v1517, %v1551
      %v1589 = vadd.f32 %v1518, %v1551
      %v1590 = vadd.f32 %v1519, %v1551
      %v1591 = vadd.f32 %v1520, %v1551
      %v1592 = vadd.f32 %v1521, %v1551
      %v1593 = vadd.f32 %v1522, %v1551
      %v1594 = vadd.f32 %v1523, %v1551
      %v1595 = vadd.f32 %v1524, %v1551
      %v1596 = vadd.f32 %v1525, %v1551
      %v1597 = vadd.f32 %v1526, %v1551
      %v1598 = vadd.f32 %v1527, %v1551
      %v1599 = vadd.f32 %v1528, %v1551
      %v1600 = vadd.f32 %v1529, %v1551
      %v1601 = vadd.f32 %v1530, %v1551
      %v1602 = vadd.f32 %v1531, %v1551
      %v1603 = vadd.f32 %v1532, %v1551
      %v1604 = vadd.f32 %v1533, %v1551
      %v1605 = vadd.f32 %v1534, %v1551
      %v1606 = vadd.f32 %v1535, %v1551
      %v1607 = vadd.f32 %v1536, %v1551
      %v1608 = vadd.f32 %v1537, %v1551
      %v1609 = vadd.f32 %v1538, %v1551
      %v1610 = vadd.f32 %v1539, %v1551
      %v1611 = vadd.f32 %v1540, %v1551
      %v1612 = vadd.f32 %v1541, %v1551
      %v1613 = vadd.f32 %v1542, %v1551
      %v1614 = vadd.f32 %v1543, %v1551
      %v1615 = vadd.f32 %v1544, %v1551
      %v1616 = vadd.f32 %v1545, %v1551
      %v1617 = vmax.f32 %v1553, 0.0
      %v1618 = vmax.f32 %v1554, 0.0
      %v1619 = vmax.f32 %v1555, 0.0
      %v1620 = vmax.f32 %v1556, 0.0
      %v1621 = vmax.f32 %v1557, 0.0
      %v1622 = vmax.f32 %v1558, 0.0
      %v1623 = vmax.f32 %v1559, 0.0
      %v1624 = vmax.f32 %v1560, 0.0
      %v1625 = vmax.f32 %v1561, 0.0
      %v1626 = vmax.f32 %v1562, 0.0
      %v1627 = vmax.f32 %v1563, 0.0
      %v1628 = vmax.f32 %v1564, 0.0
      %v1629 = vmax.f32 %v1565, 0.0
      %v1630 = vmax.f32 %v1566, 0.0
      %v1631 = vmax.f32 %v1567, 0.0
      %v1632 = vmax.f32 %v1568, 0.0
      %v1633 = vmax.f32 %v1569, 0.0
      %v1634 = vmax.f32 %v1570, 0.0
      %v1635 = vmax.f32 %v1571, 0.0
      %v1636 = vmax.f32 %v1572, 0.0
      %v1637 = vmax.f32 %v1573, 0.0
      %v1638 = vmax.f32 %v1574, 0.0
      %v1639 = vmax.f32 %v1575, 0.0
      %v1640 = vmax.f32 %v1576, 0.0
      %v1641 = vmax.f32 %v1577, 0.0
      %v1642 = vmax.f32 %v1578, 0.0
      %v1643 = vmax.f32 %v1579, 0.0
      %v1644 = vmax.f32 %v1580, 0.0
      %v1645 = vmax.f32 %v1581, 0.0
      %v1646 = vmax.f32 %v1582, 0.0
      %v1647 = vmax.f32 %v1583, 0.0
      %v1648 = vmax.f32 %v1584, 0.0
      %v1649 = vmax.f32 %v1585, 0.0
      %v1650 = vmax.f32 %v1586, 0.0
      %v1651 = vmax.f32 %v1587, 0.0
      %v1652 = vmax.f32 %v1588, 0.0
      %v1653 = vmax.f32 %v1589, 0.0
      %v1654 = vmax.f32 %v1590, 0.0
      %v1655 = vmax.f32 %v1591, 0.0
      %v1656 = vmax.f32 %v1592, 0.0
      %v1657 = vmax.f32 %v1593, 0.0
      %v1658 = vmax.f32 %v1594, 0.0
      %v1659 = vmax.f32 %v1595, 0.0
      %v1660 = vmax.f32 %v1596, 0.0
      %v1661 = vmax.f32 %v1597, 0.0
      %v1662 = vmax.f32 %v1598, 0.0
      %v1663 = vmax.f32 %v1599, 0.0
      %v1664 = vmax.f32 %v1600, 0.0
      %v1665 = vmax.f32 %v1601, 0.0
      %v1666 = vmax.f32 %v1602, 0.0
      %v1667 = vmax.f32 %v1603, 0.0
      %v1668 = vmax.f32 %v1604, 0.0
      %v1669 = vmax.f32 %v1605, 0.0
      %v1670 = vmax.f32 %v1606, 0.0
      %v1671 = vmax.f32 %v1607, 0.0
      %v1672 = vmax.f32 %v1608, 0.0
      %v1673 = vmax.f32 %v1609, 0.0
      %v1674 = vmax.f32 %v1610, 0.0
      %v1675 = vmax.f32 %v1611, 0.0
      %v1676 = vmax.f32 %v1612, 0.0
      %v1677 = vmax.f32 %v1613, 0.0
      %v1678 = vmax.f32 %v1614, 0.0
      %v1679 = vmax.f32 %v1615, 0.0
      %v1680 = vmax.f32 %v1616, 0.0
      %vm1681 = vcmask 523264
      %1682 = vst.msk [vmem:[%s177] sm:$0xff] %vm1681, %v1617
      %1683 = vst.msk [vmem:[%s177 + $0x8] sm:$0xff] %vm1681, %v1618
      %1684 = vst.msk [vmem:[%s177 + $0x10] sm:$0xff] %vm1681, %v1619
      %1685 = vst.msk [vmem:[%s177 + $0x18] sm:$0xff] %vm1681, %v1620
      %1686 = vst.msk [vmem:[%s177 + $0x20] sm:$0xff] %vm1681, %v1621
      %1687 = vst.msk [vmem:[%s177 + $0x28] sm:$0xff] %vm1681, %v1622
      %1688 = vst.msk [vmem:[%s177 + $0x30] sm:$0xff] %vm1681, %v1623
      %1689 = vst.msk [vmem:[%s177 + $0x38] sm:$0xff] %vm1681, %v1624
      %1690 = vst.msk [vmem:[%s177 + $0x40] sm:$0xff] %vm1681, %v1625
      %1691 = vst.msk [vmem:[%s177 + $0x48] sm:$0xff] %vm1681, %v1626
      %1692 = vst.msk [vmem:[%s177 + $0x50] sm:$0xff] %vm1681, %v1627
      %1693 = vst.msk [vmem:[%s177 + $0x58] sm:$0xff] %vm1681, %v1628
      %1694 = vst.msk [vmem:[%s177 + $0x60] sm:$0xff] %vm1681, %v1629
      %1695 = vst.msk [vmem:[%s177 + $0x68] sm:$0xff] %vm1681, %v1630
      %1696 = vst.msk [vmem:[%s177 + $0x70] sm:$0xff] %vm1681, %v1631
      %1697 = vst.msk [vmem:[%s177 + $0x78] sm:$0xff] %vm1681, %v1632
      %1698 = vst.msk [vmem:[%s177 + $0x80] sm:$0xff] %vm1681, %v1633
      %1699 = vst.msk [vmem:[%s177 + $0x88] sm:$0xff] %vm1681, %v1634
      %1700 = vst.msk [vmem:[%s177 + $0x90] sm:$0xff] %vm1681, %v1635
      %1701 = vst.msk [vmem:[%s177 + $0x98] sm:$0xff] %vm1681, %v1636
      %1702 = vst.msk [vmem:[%s177 + $0xa0] sm:$0xff] %vm1681, %v1637
      %1703 = vst.msk [vmem:[%s177 + $0xa8] sm:$0xff] %vm1681, %v1638
      %1704 = vst.msk [vmem:[%s177 + $0xb0] sm:$0xff] %vm1681, %v1639
      %1705 = vst.msk [vmem:[%s177 + $0xb8] sm:$0xff] %vm1681, %v1640
      %1706 = vst.msk [vmem:[%s177 + $0xc0] sm:$0xff] %vm1681, %v1641
      %1707 = vst.msk [vmem:[%s177 + $0xc8] sm:$0xff] %vm1681, %v1642
      %1708 = vst.msk [vmem:[%s177 + $0xd0] sm:$0xff] %vm1681, %v1643
      %1709 = vst.msk [vmem:[%s177 + $0xd8] sm:$0xff] %vm1681, %v1644
      %1710 = vst.msk [vmem:[%s177 + $0xe0] sm:$0xff] %vm1681, %v1645
      %1711 = vst.msk [vmem:[%s177 + $0xe8] sm:$0xff] %vm1681, %v1646
      %1712 = vst.msk [vmem:[%s177 + $0xf0] sm:$0xff] %vm1681, %v1647
      %1713 = vst.msk [vmem:[%s177 + $0xf8] sm:$0xff] %vm1681, %v1648
      %1714 = vst.msk [vmem:[%s177 + $0x100] sm:$0xff] %vm1681, %v1649
      %1715 = vst.msk [vmem:[%s177 + $0x108] sm:$0xff] %vm1681, %v1650
      %1716 = vst.msk [vmem:[%s177 + $0x110] sm:$0xff] %vm1681, %v1651
      %1717 = vst.msk [vmem:[%s177 + $0x118] sm:$0xff] %vm1681, %v1652
      %1718 = vst.msk [vmem:[%s177 + $0x120] sm:$0xff] %vm1681, %v1653
      %1719 = vst.msk [vmem:[%s177 + $0x128] sm:$0xff] %vm1681, %v1654
      %1720 = vst.msk [vmem:[%s177 + $0x130] sm:$0xff] %vm1681, %v1655
      %1721 = vst.msk [vmem:[%s177 + $0x138] sm:$0xff] %vm1681, %v1656
      %1722 = vst.msk [vmem:[%s177 + $0x140] sm:$0xff] %vm1681, %v1657
      %1723 = vst.msk [vmem:[%s177 + $0x148] sm:$0xff] %vm1681, %v1658
      %1724 = vst.msk [vmem:[%s177 + $0x150] sm:$0xff] %vm1681, %v1659
      %1725 = vst.msk [vmem:[%s177 + $0x158] sm:$0xff] %vm1681, %v1660
      %1726 = vst.msk [vmem:[%s177 + $0x160] sm:$0xff] %vm1681, %v1661
      %1727 = vst.msk [vmem:[%s177 + $0x168] sm:$0xff] %vm1681, %v1662
      %1728 = vst.msk [vmem:[%s177 + $0x170] sm:$0xff] %vm1681, %v1663
      %1729 = vst.msk [vmem:[%s177 + $0x178] sm:$0xff] %vm1681, %v1664
      %1730 = vst.msk [vmem:[%s177 + $0x180] sm:$0xff] %vm1681, %v1665
      %1731 = vst.msk [vmem:[%s177 + $0x188] sm:$0xff] %vm1681, %v1666
      %1732 = vst.msk [vmem:[%s177 + $0x190] sm:$0xff] %vm1681, %v1667
      %1733 = vst.msk [vmem:[%s177 + $0x198] sm:$0xff] %vm1681, %v1668
      %1734 = vst.msk [vmem:[%s177 + $0x1a0] sm:$0xff] %vm1681, %v1669
      %1735 = vst.msk [vmem:[%s177 + $0x1a8] sm:$0xff] %vm1681, %v1670
      %1736 = vst.msk [vmem:[%s177 + $0x1b0] sm:$0xff] %vm1681, %v1671
      %1737 = vst.msk [vmem:[%s177 + $0x1b8] sm:$0xff] %vm1681, %v1672
      %1738 = vst.msk [vmem:[%s177 + $0x1c0] sm:$0xff] %vm1681, %v1673
      %1739 = vst.msk [vmem:[%s177 + $0x1c8] sm:$0xff] %vm1681, %v1674
      %1740 = vst.msk [vmem:[%s177 + $0x1d0] sm:$0xff] %vm1681, %v1675
      %1741 = vst.msk [vmem:[%s177 + $0x1d8] sm:$0xff] %vm1681, %v1676
      %1742 = vst.msk [vmem:[%s177 + $0x1e0] sm:$0xff] %vm1681, %v1677
      %1743 = vst.msk [vmem:[%s177 + $0x1e8] sm:$0xff] %vm1681, %v1678
      %1744 = vst.msk [vmem:[%s177 + $0x1f0] sm:$0xff] %vm1681, %v1679
      %1745 = vst.msk [vmem:[%s177 + $0x1f8] sm:$0xff] %vm1681, %v1680
      %s1746 = smul.u32 64, %s15
      %p1747 = scmp.lt.s32.totalorder %s1746, 127
      %s1748 = scalar_select %p1747, %s1746, 127
      %s1749 = smul.addr %s1748, 8
      %s1750 = scalar_lea.vmem %s4, %s1749
      // Predicated region
      $region37: #{conv_normN_AE_forward.6} parent=35 // pred_check
        %p1751 = pneg %p117
      $region38: #{conv_normN_AE_forward.6} parent=35 // pred_check_branch
        %1753 = sbr.rel (%p1751) target = $region40
      $region39: #{conv_normN_AE_forward.6} parent=35 // pred_region
        %s1754 = smul.u32 64, %s15
      $region40: #{conv_normN_AE_forward.6} parent=35 // pred_fallthru
        _
    $region36: #{conv_normN_AE_forward.6} parent=5 // pred_fallthru
      _
    %p1755 = scmp.le.s32.totalorder 2, %s10
    // Predicated region
    $region41: #{conv_normN_AE_forward.6} parent=5 // pred_check
      %p1756 = pneg %p1755
    $region42: #{conv_normN_AE_forward.6} parent=5 // pred_check_branch
      %1758 = sbr.rel (%p1756) target = $region44
    $region43: #{conv_normN_AE_forward.6} parent=5 // pred_region
      %s1759 = ssub.s32 %s10, 2
      // Predicated region
      $region45: #{conv_normN_AE_forward.6} parent=43 // pred_check
        %p1760 = pneg %p123
      $region46: #{conv_normN_AE_forward.6} parent=43 // pred_check_branch
        %1762 = sbr.rel (%p1760) target = $region48
      $region47: #{conv_normN_AE_forward.6} parent=43 // pred_region
        %s1763 = smul.u32 64, %s16
        %p1764 = scmp.lt.s32.totalorder %s1763, 127
        %s1765 = scalar_select %p1764, %s1763, 127
        %s1766 = smul.addr %s1765, 8
        %s1767 = scalar_lea.vmem %s4, %s1766
      $region48: #{conv_normN_AE_forward.6} parent=43 // pred_fallthru
        _
    $region44: #{conv_normN_AE_forward.6} parent=5 // pred_fallthru
      _
  $region6: #{conv_normN_AE_forward.6} parent=0 // loop_footer
    %s14 = sadd.s32 1, %s10
  $region7: #{conv_normN_AE_forward.6} parent=0 // loop_footer_branch
    %9 = sbr.rel target = $region3
  $region8: #{conv_normN_AE_forward.6} parent=0 // loop_exit
    _

// kernel: conv_normN_AE_forward.7
$region0: #{conv_normN_AE_forward.7}
  #allocation0 [shape = 'u32[]', space=smem, size = 0x4, offset = 0x4, fixed_abs, tag = 'smem constant byte address 0x4 - core index']
  #allocation1 [shape = 'u32[144,128]{1,0:T(1,128)}', space=vmem, size = 0x12000, scoped, tag = 'internal scratch']
  %s0 = inlined_call_operand.vmem [shape: f32[3152,48], index: 0, kind: input, shape index: {}]
  %s1 = inlined_call_operand.vmem [shape: f32[3,48,8], index: 1, kind: input, shape index: {}]
  %s2 = inlined_call_operand.vmem [shape: f32[1,8], index: 2, kind: input, shape index: {}]
  %s3 = inlined_call_operand.vmem [shape: f32[1,8], index: 3, kind: input, shape index: {}]
  %s4 = inlined_call_operand.vmem [shape: f32[3072,8], index: 4, kind: output, shape index: {}]
  %s5 = sld [smem:[#allocation0]]
  $region49: #{conv_normN_AE_forward.7} parent=0
    _
  %s7 = ssub.s32 1, %s5
  %s8 = scalar_select 0, %s7, %s5
  loop: start=0, step=1, limit=8
  $region2: #{conv_normN_AE_forward.7} parent=0 // loop_pre_header
    _
  $region3: #{conv_normN_AE_forward.7} parent=0 // loop_header
    %s10 = sphi 0, %s14
    %p11 = scmp.ge.s32.totalorder %s10, 8
    %s18 = sphi 0, %s18
    %s20 = sphi 0, %s18
    %s21 = sphi 0, %s20
    %s35 = sphi 0, %s21
    %s39 = sphi 0, %s39
    %s41 = sphi 0, %s39
    %s42 = sphi 0, %s41
    %s56 = sphi 0, %s42
    %s60 = sphi 0, %s60
    %s62 = sphi 0, %s60
    %s63 = sphi 0, %s62
    %s77 = sphi 0, %s63
    %s81 = sphi 0, %s81
    %s83 = sphi 0, %s81
    %s84 = sphi 0, %s83
    %s98 = sphi 0, %s84
    %s104 = sphi 0, %s106
    %s107 = sphi 0, %s104
    %s108 = sphi 0, %s107
    %s124 = sphi 0, %s108
  $region4: #{conv_normN_AE_forward.7} parent=0 // loop_header_branch
    %13 = sbr.rel (%p11) target = $region8
  $region5: #{conv_normN_AE_forward.7} parent=0 // loop_body
    %s15 = ssub.s32 %s10, 1
    %s16 = ssub.s32 %s10, 2
    %s17 = sadd.s32 %s10, 1
    %s19 = sadd.s32 %s18, 1
    %p22 = scmp.eq.s32.totalorder %s10, 5
    %p23 = scmp.ne.s32.totalorder %s18, %s20
    %p24 = scmp.eq.s32.totalorder %s10, 0
    %p25 = por %p23, %p24
    %p26 = scmp.ne.s32.totalorder %s18, %s20
    %p27 = scmp.eq.s32.totalorder %s15, 5
    %p28 = por %p26, %p27
    %p29 = scmp.ne.s32.totalorder %s20, %s21
    %p30 = scmp.eq.s32.totalorder %s15, 0
    %p31 = por %p29, %p30
    %p32 = scmp.ne.s32.totalorder %s20, %s21
    %p33 = scmp.eq.s32.totalorder %s16, 5
    %p34 = por %p32, %p33
    %p36 = scmp.ne.s32.totalorder %s21, %s35
    %p37 = scmp.eq.s32.totalorder %s16, 0
    %p38 = por %p36, %p37
    %s40 = sadd.s32 %s39, 1
    %p43 = scmp.eq.s32.totalorder %s10, 5
    %p44 = scmp.ne.s32.totalorder %s39, %s41
    %p45 = scmp.eq.s32.totalorder %s10, 0
    %p46 = por %p44, %p45
    %p47 = scmp.ne.s32.totalorder %s39, %s41
    %p48 = scmp.eq.s32.totalorder %s15, 5
    %p49 = por %p47, %p48
    %p50 = scmp.ne.s32.totalorder %s41, %s42
    %p51 = scmp.eq.s32.totalorder %s15, 0
    %p52 = por %p50, %p51
    %p53 = scmp.ne.s32.totalorder %s41, %s42
    %p54 = scmp.eq.s32.totalorder %s16, 5
    %p55 = por %p53, %p54
    %p57 = scmp.ne.s32.totalorder %s42, %s56
    %p58 = scmp.eq.s32.totalorder %s16, 0
    %p59 = por %p57, %p58
    %s61 = sadd.s32 %s60, 1
    %p64 = scmp.eq.s32.totalorder %s10, 5
    %p65 = scmp.ne.s32.totalorder %s60, %s62
    %p66 = scmp.eq.s32.totalorder %s10, 0
    %p67 = por %p65, %p66
    %p68 = scmp.ne.s32.totalorder %s60, %s62
    %p69 = scmp.eq.s32.totalorder %s15, 5
    %p70 = por %p68, %p69
    %p71 = scmp.ne.s32.totalorder %s62, %s63
    %p72 = scmp.eq.s32.totalorder %s15, 0
    %p73 = por %p71, %p72
    %p74 = scmp.ne.s32.totalorder %s62, %s63
    %p75 = scmp.eq.s32.totalorder %s16, 5
    %p76 = por %p74, %p75
    %p78 = scmp.ne.s32.totalorder %s63, %s77
    %p79 = scmp.eq.s32.totalorder %s16, 0
    %p80 = por %p78, %p79
    %s82 = sadd.s32 %s81, 1
    %p85 = scmp.eq.s32.totalorder %s10, 5
    %p86 = scmp.ne.s32.totalorder %s81, %s83
    %p87 = scmp.eq.s32.totalorder %s10, 0
    %p88 = por %p86, %p87
    %p89 = scmp.ne.s32.totalorder %s81, %s83
    %p90 = scmp.eq.s32.totalorder %s15, 5
    %p91 = por %p89, %p90
    %p92 = scmp.ne.s32.totalorder %s83, %s84
    %p93 = scmp.eq.s32.totalorder %s15, 0
    %p94 = por %p92, %p93
    %p95 = scmp.ne.s32.totalorder %s83, %s84
    %p96 = scmp.eq.s32.totalorder %s16, 5
    %p97 = por %p95, %p96
    %p99 = scmp.ne.s32.totalorder %s84, %s98
    %p100 = scmp.eq.s32.totalorder %s16, 0
    %p101 = por %p99, %p100
    %s102 = ssub.s32 %s10, %s17
    %p103 = scmp.eq.s32.totalorder %s102, 0
    %s105 = sadd.s32 %s104, 1
    %s106 = scalar_select %p103, %s104, %s105
    %p109 = pneg %p103
    %p110 = scmp.eq.s32.totalorder %s10, 5
    %p111 = por %p109, %p110
    %p112 = scmp.ne.s32.totalorder %s104, %s107
    %p113 = scmp.eq.s32.totalorder %s10, 0
    %p114 = por %p112, %p113
    %p115 = scmp.ne.s32.totalorder %s104, %s107
    %p116 = scmp.eq.s32.totalorder %s15, 5
    %p117 = por %p115, %p116
    %p118 = scmp.ne.s32.totalorder %s107, %s108
    %p119 = scmp.eq.s32.totalorder %s15, 0
    %p120 = por %p118, %p119
    %p121 = scmp.ne.s32.totalorder %s107, %s108
    %p122 = scmp.eq.s32.totalorder %s16, 5
    %p123 = por %p121, %p122
    %p125 = scmp.ne.s32.totalorder %s108, %s124
    %p126 = scmp.eq.s32.totalorder %s16, 0
    %p127 = por %p125, %p126
    %p128 = scmp.le.s32.totalorder 1, %s10
    %p129 = scmp.lt.s32.totalorder %s10, 7
    %p130 = pnand %p128, %p129
    %p131 = pneg %p130
    // Predicated region
    $region9: #{conv_normN_AE_forward.7} parent=5 // pred_check
      _
    $region10: #{conv_normN_AE_forward.7} parent=5 // pred_check_branch
      %133 = sbr.rel (%p130) target = $region12
    $region11: #{conv_normN_AE_forward.7} parent=5 // pred_region
      %s134 = ssub.s32 %s10, 1
      // Predicated region
      $region13: #{conv_normN_AE_forward.7} parent=11 // pred_check
        %p135 = pneg %p31
      $region14: #{conv_normN_AE_forward.7} parent=11 // pred_check_branch
        %137 = sbr.rel (%p135) target = $region16
      $region15: #{conv_normN_AE_forward.7} parent=11 // pred_region
        _
      $region16: #{conv_normN_AE_forward.7} parent=11 // pred_fallthru
        _
      // Predicated region
      $region17: #{conv_normN_AE_forward.7} parent=11 // pred_check
        %p138 = pneg %p52
      $region18: #{conv_normN_AE_forward.7} parent=11 // pred_check_branch
        %140 = sbr.rel (%p138) target = $region20
      $region19: #{conv_normN_AE_forward.7} parent=11 // pred_region
        _
      $region20: #{conv_normN_AE_forward.7} parent=11 // pred_fallthru
        _
      // Predicated region
      $region21: #{conv_normN_AE_forward.7} parent=11 // pred_check
        %p141 = pneg %p73
      $region22: #{conv_normN_AE_forward.7} parent=11 // pred_check_branch
        %143 = sbr.rel (%p141) target = $region24
      $region23: #{conv_normN_AE_forward.7} parent=11 // pred_region
        _
      $region24: #{conv_normN_AE_forward.7} parent=11 // pred_fallthru
        _
      // Predicated region
      $region25: #{conv_normN_AE_forward.7} parent=11 // pred_check
        %p144 = pneg %p94
      $region26: #{conv_normN_AE_forward.7} parent=11 // pred_check_branch
        %146 = sbr.rel (%p144) target = $region28
      $region27: #{conv_normN_AE_forward.7} parent=11 // pred_region
        _
      $region28: #{conv_normN_AE_forward.7} parent=11 // pred_fallthru
        _
    $region12: #{conv_normN_AE_forward.7} parent=5 // pred_fallthru
      _
    %p147 = scmp.lt.s32.totalorder %s10, 6
    // Predicated region
    $region29: #{conv_normN_AE_forward.7} parent=5 // pred_check
      %p148 = pneg %p147
    $region30: #{conv_normN_AE_forward.7} parent=5 // pred_check_branch
      %150 = sbr.rel (%p148) target = $region32
    $region31: #{conv_normN_AE_forward.7} parent=5 // pred_region
      _
    $region32: #{conv_normN_AE_forward.7} parent=5 // pred_fallthru
      _
    %p151 = scmp.le.s32.totalorder 1, %s10
    %p152 = scmp.lt.s32.totalorder %s10, 7
    %p153 = pnand %p151, %p152
    %p154 = pneg %p153
    // Predicated region
    $region33: #{conv_normN_AE_forward.7} parent=5 // pred_check
      _
    $region34: #{conv_normN_AE_forward.7} parent=5 // pred_check_branch
      %156 = sbr.rel (%p153) target = $region36
    $region35: #{conv_normN_AE_forward.7} parent=5 // pred_region
      %s157 = ssub.s32 %s10, 1
      %p158 = pneg %p31
      %p159 = pneg %p28
      %p160 = pneg %p52
      %p161 = pneg %p49
      %p162 = pneg %p73
      %p163 = pneg %p70
      %p164 = pneg %p94
      %p165 = pneg %p91
      %p166 = pneg %p120
      %p167 = pneg %p117
      %s168 = smul.u32 64, %s15
      %p169 = scmp.lt.s32.totalorder %s168, 383
      %s170 = scalar_select %p169, %s168, 383
      %s171 = smul.addr %s170, 8
      %s172 = scalar_lea.vmem %s4, %s171
      %s173 = smul.u32 64, %s15
      %p174 = scmp.lt.s32.totalorder %s173, 383
      %s175 = scalar_select %p174, %s173, 383
      %s176 = smul.addr %s175, 8
      %s177 = scalar_lea.vmem %s4, %s176
      %s178 = smul.u32 64, %s15
      %s179 = smul.u32 %s15, 512
      %s180 = scalar_lea.vmem %s0, %s179
      %v181 = vld [vmem:[%s180] sm:$0xff]
      %v182 = vld [vmem:[%s180 + $0x8] sm:$0xff]
      %v183 = vld [vmem:[%s180 + $0x10] sm:$0xff]
      %v184 = vld [vmem:[%s180 + $0x18] sm:$0xff]
      %v185 = vld [vmem:[%s180 + $0x20] sm:$0xff]
      %v186 = vld [vmem:[%s180 + $0x28] sm:$0xff]
      %v187 = vld [vmem:[%s180 + $0x30] sm:$0xff]
      %v188 = vld [vmem:[%s180 + $0x38] sm:$0xff]
      %v189 = vld [vmem:[%s180 + $0x40] sm:$0xff]
      %v190 = vld [vmem:[%s180 + $0x48] sm:$0xff]
      %v191 = vld [vmem:[%s180 + $0x50] sm:$0xff]
      %v192 = vld [vmem:[%s180 + $0x58] sm:$0xff]
      %v193 = vld [vmem:[%s180 + $0x60] sm:$0xff]
      %v194 = vld [vmem:[%s180 + $0x68] sm:$0xff]
      %v195 = vld [vmem:[%s180 + $0x70] sm:$0xff]
      %v196 = vld [vmem:[%s180 + $0x78] sm:$0xff]
      %v197 = vld [vmem:[%s180 + $0x80] sm:$0xff]
      %v198 = vld [vmem:[%s180 + $0x88] sm:$0xff]
      %v199 = vld [vmem:[%s180 + $0x90] sm:$0xff]
      %v200 = vld [vmem:[%s180 + $0x98] sm:$0xff]
      %v201 = vld [vmem:[%s180 + $0xa0] sm:$0xff]
      %v202 = vld [vmem:[%s180 + $0xa8] sm:$0xff]
      %v203 = vld [vmem:[%s180 + $0xb0] sm:$0xff]
      %v204 = vld [vmem:[%s180 + $0xb8] sm:$0xff]
      %v205 = vld [vmem:[%s180 + $0xc0] sm:$0xff]
      %v206 = vld [vmem:[%s180 + $0xc8] sm:$0xff]
      %v207 = vld [vmem:[%s180 + $0xd0] sm:$0xff]
      %v208 = vld [vmem:[%s180 + $0xd8] sm:$0xff]
      %v209 = vld [vmem:[%s180 + $0xe0] sm:$0xff]
      %v210 = vld [vmem:[%s180 + $0xe8] sm:$0xff]
      %v211 = vld [vmem:[%s180 + $0xf0] sm:$0xff]
      %v212 = vld [vmem:[%s180 + $0xf8] sm:$0xff]
      %v213 = vld [vmem:[%s180 + $0x100] sm:$0xff]
      %v214 = vld [vmem:[%s180 + $0x108] sm:$0xff]
      %v215 = vld [vmem:[%s180 + $0x110] sm:$0xff]
      %v216 = vld [vmem:[%s180 + $0x118] sm:$0xff]
      %v217 = vld [vmem:[%s180 + $0x120] sm:$0xff]
      %v218 = vld [vmem:[%s180 + $0x128] sm:$0xff]
      %v219 = vld [vmem:[%s180 + $0x130] sm:$0xff]
      %v220 = vld [vmem:[%s180 + $0x138] sm:$0xff]
      %v221 = vld [vmem:[%s180 + $0x140] sm:$0xff]
      %v222 = vld [vmem:[%s180 + $0x148] sm:$0xff]
      %v223 = vld [vmem:[%s180 + $0x150] sm:$0xff]
      %v224 = vld [vmem:[%s180 + $0x158] sm:$0xff]
      %v225 = vld [vmem:[%s180 + $0x160] sm:$0xff]
      %v226 = vld [vmem:[%s180 + $0x168] sm:$0xff]
      %v227 = vld [vmem:[%s180 + $0x170] sm:$0xff]
      %v228 = vld [vmem:[%s180 + $0x178] sm:$0xff]
      %v229 = vld [vmem:[%s180 + $0x180] sm:$0xff]
      %v230 = vld [vmem:[%s180 + $0x188] sm:$0xff]
      %v231 = vld [vmem:[%s180 + $0x190] sm:$0xff]
      %v232 = vld [vmem:[%s180 + $0x198] sm:$0xff]
      %v233 = vld [vmem:[%s180 + $0x1a0] sm:$0xff]
      %v234 = vld [vmem:[%s180 + $0x1a8] sm:$0xff]
      %v235 = vld [vmem:[%s180 + $0x1b0] sm:$0xff]
      %v236 = vld [vmem:[%s180 + $0x1b8] sm:$0xff]
      %v237 = vld [vmem:[%s180 + $0x1c0] sm:$0xff]
      %v238 = vld [vmem:[%s180 + $0x1c8] sm:$0xff]
      %v239 = vld [vmem:[%s180 + $0x1d0] sm:$0xff]
      %v240 = vld [vmem:[%s180 + $0x1d8] sm:$0xff]
      %v241 = vld [vmem:[%s180 + $0x1e0] sm:$0xff]
      %v242 = vld [vmem:[%s180 + $0x1e8] sm:$0xff]
      %v243 = vld [vmem:[%s180 + $0x1f0] sm:$0xff]
      %v244 = vld [vmem:[%s180 + $0x1f8] sm:$0xff]
      %v245 = vld [vmem:[%s1] sm:$0xff]
      %v246 = vld [vmem:[%s1 + $0x8] sm:$0xff]
      %v247 = vld [vmem:[%s1 + $0x10] sm:$0xff]
      %v248 = vld [vmem:[%s1 + $0x18] sm:$0xff]
      %v249 = vld [vmem:[%s1 + $0x20] sm:$0xff]
      %v250 = vld [vmem:[%s1 + $0x28] sm:$0xff]
      %s251 = sadd.s32 %s179, 40
      %s252 = scalar_lea.vmem %s0, %s251
      %v253 = vld [vmem:[%s252] sm:$0xff]
      %v254 = vld [vmem:[%s252 + $0x8] sm:$0xff]
      %v255 = vld [vmem:[%s252 + $0x10] sm:$0xff]
      %v256 = vld [vmem:[%s252 + $0x18] sm:$0xff]
      %v257 = vld [vmem:[%s252 + $0x20] sm:$0xff]
      %v258 = vld [vmem:[%s252 + $0x28] sm:$0xff]
      %v259 = vld [vmem:[%s252 + $0x30] sm:$0xff]
      %v260 = vld [vmem:[%s252 + $0x38] sm:$0xff]
      %v261 = vld [vmem:[%s252 + $0x40] sm:$0xff]
      %v262 = vld [vmem:[%s252 + $0x48] sm:$0xff]
      %v263 = vld [vmem:[%s252 + $0x50] sm:$0xff]
      %v264 = vld [vmem:[%s252 + $0x58] sm:$0xff]
      %v265 = vld [vmem:[%s252 + $0x60] sm:$0xff]
      %v266 = vld [vmem:[%s252 + $0x68] sm:$0xff]
      %v267 = vld [vmem:[%s252 + $0x70] sm:$0xff]
      %v268 = vld [vmem:[%s252 + $0x78] sm:$0xff]
      %v269 = vld [vmem:[%s252 + $0x80] sm:$0xff]
      %v270 = vld [vmem:[%s252 + $0x88] sm:$0xff]
      %v271 = vld [vmem:[%s252 + $0x90] sm:$0xff]
      %v272 = vld [vmem:[%s252 + $0x98] sm:$0xff]
      %v273 = vld [vmem:[%s252 + $0xa0] sm:$0xff]
      %v274 = vld [vmem:[%s252 + $0xa8] sm:$0xff]
      %v275 = vld [vmem:[%s252 + $0xb0] sm:$0xff]
      %v276 = vld [vmem:[%s252 + $0xb8] sm:$0xff]
      %v277 = vld [vmem:[%s252 + $0xc0] sm:$0xff]
      %v278 = vld [vmem:[%s252 + $0xc8] sm:$0xff]
      %v279 = vld [vmem:[%s252 + $0xd0] sm:$0xff]
      %v280 = vld [vmem:[%s252 + $0xd8] sm:$0xff]
      %v281 = vld [vmem:[%s252 + $0xe0] sm:$0xff]
      %v282 = vld [vmem:[%s252 + $0xe8] sm:$0xff]
      %v283 = vld [vmem:[%s252 + $0xf0] sm:$0xff]
      %v284 = vld [vmem:[%s252 + $0xf8] sm:$0xff]
      %v285 = vld [vmem:[%s252 + $0x100] sm:$0xff]
      %v286 = vld [vmem:[%s252 + $0x108] sm:$0xff]
      %v287 = vld [vmem:[%s252 + $0x110] sm:$0xff]
      %v288 = vld [vmem:[%s252 + $0x118] sm:$0xff]
      %v289 = vld [vmem:[%s252 + $0x120] sm:$0xff]
      %v290 = vld [vmem:[%s252 + $0x128] sm:$0xff]
      %v291 = vld [vmem:[%s252 + $0x130] sm:$0xff]
      %v292 = vld [vmem:[%s252 + $0x138] sm:$0xff]
      %v293 = vld [vmem:[%s252 + $0x140] sm:$0xff]
      %v294 = vld [vmem:[%s252 + $0x148] sm:$0xff]
      %v295 = vld [vmem:[%s252 + $0x150] sm:$0xff]
      %v296 = vld [vmem:[%s252 + $0x158] sm:$0xff]
      %v297 = vld [vmem:[%s252 + $0x160] sm:$0xff]
      %v298 = vld [vmem:[%s252 + $0x168] sm:$0xff]
      %v299 = vld [vmem:[%s252 + $0x170] sm:$0xff]
      %v300 = vld [vmem:[%s252 + $0x178] sm:$0xff]
      %v301 = vld [vmem:[%s252 + $0x180] sm:$0xff]
      %v302 = vld [vmem:[%s252 + $0x188] sm:$0xff]
      %v303 = vld [vmem:[%s252 + $0x190] sm:$0xff]
      %v304 = vld [vmem:[%s252 + $0x198] sm:$0xff]
      %v305 = vld [vmem:[%s252 + $0x1a0] sm:$0xff]
      %v306 = vld [vmem:[%s252 + $0x1a8] sm:$0xff]
      %v307 = vld [vmem:[%s252 + $0x1b0] sm:$0xff]
      %v308 = vld [vmem:[%s252 + $0x1b8] sm:$0xff]
      %v309 = vld [vmem:[%s252 + $0x1c0] sm:$0xff]
      %v310 = vld [vmem:[%s252 + $0x1c8] sm:$0xff]
      %v311 = vld [vmem:[%s252 + $0x1d0] sm:$0xff]
      %v312 = vld [vmem:[%s252 + $0x1d8] sm:$0xff]
      %v313 = vld [vmem:[%s252 + $0x1e0] sm:$0xff]
      %v314 = vld [vmem:[%s252 + $0x1e8] sm:$0xff]
      %v315 = vld [vmem:[%s252 + $0x1f0] sm:$0xff]
      %v316 = vld [vmem:[%s252 + $0x1f8] sm:$0xff]
      %s317 = scalar_lea.vmem %s1, 48
      %v318 = vld [vmem:[%s317] sm:$0xff]
      %v319 = vld [vmem:[%s317 + $0x8] sm:$0xff]
      %v320 = vld [vmem:[%s317 + $0x10] sm:$0xff]
      %v321 = vld [vmem:[%s317 + $0x18] sm:$0xff]
      %v322 = vld [vmem:[%s317 + $0x20] sm:$0xff]
      %v323 = vld [vmem:[%s317 + $0x28] sm:$0xff]
      %vm324 = vcmask 392192
      %v326 = vsel %vm324, %v253, 0
      %v329 = vsel %vm324, %v254, 0
      %v332 = vsel %vm324, %v255, 0
      %v335 = vsel %vm324, %v256, 0
      %v338 = vsel %vm324, %v257, 0
      %v341 = vsel %vm324, %v258, 0
      %v344 = vsel %vm324, %v259, 0
      %v347 = vsel %vm324, %v260, 0
      %v350 = vsel %vm324, %v261, 0
      %v353 = vsel %vm324, %v262, 0
      %v356 = vsel %vm324, %v263, 0
      %v359 = vsel %vm324, %v264, 0
      %v362 = vsel %vm324, %v265, 0
      %v365 = vsel %vm324, %v266, 0
      %v368 = vsel %vm324, %v267, 0
      %v371 = vsel %vm324, %v268, 0
      %v374 = vsel %vm324, %v269, 0
      %v377 = vsel %vm324, %v270, 0
      %v380 = vsel %vm324, %v271, 0
      %v383 = vsel %vm324, %v272, 0
      %v386 = vsel %vm324, %v273, 0
      %v389 = vsel %vm324, %v274, 0
      %v392 = vsel %vm324, %v275, 0
      %v395 = vsel %vm324, %v276, 0
      %v398 = vsel %vm324, %v277, 0
      %v401 = vsel %vm324, %v278, 0
      %v404 = vsel %vm324, %v279, 0
      %v407 = vsel %vm324, %v280, 0
      %v410 = vsel %vm324, %v281, 0
      %v413 = vsel %vm324, %v282, 0
      %v416 = vsel %vm324, %v283, 0
      %v419 = vsel %vm324, %v284, 0
      %v422 = vsel %vm324, %v285, 0
      %v425 = vsel %vm324, %v286, 0
      %v428 = vsel %vm324, %v287, 0
      %v431 = vsel %vm324, %v288, 0
      %v434 = vsel %vm324, %v289, 0
      %v437 = vsel %vm324, %v290, 0
      %v440 = vsel %vm324, %v291, 0
      %v443 = vsel %vm324, %v292, 0
      %v446 = vsel %vm324, %v293, 0
      %v449 = vsel %vm324, %v294, 0
      %v452 = vsel %vm324, %v295, 0
      %v455 = vsel %vm324, %v296, 0
      %v458 = vsel %vm324, %v297, 0
      %v461 = vsel %vm324, %v298, 0
      %v464 = vsel %vm324, %v299, 0
      %v467 = vsel %vm324, %v300, 0
      %v470 = vsel %vm324, %v301, 0
      %v473 = vsel %vm324, %v302, 0
      %v476 = vsel %vm324, %v303, 0
      %v479 = vsel %vm324, %v304, 0
      %v482 = vsel %vm324, %v305, 0
      %v485 = vsel %vm324, %v306, 0
      %v488 = vsel %vm324, %v307, 0
      %v491 = vsel %vm324, %v308, 0
      %v494 = vsel %vm324, %v309, 0
      %v497 = vsel %vm324, %v310, 0
      %v500 = vsel %vm324, %v311, 0
      %v503 = vsel %vm324, %v312, 0
      %v506 = vsel %vm324, %v313, 0
      %v509 = vsel %vm324, %v314, 0
      %v512 = vsel %vm324, %v315, 0
      %v515 = vsel %vm324, %v316, 0
      %517 = vmatprep.subr.mxu0 0.0
      %518 = vmatpush1.msra.mxu0 0.0
      %519 = vmatprep.subr.mxu0 0.0
      %520 = vmatpush1.msra.mxu0 0.0
      %521 = vmatprep.subr.mxu0 0.0
      %522 = vmatpush1.msra.mxu0 0.0
      %523 = vmatprep.subr.mxu0 0.0
      %524 = vmatpush1.msra.mxu0 0.0
      %525 = vmatprep.subr.mxu0 0.0
      %526 = vmatpush1.msra.mxu0 0.0
      %527 = vmatprep.subr.mxu0 0.0
      %528 = vmatpush1.msra.mxu0 0.0
      %529 = vmatprep.subr.mxu0 0.0
      %530 = vmatpush1.msra.mxu0 0.0
      %531 = vmatprep.subr.mxu0 0.0
      %532 = vmatpush1.msra.mxu0 0.0
      %533 = vmatprep.subr.mxu0 0.0
      %534 = vmatpush1.msra.mxu0 0.0
      %535 = vmatprep.subr.mxu0 0.0
      %536 = vmatpush1.msra.mxu0 0.0
      %537 = vmatprep.subr.mxu0 0.0
      %538 = vmatpush1.msra.mxu0 %v323
      %539 = vmatprep.subr.mxu0 0.0
      %540 = vmatpush1.msra.mxu0 %v322
      %541 = vmatprep.subr.mxu0 0.0
      %542 = vmatpush1.msra.mxu0 %v321
      %543 = vmatprep.subr.mxu0 0.0
      %544 = vmatpush1.msra.mxu0 %v320
      %545 = vmatprep.subr.mxu0 0.0
      %546 = vmatpush1.msra.mxu0 %v319
      %547 = vmatprep.subr.mxu0 0.0
      %548 = vmatpush1.msra.mxu0 %v318
      %549 = vmatprep.subr.mxu0 0.0
      %550 = vmatpush2.msra.mxu0 0.0
      %551 = vmatprep.subr.mxu0 0.0
      %552 = vmatpush2.msra.mxu0 0.0
      %553 = vmatprep.subr.mxu0 0.0
      %554 = vmatpush2.msra.mxu0 0.0
      %555 = vmatprep.subr.mxu0 0.0
      %556 = vmatpush2.msra.mxu0 0.0
      %557 = vmatprep.subr.mxu0 0.0
      %558 = vmatpush2.msra.mxu0 0.0
      %559 = vmatprep.subr.mxu0 0.0
      %560 = vmatpush2.msra.mxu0 0.0
      %561 = vmatprep.subr.mxu0 0.0
      %562 = vmatpush2.msra.mxu0 0.0
      %563 = vmatprep.subr.mxu0 0.0
      %564 = vmatpush2.msra.mxu0 0.0
      %565 = vmatprep.subr.mxu0 0.0
      %566 = vmatpush2.msra.mxu0 0.0
      %567 = vmatprep.subr.mxu0 0.0
      %568 = vmatpush2.msra.mxu0 0.0
      %569 = vmatprep.subr.mxu0 0.0
      %570 = vmatpush2.msra.mxu0 0.0
      %571 = vmatprep.subr.mxu0 0.0
      %572 = vmatpush2.msra.mxu0 0.0
      %573 = vmatprep.subr.mxu0 0.0
      %574 = vmatpush2.msra.mxu0 0.0
      %575 = vmatprep.subr.mxu0 0.0
      %576 = vmatpush2.msra.mxu0 0.0
      %577 = vmatprep.subr.mxu0 0.0
      %578 = vmatpush2.msra.mxu0 0.0
      %579 = vmatprep.subr.mxu0 0.0
      %580 = vmatpush2.msra.mxu0 0.0
      %581 = vmatprep.mubr.f32.mxu0 0.0
      %582 = vmatmul.mubr.f32.gmra.mxu0 %v326
      %v583 = vpop.f32.mrf.mxu0
      %v584 = vadd.f32 0.0, %v583
      %v585 = vpop.f32.mrf.mxu0
      %586 = vmatprep.mubr.f32.mxu0 0.0
      %587 = vmatmul.mubr.f32.gmra.mxu0 %v329
      %v588 = vpop.f32.mrf.mxu0
      %v589 = vadd.f32 0.0, %v588
      %v590 = vpop.f32.mrf.mxu0
      %591 = vmatprep.mubr.f32.mxu0 0.0
      %592 = vmatmul.mubr.f32.gmra.mxu0 %v332
      %v593 = vpop.f32.mrf.mxu0
      %v594 = vadd.f32 0.0, %v593
      %v595 = vpop.f32.mrf.mxu0
      %596 = vmatprep.mubr.f32.mxu0 0.0
      %597 = vmatmul.mubr.f32.gmra.mxu0 %v335
      %v598 = vpop.f32.mrf.mxu0
      %v599 = vadd.f32 0.0, %v598
      %v600 = vpop.f32.mrf.mxu0
      %601 = vmatprep.mubr.f32.mxu0 0.0
      %602 = vmatmul.mubr.f32.gmra.mxu0 %v338
      %v603 = vpop.f32.mrf.mxu0
      %v604 = vadd.f32 0.0, %v603
      %v605 = vpop.f32.mrf.mxu0
      %606 = vmatprep.mubr.f32.mxu0 0.0
      %607 = vmatmul.mubr.f32.gmra.mxu0 %v341
      %v608 = vpop.f32.mrf.mxu0
      %v609 = vadd.f32 0.0, %v608
      %v610 = vpop.f32.mrf.mxu0
      %611 = vmatprep.mubr.f32.mxu0 0.0
      %612 = vmatmul.mubr.f32.gmra.mxu0 %v344
      %v613 = vpop.f32.mrf.mxu0
      %v614 = vadd.f32 0.0, %v613
      %v615 = vpop.f32.mrf.mxu0
      %616 = vmatprep.mubr.f32.mxu0 0.0
      %617 = vmatmul.mubr.f32.gmra.mxu0 %v347
      %v618 = vpop.f32.mrf.mxu0
      %v619 = vadd.f32 0.0, %v618
      %v620 = vpop.f32.mrf.mxu0
      %621 = vmatprep.mubr.f32.mxu0 0.0
      %622 = vmatmul.mubr.f32.gmra.mxu0 %v350
      %v623 = vpop.f32.mrf.mxu0
      %v624 = vadd.f32 0.0, %v623
      %v625 = vpop.f32.mrf.mxu0
      %626 = vmatprep.mubr.f32.mxu0 0.0
      %627 = vmatmul.mubr.f32.gmra.mxu0 %v353
      %v628 = vpop.f32.mrf.mxu0
      %v629 = vadd.f32 0.0, %v628
      %v630 = vpop.f32.mrf.mxu0
      %631 = vmatprep.mubr.f32.mxu0 0.0
      %632 = vmatmul.mubr.f32.gmra.mxu0 %v356
      %v633 = vpop.f32.mrf.mxu0
      %v634 = vadd.f32 0.0, %v633
      %v635 = vpop.f32.mrf.mxu0
      %636 = vmatprep.mubr.f32.mxu0 0.0
      %637 = vmatmul.mubr.f32.gmra.mxu0 %v359
      %v638 = vpop.f32.mrf.mxu0
      %v639 = vadd.f32 0.0, %v638
      %v640 = vpop.f32.mrf.mxu0
      %641 = vmatprep.mubr.f32.mxu0 0.0
      %642 = vmatmul.mubr.f32.gmra.mxu0 %v362
      %v643 = vpop.f32.mrf.mxu0
      %v644 = vadd.f32 0.0, %v643
      %v645 = vpop.f32.mrf.mxu0
      %646 = vmatprep.mubr.f32.mxu0 0.0
      %647 = vmatmul.mubr.f32.gmra.mxu0 %v365
      %v648 = vpop.f32.mrf.mxu0
      %v649 = vadd.f32 0.0, %v648
      %v650 = vpop.f32.mrf.mxu0
      %651 = vmatprep.mubr.f32.mxu0 0.0
      %652 = vmatmul.mubr.f32.gmra.mxu0 %v368
      %v653 = vpop.f32.mrf.mxu0
      %v654 = vadd.f32 0.0, %v653
      %v655 = vpop.f32.mrf.mxu0
      %656 = vmatprep.mubr.f32.mxu0 0.0
      %657 = vmatmul.mubr.f32.gmra.mxu0 %v371
      %v658 = vpop.f32.mrf.mxu0
      %v659 = vadd.f32 0.0, %v658
      %v660 = vpop.f32.mrf.mxu0
      %661 = vmatprep.mubr.f32.mxu0 0.0
      %662 = vmatmul.mubr.f32.gmra.mxu0 %v374
      %v663 = vpop.f32.mrf.mxu0
      %v664 = vadd.f32 0.0, %v663
      %v665 = vpop.f32.mrf.mxu0
      %666 = vmatprep.mubr.f32.mxu0 0.0
      %667 = vmatmul.mubr.f32.gmra.mxu0 %v377
      %v668 = vpop.f32.mrf.mxu0
      %v669 = vadd.f32 0.0, %v668
      %v670 = vpop.f32.mrf.mxu0
      %671 = vmatprep.mubr.f32.mxu0 0.0
      %672 = vmatmul.mubr.f32.gmra.mxu0 %v380
      %v673 = vpop.f32.mrf.mxu0
      %v674 = vadd.f32 0.0, %v673
      %v675 = vpop.f32.mrf.mxu0
      %676 = vmatprep.mubr.f32.mxu0 0.0
      %677 = vmatmul.mubr.f32.gmra.mxu0 %v383
      %v678 = vpop.f32.mrf.mxu0
      %v679 = vadd.f32 0.0, %v678
      %v680 = vpop.f32.mrf.mxu0
      %681 = vmatprep.mubr.f32.mxu0 0.0
      %682 = vmatmul.mubr.f32.gmra.mxu0 %v386
      %v683 = vpop.f32.mrf.mxu0
      %v684 = vadd.f32 0.0, %v683
      %v685 = vpop.f32.mrf.mxu0
      %686 = vmatprep.mubr.f32.mxu0 0.0
      %687 = vmatmul.mubr.f32.gmra.mxu0 %v389
      %v688 = vpop.f32.mrf.mxu0
      %v689 = vadd.f32 0.0, %v688
      %v690 = vpop.f32.mrf.mxu0
      %691 = vmatprep.mubr.f32.mxu0 0.0
      %692 = vmatmul.mubr.f32.gmra.mxu0 %v392
      %v693 = vpop.f32.mrf.mxu0
      %v694 = vadd.f32 0.0, %v693
      %v695 = vpop.f32.mrf.mxu0
      %696 = vmatprep.mubr.f32.mxu0 0.0
      %697 = vmatmul.mubr.f32.gmra.mxu0 %v395
      %v698 = vpop.f32.mrf.mxu0
      %v699 = vadd.f32 0.0, %v698
      %v700 = vpop.f32.mrf.mxu0
      %701 = vmatprep.mubr.f32.mxu0 0.0
      %702 = vmatmul.mubr.f32.gmra.mxu0 %v398
      %v703 = vpop.f32.mrf.mxu0
      %v704 = vadd.f32 0.0, %v703
      %v705 = vpop.f32.mrf.mxu0
      %706 = vmatprep.mubr.f32.mxu0 0.0
      %707 = vmatmul.mubr.f32.gmra.mxu0 %v401
      %v708 = vpop.f32.mrf.mxu0
      %v709 = vadd.f32 0.0, %v708
      %v710 = vpop.f32.mrf.mxu0
      %711 = vmatprep.mubr.f32.mxu0 0.0
      %712 = vmatmul.mubr.f32.gmra.mxu0 %v404
      %v713 = vpop.f32.mrf.mxu0
      %v714 = vadd.f32 0.0, %v713
      %v715 = vpop.f32.mrf.mxu0
      %716 = vmatprep.mubr.f32.mxu0 0.0
      %717 = vmatmul.mubr.f32.gmra.mxu0 %v407
      %v718 = vpop.f32.mrf.mxu0
      %v719 = vadd.f32 0.0, %v718
      %v720 = vpop.f32.mrf.mxu0
      %721 = vmatprep.mubr.f32.mxu0 0.0
      %722 = vmatmul.mubr.f32.gmra.mxu0 %v410
      %v723 = vpop.f32.mrf.mxu0
      %v724 = vadd.f32 0.0, %v723
      %v725 = vpop.f32.mrf.mxu0
      %726 = vmatprep.mubr.f32.mxu0 0.0
      %727 = vmatmul.mubr.f32.gmra.mxu0 %v413
      %v728 = vpop.f32.mrf.mxu0
      %v729 = vadd.f32 0.0, %v728
      %v730 = vpop.f32.mrf.mxu0
      %731 = vmatprep.mubr.f32.mxu0 0.0
      %732 = vmatmul.mubr.f32.gmra.mxu0 %v416
      %v733 = vpop.f32.mrf.mxu0
      %v734 = vadd.f32 0.0, %v733
      %v735 = vpop.f32.mrf.mxu0
      %736 = vmatprep.mubr.f32.mxu0 0.0
      %737 = vmatmul.mubr.f32.gmra.mxu0 %v419
      %v738 = vpop.f32.mrf.mxu0
      %v739 = vadd.f32 0.0, %v738
      %v740 = vpop.f32.mrf.mxu0
      %741 = vmatprep.mubr.f32.mxu0 0.0
      %742 = vmatmul.mubr.f32.gmra.mxu0 %v422
      %v743 = vpop.f32.mrf.mxu0
      %v744 = vadd.f32 0.0, %v743
      %v745 = vpop.f32.mrf.mxu0
      %746 = vmatprep.mubr.f32.mxu0 0.0
      %747 = vmatmul.mubr.f32.gmra.mxu0 %v425
      %v748 = vpop.f32.mrf.mxu0
      %v749 = vadd.f32 0.0, %v748
      %v750 = vpop.f32.mrf.mxu0
      %751 = vmatprep.mubr.f32.mxu0 0.0
      %752 = vmatmul.mubr.f32.gmra.mxu0 %v428
      %v753 = vpop.f32.mrf.mxu0
      %v754 = vadd.f32 0.0, %v753
      %v755 = vpop.f32.mrf.mxu0
      %756 = vmatprep.mubr.f32.mxu0 0.0
      %757 = vmatmul.mubr.f32.gmra.mxu0 %v431
      %v758 = vpop.f32.mrf.mxu0
      %v759 = vadd.f32 0.0, %v758
      %v760 = vpop.f32.mrf.mxu0
      %761 = vmatprep.mubr.f32.mxu0 0.0
      %762 = vmatmul.mubr.f32.gmra.mxu0 %v434
      %v763 = vpop.f32.mrf.mxu0
      %v764 = vadd.f32 0.0, %v763
      %v765 = vpop.f32.mrf.mxu0
      %766 = vmatprep.mubr.f32.mxu0 0.0
      %767 = vmatmul.mubr.f32.gmra.mxu0 %v437
      %v768 = vpop.f32.mrf.mxu0
      %v769 = vadd.f32 0.0, %v768
      %v770 = vpop.f32.mrf.mxu0
      %771 = vmatprep.mubr.f32.mxu0 0.0
      %772 = vmatmul.mubr.f32.gmra.mxu0 %v440
      %v773 = vpop.f32.mrf.mxu0
      %v774 = vadd.f32 0.0, %v773
      %v775 = vpop.f32.mrf.mxu0
      %776 = vmatprep.mubr.f32.mxu0 0.0
      %777 = vmatmul.mubr.f32.gmra.mxu0 %v443
      %v778 = vpop.f32.mrf.mxu0
      %v779 = vadd.f32 0.0, %v778
      %v780 = vpop.f32.mrf.mxu0
      %781 = vmatprep.mubr.f32.mxu0 0.0
      %782 = vmatmul.mubr.f32.gmra.mxu0 %v446
      %v783 = vpop.f32.mrf.mxu0
      %v784 = vadd.f32 0.0, %v783
      %v785 = vpop.f32.mrf.mxu0
      %786 = vmatprep.mubr.f32.mxu0 0.0
      %787 = vmatmul.mubr.f32.gmra.mxu0 %v449
      %v788 = vpop.f32.mrf.mxu0
      %v789 = vadd.f32 0.0, %v788
      %v790 = vpop.f32.mrf.mxu0
      %791 = vmatprep.mubr.f32.mxu0 0.0
      %792 = vmatmul.mubr.f32.gmra.mxu0 %v452
      %v793 = vpop.f32.mrf.mxu0
      %v794 = vadd.f32 0.0, %v793
      %v795 = vpop.f32.mrf.mxu0
      %796 = vmatprep.mubr.f32.mxu0 0.0
      %797 = vmatmul.mubr.f32.gmra.mxu0 %v455
      %v798 = vpop.f32.mrf.mxu0
      %v799 = vadd.f32 0.0, %v798
      %v800 = vpop.f32.mrf.mxu0
      %801 = vmatprep.mubr.f32.mxu0 0.0
      %802 = vmatmul.mubr.f32.gmra.mxu0 %v458
      %v803 = vpop.f32.mrf.mxu0
      %v804 = vadd.f32 0.0, %v803
      %v805 = vpop.f32.mrf.mxu0
      %806 = vmatprep.mubr.f32.mxu0 0.0
      %807 = vmatmul.mubr.f32.gmra.mxu0 %v461
      %v808 = vpop.f32.mrf.mxu0
      %v809 = vadd.f32 0.0, %v808
      %v810 = vpop.f32.mrf.mxu0
      %811 = vmatprep.mubr.f32.mxu0 0.0
      %812 = vmatmul.mubr.f32.gmra.mxu0 %v464
      %v813 = vpop.f32.mrf.mxu0
      %v814 = vadd.f32 0.0, %v813
      %v815 = vpop.f32.mrf.mxu0
      %816 = vmatprep.mubr.f32.mxu0 0.0
      %817 = vmatmul.mubr.f32.gmra.mxu0 %v467
      %v818 = vpop.f32.mrf.mxu0
      %v819 = vadd.f32 0.0, %v818
      %v820 = vpop.f32.mrf.mxu0
      %821 = vmatprep.mubr.f32.mxu0 0.0
      %822 = vmatmul.mubr.f32.gmra.mxu0 %v470
      %v823 = vpop.f32.mrf.mxu0
      %v824 = vadd.f32 0.0, %v823
      %v825 = vpop.f32.mrf.mxu0
      %826 = vmatprep.mubr.f32.mxu0 0.0
      %827 = vmatmul.mubr.f32.gmra.mxu0 %v473
      %v828 = vpop.f32.mrf.mxu0
      %v829 = vadd.f32 0.0, %v828
      %v830 = vpop.f32.mrf.mxu0
      %831 = vmatprep.mubr.f32.mxu0 0.0
      %832 = vmatmul.mubr.f32.gmra.mxu0 %v476
      %v833 = vpop.f32.mrf.mxu0
      %v834 = vadd.f32 0.0, %v833
      %v835 = vpop.f32.mrf.mxu0
      %836 = vmatprep.mubr.f32.mxu0 0.0
      %837 = vmatmul.mubr.f32.gmra.mxu0 %v479
      %v838 = vpop.f32.mrf.mxu0
      %v839 = vadd.f32 0.0, %v838
      %v840 = vpop.f32.mrf.mxu0
      %841 = vmatprep.mubr.f32.mxu0 0.0
      %842 = vmatmul.mubr.f32.gmra.mxu0 %v482
      %v843 = vpop.f32.mrf.mxu0
      %v844 = vadd.f32 0.0, %v843
      %v845 = vpop.f32.mrf.mxu0
      %846 = vmatprep.mubr.f32.mxu0 0.0
      %847 = vmatmul.mubr.f32.gmra.mxu0 %v485
      %v848 = vpop.f32.mrf.mxu0
      %v849 = vadd.f32 0.0, %v848
      %v850 = vpop.f32.mrf.mxu0
      %851 = vmatprep.mubr.f32.mxu0 0.0
      %852 = vmatmul.mubr.f32.gmra.mxu0 %v488
      %v853 = vpop.f32.mrf.mxu0
      %v854 = vadd.f32 0.0, %v853
      %v855 = vpop.f32.mrf.mxu0
      %856 = vmatprep.mubr.f32.mxu0 0.0
      %857 = vmatmul.mubr.f32.gmra.mxu0 %v491
      %v858 = vpop.f32.mrf.mxu0
      %v859 = vadd.f32 0.0, %v858
      %v860 = vpop.f32.mrf.mxu0
      %861 = vmatprep.mubr.f32.mxu0 0.0
      %862 = vmatmul.mubr.f32.gmra.mxu0 %v494
      %v863 = vpop.f32.mrf.mxu0
      %v864 = vadd.f32 0.0, %v863
      %v865 = vpop.f32.mrf.mxu0
      %866 = vmatprep.mubr.f32.mxu0 0.0
      %867 = vmatmul.mubr.f32.gmra.mxu0 %v497
      %v868 = vpop.f32.mrf.mxu0
      %v869 = vadd.f32 0.0, %v868
      %v870 = vpop.f32.mrf.mxu0
      %871 = vmatprep.mubr.f32.mxu0 0.0
      %872 = vmatmul.mubr.f32.gmra.mxu0 %v500
      %v873 = vpop.f32.mrf.mxu0
      %v874 = vadd.f32 0.0, %v873
      %v875 = vpop.f32.mrf.mxu0
      %876 = vmatprep.mubr.f32.mxu0 0.0
      %877 = vmatmul.mubr.f32.gmra.mxu0 %v503
      %v878 = vpop.f32.mrf.mxu0
      %v879 = vadd.f32 0.0, %v878
      %v880 = vpop.f32.mrf.mxu0
      %881 = vmatprep.mubr.f32.mxu0 0.0
      %882 = vmatmul.mubr.f32.gmra.mxu0 %v506
      %v883 = vpop.f32.mrf.mxu0
      %v884 = vadd.f32 0.0, %v883
      %v885 = vpop.f32.mrf.mxu0
      %886 = vmatprep.mubr.f32.mxu0 0.0
      %887 = vmatmul.mubr.f32.gmra.mxu0 %v509
      %v888 = vpop.f32.mrf.mxu0
      %v889 = vadd.f32 0.0, %v888
      %v890 = vpop.f32.mrf.mxu0
      %891 = vmatprep.mubr.f32.mxu0 0.0
      %892 = vmatmul.mubr.f32.gmra.mxu0 %v512
      %v893 = vpop.f32.mrf.mxu0
      %v894 = vadd.f32 0.0, %v893
      %v895 = vpop.f32.mrf.mxu0
      %896 = vmatprep.mubr.f32.mxu0 0.0
      %897 = vmatmul.mubr.f32.gmra.mxu0 %v515
      %v898 = vpop.f32.mrf.mxu0
      %v899 = vadd.f32 0.0, %v898
      %v900 = vpop.f32.mrf.mxu0
      %901 = vdwg.mxu0
      %v903 = vsel %vm324, %v181, 0
      %v906 = vsel %vm324, %v182, 0
      %v909 = vsel %vm324, %v183, 0
      %v912 = vsel %vm324, %v184, 0
      %v915 = vsel %vm324, %v185, 0
      %v918 = vsel %vm324, %v186, 0
      %v921 = vsel %vm324, %v187, 0
      %v924 = vsel %vm324, %v188, 0
      %v927 = vsel %vm324, %v189, 0
      %v930 = vsel %vm324, %v190, 0
      %v933 = vsel %vm324, %v191, 0
      %v936 = vsel %vm324, %v192, 0
      %v939 = vsel %vm324, %v193, 0
      %v942 = vsel %vm324, %v194, 0
      %v945 = vsel %vm324, %v195, 0
      %v948 = vsel %vm324, %v196, 0
      %v951 = vsel %vm324, %v197, 0
      %v954 = vsel %vm324, %v198, 0
      %v957 = vsel %vm324, %v199, 0
      %v960 = vsel %vm324, %v200, 0
      %v963 = vsel %vm324, %v201, 0
      %v966 = vsel %vm324, %v202, 0
      %v969 = vsel %vm324, %v203, 0
      %v972 = vsel %vm324, %v204, 0
      %v975 = vsel %vm324, %v205, 0
      %v978 = vsel %vm324, %v206, 0
      %v981 = vsel %vm324, %v207, 0
      %v984 = vsel %vm324, %v208, 0
      %v987 = vsel %vm324, %v209, 0
      %v990 = vsel %vm324, %v210, 0
      %v993 = vsel %vm324, %v211, 0
      %v996 = vsel %vm324, %v212, 0
      %v999 = vsel %vm324, %v213, 0
      %v1002 = vsel %vm324, %v214, 0
      %v1005 = vsel %vm324, %v215, 0
      %v1008 = vsel %vm324, %v216, 0
      %v1011 = vsel %vm324, %v217, 0
      %v1014 = vsel %vm324, %v218, 0
      %v1017 = vsel %vm324, %v219, 0
      %v1020 = vsel %vm324, %v220, 0
      %v1023 = vsel %vm324, %v221, 0
      %v1026 = vsel %vm324, %v222, 0
      %v1029 = vsel %vm324, %v223, 0
      %v1032 = vsel %vm324, %v224, 0
      %v1035 = vsel %vm324, %v225, 0
      %v1038 = vsel %vm324, %v226, 0
      %v1041 = vsel %vm324, %v227, 0
      %v1044 = vsel %vm324, %v228, 0
      %v1047 = vsel %vm324, %v229, 0
      %v1050 = vsel %vm324, %v230, 0
      %v1053 = vsel %vm324, %v231, 0
      %v1056 = vsel %vm324, %v232, 0
      %v1059 = vsel %vm324, %v233, 0
      %v1062 = vsel %vm324, %v234, 0
      %v1065 = vsel %vm324, %v235, 0
      %v1068 = vsel %vm324, %v236, 0
      %v1071 = vsel %vm324, %v237, 0
      %v1074 = vsel %vm324, %v238, 0
      %v1077 = vsel %vm324, %v239, 0
      %v1080 = vsel %vm324, %v240, 0
      %v1083 = vsel %vm324, %v241, 0
      %v1086 = vsel %vm324, %v242, 0
      %v1089 = vsel %vm324, %v243, 0
      %v1092 = vsel %vm324, %v244, 0
      %1094 = vmatprep.subr.mxu0 0.0
      %1095 = vmatpush1.msra.mxu0 0.0
      %1096 = vmatprep.subr.mxu0 0.0
      %1097 = vmatpush1.msra.mxu0 0.0
      %1098 = vmatprep.subr.mxu0 0.0
      %1099 = vmatpush1.msra.mxu0 0.0
      %1100 = vmatprep.subr.mxu0 0.0
      %1101 = vmatpush1.msra.mxu0 0.0
      %1102 = vmatprep.subr.mxu0 0.0
      %1103 = vmatpush1.msra.mxu0 0.0
      %1104 = vmatprep.subr.mxu0 0.0
      %1105 = vmatpush1.msra.mxu0 0.0
      %1106 = vmatprep.subr.mxu0 0.0
      %1107 = vmatpush1.msra.mxu0 0.0
      %1108 = vmatprep.subr.mxu0 0.0
      %1109 = vmatpush1.msra.mxu0 0.0
      %1110 = vmatprep.subr.mxu0 0.0
      %1111 = vmatpush1.msra.mxu0 0.0
      %1112 = vmatprep.subr.mxu0 0.0
      %1113 = vmatpush1.msra.mxu0 0.0
      %1114 = vmatprep.subr.mxu0 0.0
      %1115 = vmatpush1.msra.mxu0 %v250
      %1116 = vmatprep.subr.mxu0 0.0
      %1117 = vmatpush1.msra.mxu0 %v249
      %1118 = vmatprep.subr.mxu0 0.0
      %1119 = vmatpush1.msra.mxu0 %v248
      %1120 = vmatprep.subr.mxu0 0.0
      %1121 = vmatpush1.msra.mxu0 %v247
      %1122 = vmatprep.subr.mxu0 0.0
      %1123 = vmatpush1.msra.mxu0 %v246
      %1124 = vmatprep.subr.mxu0 0.0
      %1125 = vmatpush1.msra.mxu0 %v245
      %1126 = vmatprep.subr.mxu0 0.0
      %1127 = vmatpush2.msra.mxu0 0.0
      %1128 = vmatprep.subr.mxu0 0.0
      %1129 = vmatpush2.msra.mxu0 0.0
      %1130 = vmatprep.subr.mxu0 0.0
      %1131 = vmatpush2.msra.mxu0 0.0
      %1132 = vmatprep.subr.mxu0 0.0
      %1133 = vmatpush2.msra.mxu0 0.0
      %1134 = vmatprep.subr.mxu0 0.0
      %1135 = vmatpush2.msra.mxu0 0.0
      %1136 = vmatprep.subr.mxu0 0.0
      %1137 = vmatpush2.msra.mxu0 0.0
      %1138 = vmatprep.subr.mxu0 0.0
      %1139 = vmatpush2.msra.mxu0 0.0
      %1140 = vmatprep.subr.mxu0 0.0
      %1141 = vmatpush2.msra.mxu0 0.0
      %1142 = vmatprep.subr.mxu0 0.0
      %1143 = vmatpush2.msra.mxu0 0.0
      %1144 = vmatprep.subr.mxu0 0.0
      %1145 = vmatpush2.msra.mxu0 0.0
      %1146 = vmatprep.subr.mxu0 0.0
      %1147 = vmatpush2.msra.mxu0 0.0
      %1148 = vmatprep.subr.mxu0 0.0
      %1149 = vmatpush2.msra.mxu0 0.0
      %1150 = vmatprep.subr.mxu0 0.0
      %1151 = vmatpush2.msra.mxu0 0.0
      %1152 = vmatprep.subr.mxu0 0.0
      %1153 = vmatpush2.msra.mxu0 0.0
      %1154 = vmatprep.subr.mxu0 0.0
      %1155 = vmatpush2.msra.mxu0 0.0
      %1156 = vmatprep.subr.mxu0 0.0
      %1157 = vmatpush2.msra.mxu0 0.0
      %1158 = vmatprep.mubr.f32.mxu0 0.0
      %1159 = vmatmul.mubr.f32.gmra.mxu0 %v903
      %v1160 = vpop.f32.mrf.mxu0
      %v1161 = vadd.f32 %v584, %v1160
      %v1162 = vpop.f32.mrf.mxu0
      %1163 = vmatprep.mubr.f32.mxu0 0.0
      %1164 = vmatmul.mubr.f32.gmra.mxu0 %v906
      %v1165 = vpop.f32.mrf.mxu0
      %v1166 = vadd.f32 %v589, %v1165
      %v1167 = vpop.f32.mrf.mxu0
      %1168 = vmatprep.mubr.f32.mxu0 0.0
      %1169 = vmatmul.mubr.f32.gmra.mxu0 %v909
      %v1170 = vpop.f32.mrf.mxu0
      %v1171 = vadd.f32 %v594, %v1170
      %v1172 = vpop.f32.mrf.mxu0
      %1173 = vmatprep.mubr.f32.mxu0 0.0
      %1174 = vmatmul.mubr.f32.gmra.mxu0 %v912
      %v1175 = vpop.f32.mrf.mxu0
      %v1176 = vadd.f32 %v599, %v1175
      %v1177 = vpop.f32.mrf.mxu0
      %1178 = vmatprep.mubr.f32.mxu0 0.0
      %1179 = vmatmul.mubr.f32.gmra.mxu0 %v915
      %v1180 = vpop.f32.mrf.mxu0
      %v1181 = vadd.f32 %v604, %v1180
      %v1182 = vpop.f32.mrf.mxu0
      %1183 = vmatprep.mubr.f32.mxu0 0.0
      %1184 = vmatmul.mubr.f32.gmra.mxu0 %v918
      %v1185 = vpop.f32.mrf.mxu0
      %v1186 = vadd.f32 %v609, %v1185
      %v1187 = vpop.f32.mrf.mxu0
      %1188 = vmatprep.mubr.f32.mxu0 0.0
      %1189 = vmatmul.mubr.f32.gmra.mxu0 %v921
      %v1190 = vpop.f32.mrf.mxu0
      %v1191 = vadd.f32 %v614, %v1190
      %v1192 = vpop.f32.mrf.mxu0
      %1193 = vmatprep.mubr.f32.mxu0 0.0
      %1194 = vmatmul.mubr.f32.gmra.mxu0 %v924
      %v1195 = vpop.f32.mrf.mxu0
      %v1196 = vadd.f32 %v619, %v1195
      %v1197 = vpop.f32.mrf.mxu0
      %1198 = vmatprep.mubr.f32.mxu0 0.0
      %1199 = vmatmul.mubr.f32.gmra.mxu0 %v927
      %v1200 = vpop.f32.mrf.mxu0
      %v1201 = vadd.f32 %v624, %v1200
      %v1202 = vpop.f32.mrf.mxu0
      %1203 = vmatprep.mubr.f32.mxu0 0.0
      %1204 = vmatmul.mubr.f32.gmra.mxu0 %v930
      %v1205 = vpop.f32.mrf.mxu0
      %v1206 = vadd.f32 %v629, %v1205
      %v1207 = vpop.f32.mrf.mxu0
      %1208 = vmatprep.mubr.f32.mxu0 0.0
      %1209 = vmatmul.mubr.f32.gmra.mxu0 %v933
      %v1210 = vpop.f32.mrf.mxu0
      %v1211 = vadd.f32 %v634, %v1210
      %v1212 = vpop.f32.mrf.mxu0
      %1213 = vmatprep.mubr.f32.mxu0 0.0
      %1214 = vmatmul.mubr.f32.gmra.mxu0 %v936
      %v1215 = vpop.f32.mrf.mxu0
      %v1216 = vadd.f32 %v639, %v1215
      %v1217 = vpop.f32.mrf.mxu0
      %1218 = vmatprep.mubr.f32.mxu0 0.0
      %1219 = vmatmul.mubr.f32.gmra.mxu0 %v939
      %v1220 = vpop.f32.mrf.mxu0
      %v1221 = vadd.f32 %v644, %v1220
      %v1222 = vpop.f32.mrf.mxu0
      %1223 = vmatprep.mubr.f32.mxu0 0.0
      %1224 = vmatmul.mubr.f32.gmra.mxu0 %v942
      %v1225 = vpop.f32.mrf.mxu0
      %v1226 = vadd.f32 %v649, %v1225
      %v1227 = vpop.f32.mrf.mxu0
      %1228 = vmatprep.mubr.f32.mxu0 0.0
      %1229 = vmatmul.mubr.f32.gmra.mxu0 %v945
      %v1230 = vpop.f32.mrf.mxu0
      %v1231 = vadd.f32 %v654, %v1230
      %v1232 = vpop.f32.mrf.mxu0
      %1233 = vmatprep.mubr.f32.mxu0 0.0
      %1234 = vmatmul.mubr.f32.gmra.mxu0 %v948
      %v1235 = vpop.f32.mrf.mxu0
      %v1236 = vadd.f32 %v659, %v1235
      %v1237 = vpop.f32.mrf.mxu0
      %1238 = vmatprep.mubr.f32.mxu0 0.0
      %1239 = vmatmul.mubr.f32.gmra.mxu0 %v951
      %v1240 = vpop.f32.mrf.mxu0
      %v1241 = vadd.f32 %v664, %v1240
      %v1242 = vpop.f32.mrf.mxu0
      %1243 = vmatprep.mubr.f32.mxu0 0.0
      %1244 = vmatmul.mubr.f32.gmra.mxu0 %v954
      %v1245 = vpop.f32.mrf.mxu0
      %v1246 = vadd.f32 %v669, %v1245
      %v1247 = vpop.f32.mrf.mxu0
      %1248 = vmatprep.mubr.f32.mxu0 0.0
      %1249 = vmatmul.mubr.f32.gmra.mxu0 %v957
      %v1250 = vpop.f32.mrf.mxu0
      %v1251 = vadd.f32 %v674, %v1250
      %v1252 = vpop.f32.mrf.mxu0
      %1253 = vmatprep.mubr.f32.mxu0 0.0
      %1254 = vmatmul.mubr.f32.gmra.mxu0 %v960
      %v1255 = vpop.f32.mrf.mxu0
      %v1256 = vadd.f32 %v679, %v1255
      %v1257 = vpop.f32.mrf.mxu0
      %1258 = vmatprep.mubr.f32.mxu0 0.0
      %1259 = vmatmul.mubr.f32.gmra.mxu0 %v963
      %v1260 = vpop.f32.mrf.mxu0
      %v1261 = vadd.f32 %v684, %v1260
      %v1262 = vpop.f32.mrf.mxu0
      %1263 = vmatprep.mubr.f32.mxu0 0.0
      %1264 = vmatmul.mubr.f32.gmra.mxu0 %v966
      %v1265 = vpop.f32.mrf.mxu0
      %v1266 = vadd.f32 %v689, %v1265
      %v1267 = vpop.f32.mrf.mxu0
      %1268 = vmatprep.mubr.f32.mxu0 0.0
      %1269 = vmatmul.mubr.f32.gmra.mxu0 %v969
      %v1270 = vpop.f32.mrf.mxu0
      %v1271 = vadd.f32 %v694, %v1270
      %v1272 = vpop.f32.mrf.mxu0
      %1273 = vmatprep.mubr.f32.mxu0 0.0
      %1274 = vmatmul.mubr.f32.gmra.mxu0 %v972
      %v1275 = vpop.f32.mrf.mxu0
      %v1276 = vadd.f32 %v699, %v1275
      %v1277 = vpop.f32.mrf.mxu0
      %1278 = vmatprep.mubr.f32.mxu0 0.0
      %1279 = vmatmul.mubr.f32.gmra.mxu0 %v975
      %v1280 = vpop.f32.mrf.mxu0
      %v1281 = vadd.f32 %v704, %v1280
      %v1282 = vpop.f32.mrf.mxu0
      %1283 = vmatprep.mubr.f32.mxu0 0.0
      %1284 = vmatmul.mubr.f32.gmra.mxu0 %v978
      %v1285 = vpop.f32.mrf.mxu0
      %v1286 = vadd.f32 %v709, %v1285
      %v1287 = vpop.f32.mrf.mxu0
      %1288 = vmatprep.mubr.f32.mxu0 0.0
      %1289 = vmatmul.mubr.f32.gmra.mxu0 %v981
      %v1290 = vpop.f32.mrf.mxu0
      %v1291 = vadd.f32 %v714, %v1290
      %v1292 = vpop.f32.mrf.mxu0
      %1293 = vmatprep.mubr.f32.mxu0 0.0
      %1294 = vmatmul.mubr.f32.gmra.mxu0 %v984
      %v1295 = vpop.f32.mrf.mxu0
      %v1296 = vadd.f32 %v719, %v1295
      %v1297 = vpop.f32.mrf.mxu0
      %1298 = vmatprep.mubr.f32.mxu0 0.0
      %1299 = vmatmul.mubr.f32.gmra.mxu0 %v987
      %v1300 = vpop.f32.mrf.mxu0
      %v1301 = vadd.f32 %v724, %v1300
      %v1302 = vpop.f32.mrf.mxu0
      %1303 = vmatprep.mubr.f32.mxu0 0.0
      %1304 = vmatmul.mubr.f32.gmra.mxu0 %v990
      %v1305 = vpop.f32.mrf.mxu0
      %v1306 = vadd.f32 %v729, %v1305
      %v1307 = vpop.f32.mrf.mxu0
      %1308 = vmatprep.mubr.f32.mxu0 0.0
      %1309 = vmatmul.mubr.f32.gmra.mxu0 %v993
      %v1310 = vpop.f32.mrf.mxu0
      %v1311 = vadd.f32 %v734, %v1310
      %v1312 = vpop.f32.mrf.mxu0
      %1313 = vmatprep.mubr.f32.mxu0 0.0
      %1314 = vmatmul.mubr.f32.gmra.mxu0 %v996
      %v1315 = vpop.f32.mrf.mxu0
      %v1316 = vadd.f32 %v739, %v1315
      %v1317 = vpop.f32.mrf.mxu0
      %1318 = vmatprep.mubr.f32.mxu0 0.0
      %1319 = vmatmul.mubr.f32.gmra.mxu0 %v999
      %v1320 = vpop.f32.mrf.mxu0
      %v1321 = vadd.f32 %v744, %v1320
      %v1322 = vpop.f32.mrf.mxu0
      %1323 = vmatprep.mubr.f32.mxu0 0.0
      %1324 = vmatmul.mubr.f32.gmra.mxu0 %v1002
      %v1325 = vpop.f32.mrf.mxu0
      %v1326 = vadd.f32 %v749, %v1325
      %v1327 = vpop.f32.mrf.mxu0
      %1328 = vmatprep.mubr.f32.mxu0 0.0
      %1329 = vmatmul.mubr.f32.gmra.mxu0 %v1005
      %v1330 = vpop.f32.mrf.mxu0
      %v1331 = vadd.f32 %v754, %v1330
      %v1332 = vpop.f32.mrf.mxu0
      %1333 = vmatprep.mubr.f32.mxu0 0.0
      %1334 = vmatmul.mubr.f32.gmra.mxu0 %v1008
      %v1335 = vpop.f32.mrf.mxu0
      %v1336 = vadd.f32 %v759, %v1335
      %v1337 = vpop.f32.mrf.mxu0
      %1338 = vmatprep.mubr.f32.mxu0 0.0
      %1339 = vmatmul.mubr.f32.gmra.mxu0 %v1011
      %v1340 = vpop.f32.mrf.mxu0
      %v1341 = vadd.f32 %v764, %v1340
      %v1342 = vpop.f32.mrf.mxu0
      %1343 = vmatprep.mubr.f32.mxu0 0.0
      %1344 = vmatmul.mubr.f32.gmra.mxu0 %v1014
      %v1345 = vpop.f32.mrf.mxu0
      %v1346 = vadd.f32 %v769, %v1345
      %v1347 = vpop.f32.mrf.mxu0
      %1348 = vmatprep.mubr.f32.mxu0 0.0
      %1349 = vmatmul.mubr.f32.gmra.mxu0 %v1017
      %v1350 = vpop.f32.mrf.mxu0
      %v1351 = vadd.f32 %v774, %v1350
      %v1352 = vpop.f32.mrf.mxu0
      %1353 = vmatprep.mubr.f32.mxu0 0.0
      %1354 = vmatmul.mubr.f32.gmra.mxu0 %v1020
      %v1355 = vpop.f32.mrf.mxu0
      %v1356 = vadd.f32 %v779, %v1355
      %v1357 = vpop.f32.mrf.mxu0
      %1358 = vmatprep.mubr.f32.mxu0 0.0
      %1359 = vmatmul.mubr.f32.gmra.mxu0 %v1023
      %v1360 = vpop.f32.mrf.mxu0
      %v1361 = vadd.f32 %v784, %v1360
      %v1362 = vpop.f32.mrf.mxu0
      %1363 = vmatprep.mubr.f32.mxu0 0.0
      %1364 = vmatmul.mubr.f32.gmra.mxu0 %v1026
      %v1365 = vpop.f32.mrf.mxu0
      %v1366 = vadd.f32 %v789, %v1365
      %v1367 = vpop.f32.mrf.mxu0
      %1368 = vmatprep.mubr.f32.mxu0 0.0
      %1369 = vmatmul.mubr.f32.gmra.mxu0 %v1029
      %v1370 = vpop.f32.mrf.mxu0
      %v1371 = vadd.f32 %v794, %v1370
      %v1372 = vpop.f32.mrf.mxu0
      %1373 = vmatprep.mubr.f32.mxu0 0.0
      %1374 = vmatmul.mubr.f32.gmra.mxu0 %v1032
      %v1375 = vpop.f32.mrf.mxu0
      %v1376 = vadd.f32 %v799, %v1375
      %v1377 = vpop.f32.mrf.mxu0
      %1378 = vmatprep.mubr.f32.mxu0 0.0
      %1379 = vmatmul.mubr.f32.gmra.mxu0 %v1035
      %v1380 = vpop.f32.mrf.mxu0
      %v1381 = vadd.f32 %v804, %v1380
      %v1382 = vpop.f32.mrf.mxu0
      %1383 = vmatprep.mubr.f32.mxu0 0.0
      %1384 = vmatmul.mubr.f32.gmra.mxu0 %v1038
      %v1385 = vpop.f32.mrf.mxu0
      %v1386 = vadd.f32 %v809, %v1385
      %v1387 = vpop.f32.mrf.mxu0
      %1388 = vmatprep.mubr.f32.mxu0 0.0
      %1389 = vmatmul.mubr.f32.gmra.mxu0 %v1041
      %v1390 = vpop.f32.mrf.mxu0
      %v1391 = vadd.f32 %v814, %v1390
      %v1392 = vpop.f32.mrf.mxu0
      %1393 = vmatprep.mubr.f32.mxu0 0.0
      %1394 = vmatmul.mubr.f32.gmra.mxu0 %v1044
      %v1395 = vpop.f32.mrf.mxu0
      %v1396 = vadd.f32 %v819, %v1395
      %v1397 = vpop.f32.mrf.mxu0
      %1398 = vmatprep.mubr.f32.mxu0 0.0
      %1399 = vmatmul.mubr.f32.gmra.mxu0 %v1047
      %v1400 = vpop.f32.mrf.mxu0
      %v1401 = vadd.f32 %v824, %v1400
      %v1402 = vpop.f32.mrf.mxu0
      %1403 = vmatprep.mubr.f32.mxu0 0.0
      %1404 = vmatmul.mubr.f32.gmra.mxu0 %v1050
      %v1405 = vpop.f32.mrf.mxu0
      %v1406 = vadd.f32 %v829, %v1405
      %v1407 = vpop.f32.mrf.mxu0
      %1408 = vmatprep.mubr.f32.mxu0 0.0
      %1409 = vmatmul.mubr.f32.gmra.mxu0 %v1053
      %v1410 = vpop.f32.mrf.mxu0
      %v1411 = vadd.f32 %v834, %v1410
      %v1412 = vpop.f32.mrf.mxu0
      %1413 = vmatprep.mubr.f32.mxu0 0.0
      %1414 = vmatmul.mubr.f32.gmra.mxu0 %v1056
      %v1415 = vpop.f32.mrf.mxu0
      %v1416 = vadd.f32 %v839, %v1415
      %v1417 = vpop.f32.mrf.mxu0
      %1418 = vmatprep.mubr.f32.mxu0 0.0
      %1419 = vmatmul.mubr.f32.gmra.mxu0 %v1059
      %v1420 = vpop.f32.mrf.mxu0
      %v1421 = vadd.f32 %v844, %v1420
      %v1422 = vpop.f32.mrf.mxu0
      %1423 = vmatprep.mubr.f32.mxu0 0.0
      %1424 = vmatmul.mubr.f32.gmra.mxu0 %v1062
      %v1425 = vpop.f32.mrf.mxu0
      %v1426 = vadd.f32 %v849, %v1425
      %v1427 = vpop.f32.mrf.mxu0
      %1428 = vmatprep.mubr.f32.mxu0 0.0
      %1429 = vmatmul.mubr.f32.gmra.mxu0 %v1065
      %v1430 = vpop.f32.mrf.mxu0
      %v1431 = vadd.f32 %v854, %v1430
      %v1432 = vpop.f32.mrf.mxu0
      %1433 = vmatprep.mubr.f32.mxu0 0.0
      %1434 = vmatmul.mubr.f32.gmra.mxu0 %v1068
      %v1435 = vpop.f32.mrf.mxu0
      %v1436 = vadd.f32 %v859, %v1435
      %v1437 = vpop.f32.mrf.mxu0
      %1438 = vmatprep.mubr.f32.mxu0 0.0
      %1439 = vmatmul.mubr.f32.gmra.mxu0 %v1071
      %v1440 = vpop.f32.mrf.mxu0
      %v1441 = vadd.f32 %v864, %v1440
      %v1442 = vpop.f32.mrf.mxu0
      %1443 = vmatprep.mubr.f32.mxu0 0.0
      %1444 = vmatmul.mubr.f32.gmra.mxu0 %v1074
      %v1445 = vpop.f32.mrf.mxu0
      %v1446 = vadd.f32 %v869, %v1445
      %v1447 = vpop.f32.mrf.mxu0
      %1448 = vmatprep.mubr.f32.mxu0 0.0
      %1449 = vmatmul.mubr.f32.gmra.mxu0 %v1077
      %v1450 = vpop.f32.mrf.mxu0
      %v1451 = vadd.f32 %v874, %v1450
      %v1452 = vpop.f32.mrf.mxu0
      %1453 = vmatprep.mubr.f32.mxu0 0.0
      %1454 = vmatmul.mubr.f32.gmra.mxu0 %v1080
      %v1455 = vpop.f32.mrf.mxu0
      %v1456 = vadd.f32 %v879, %v1455
      %v1457 = vpop.f32.mrf.mxu0
      %1458 = vmatprep.mubr.f32.mxu0 0.0
      %1459 = vmatmul.mubr.f32.gmra.mxu0 %v1083
      %v1460 = vpop.f32.mrf.mxu0
      %v1461 = vadd.f32 %v884, %v1460
      %v1462 = vpop.f32.mrf.mxu0
      %1463 = vmatprep.mubr.f32.mxu0 0.0
      %1464 = vmatmul.mubr.f32.gmra.mxu0 %v1086
      %v1465 = vpop.f32.mrf.mxu0
      %v1466 = vadd.f32 %v889, %v1465
      %v1467 = vpop.f32.mrf.mxu0
      %1468 = vmatprep.mubr.f32.mxu0 0.0
      %1469 = vmatmul.mubr.f32.gmra.mxu0 %v1089
      %v1470 = vpop.f32.mrf.mxu0
      %v1471 = vadd.f32 %v894, %v1470
      %v1472 = vpop.f32.mrf.mxu0
      %1473 = vmatprep.mubr.f32.mxu0 0.0
      %1474 = vmatmul.mubr.f32.gmra.mxu0 %v1092
      %v1475 = vpop.f32.mrf.mxu0
      %v1476 = vadd.f32 %v899, %v1475
      %v1477 = vpop.f32.mrf.mxu0
      %1478 = vdwg.mxu0
      %s1479 = sadd.s32 %s179, 80
      %s1480 = scalar_lea.vmem %s0, %s1479
      %v1481 = vld [vmem:[%s1480] sm:$0xff]
      %v1482 = vld [vmem:[%s1480 + $0x8] sm:$0xff]
      %v1483 = vld [vmem:[%s1480 + $0x10] sm:$0xff]
      %v1484 = vld [vmem:[%s1480 + $0x18] sm:$0xff]
      %v1485 = vld [vmem:[%s1480 + $0x20] sm:$0xff]
      %v1486 = vld [vmem:[%s1480 + $0x28] sm:$0xff]
      %v1487 = vld [vmem:[%s1480 + $0x30] sm:$0xff]
      %v1488 = vld [vmem:[%s1480 + $0x38] sm:$0xff]
      %v1489 = vld [vmem:[%s1480 + $0x40] sm:$0xff]
      %v1490 = vld [vmem:[%s1480 + $0x48] sm:$0xff]
      %v1491 = vld [vmem:[%s1480 + $0x50] sm:$0xff]
      %v1492 = vld [vmem:[%s1480 + $0x58] sm:$0xff]
      %v1493 = vld [vmem:[%s1480 + $0x60] sm:$0xff]
      %v1494 = vld [vmem:[%s1480 + $0x68] sm:$0xff]
      %v1495 = vld [vmem:[%s1480 + $0x70] sm:$0xff]
      %v1496 = vld [vmem:[%s1480 + $0x78] sm:$0xff]
      %v1497 = vld [vmem:[%s1480 + $0x80] sm:$0xff]
      %v1498 = vld [vmem:[%s1480 + $0x88] sm:$0xff]
      %v1499 = vld [vmem:[%s1480 + $0x90] sm:$0xff]
      %v1500 = vld [vmem:[%s1480 + $0x98] sm:$0xff]
      %v1501 = vld [vmem:[%s1480 + $0xa0] sm:$0xff]
      %v1502 = vld [vmem:[%s1480 + $0xa8] sm:$0xff]
      %v1503 = vld [vmem:[%s1480 + $0xb0] sm:$0xff]
      %v1504 = vld [vmem:[%s1480 + $0xb8] sm:$0xff]
      %v1505 = vld [vmem:[%s1480 + $0xc0] sm:$0xff]
      %v1506 = vld [vmem:[%s1480 + $0xc8] sm:$0xff]
      %v1507 = vld [vmem:[%s1480 + $0xd0] sm:$0xff]
      %v1508 = vld [vmem:[%s1480 + $0xd8] sm:$0xff]
      %v1509 = vld [vmem:[%s1480 + $0xe0] sm:$0xff]
      %v1510 = vld [vmem:[%s1480 + $0xe8] sm:$0xff]
      %v1511 = vld [vmem:[%s1480 + $0xf0] sm:$0xff]
      %v1512 = vld [vmem:[%s1480 + $0xf8] sm:$0xff]
      %v1513 = vld [vmem:[%s1480 + $0x100] sm:$0xff]
      %v1514 = vld [vmem:[%s1480 + $0x108] sm:$0xff]
      %v1515 = vld [vmem:[%s1480 + $0x110] sm:$0xff]
      %v1516 = vld [vmem:[%s1480 + $0x118] sm:$0xff]
      %v1517 = vld [vmem:[%s1480 + $0x120] sm:$0xff]
      %v1518 = vld [vmem:[%s1480 + $0x128] sm:$0xff]
      %v1519 = vld [vmem:[%s1480 + $0x130] sm:$0xff]
      %v1520 = vld [vmem:[%s1480 + $0x138] sm:$0xff]
      %v1521 = vld [vmem:[%s1480 + $0x140] sm:$0xff]
      %v1522 = vld [vmem:[%s1480 + $0x148] sm:$0xff]
      %v1523 = vld [vmem:[%s1480 + $0x150] sm:$0xff]
      %v1524 = vld [vmem:[%s1480 + $0x158] sm:$0xff]
      %v1525 = vld [vmem:[%s1480 + $0x160] sm:$0xff]
      %v1526 = vld [vmem:[%s1480 + $0x168] sm:$0xff]
      %v1527 = vld [vmem:[%s1480 + $0x170] sm:$0xff]
      %v1528 = vld [vmem:[%s1480 + $0x178] sm:$0xff]
      %v1529 = vld [vmem:[%s1480 + $0x180] sm:$0xff]
      %v1530 = vld [vmem:[%s1480 + $0x188] sm:$0xff]
      %v1531 = vld [vmem:[%s1480 + $0x190] sm:$0xff]
      %v1532 = vld [vmem:[%s1480 + $0x198] sm:$0xff]
      %v1533 = vld [vmem:[%s1480 + $0x1a0] sm:$0xff]
      %v1534 = vld [vmem:[%s1480 + $0x1a8] sm:$0xff]
      %v1535 = vld [vmem:[%s1480 + $0x1b0] sm:$0xff]
      %v1536 = vld [vmem:[%s1480 + $0x1b8] sm:$0xff]
      %v1537 = vld [vmem:[%s1480 + $0x1c0] sm:$0xff]
      %v1538 = vld [vmem:[%s1480 + $0x1c8] sm:$0xff]
      %v1539 = vld [vmem:[%s1480 + $0x1d0] sm:$0xff]
      %v1540 = vld [vmem:[%s1480 + $0x1d8] sm:$0xff]
      %v1541 = vld [vmem:[%s1480 + $0x1e0] sm:$0xff]
      %v1542 = vld [vmem:[%s1480 + $0x1e8] sm:$0xff]
      %v1543 = vld [vmem:[%s1480 + $0x1f0] sm:$0xff]
      %v1544 = vld [vmem:[%s1480 + $0x1f8] sm:$0xff]
      %s1545 = scalar_lea.vmem %s1, 96
      %v1546 = vld [vmem:[%s1545] sm:$0xff]
      %v1547 = vld [vmem:[%s1545 + $0x8] sm:$0xff]
      %v1548 = vld [vmem:[%s1545 + $0x10] sm:$0xff]
      %v1549 = vld [vmem:[%s1545 + $0x18] sm:$0xff]
      %v1550 = vld [vmem:[%s1545 + $0x20] sm:$0xff]
      %v1551 = vld [vmem:[%s1545 + $0x28] sm:$0xff]
      %v1553 = vsel %vm324, %v1481, 0
      %v1556 = vsel %vm324, %v1482, 0
      %v1559 = vsel %vm324, %v1483, 0
      %v1562 = vsel %vm324, %v1484, 0
      %v1565 = vsel %vm324, %v1485, 0
      %v1568 = vsel %vm324, %v1486, 0
      %v1571 = vsel %vm324, %v1487, 0
      %v1574 = vsel %vm324, %v1488, 0
      %v1577 = vsel %vm324, %v1489, 0
      %v1580 = vsel %vm324, %v1490, 0
      %v1583 = vsel %vm324, %v1491, 0
      %v1586 = vsel %vm324, %v1492, 0
      %v1589 = vsel %vm324, %v1493, 0
      %v1592 = vsel %vm324, %v1494, 0
      %v1595 = vsel %vm324, %v1495, 0
      %v1598 = vsel %vm324, %v1496, 0
      %v1601 = vsel %vm324, %v1497, 0
      %v1604 = vsel %vm324, %v1498, 0
      %v1607 = vsel %vm324, %v1499, 0
      %v1610 = vsel %vm324, %v1500, 0
      %v1613 = vsel %vm324, %v1501, 0
      %v1616 = vsel %vm324, %v1502, 0
      %v1619 = vsel %vm324, %v1503, 0
      %v1622 = vsel %vm324, %v1504, 0
      %v1625 = vsel %vm324, %v1505, 0
      %v1628 = vsel %vm324, %v1506, 0
      %v1631 = vsel %vm324, %v1507, 0
      %v1634 = vsel %vm324, %v1508, 0
      %v1637 = vsel %vm324, %v1509, 0
      %v1640 = vsel %vm324, %v1510, 0
      %v1643 = vsel %vm324, %v1511, 0
      %v1646 = vsel %vm324, %v1512, 0
      %v1649 = vsel %vm324, %v1513, 0
      %v1652 = vsel %vm324, %v1514, 0
      %v1655 = vsel %vm324, %v1515, 0
      %v1658 = vsel %vm324, %v1516, 0
      %v1661 = vsel %vm324, %v1517, 0
      %v1664 = vsel %vm324, %v1518, 0
      %v1667 = vsel %vm324, %v1519, 0
      %v1670 = vsel %vm324, %v1520, 0
      %v1673 = vsel %vm324, %v1521, 0
      %v1676 = vsel %vm324, %v1522, 0
      %v1679 = vsel %vm324, %v1523, 0
      %v1682 = vsel %vm324, %v1524, 0
      %v1685 = vsel %vm324, %v1525, 0
      %v1688 = vsel %vm324, %v1526, 0
      %v1691 = vsel %vm324, %v1527, 0
      %v1694 = vsel %vm324, %v1528, 0
      %v1697 = vsel %vm324, %v1529, 0
      %v1700 = vsel %vm324, %v1530, 0
      %v1703 = vsel %vm324, %v1531, 0
      %v1706 = vsel %vm324, %v1532, 0
      %v1709 = vsel %vm324, %v1533, 0
      %v1712 = vsel %vm324, %v1534, 0
      %v1715 = vsel %vm324, %v1535, 0
      %v1718 = vsel %vm324, %v1536, 0
      %v1721 = vsel %vm324, %v1537, 0
      %v1724 = vsel %vm324, %v1538, 0
      %v1727 = vsel %vm324, %v1539, 0
      %v1730 = vsel %vm324, %v1540, 0
      %v1733 = vsel %vm324, %v1541, 0
      %v1736 = vsel %vm324, %v1542, 0
      %v1739 = vsel %vm324, %v1543, 0
      %v1742 = vsel %vm324, %v1544, 0
      %1744 = vmatprep.subr.mxu0 0.0
      %1745 = vmatpush1.msra.mxu0 0.0
      %1746 = vmatprep.subr.mxu0 0.0
      %1747 = vmatpush1.msra.mxu0 0.0
      %1748 = vmatprep.subr.mxu0 0.0
      %1749 = vmatpush1.msra.mxu0 0.0
      %1750 = vmatprep.subr.mxu0 0.0
      %1751 = vmatpush1.msra.mxu0 0.0
      %1752 = vmatprep.subr.mxu0 0.0
      %1753 = vmatpush1.msra.mxu0 0.0
      %1754 = vmatprep.subr.mxu0 0.0
      %1755 = vmatpush1.msra.mxu0 0.0
      %1756 = vmatprep.subr.mxu0 0.0
      %1757 = vmatpush1.msra.mxu0 0.0
      %1758 = vmatprep.subr.mxu0 0.0
      %1759 = vmatpush1.msra.mxu0 0.0
      %1760 = vmatprep.subr.mxu0 0.0
      %1761 = vmatpush1.msra.mxu0 0.0
      %1762 = vmatprep.subr.mxu0 0.0
      %1763 = vmatpush1.msra.mxu0 0.0
      %1764 = vmatprep.subr.mxu0 0.0
      %1765 = vmatpush1.msra.mxu0 %v1551
      %1766 = vmatprep.subr.mxu0 0.0
      %1767 = vmatpush1.msra.mxu0 %v1550
      %1768 = vmatprep.subr.mxu0 0.0
      %1769 = vmatpush1.msra.mxu0 %v1549
      %1770 = vmatprep.subr.mxu0 0.0
      %1771 = vmatpush1.msra.mxu0 %v1548
      %1772 = vmatprep.subr.mxu0 0.0
      %1773 = vmatpush1.msra.mxu0 %v1547
      %1774 = vmatprep.subr.mxu0 0.0
      %1775 = vmatpush1.msra.mxu0 %v1546
      %1776 = vmatprep.subr.mxu0 0.0
      %1777 = vmatpush2.msra.mxu0 0.0
      %1778 = vmatprep.subr.mxu0 0.0
      %1779 = vmatpush2.msra.mxu0 0.0
      %1780 = vmatprep.subr.mxu0 0.0
      %1781 = vmatpush2.msra.mxu0 0.0
      %1782 = vmatprep.subr.mxu0 0.0
      %1783 = vmatpush2.msra.mxu0 0.0
      %1784 = vmatprep.subr.mxu0 0.0
      %1785 = vmatpush2.msra.mxu0 0.0
      %1786 = vmatprep.subr.mxu0 0.0
      %1787 = vmatpush2.msra.mxu0 0.0
      %1788 = vmatprep.subr.mxu0 0.0
      %1789 = vmatpush2.msra.mxu0 0.0
      %1790 = vmatprep.subr.mxu0 0.0
      %1791 = vmatpush2.msra.mxu0 0.0
      %1792 = vmatprep.subr.mxu0 0.0
      %1793 = vmatpush2.msra.mxu0 0.0
      %1794 = vmatprep.subr.mxu0 0.0
      %1795 = vmatpush2.msra.mxu0 0.0
      %1796 = vmatprep.subr.mxu0 0.0
      %1797 = vmatpush2.msra.mxu0 0.0
      %1798 = vmatprep.subr.mxu0 0.0
      %1799 = vmatpush2.msra.mxu0 0.0
      %1800 = vmatprep.subr.mxu0 0.0
      %1801 = vmatpush2.msra.mxu0 0.0
      %1802 = vmatprep.subr.mxu0 0.0
      %1803 = vmatpush2.msra.mxu0 0.0
      %1804 = vmatprep.subr.mxu0 0.0
      %1805 = vmatpush2.msra.mxu0 0.0
      %1806 = vmatprep.subr.mxu0 0.0
      %1807 = vmatpush2.msra.mxu0 0.0
      %1808 = vmatprep.mubr.f32.mxu0 0.0
      %1809 = vmatmul.mubr.f32.gmra.mxu0 %v1553
      %v1810 = vpop.f32.mrf.mxu0
      %v1811 = vadd.f32 0.0, %v1810
      %v1812 = vpop.f32.mrf.mxu0
      %1813 = vmatprep.mubr.f32.mxu0 0.0
      %1814 = vmatmul.mubr.f32.gmra.mxu0 %v1556
      %v1815 = vpop.f32.mrf.mxu0
      %v1816 = vadd.f32 0.0, %v1815
      %v1817 = vpop.f32.mrf.mxu0
      %1818 = vmatprep.mubr.f32.mxu0 0.0
      %1819 = vmatmul.mubr.f32.gmra.mxu0 %v1559
      %v1820 = vpop.f32.mrf.mxu0
      %v1821 = vadd.f32 0.0, %v1820
      %v1822 = vpop.f32.mrf.mxu0
      %1823 = vmatprep.mubr.f32.mxu0 0.0
      %1824 = vmatmul.mubr.f32.gmra.mxu0 %v1562
      %v1825 = vpop.f32.mrf.mxu0
      %v1826 = vadd.f32 0.0, %v1825
      %v1827 = vpop.f32.mrf.mxu0
      %1828 = vmatprep.mubr.f32.mxu0 0.0
      %1829 = vmatmul.mubr.f32.gmra.mxu0 %v1565
      %v1830 = vpop.f32.mrf.mxu0
      %v1831 = vadd.f32 0.0, %v1830
      %v1832 = vpop.f32.mrf.mxu0
      %1833 = vmatprep.mubr.f32.mxu0 0.0
      %1834 = vmatmul.mubr.f32.gmra.mxu0 %v1568
      %v1835 = vpop.f32.mrf.mxu0
      %v1836 = vadd.f32 0.0, %v1835
      %v1837 = vpop.f32.mrf.mxu0
      %1838 = vmatprep.mubr.f32.mxu0 0.0
      %1839 = vmatmul.mubr.f32.gmra.mxu0 %v1571
      %v1840 = vpop.f32.mrf.mxu0
      %v1841 = vadd.f32 0.0, %v1840
      %v1842 = vpop.f32.mrf.mxu0
      %1843 = vmatprep.mubr.f32.mxu0 0.0
      %1844 = vmatmul.mubr.f32.gmra.mxu0 %v1574
      %v1845 = vpop.f32.mrf.mxu0
      %v1846 = vadd.f32 0.0, %v1845
      %v1847 = vpop.f32.mrf.mxu0
      %1848 = vmatprep.mubr.f32.mxu0 0.0
      %1849 = vmatmul.mubr.f32.gmra.mxu0 %v1577
      %v1850 = vpop.f32.mrf.mxu0
      %v1851 = vadd.f32 0.0, %v1850
      %v1852 = vpop.f32.mrf.mxu0
      %1853 = vmatprep.mubr.f32.mxu0 0.0
      %1854 = vmatmul.mubr.f32.gmra.mxu0 %v1580
      %v1855 = vpop.f32.mrf.mxu0
      %v1856 = vadd.f32 0.0, %v1855
      %v1857 = vpop.f32.mrf.mxu0
      %1858 = vmatprep.mubr.f32.mxu0 0.0
      %1859 = vmatmul.mubr.f32.gmra.mxu0 %v1583
      %v1860 = vpop.f32.mrf.mxu0
      %v1861 = vadd.f32 0.0, %v1860
      %v1862 = vpop.f32.mrf.mxu0
      %1863 = vmatprep.mubr.f32.mxu0 0.0
      %1864 = vmatmul.mubr.f32.gmra.mxu0 %v1586
      %v1865 = vpop.f32.mrf.mxu0
      %v1866 = vadd.f32 0.0, %v1865
      %v1867 = vpop.f32.mrf.mxu0
      %1868 = vmatprep.mubr.f32.mxu0 0.0
      %1869 = vmatmul.mubr.f32.gmra.mxu0 %v1589
      %v1870 = vpop.f32.mrf.mxu0
      %v1871 = vadd.f32 0.0, %v1870
      %v1872 = vpop.f32.mrf.mxu0
      %1873 = vmatprep.mubr.f32.mxu0 0.0
      %1874 = vmatmul.mubr.f32.gmra.mxu0 %v1592
      %v1875 = vpop.f32.mrf.mxu0
      %v1876 = vadd.f32 0.0, %v1875
      %v1877 = vpop.f32.mrf.mxu0
      %1878 = vmatprep.mubr.f32.mxu0 0.0
      %1879 = vmatmul.mubr.f32.gmra.mxu0 %v1595
      %v1880 = vpop.f32.mrf.mxu0
      %v1881 = vadd.f32 0.0, %v1880
      %v1882 = vpop.f32.mrf.mxu0
      %1883 = vmatprep.mubr.f32.mxu0 0.0
      %1884 = vmatmul.mubr.f32.gmra.mxu0 %v1598
      %v1885 = vpop.f32.mrf.mxu0
      %v1886 = vadd.f32 0.0, %v1885
      %v1887 = vpop.f32.mrf.mxu0
      %1888 = vmatprep.mubr.f32.mxu0 0.0
      %1889 = vmatmul.mubr.f32.gmra.mxu0 %v1601
      %v1890 = vpop.f32.mrf.mxu0
      %v1891 = vadd.f32 0.0, %v1890
      %v1892 = vpop.f32.mrf.mxu0
      %1893 = vmatprep.mubr.f32.mxu0 0.0
      %1894 = vmatmul.mubr.f32.gmra.mxu0 %v1604
      %v1895 = vpop.f32.mrf.mxu0
      %v1896 = vadd.f32 0.0, %v1895
      %v1897 = vpop.f32.mrf.mxu0
      %1898 = vmatprep.mubr.f32.mxu0 0.0
      %1899 = vmatmul.mubr.f32.gmra.mxu0 %v1607
      %v1900 = vpop.f32.mrf.mxu0
      %v1901 = vadd.f32 0.0, %v1900
      %v1902 = vpop.f32.mrf.mxu0
      %1903 = vmatprep.mubr.f32.mxu0 0.0
      %1904 = vmatmul.mubr.f32.gmra.mxu0 %v1610
      %v1905 = vpop.f32.mrf.mxu0
      %v1906 = vadd.f32 0.0, %v1905
      %v1907 = vpop.f32.mrf.mxu0
      %1908 = vmatprep.mubr.f32.mxu0 0.0
      %1909 = vmatmul.mubr.f32.gmra.mxu0 %v1613
      %v1910 = vpop.f32.mrf.mxu0
      %v1911 = vadd.f32 0.0, %v1910
      %v1912 = vpop.f32.mrf.mxu0
      %1913 = vmatprep.mubr.f32.mxu0 0.0
      %1914 = vmatmul.mubr.f32.gmra.mxu0 %v1616
      %v1915 = vpop.f32.mrf.mxu0
      %v1916 = vadd.f32 0.0, %v1915
      %v1917 = vpop.f32.mrf.mxu0
      %1918 = vmatprep.mubr.f32.mxu0 0.0
      %1919 = vmatmul.mubr.f32.gmra.mxu0 %v1619
      %v1920 = vpop.f32.mrf.mxu0
      %v1921 = vadd.f32 0.0, %v1920
      %v1922 = vpop.f32.mrf.mxu0
      %1923 = vmatprep.mubr.f32.mxu0 0.0
      %1924 = vmatmul.mubr.f32.gmra.mxu0 %v1622
      %v1925 = vpop.f32.mrf.mxu0
      %v1926 = vadd.f32 0.0, %v1925
      %v1927 = vpop.f32.mrf.mxu0
      %1928 = vmatprep.mubr.f32.mxu0 0.0
      %1929 = vmatmul.mubr.f32.gmra.mxu0 %v1625
      %v1930 = vpop.f32.mrf.mxu0
      %v1931 = vadd.f32 0.0, %v1930
      %v1932 = vpop.f32.mrf.mxu0
      %1933 = vmatprep.mubr.f32.mxu0 0.0
      %1934 = vmatmul.mubr.f32.gmra.mxu0 %v1628
      %v1935 = vpop.f32.mrf.mxu0
      %v1936 = vadd.f32 0.0, %v1935
      %v1937 = vpop.f32.mrf.mxu0
      %1938 = vmatprep.mubr.f32.mxu0 0.0
      %1939 = vmatmul.mubr.f32.gmra.mxu0 %v1631
      %v1940 = vpop.f32.mrf.mxu0
      %v1941 = vadd.f32 0.0, %v1940
      %v1942 = vpop.f32.mrf.mxu0
      %1943 = vmatprep.mubr.f32.mxu0 0.0
      %1944 = vmatmul.mubr.f32.gmra.mxu0 %v1634
      %v1945 = vpop.f32.mrf.mxu0
      %v1946 = vadd.f32 0.0, %v1945
      %v1947 = vpop.f32.mrf.mxu0
      %1948 = vmatprep.mubr.f32.mxu0 0.0
      %1949 = vmatmul.mubr.f32.gmra.mxu0 %v1637
      %v1950 = vpop.f32.mrf.mxu0
      %v1951 = vadd.f32 0.0, %v1950
      %v1952 = vpop.f32.mrf.mxu0
      %1953 = vmatprep.mubr.f32.mxu0 0.0
      %1954 = vmatmul.mubr.f32.gmra.mxu0 %v1640
      %v1955 = vpop.f32.mrf.mxu0
      %v1956 = vadd.f32 0.0, %v1955
      %v1957 = vpop.f32.mrf.mxu0
      %1958 = vmatprep.mubr.f32.mxu0 0.0
      %1959 = vmatmul.mubr.f32.gmra.mxu0 %v1643
      %v1960 = vpop.f32.mrf.mxu0
      %v1961 = vadd.f32 0.0, %v1960
      %v1962 = vpop.f32.mrf.mxu0
      %1963 = vmatprep.mubr.f32.mxu0 0.0
      %1964 = vmatmul.mubr.f32.gmra.mxu0 %v1646
      %v1965 = vpop.f32.mrf.mxu0
      %v1966 = vadd.f32 0.0, %v1965
      %v1967 = vpop.f32.mrf.mxu0
      %1968 = vmatprep.mubr.f32.mxu0 0.0
      %1969 = vmatmul.mubr.f32.gmra.mxu0 %v1649
      %v1970 = vpop.f32.mrf.mxu0
      %v1971 = vadd.f32 0.0, %v1970
      %v1972 = vpop.f32.mrf.mxu0
      %1973 = vmatprep.mubr.f32.mxu0 0.0
      %1974 = vmatmul.mubr.f32.gmra.mxu0 %v1652
      %v1975 = vpop.f32.mrf.mxu0
      %v1976 = vadd.f32 0.0, %v1975
      %v1977 = vpop.f32.mrf.mxu0
      %1978 = vmatprep.mubr.f32.mxu0 0.0
      %1979 = vmatmul.mubr.f32.gmra.mxu0 %v1655
      %v1980 = vpop.f32.mrf.mxu0
      %v1981 = vadd.f32 0.0, %v1980
      %v1982 = vpop.f32.mrf.mxu0
      %1983 = vmatprep.mubr.f32.mxu0 0.0
      %1984 = vmatmul.mubr.f32.gmra.mxu0 %v1658
      %v1985 = vpop.f32.mrf.mxu0
      %v1986 = vadd.f32 0.0, %v1985
      %v1987 = vpop.f32.mrf.mxu0
      %1988 = vmatprep.mubr.f32.mxu0 0.0
      %1989 = vmatmul.mubr.f32.gmra.mxu0 %v1661
      %v1990 = vpop.f32.mrf.mxu0
      %v1991 = vadd.f32 0.0, %v1990
      %v1992 = vpop.f32.mrf.mxu0
      %1993 = vmatprep.mubr.f32.mxu0 0.0
      %1994 = vmatmul.mubr.f32.gmra.mxu0 %v1664
      %v1995 = vpop.f32.mrf.mxu0
      %v1996 = vadd.f32 0.0, %v1995
      %v1997 = vpop.f32.mrf.mxu0
      %1998 = vmatprep.mubr.f32.mxu0 0.0
      %1999 = vmatmul.mubr.f32.gmra.mxu0 %v1667
      %v2000 = vpop.f32.mrf.mxu0
      %v2001 = vadd.f32 0.0, %v2000
      %v2002 = vpop.f32.mrf.mxu0
      %2003 = vmatprep.mubr.f32.mxu0 0.0
      %2004 = vmatmul.mubr.f32.gmra.mxu0 %v1670
      %v2005 = vpop.f32.mrf.mxu0
      %v2006 = vadd.f32 0.0, %v2005
      %v2007 = vpop.f32.mrf.mxu0
      %2008 = vmatprep.mubr.f32.mxu0 0.0
      %2009 = vmatmul.mubr.f32.gmra.mxu0 %v1673
      %v2010 = vpop.f32.mrf.mxu0
      %v2011 = vadd.f32 0.0, %v2010
      %v2012 = vpop.f32.mrf.mxu0
      %2013 = vmatprep.mubr.f32.mxu0 0.0
      %2014 = vmatmul.mubr.f32.gmra.mxu0 %v1676
      %v2015 = vpop.f32.mrf.mxu0
      %v2016 = vadd.f32 0.0, %v2015
      %v2017 = vpop.f32.mrf.mxu0
      %2018 = vmatprep.mubr.f32.mxu0 0.0
      %2019 = vmatmul.mubr.f32.gmra.mxu0 %v1679
      %v2020 = vpop.f32.mrf.mxu0
      %v2021 = vadd.f32 0.0, %v2020
      %v2022 = vpop.f32.mrf.mxu0
      %2023 = vmatprep.mubr.f32.mxu0 0.0
      %2024 = vmatmul.mubr.f32.gmra.mxu0 %v1682
      %v2025 = vpop.f32.mrf.mxu0
      %v2026 = vadd.f32 0.0, %v2025
      %v2027 = vpop.f32.mrf.mxu0
      %2028 = vmatprep.mubr.f32.mxu0 0.0
      %2029 = vmatmul.mubr.f32.gmra.mxu0 %v1685
      %v2030 = vpop.f32.mrf.mxu0
      %v2031 = vadd.f32 0.0, %v2030
      %v2032 = vpop.f32.mrf.mxu0
      %2033 = vmatprep.mubr.f32.mxu0 0.0
      %2034 = vmatmul.mubr.f32.gmra.mxu0 %v1688
      %v2035 = vpop.f32.mrf.mxu0
      %v2036 = vadd.f32 0.0, %v2035
      %v2037 = vpop.f32.mrf.mxu0
      %2038 = vmatprep.mubr.f32.mxu0 0.0
      %2039 = vmatmul.mubr.f32.gmra.mxu0 %v1691
      %v2040 = vpop.f32.mrf.mxu0
      %v2041 = vadd.f32 0.0, %v2040
      %v2042 = vpop.f32.mrf.mxu0
      %2043 = vmatprep.mubr.f32.mxu0 0.0
      %2044 = vmatmul.mubr.f32.gmra.mxu0 %v1694
      %v2045 = vpop.f32.mrf.mxu0
      %v2046 = vadd.f32 0.0, %v2045
      %v2047 = vpop.f32.mrf.mxu0
      %2048 = vmatprep.mubr.f32.mxu0 0.0
      %2049 = vmatmul.mubr.f32.gmra.mxu0 %v1697
      %v2050 = vpop.f32.mrf.mxu0
      %v2051 = vadd.f32 0.0, %v2050
      %v2052 = vpop.f32.mrf.mxu0
      %2053 = vmatprep.mubr.f32.mxu0 0.0
      %2054 = vmatmul.mubr.f32.gmra.mxu0 %v1700
      %v2055 = vpop.f32.mrf.mxu0
      %v2056 = vadd.f32 0.0, %v2055
      %v2057 = vpop.f32.mrf.mxu0
      %2058 = vmatprep.mubr.f32.mxu0 0.0
      %2059 = vmatmul.mubr.f32.gmra.mxu0 %v1703
      %v2060 = vpop.f32.mrf.mxu0
      %v2061 = vadd.f32 0.0, %v2060
      %v2062 = vpop.f32.mrf.mxu0
      %2063 = vmatprep.mubr.f32.mxu0 0.0
      %2064 = vmatmul.mubr.f32.gmra.mxu0 %v1706
      %v2065 = vpop.f32.mrf.mxu0
      %v2066 = vadd.f32 0.0, %v2065
      %v2067 = vpop.f32.mrf.mxu0
      %2068 = vmatprep.mubr.f32.mxu0 0.0
      %2069 = vmatmul.mubr.f32.gmra.mxu0 %v1709
      %v2070 = vpop.f32.mrf.mxu0
      %v2071 = vadd.f32 0.0, %v2070
      %v2072 = vpop.f32.mrf.mxu0
      %2073 = vmatprep.mubr.f32.mxu0 0.0
      %2074 = vmatmul.mubr.f32.gmra.mxu0 %v1712
      %v2075 = vpop.f32.mrf.mxu0
      %v2076 = vadd.f32 0.0, %v2075
      %v2077 = vpop.f32.mrf.mxu0
      %2078 = vmatprep.mubr.f32.mxu0 0.0
      %2079 = vmatmul.mubr.f32.gmra.mxu0 %v1715
      %v2080 = vpop.f32.mrf.mxu0
      %v2081 = vadd.f32 0.0, %v2080
      %v2082 = vpop.f32.mrf.mxu0
      %2083 = vmatprep.mubr.f32.mxu0 0.0
      %2084 = vmatmul.mubr.f32.gmra.mxu0 %v1718
      %v2085 = vpop.f32.mrf.mxu0
      %v2086 = vadd.f32 0.0, %v2085
      %v2087 = vpop.f32.mrf.mxu0
      %2088 = vmatprep.mubr.f32.mxu0 0.0
      %2089 = vmatmul.mubr.f32.gmra.mxu0 %v1721
      %v2090 = vpop.f32.mrf.mxu0
      %v2091 = vadd.f32 0.0, %v2090
      %v2092 = vpop.f32.mrf.mxu0
      %2093 = vmatprep.mubr.f32.mxu0 0.0
      %2094 = vmatmul.mubr.f32.gmra.mxu0 %v1724
      %v2095 = vpop.f32.mrf.mxu0
      %v2096 = vadd.f32 0.0, %v2095
      %v2097 = vpop.f32.mrf.mxu0
      %2098 = vmatprep.mubr.f32.mxu0 0.0
      %2099 = vmatmul.mubr.f32.gmra.mxu0 %v1727
      %v2100 = vpop.f32.mrf.mxu0
      %v2101 = vadd.f32 0.0, %v2100
      %v2102 = vpop.f32.mrf.mxu0
      %2103 = vmatprep.mubr.f32.mxu0 0.0
      %2104 = vmatmul.mubr.f32.gmra.mxu0 %v1730
      %v2105 = vpop.f32.mrf.mxu0
      %v2106 = vadd.f32 0.0, %v2105
      %v2107 = vpop.f32.mrf.mxu0
      %2108 = vmatprep.mubr.f32.mxu0 0.0
      %2109 = vmatmul.mubr.f32.gmra.mxu0 %v1733
      %v2110 = vpop.f32.mrf.mxu0
      %v2111 = vadd.f32 0.0, %v2110
      %v2112 = vpop.f32.mrf.mxu0
      %2113 = vmatprep.mubr.f32.mxu0 0.0
      %2114 = vmatmul.mubr.f32.gmra.mxu0 %v1736
      %v2115 = vpop.f32.mrf.mxu0
      %v2116 = vadd.f32 0.0, %v2115
      %v2117 = vpop.f32.mrf.mxu0
      %2118 = vmatprep.mubr.f32.mxu0 0.0
      %2119 = vmatmul.mubr.f32.gmra.mxu0 %v1739
      %v2120 = vpop.f32.mrf.mxu0
      %v2121 = vadd.f32 0.0, %v2120
      %v2122 = vpop.f32.mrf.mxu0
      %2123 = vmatprep.mubr.f32.mxu0 0.0
      %2124 = vmatmul.mubr.f32.gmra.mxu0 %v1742
      %v2125 = vpop.f32.mrf.mxu0
      %v2126 = vadd.f32 0.0, %v2125
      %v2127 = vpop.f32.mrf.mxu0
      %2128 = vdwg.mxu0
      %v2129 = vadd.f32 %v1161, %v1811
      %v2130 = vadd.f32 %v1166, %v1816
      %v2131 = vadd.f32 %v1171, %v1821
      %v2132 = vadd.f32 %v1176, %v1826
      %v2133 = vadd.f32 %v1181, %v1831
      %v2134 = vadd.f32 %v1186, %v1836
      %v2135 = vadd.f32 %v1191, %v1841
      %v2136 = vadd.f32 %v1196, %v1846
      %v2137 = vadd.f32 %v1201, %v1851
      %v2138 = vadd.f32 %v1206, %v1856
      %v2139 = vadd.f32 %v1211, %v1861
      %v2140 = vadd.f32 %v1216, %v1866
      %v2141 = vadd.f32 %v1221, %v1871
      %v2142 = vadd.f32 %v1226, %v1876
      %v2143 = vadd.f32 %v1231, %v1881
      %v2144 = vadd.f32 %v1236, %v1886
      %v2145 = vadd.f32 %v1241, %v1891
      %v2146 = vadd.f32 %v1246, %v1896
      %v2147 = vadd.f32 %v1251, %v1901
      %v2148 = vadd.f32 %v1256, %v1906
      %v2149 = vadd.f32 %v1261, %v1911
      %v2150 = vadd.f32 %v1266, %v1916
      %v2151 = vadd.f32 %v1271, %v1921
      %v2152 = vadd.f32 %v1276, %v1926
      %v2153 = vadd.f32 %v1281, %v1931
      %v2154 = vadd.f32 %v1286, %v1936
      %v2155 = vadd.f32 %v1291, %v1941
      %v2156 = vadd.f32 %v1296, %v1946
      %v2157 = vadd.f32 %v1301, %v1951
      %v2158 = vadd.f32 %v1306, %v1956
      %v2159 = vadd.f32 %v1311, %v1961
      %v2160 = vadd.f32 %v1316, %v1966
      %v2161 = vadd.f32 %v1321, %v1971
      %v2162 = vadd.f32 %v1326, %v1976
      %v2163 = vadd.f32 %v1331, %v1981
      %v2164 = vadd.f32 %v1336, %v1986
      %v2165 = vadd.f32 %v1341, %v1991
      %v2166 = vadd.f32 %v1346, %v1996
      %v2167 = vadd.f32 %v1351, %v2001
      %v2168 = vadd.f32 %v1356, %v2006
      %v2169 = vadd.f32 %v1361, %v2011
      %v2170 = vadd.f32 %v1366, %v2016
      %v2171 = vadd.f32 %v1371, %v2021
      %v2172 = vadd.f32 %v1376, %v2026
      %v2173 = vadd.f32 %v1381, %v2031
      %v2174 = vadd.f32 %v1386, %v2036
      %v2175 = vadd.f32 %v1391, %v2041
      %v2176 = vadd.f32 %v1396, %v2046
      %v2177 = vadd.f32 %v1401, %v2051
      %v2178 = vadd.f32 %v1406, %v2056
      %v2179 = vadd.f32 %v1411, %v2061
      %v2180 = vadd.f32 %v1416, %v2066
      %v2181 = vadd.f32 %v1421, %v2071
      %v2182 = vadd.f32 %v1426, %v2076
      %v2183 = vadd.f32 %v1431, %v2081
      %v2184 = vadd.f32 %v1436, %v2086
      %v2185 = vadd.f32 %v1441, %v2091
      %v2186 = vadd.f32 %v1446, %v2096
      %v2187 = vadd.f32 %v1451, %v2101
      %v2188 = vadd.f32 %v1456, %v2106
      %v2189 = vadd.f32 %v1461, %v2111
      %v2190 = vadd.f32 %v1466, %v2116
      %v2191 = vadd.f32 %v1471, %v2121
      %v2192 = vadd.f32 %v1476, %v2126
      %v2193 = vld [vmem:[%s2] sm:$0x1]
      %v2195 = vlaneseq
      %v2196 = vshrl.u32 %v2195, 7
      %v2197 = vsub.s32 0, %v2196
      %v2198 = vrot.slane %v2193, %v2197
      %v2200 = vmul.f32 %v2129, %v2198
      %v2201 = vmul.f32 %v2130, %v2198
      %v2202 = vmul.f32 %v2131, %v2198
      %v2203 = vmul.f32 %v2132, %v2198
      %v2204 = vmul.f32 %v2133, %v2198
      %v2205 = vmul.f32 %v2134, %v2198
      %v2206 = vmul.f32 %v2135, %v2198
      %v2207 = vmul.f32 %v2136, %v2198
      %v2208 = vmul.f32 %v2137, %v2198
      %v2209 = vmul.f32 %v2138, %v2198
      %v2210 = vmul.f32 %v2139, %v2198
      %v2211 = vmul.f32 %v2140, %v2198
      %v2212 = vmul.f32 %v2141, %v2198
      %v2213 = vmul.f32 %v2142, %v2198
      %v2214 = vmul.f32 %v2143, %v2198
      %v2215 = vmul.f32 %v2144, %v2198
      %v2216 = vmul.f32 %v2145, %v2198
      %v2217 = vmul.f32 %v2146, %v2198
      %v2218 = vmul.f32 %v2147, %v2198
      %v2219 = vmul.f32 %v2148, %v2198
      %v2220 = vmul.f32 %v2149, %v2198
      %v2221 = vmul.f32 %v2150, %v2198
      %v2222 = vmul.f32 %v2151, %v2198
      %v2223 = vmul.f32 %v2152, %v2198
      %v2224 = vmul.f32 %v2153, %v2198
      %v2225 = vmul.f32 %v2154, %v2198
      %v2226 = vmul.f32 %v2155, %v2198
      %v2227 = vmul.f32 %v2156, %v2198
      %v2228 = vmul.f32 %v2157, %v2198
      %v2229 = vmul.f32 %v2158, %v2198
      %v2230 = vmul.f32 %v2159, %v2198
      %v2231 = vmul.f32 %v2160, %v2198
      %v2232 = vmul.f32 %v2161, %v2198
      %v2233 = vmul.f32 %v2162, %v2198
      %v2234 = vmul.f32 %v2163, %v2198
      %v2235 = vmul.f32 %v2164, %v2198
      %v2236 = vmul.f32 %v2165, %v2198
      %v2237 = vmul.f32 %v2166, %v2198
      %v2238 = vmul.f32 %v2167, %v2198
      %v2239 = vmul.f32 %v2168, %v2198
      %v2240 = vmul.f32 %v2169, %v2198
      %v2241 = vmul.f32 %v2170, %v2198
      %v2242 = vmul.f32 %v2171, %v2198
      %v2243 = vmul.f32 %v2172, %v2198
      %v2244 = vmul.f32 %v2173, %v2198
      %v2245 = vmul.f32 %v2174, %v2198
      %v2246 = vmul.f32 %v2175, %v2198
      %v2247 = vmul.f32 %v2176, %v2198
      %v2248 = vmul.f32 %v2177, %v2198
      %v2249 = vmul.f32 %v2178, %v2198
      %v2250 = vmul.f32 %v2179, %v2198
      %v2251 = vmul.f32 %v2180, %v2198
      %v2252 = vmul.f32 %v2181, %v2198
      %v2253 = vmul.f32 %v2182, %v2198
      %v2254 = vmul.f32 %v2183, %v2198
      %v2255 = vmul.f32 %v2184, %v2198
      %v2256 = vmul.f32 %v2185, %v2198
      %v2257 = vmul.f32 %v2186, %v2198
      %v2258 = vmul.f32 %v2187, %v2198
      %v2259 = vmul.f32 %v2188, %v2198
      %v2260 = vmul.f32 %v2189, %v2198
      %v2261 = vmul.f32 %v2190, %v2198
      %v2262 = vmul.f32 %v2191, %v2198
      %v2263 = vmul.f32 %v2192, %v2198
      %v2264 = vld [vmem:[%s3] sm:$0x1]
      %v2266 = vlaneseq
      %v2267 = vshrl.u32 %v2266, 7
      %v2268 = vsub.s32 0, %v2267
      %v2269 = vrot.slane %v2264, %v2268
      %v2271 = vadd.f32 %v2200, %v2269
      %v2272 = vadd.f32 %v2201, %v2269
      %v2273 = vadd.f32 %v2202, %v2269
      %v2274 = vadd.f32 %v2203, %v2269
      %v2275 = vadd.f32 %v2204, %v2269
      %v2276 = vadd.f32 %v2205, %v2269
      %v2277 = vadd.f32 %v2206, %v2269
      %v2278 = vadd.f32 %v2207, %v2269
      %v2279 = vadd.f32 %v2208, %v2269
      %v2280 = vadd.f32 %v2209, %v2269
      %v2281 = vadd.f32 %v2210, %v2269
      %v2282 = vadd.f32 %v2211, %v2269
      %v2283 = vadd.f32 %v2212, %v2269
      %v2284 = vadd.f32 %v2213, %v2269
      %v2285 = vadd.f32 %v2214, %v2269
      %v2286 = vadd.f32 %v2215, %v2269
      %v2287 = vadd.f32 %v2216, %v2269
      %v2288 = vadd.f32 %v2217, %v2269
      %v2289 = vadd.f32 %v2218, %v2269
      %v2290 = vadd.f32 %v2219, %v2269
      %v2291 = vadd.f32 %v2220, %v2269
      %v2292 = vadd.f32 %v2221, %v2269
      %v2293 = vadd.f32 %v2222, %v2269
      %v2294 = vadd.f32 %v2223, %v2269
      %v2295 = vadd.f32 %v2224, %v2269
      %v2296 = vadd.f32 %v2225, %v2269
      %v2297 = vadd.f32 %v2226, %v2269
      %v2298 = vadd.f32 %v2227, %v2269
      %v2299 = vadd.f32 %v2228, %v2269
      %v2300 = vadd.f32 %v2229, %v2269
      %v2301 = vadd.f32 %v2230, %v2269
      %v2302 = vadd.f32 %v2231, %v2269
      %v2303 = vadd.f32 %v2232, %v2269
      %v2304 = vadd.f32 %v2233, %v2269
      %v2305 = vadd.f32 %v2234, %v2269
      %v2306 = vadd.f32 %v2235, %v2269
      %v2307 = vadd.f32 %v2236, %v2269
      %v2308 = vadd.f32 %v2237, %v2269
      %v2309 = vadd.f32 %v2238, %v2269
      %v2310 = vadd.f32 %v2239, %v2269
      %v2311 = vadd.f32 %v2240, %v2269
      %v2312 = vadd.f32 %v2241, %v2269
      %v2313 = vadd.f32 %v2242, %v2269
      %v2314 = vadd.f32 %v2243, %v2269
      %v2315 = vadd.f32 %v2244, %v2269
      %v2316 = vadd.f32 %v2245, %v2269
      %v2317 = vadd.f32 %v2246, %v2269
      %v2318 = vadd.f32 %v2247, %v2269
      %v2319 = vadd.f32 %v2248, %v2269
      %v2320 = vadd.f32 %v2249, %v2269
      %v2321 = vadd.f32 %v2250, %v2269
      %v2322 = vadd.f32 %v2251, %v2269
      %v2323 = vadd.f32 %v2252, %v2269
      %v2324 = vadd.f32 %v2253, %v2269
      %v2325 = vadd.f32 %v2254, %v2269
      %v2326 = vadd.f32 %v2255, %v2269
      %v2327 = vadd.f32 %v2256, %v2269
      %v2328 = vadd.f32 %v2257, %v2269
      %v2329 = vadd.f32 %v2258, %v2269
      %v2330 = vadd.f32 %v2259, %v2269
      %v2331 = vadd.f32 %v2260, %v2269
      %v2332 = vadd.f32 %v2261, %v2269
      %v2333 = vadd.f32 %v2262, %v2269
      %v2334 = vadd.f32 %v2263, %v2269
      %v2335 = vsub.f32 0.0, %v2271
      %v2336 = vsub.f32 0.0, %v2272
      %v2337 = vsub.f32 0.0, %v2273
      %v2338 = vsub.f32 0.0, %v2274
      %v2339 = vsub.f32 0.0, %v2275
      %v2340 = vsub.f32 0.0, %v2276
      %v2341 = vsub.f32 0.0, %v2277
      %v2342 = vsub.f32 0.0, %v2278
      %v2343 = vsub.f32 0.0, %v2279
      %v2344 = vsub.f32 0.0, %v2280
      %v2345 = vsub.f32 0.0, %v2281
      %v2346 = vsub.f32 0.0, %v2282
      %v2347 = vsub.f32 0.0, %v2283
      %v2348 = vsub.f32 0.0, %v2284
      %v2349 = vsub.f32 0.0, %v2285
      %v2350 = vsub.f32 0.0, %v2286
      %v2351 = vsub.f32 0.0, %v2287
      %v2352 = vsub.f32 0.0, %v2288
      %v2353 = vsub.f32 0.0, %v2289
      %v2354 = vsub.f32 0.0, %v2290
      %v2355 = vsub.f32 0.0, %v2291
      %v2356 = vsub.f32 0.0, %v2292
      %v2357 = vsub.f32 0.0, %v2293
      %v2358 = vsub.f32 0.0, %v2294
      %v2359 = vsub.f32 0.0, %v2295
      %v2360 = vsub.f32 0.0, %v2296
      %v2361 = vsub.f32 0.0, %v2297
      %v2362 = vsub.f32 0.0, %v2298
      %v2363 = vsub.f32 0.0, %v2299
      %v2364 = vsub.f32 0.0, %v2300
      %v2365 = vsub.f32 0.0, %v2301
      %v2366 = vsub.f32 0.0, %v2302
      %v2367 = vsub.f32 0.0, %v2303
      %v2368 = vsub.f32 0.0, %v2304
      %v2369 = vsub.f32 0.0, %v2305
      %v2370 = vsub.f32 0.0, %v2306
      %v2371 = vsub.f32 0.0, %v2307
      %v2372 = vsub.f32 0.0, %v2308
      %v2373 = vsub.f32 0.0, %v2309
      %v2374 = vsub.f32 0.0, %v2310
      %v2375 = vsub.f32 0.0, %v2311
      %v2376 = vsub.f32 0.0, %v2312
      %v2377 = vsub.f32 0.0, %v2313
      %v2378 = vsub.f32 0.0, %v2314
      %v2379 = vsub.f32 0.0, %v2315
      %v2380 = vsub.f32 0.0, %v2316
      %v2381 = vsub.f32 0.0, %v2317
      %v2382 = vsub.f32 0.0, %v2318
      %v2383 = vsub.f32 0.0, %v2319
      %v2384 = vsub.f32 0.0, %v2320
      %v2385 = vsub.f32 0.0, %v2321
      %v2386 = vsub.f32 0.0, %v2322
      %v2387 = vsub.f32 0.0, %v2323
      %v2388 = vsub.f32 0.0, %v2324
      %v2389 = vsub.f32 0.0, %v2325
      %v2390 = vsub.f32 0.0, %v2326
      %v2391 = vsub.f32 0.0, %v2327
      %v2392 = vsub.f32 0.0, %v2328
      %v2393 = vsub.f32 0.0, %v2329
      %v2394 = vsub.f32 0.0, %v2330
      %v2395 = vsub.f32 0.0, %v2331
      %v2396 = vsub.f32 0.0, %v2332
      %v2397 = vsub.f32 0.0, %v2333
      %v2398 = vsub.f32 0.0, %v2334
      %v2399 = vmul.f32 %v2335, 1.442695
      %v2400 = vpow.pop %v2399
      %v2401 = vmul.f32 %v2336, 1.442695
      %v2402 = vpow.pop %v2401
      %v2403 = vmul.f32 %v2337, 1.442695
      %v2404 = vpow.pop %v2403
      %v2405 = vmul.f32 %v2338, 1.442695
      %v2406 = vpow.pop %v2405
      %v2407 = vmul.f32 %v2339, 1.442695
      %v2408 = vpow.pop %v2407
      %v2409 = vmul.f32 %v2340, 1.442695
      %v2410 = vpow.pop %v2409
      %v2411 = vmul.f32 %v2341, 1.442695
      %v2412 = vpow.pop %v2411
      %v2413 = vmul.f32 %v2342, 1.442695
      %v2414 = vpow.pop %v2413
      %v2415 = vmul.f32 %v2343, 1.442695
      %v2416 = vpow.pop %v2415
      %v2417 = vmul.f32 %v2344, 1.442695
      %v2418 = vpow.pop %v2417
      %v2419 = vmul.f32 %v2345, 1.442695
      %v2420 = vpow.pop %v2419
      %v2421 = vmul.f32 %v2346, 1.442695
      %v2422 = vpow.pop %v2421
      %v2423 = vmul.f32 %v2347, 1.442695
      %v2424 = vpow.pop %v2423
      %v2425 = vmul.f32 %v2348, 1.442695
      %v2426 = vpow.pop %v2425
      %v2427 = vmul.f32 %v2349, 1.442695
      %v2428 = vpow.pop %v2427
      %v2429 = vmul.f32 %v2350, 1.442695
      %v2430 = vpow.pop %v2429
      %v2431 = vmul.f32 %v2351, 1.442695
      %v2432 = vpow.pop %v2431
      %v2433 = vmul.f32 %v2352, 1.442695
      %v2434 = vpow.pop %v2433
      %v2435 = vmul.f32 %v2353, 1.442695
      %v2436 = vpow.pop %v2435
      %v2437 = vmul.f32 %v2354, 1.442695
      %v2438 = vpow.pop %v2437
      %v2439 = vmul.f32 %v2355, 1.442695
      %v2440 = vpow.pop %v2439
      %v2441 = vmul.f32 %v2356, 1.442695
      %v2442 = vpow.pop %v2441
      %v2443 = vmul.f32 %v2357, 1.442695
      %v2444 = vpow.pop %v2443
      %v2445 = vmul.f32 %v2358, 1.442695
      %v2446 = vpow.pop %v2445
      %v2447 = vmul.f32 %v2359, 1.442695
      %v2448 = vpow.pop %v2447
      %v2449 = vmul.f32 %v2360, 1.442695
      %v2450 = vpow.pop %v2449
      %v2451 = vmul.f32 %v2361, 1.442695
      %v2452 = vpow.pop %v2451
      %v2453 = vmul.f32 %v2362, 1.442695
      %v2454 = vpow.pop %v2453
      %v2455 = vmul.f32 %v2363, 1.442695
      %v2456 = vpow.pop %v2455
      %v2457 = vmul.f32 %v2364, 1.442695
      %v2458 = vpow.pop %v2457
      %v2459 = vmul.f32 %v2365, 1.442695
      %v2460 = vpow.pop %v2459
      %v2461 = vmul.f32 %v2366, 1.442695
      %v2462 = vpow.pop %v2461
      %v2463 = vmul.f32 %v2367, 1.442695
      %v2464 = vpow.pop %v2463
      %v2465 = vmul.f32 %v2368, 1.442695
      %v2466 = vpow.pop %v2465
      %v2467 = vmul.f32 %v2369, 1.442695
      %v2468 = vpow.pop %v2467
      %v2469 = vmul.f32 %v2370, 1.442695
      %v2470 = vpow.pop %v2469
      %v2471 = vmul.f32 %v2371, 1.442695
      %v2472 = vpow.pop %v2471
      %v2473 = vmul.f32 %v2372, 1.442695
      %v2474 = vpow.pop %v2473
      %v2475 = vmul.f32 %v2373, 1.442695
      %v2476 = vpow.pop %v2475
      %v2477 = vmul.f32 %v2374, 1.442695
      %v2478 = vpow.pop %v2477
      %v2479 = vmul.f32 %v2375, 1.442695
      %v2480 = vpow.pop %v2479
      %v2481 = vmul.f32 %v2376, 1.442695
      %v2482 = vpow.pop %v2481
      %v2483 = vmul.f32 %v2377, 1.442695
      %v2484 = vpow.pop %v2483
      %v2485 = vmul.f32 %v2378, 1.442695
      %v2486 = vpow.pop %v2485
      %v2487 = vmul.f32 %v2379, 1.442695
      %v2488 = vpow.pop %v2487
      %v2489 = vmul.f32 %v2380, 1.442695
      %v2490 = vpow.pop %v2489
      %v2491 = vmul.f32 %v2381, 1.442695
      %v2492 = vpow.pop %v2491
      %v2493 = vmul.f32 %v2382, 1.442695
      %v2494 = vpow.pop %v2493
      %v2495 = vmul.f32 %v2383, 1.442695
      %v2496 = vpow.pop %v2495
      %v2497 = vmul.f32 %v2384, 1.442695
      %v2498 = vpow.pop %v2497
      %v2499 = vmul.f32 %v2385, 1.442695
      %v2500 = vpow.pop %v2499
      %v2501 = vmul.f32 %v2386, 1.442695
      %v2502 = vpow.pop %v2501
      %v2503 = vmul.f32 %v2387, 1.442695
      %v2504 = vpow.pop %v2503
      %v2505 = vmul.f32 %v2388, 1.442695
      %v2506 = vpow.pop %v2505
      %v2507 = vmul.f32 %v2389, 1.442695
      %v2508 = vpow.pop %v2507
      %v2509 = vmul.f32 %v2390, 1.442695
      %v2510 = vpow.pop %v2509
      %v2511 = vmul.f32 %v2391, 1.442695
      %v2512 = vpow.pop %v2511
      %v2513 = vmul.f32 %v2392, 1.442695
      %v2514 = vpow.pop %v2513
      %v2515 = vmul.f32 %v2393, 1.442695
      %v2516 = vpow.pop %v2515
      %v2517 = vmul.f32 %v2394, 1.442695
      %v2518 = vpow.pop %v2517
      %v2519 = vmul.f32 %v2395, 1.442695
      %v2520 = vpow.pop %v2519
      %v2521 = vmul.f32 %v2396, 1.442695
      %v2522 = vpow.pop %v2521
      %v2523 = vmul.f32 %v2397, 1.442695
      %v2524 = vpow.pop %v2523
      %v2525 = vmul.f32 %v2398, 1.442695
      %v2526 = vpow.pop %v2525
      %v2527 = vadd.f32 %v2400, 1.0
      %v2528 = vadd.f32 %v2402, 1.0
      %v2529 = vadd.f32 %v2404, 1.0
      %v2530 = vadd.f32 %v2406, 1.0
      %v2531 = vadd.f32 %v2408, 1.0
      %v2532 = vadd.f32 %v2410, 1.0
      %v2533 = vadd.f32 %v2412, 1.0
      %v2534 = vadd.f32 %v2414, 1.0
      %v2535 = vadd.f32 %v2416, 1.0
      %v2536 = vadd.f32 %v2418, 1.0
      %v2537 = vadd.f32 %v2420, 1.0
      %v2538 = vadd.f32 %v2422, 1.0
      %v2539 = vadd.f32 %v2424, 1.0
      %v2540 = vadd.f32 %v2426, 1.0
      %v2541 = vadd.f32 %v2428, 1.0
      %v2542 = vadd.f32 %v2430, 1.0
      %v2543 = vadd.f32 %v2432, 1.0
      %v2544 = vadd.f32 %v2434, 1.0
      %v2545 = vadd.f32 %v2436, 1.0
      %v2546 = vadd.f32 %v2438, 1.0
      %v2547 = vadd.f32 %v2440, 1.0
      %v2548 = vadd.f32 %v2442, 1.0
      %v2549 = vadd.f32 %v2444, 1.0
      %v2550 = vadd.f32 %v2446, 1.0
      %v2551 = vadd.f32 %v2448, 1.0
      %v2552 = vadd.f32 %v2450, 1.0
      %v2553 = vadd.f32 %v2452, 1.0
      %v2554 = vadd.f32 %v2454, 1.0
      %v2555 = vadd.f32 %v2456, 1.0
      %v2556 = vadd.f32 %v2458, 1.0
      %v2557 = vadd.f32 %v2460, 1.0
      %v2558 = vadd.f32 %v2462, 1.0
      %v2559 = vadd.f32 %v2464, 1.0
      %v2560 = vadd.f32 %v2466, 1.0
      %v2561 = vadd.f32 %v2468, 1.0
      %v2562 = vadd.f32 %v2470, 1.0
      %v2563 = vadd.f32 %v2472, 1.0
      %v2564 = vadd.f32 %v2474, 1.0
      %v2565 = vadd.f32 %v2476, 1.0
      %v2566 = vadd.f32 %v2478, 1.0
      %v2567 = vadd.f32 %v2480, 1.0
      %v2568 = vadd.f32 %v2482, 1.0
      %v2569 = vadd.f32 %v2484, 1.0
      %v2570 = vadd.f32 %v2486, 1.0
      %v2571 = vadd.f32 %v2488, 1.0
      %v2572 = vadd.f32 %v2490, 1.0
      %v2573 = vadd.f32 %v2492, 1.0
      %v2574 = vadd.f32 %v2494, 1.0
      %v2575 = vadd.f32 %v2496, 1.0
      %v2576 = vadd.f32 %v2498, 1.0
      %v2577 = vadd.f32 %v2500, 1.0
      %v2578 = vadd.f32 %v2502, 1.0
      %v2579 = vadd.f32 %v2504, 1.0
      %v2580 = vadd.f32 %v2506, 1.0
      %v2581 = vadd.f32 %v2508, 1.0
      %v2582 = vadd.f32 %v2510, 1.0
      %v2583 = vadd.f32 %v2512, 1.0
      %v2584 = vadd.f32 %v2514, 1.0
      %v2585 = vadd.f32 %v2516, 1.0
      %v2586 = vadd.f32 %v2518, 1.0
      %v2587 = vadd.f32 %v2520, 1.0
      %v2588 = vadd.f32 %v2522, 1.0
      %v2589 = vadd.f32 %v2524, 1.0
      %v2590 = vadd.f32 %v2526, 1.0
      %v2591 = vrcp.pop %v2527
      %v2592 = vmul.f32 1.0, %v2591
      %v2593 = vrcp.pop %v2528
      %v2594 = vmul.f32 1.0, %v2593
      %v2595 = vrcp.pop %v2529
      %v2596 = vmul.f32 1.0, %v2595
      %v2597 = vrcp.pop %v2530
      %v2598 = vmul.f32 1.0, %v2597
      %v2599 = vrcp.pop %v2531
      %v2600 = vmul.f32 1.0, %v2599
      %v2601 = vrcp.pop %v2532
      %v2602 = vmul.f32 1.0, %v2601
      %v2603 = vrcp.pop %v2533
      %v2604 = vmul.f32 1.0, %v2603
      %v2605 = vrcp.pop %v2534
      %v2606 = vmul.f32 1.0, %v2605
      %v2607 = vrcp.pop %v2535
      %v2608 = vmul.f32 1.0, %v2607
      %v2609 = vrcp.pop %v2536
      %v2610 = vmul.f32 1.0, %v2609
      %v2611 = vrcp.pop %v2537
      %v2612 = vmul.f32 1.0, %v2611
      %v2613 = vrcp.pop %v2538
      %v2614 = vmul.f32 1.0, %v2613
      %v2615 = vrcp.pop %v2539
      %v2616 = vmul.f32 1.0, %v2615
      %v2617 = vrcp.pop %v2540
      %v2618 = vmul.f32 1.0, %v2617
      %v2619 = vrcp.pop %v2541
      %v2620 = vmul.f32 1.0, %v2619
      %v2621 = vrcp.pop %v2542
      %v2622 = vmul.f32 1.0, %v2621
      %v2623 = vrcp.pop %v2543
      %v2624 = vmul.f32 1.0, %v2623
      %v2625 = vrcp.pop %v2544
      %v2626 = vmul.f32 1.0, %v2625
      %v2627 = vrcp.pop %v2545
      %v2628 = vmul.f32 1.0, %v2627
      %v2629 = vrcp.pop %v2546
      %v2630 = vmul.f32 1.0, %v2629
      %v2631 = vrcp.pop %v2547
      %v2632 = vmul.f32 1.0, %v2631
      %v2633 = vrcp.pop %v2548
      %v2634 = vmul.f32 1.0, %v2633
      %v2635 = vrcp.pop %v2549
      %v2636 = vmul.f32 1.0, %v2635
      %v2637 = vrcp.pop %v2550
      %v2638 = vmul.f32 1.0, %v2637
      %v2639 = vrcp.pop %v2551
      %v2640 = vmul.f32 1.0, %v2639
      %v2641 = vrcp.pop %v2552
      %v2642 = vmul.f32 1.0, %v2641
      %v2643 = vrcp.pop %v2553
      %v2644 = vmul.f32 1.0, %v2643
      %v2645 = vrcp.pop %v2554
      %v2646 = vmul.f32 1.0, %v2645
      %v2647 = vrcp.pop %v2555
      %v2648 = vmul.f32 1.0, %v2647
      %v2649 = vrcp.pop %v2556
      %v2650 = vmul.f32 1.0, %v2649
      %v2651 = vrcp.pop %v2557
      %v2652 = vmul.f32 1.0, %v2651
      %v2653 = vrcp.pop %v2558
      %v2654 = vmul.f32 1.0, %v2653
      %v2655 = vrcp.pop %v2559
      %v2656 = vmul.f32 1.0, %v2655
      %v2657 = vrcp.pop %v2560
      %v2658 = vmul.f32 1.0, %v2657
      %v2659 = vrcp.pop %v2561
      %v2660 = vmul.f32 1.0, %v2659
      %v2661 = vrcp.pop %v2562
      %v2662 = vmul.f32 1.0, %v2661
      %v2663 = vrcp.pop %v2563
      %v2664 = vmul.f32 1.0, %v2663
      %v2665 = vrcp.pop %v2564
      %v2666 = vmul.f32 1.0, %v2665
      %v2667 = vrcp.pop %v2565
      %v2668 = vmul.f32 1.0, %v2667
      %v2669 = vrcp.pop %v2566
      %v2670 = vmul.f32 1.0, %v2669
      %v2671 = vrcp.pop %v2567
      %v2672 = vmul.f32 1.0, %v2671
      %v2673 = vrcp.pop %v2568
      %v2674 = vmul.f32 1.0, %v2673
      %v2675 = vrcp.pop %v2569
      %v2676 = vmul.f32 1.0, %v2675
      %v2677 = vrcp.pop %v2570
      %v2678 = vmul.f32 1.0, %v2677
      %v2679 = vrcp.pop %v2571
      %v2680 = vmul.f32 1.0, %v2679
      %v2681 = vrcp.pop %v2572
      %v2682 = vmul.f32 1.0, %v2681
      %v2683 = vrcp.pop %v2573
      %v2684 = vmul.f32 1.0, %v2683
      %v2685 = vrcp.pop %v2574
      %v2686 = vmul.f32 1.0, %v2685
      %v2687 = vrcp.pop %v2575
      %v2688 = vmul.f32 1.0, %v2687
      %v2689 = vrcp.pop %v2576
      %v2690 = vmul.f32 1.0, %v2689
      %v2691 = vrcp.pop %v2577
      %v2692 = vmul.f32 1.0, %v2691
      %v2693 = vrcp.pop %v2578
      %v2694 = vmul.f32 1.0, %v2693
      %v2695 = vrcp.pop %v2579
      %v2696 = vmul.f32 1.0, %v2695
      %v2697 = vrcp.pop %v2580
      %v2698 = vmul.f32 1.0, %v2697
      %v2699 = vrcp.pop %v2581
      %v2700 = vmul.f32 1.0, %v2699
      %v2701 = vrcp.pop %v2582
      %v2702 = vmul.f32 1.0, %v2701
      %v2703 = vrcp.pop %v2583
      %v2704 = vmul.f32 1.0, %v2703
      %v2705 = vrcp.pop %v2584
      %v2706 = vmul.f32 1.0, %v2705
      %v2707 = vrcp.pop %v2585
      %v2708 = vmul.f32 1.0, %v2707
      %v2709 = vrcp.pop %v2586
      %v2710 = vmul.f32 1.0, %v2709
      %v2711 = vrcp.pop %v2587
      %v2712 = vmul.f32 1.0, %v2711
      %v2713 = vrcp.pop %v2588
      %v2714 = vmul.f32 1.0, %v2713
      %v2715 = vrcp.pop %v2589
      %v2716 = vmul.f32 1.0, %v2715
      %v2717 = vrcp.pop %v2590
      %v2718 = vmul.f32 1.0, %v2717
      %vm2719 = vcmask 64512
      %2720 = vst.msk [vmem:[%s177] sm:$0xff] %vm2719, %v2592
      %2721 = vst.msk [vmem:[%s177 + $0x8] sm:$0xff] %vm2719, %v2594
      %2722 = vst.msk [vmem:[%s177 + $0x10] sm:$0xff] %vm2719, %v2596
      %2723 = vst.msk [vmem:[%s177 + $0x18] sm:$0xff] %vm2719, %v2598
      %2724 = vst.msk [vmem:[%s177 + $0x20] sm:$0xff] %vm2719, %v2600
      %2725 = vst.msk [vmem:[%s177 + $0x28] sm:$0xff] %vm2719, %v2602
      %2726 = vst.msk [vmem:[%s177 + $0x30] sm:$0xff] %vm2719, %v2604
      %2727 = vst.msk [vmem:[%s177 + $0x38] sm:$0xff] %vm2719, %v2606
      %2728 = vst.msk [vmem:[%s177 + $0x40] sm:$0xff] %vm2719, %v2608
      %2729 = vst.msk [vmem:[%s177 + $0x48] sm:$0xff] %vm2719, %v2610
      %2730 = vst.msk [vmem:[%s177 + $0x50] sm:$0xff] %vm2719, %v2612
      %2731 = vst.msk [vmem:[%s177 + $0x58] sm:$0xff] %vm2719, %v2614
      %2732 = vst.msk [vmem:[%s177 + $0x60] sm:$0xff] %vm2719, %v2616
      %2733 = vst.msk [vmem:[%s177 + $0x68] sm:$0xff] %vm2719, %v2618
      %2734 = vst.msk [vmem:[%s177 + $0x70] sm:$0xff] %vm2719, %v2620
      %2735 = vst.msk [vmem:[%s177 + $0x78] sm:$0xff] %vm2719, %v2622
      %2736 = vst.msk [vmem:[%s177 + $0x80] sm:$0xff] %vm2719, %v2624
      %2737 = vst.msk [vmem:[%s177 + $0x88] sm:$0xff] %vm2719, %v2626
      %2738 = vst.msk [vmem:[%s177 + $0x90] sm:$0xff] %vm2719, %v2628
      %2739 = vst.msk [vmem:[%s177 + $0x98] sm:$0xff] %vm2719, %v2630
      %2740 = vst.msk [vmem:[%s177 + $0xa0] sm:$0xff] %vm2719, %v2632
      %2741 = vst.msk [vmem:[%s177 + $0xa8] sm:$0xff] %vm2719, %v2634
      %2742 = vst.msk [vmem:[%s177 + $0xb0] sm:$0xff] %vm2719, %v2636
      %2743 = vst.msk [vmem:[%s177 + $0xb8] sm:$0xff] %vm2719, %v2638
      %2744 = vst.msk [vmem:[%s177 + $0xc0] sm:$0xff] %vm2719, %v2640
      %2745 = vst.msk [vmem:[%s177 + $0xc8] sm:$0xff] %vm2719, %v2642
      %2746 = vst.msk [vmem:[%s177 + $0xd0] sm:$0xff] %vm2719, %v2644
      %2747 = vst.msk [vmem:[%s177 + $0xd8] sm:$0xff] %vm2719, %v2646
      %2748 = vst.msk [vmem:[%s177 + $0xe0] sm:$0xff] %vm2719, %v2648
      %2749 = vst.msk [vmem:[%s177 + $0xe8] sm:$0xff] %vm2719, %v2650
      %2750 = vst.msk [vmem:[%s177 + $0xf0] sm:$0xff] %vm2719, %v2652
      %2751 = vst.msk [vmem:[%s177 + $0xf8] sm:$0xff] %vm2719, %v2654
      %2752 = vst.msk [vmem:[%s177 + $0x100] sm:$0xff] %vm2719, %v2656
      %2753 = vst.msk [vmem:[%s177 + $0x108] sm:$0xff] %vm2719, %v2658
      %2754 = vst.msk [vmem:[%s177 + $0x110] sm:$0xff] %vm2719, %v2660
      %2755 = vst.msk [vmem:[%s177 + $0x118] sm:$0xff] %vm2719, %v2662
      %2756 = vst.msk [vmem:[%s177 + $0x120] sm:$0xff] %vm2719, %v2664
      %2757 = vst.msk [vmem:[%s177 + $0x128] sm:$0xff] %vm2719, %v2666
      %2758 = vst.msk [vmem:[%s177 + $0x130] sm:$0xff] %vm2719, %v2668
      %2759 = vst.msk [vmem:[%s177 + $0x138] sm:$0xff] %vm2719, %v2670
      %2760 = vst.msk [vmem:[%s177 + $0x140] sm:$0xff] %vm2719, %v2672
      %2761 = vst.msk [vmem:[%s177 + $0x148] sm:$0xff] %vm2719, %v2674
      %2762 = vst.msk [vmem:[%s177 + $0x150] sm:$0xff] %vm2719, %v2676
      %2763 = vst.msk [vmem:[%s177 + $0x158] sm:$0xff] %vm2719, %v2678
      %2764 = vst.msk [vmem:[%s177 + $0x160] sm:$0xff] %vm2719, %v2680
      %2765 = vst.msk [vmem:[%s177 + $0x168] sm:$0xff] %vm2719, %v2682
      %2766 = vst.msk [vmem:[%s177 + $0x170] sm:$0xff] %vm2719, %v2684
      %2767 = vst.msk [vmem:[%s177 + $0x178] sm:$0xff] %vm2719, %v2686
      %2768 = vst.msk [vmem:[%s177 + $0x180] sm:$0xff] %vm2719, %v2688
      %2769 = vst.msk [vmem:[%s177 + $0x188] sm:$0xff] %vm2719, %v2690
      %2770 = vst.msk [vmem:[%s177 + $0x190] sm:$0xff] %vm2719, %v2692
      %2771 = vst.msk [vmem:[%s177 + $0x198] sm:$0xff] %vm2719, %v2694
      %2772 = vst.msk [vmem:[%s177 + $0x1a0] sm:$0xff] %vm2719, %v2696
      %2773 = vst.msk [vmem:[%s177 + $0x1a8] sm:$0xff] %vm2719, %v2698
      %2774 = vst.msk [vmem:[%s177 + $0x1b0] sm:$0xff] %vm2719, %v2700
      %2775 = vst.msk [vmem:[%s177 + $0x1b8] sm:$0xff] %vm2719, %v2702
      %2776 = vst.msk [vmem:[%s177 + $0x1c0] sm:$0xff] %vm2719, %v2704
      %2777 = vst.msk [vmem:[%s177 + $0x1c8] sm:$0xff] %vm2719, %v2706
      %2778 = vst.msk [vmem:[%s177 + $0x1d0] sm:$0xff] %vm2719, %v2708
      %2779 = vst.msk [vmem:[%s177 + $0x1d8] sm:$0xff] %vm2719, %v2710
      %2780 = vst.msk [vmem:[%s177 + $0x1e0] sm:$0xff] %vm2719, %v2712
      %2781 = vst.msk [vmem:[%s177 + $0x1e8] sm:$0xff] %vm2719, %v2714
      %2782 = vst.msk [vmem:[%s177 + $0x1f0] sm:$0xff] %vm2719, %v2716
      %2783 = vst.msk [vmem:[%s177 + $0x1f8] sm:$0xff] %vm2719, %v2718
      %s2784 = smul.u32 64, %s15
      %p2785 = scmp.lt.s32.totalorder %s2784, 383
      %s2786 = scalar_select %p2785, %s2784, 383
      %s2787 = smul.addr %s2786, 8
      %s2788 = scalar_lea.vmem %s4, %s2787
      // Predicated region
      $region37: #{conv_normN_AE_forward.7} parent=35 // pred_check
        %p2789 = pneg %p117
      $region38: #{conv_normN_AE_forward.7} parent=35 // pred_check_branch
        %2791 = sbr.rel (%p2789) target = $region40
      $region39: #{conv_normN_AE_forward.7} parent=35 // pred_region
        %s2792 = smul.u32 64, %s15
      $region40: #{conv_normN_AE_forward.7} parent=35 // pred_fallthru
        _
    $region36: #{conv_normN_AE_forward.7} parent=5 // pred_fallthru
      _
    %p2793 = scmp.le.s32.totalorder 2, %s10
    // Predicated region
    $region41: #{conv_normN_AE_forward.7} parent=5 // pred_check
      %p2794 = pneg %p2793
    $region42: #{conv_normN_AE_forward.7} parent=5 // pred_check_branch
      %2796 = sbr.rel (%p2794) target = $region44
    $region43: #{conv_normN_AE_forward.7} parent=5 // pred_region
      %s2797 = ssub.s32 %s10, 2
      // Predicated region
      $region45: #{conv_normN_AE_forward.7} parent=43 // pred_check
        %p2798 = pneg %p123
      $region46: #{conv_normN_AE_forward.7} parent=43 // pred_check_branch
        %2800 = sbr.rel (%p2798) target = $region48
      $region47: #{conv_normN_AE_forward.7} parent=43 // pred_region
        %s2801 = smul.u32 64, %s16
        %p2802 = scmp.lt.s32.totalorder %s2801, 383
        %s2803 = scalar_select %p2802, %s2801, 383
        %s2804 = smul.addr %s2803, 8
        %s2805 = scalar_lea.vmem %s4, %s2804
      $region48: #{conv_normN_AE_forward.7} parent=43 // pred_fallthru
        _
    $region44: #{conv_normN_AE_forward.7} parent=5 // pred_fallthru
      _
  $region6: #{conv_normN_AE_forward.7} parent=0 // loop_footer
    %s14 = sadd.s32 1, %s10
  $region7: #{conv_normN_AE_forward.7} parent=0 // loop_footer_branch
    %9 = sbr.rel target = $region3
  $region8: #{conv_normN_AE_forward.7} parent=0 // loop_exit
    _

</llo_original>
